<compile_context>
chip_gen: v7x
topology: tpu7x:2x2x1
jax: 0.10.0
libtpu: 0.0.40
codegen_flags: <defaults>
</compile_context>

<pallas_src>
import functools
import math

import jax
import jax.numpy as jnp
from jax.experimental import pallas as pl
from jax.experimental.pallas import tpu as pltpu


# MXU input precision for the conv matmuls.  float32 reproduces the PyTorch
# float32 forward (up to accumulation order).  On v6e / v7x, switching to
# jnp.bfloat16 (accumulation stays f32) raises MXU throughput at production
# shapes; the test tolerance below adapts automatically.
MXU_DTYPE = jnp.float32

PAD = 3          # halo width kept around the image (max kernel is 7x7)
N_BLOCKS = 9


def _round_up(x, m):
    return (x + m - 1) // m * m


# -----------------------------------------------------------------------------
# Fused whole-network kernel (one grid step = one batch element)
# -----------------------------------------------------------------------------
def _resnet_kernel(coord_ref, x_ref, sw_ref, sb_ref, bw_ref, bb_ref,
                   hw_ref, hb_ref, o_ref, *, H, W, HP, WP, nf):
    L = HP * WP
    row = coord_ref[0:1, :]   # (1, L) padded-row index of every lane
    col = coord_ref[1:2, :]   # (1, L) padded-col index of every lane

    def shift(a, d):
        # y[:, o] = a[:, (o + d) % L].  Only lanes whose shifted source is
        # in-bounds are ever consumed, so wrapped lanes are "don't care".
        # (A lane roll, written as two lane slices + a lane concat.)
        d = d % L
        if d == 0:
            return a
        return jnp.concatenate([a[:, d:], a[:, :d]], axis=1)

    def masked_set(a, cond, d):
        # a[:, cond] <- a[:, cond + d]
        return jnp.where(jnp.broadcast_to(cond, a.shape), shift(a, d), a)

    def repad(a, p):
        # Rebuild the reflection halo of width `p` around the interior
        # [PAD:PAD+H, PAD:PAD+W] from interior values.  Rows first, then
        # columns, so corners come out as reflect-reflect.
        for k in range(1, p + 1):
            a = masked_set(a, row == PAD - k,          2 * k * WP)
            a = masked_set(a, row == PAD + H - 1 + k, -2 * k * WP)
        for k in range(1, p + 1):
            a = masked_set(a, col == PAD - k,          2 * k)
            a = masked_set(a, col == PAD + W - 1 + k, -2 * k)
        return a

    def conv(a, w, b, ksize):
        # a: (Cin, L) with a valid reflection halo of width ksize // 2
        # w: (Cout, ksize*ksize*Cin)   b: (Cout, 1)
        # Single im2col MXU matmul; output (Cout, L) is lane-dense.
        r = ksize // 2
        slabs = []
        for kh in range(-r, r + 1):
            for kw in range(-r, r + 1):
                slabs.append(shift(a, kh * WP + kw))
        im2col = jnp.concatenate(slabs, axis=0)                  # (k*k*Cin, L)
        y = jnp.dot(w.astype(MXU_DTYPE), im2col.astype(MXU_DTYPE),
                    preferred_element_type=jnp.float32)          # (Cout, L)
        return y + b

    # ---- stem: ReflectionPad(3) -> Conv7x7 -> ReLU --------------------------
    x = x_ref[0]                          # (cin_pad, L): interior valid
    x = repad(x, PAD)                     # in-kernel reflection padding
    x = jnp.maximum(conv(x, sw_ref[...], sb_ref[...], 7), 0.0)
    x = repad(x, 1)

    # ---- 9 residual blocks: activation stays resident on-chip --------------
    def block(i, xc):
        bwi = bw_ref[i]                   # (2*nf, 9*nf)
        bbi = bb_ref[i]                   # (2*nf, 1)
        h = jnp.maximum(conv(xc, bwi[:nf], bbi[:nf], 3), 0.0)
        h = repad(h, 1)
        y = xc + conv(h, bwi[nf:], bbi[nf:], 3)      # skip connection
        return repad(y, 1)

    x = jax.lax.fori_loop(0, N_BLOCKS, block, x)

    # ---- head: ReflectionPad(3) -> Conv7x7 ----------------------------------
    x = repad(x, PAD)
    o_ref[0] = conv(x, hw_ref[...], hb_ref[...], 7).astype(o_ref.dtype)


# -----------------------------------------------------------------------------
# Host-side packing / wrapper
# -----------------------------------------------------------------------------
def _pack_conv(w_torch, b_torch, cin_pad, cout_pad):
    """(Cout, Cin, K, K) torch weights -> (Cout_pad, K*K*Cin_pad) matching the
    kernel's im2col ordering (kh, kw, cin); bias -> (Cout_pad, 1)."""
    cout, cin, kh, kw = w_torch.shape
    w = jnp.pad(w_torch, ((0, cout_pad - cout), (0, cin_pad - cin),
                          (0, 0), (0, 0)))
    w = jnp.transpose(w, (0, 2, 3, 1)).reshape(cout_pad, kh * kw * cin_pad)
    b = jnp.pad(b_torch, ((0, cout_pad - cout),)).reshape(cout_pad, 1)
    return w.astype(jnp.float32), b.astype(jnp.float32)


def resnet_forward(x_nchw, params):
    x = x_nchw.astype(jnp.float32)        # x.type(FloatTensor)
    N, in_nc, H, W = x.shape
    nf = params["stem_b"].shape[0]
    out_nc = params["head_b"].shape[0]
    cin_pad = _round_up(in_nc, 8)         # zero-padded input channels (sublane)
    cout_pad = _round_up(out_nc, 8)       # zero-padded head channels (aligned store)

    # Flat padded layout: row stride WP, HP rows, L = HP*WP a multiple of 128
    # so every lane op works on fully aligned vregs.
    WP = _round_up(W + 2 * PAD, 8)
    HP = _round_up(H + 2 * PAD, 128 // math.gcd(WP, 128))
    L = HP * WP

    # Input -> (N, cin_pad, L): image in the interior, halo/extra lanes zero.
    xbuf = jnp.zeros((N, cin_pad, HP, WP), jnp.float32)
    xbuf = xbuf.at[:, :in_nc, PAD:PAD + H, PAD:PAD + W].set(x)
    x_flat = xbuf.reshape(N, cin_pad, L)

    # Per-lane (row, col) indices used by the in-kernel reflection-pad masks.
    lane = jnp.arange(L, dtype=jnp.int32)
    coords = jnp.stack([lane // WP, lane % WP])                 # (2, L) int32

    # Repack weights into MXU-friendly (Cout, K*K*Cin) matrices.
    sw, sb = _pack_conv(params["stem_w"], params["stem_b"], cin_pad, nf)
    hw, hb = _pack_conv(params["head_w"], params["head_b"], nf, cout_pad)
    bws, bbs = [], []
    for blk in params["blocks"]:
        w1, b1 = _pack_conv(blk["w1"], blk["b1"], nf, nf)
        w2, b2 = _pack_conv(blk["w2"], blk["b2"], nf, nf)
        bws.append(jnp.concatenate([w1, w2], axis=0))           # (2*nf, 9*nf)
        bbs.append(jnp.concatenate([b1, b2], axis=0))           # (2*nf, 1)
    bw = jnp.stack(bws)                                         # (9, 2*nf, 9*nf)
    bb = jnp.stack(bbs)                                         # (9, 2*nf, 1)

    kernel = functools.partial(_resnet_kernel, H=H, W=W, HP=HP, WP=WP, nf=nf)
    full = lambda s: pl.BlockSpec(s, lambda n: (0,) * len(s))   # noqa: E731

    out_flat = pl.pallas_call(
        kernel,
        out_shape=jax.ShapeDtypeStruct((N, cout_pad, L), jnp.float32),
        grid=(N,),
        in_specs=[
            full((2, L)),                                        # coords
            pl.BlockSpec((1, cin_pad, L), lambda n: (n, 0, 0)),  # input image
            full((nf, 49 * cin_pad)), full((nf, 1)),             # stem
            full((N_BLOCKS, 2 * nf, 9 * nf)),                    # block weights
            full((N_BLOCKS, 2 * nf, 1)),                         # block biases
            full((cout_pad, 49 * nf)), full((cout_pad, 1)),      # head
        ],
        out_specs=pl.BlockSpec((1, cout_pad, L), lambda n: (n, 0, 0)),
        compiler_params=pltpu.CompilerParams(
            dimension_semantics=("parallel",),
            vmem_limit_bytes=32 * 1024 * 1024),
    )(coords, x_flat, sw, sb, bw, bb, hw, hb)

    out = out_flat.reshape(N, cout_pad, HP, WP)
    return out[:, :out_nc, PAD:PAD + H, PAD:PAD + W]             # NCHW


# -----------------------------------------------------------------------------
# Parameter init (PyTorch Conv2d default init, torch weight layout)
# -----------------------------------------------------------------------------
def _init_conv(key, cin, cout, k):
    kw_key, kb_key = jax.random.split(key)
    bound = 1.0 / math.sqrt(cin * k * k)
    w = jax.random.uniform(kw_key, (cout, cin, k, k), jnp.float32, -bound, bound)
    b = jax.random.uniform(kb_key, (cout,), jnp.float32, -bound, bound)
    return w, b


def init_resnet_params(key, input_nc, output_nc, nf, n_blocks=N_BLOCKS):
    keys = jax.random.split(key, 2 + 2 * n_blocks)
    params = {"blocks": []}
    params["stem_w"], params["stem_b"] = _init_conv(keys[0], input_nc, nf, 7)
    for i in range(n_blocks):
        w1, b1 = _init_conv(keys[1 + 2 * i], nf, nf, 3)
        w2, b2 = _init_conv(keys[2 + 2 * i], nf, nf, 3)
        params["blocks"].append({"w1": w1, "b1": b1, "w2": w2, "b2": b2})
    params["head_w"], params["head_b"] = _init_conv(keys[-1], nf, output_nc, 7)
    return params


# -----------------------------------------------------------------------------
# Pure-JAX (XLA conv) reference for the correctness check
# -----------------------------------------------------------------------------
def _reflect_pad_nhwc(x, p):
    return jnp.pad(x, ((0, 0), (p, p), (p, p), (0, 0)), mode="reflect")


def _ref_conv(x, w_torch, b, relu=False, residual=None):
    w = jnp.transpose(w_torch, (2, 3, 1, 0))     # HWIO
    y = jax.lax.conv_general_dilated(
        x, w, window_strides=(1, 1), padding="VALID",
        dimension_numbers=("NHWC", "HWIO", "NHWC"))
    y = y + b.reshape(1, 1, 1, -1)
    if residual is not None:
        y = y + residual
    if relu:
        y = jnp.maximum(y, 0.0)
    return y


def resnet_forward_ref(x_nchw, params):
    x = jnp.transpose(x_nchw.astype(jnp.float32), (0, 2, 3, 1))
    x = _ref_conv(_reflect_pad_nhwc(x, 3), params["stem_w"], params["stem_b"],
                  relu=True)
    for blk in params["blocks"]:
        h = _ref_conv(_reflect_pad_nhwc(x, 1), blk["w1"], blk["b1"], relu=True)
        x = _ref_conv(_reflect_pad_nhwc(h, 1), blk["w2"], blk["b2"], residual=x)
    x = _ref_conv(_reflect_pad_nhwc(x, 3), params["head_w"], params["head_b"])
    return jnp.transpose(x, (0, 3, 1, 2))


if __name__ == "__main__":
    key = jax.random.PRNGKey(0)
    k_x, k_p = jax.random.split(key)
    N, input_nc, output_nc, nf, H, W = 2, 3, 3, 8, 16, 16

    x = jax.random.normal(k_x, (N, input_nc, H, W), jnp.float32)   # NCHW
    params = init_resnet_params(k_p, input_nc, output_nc, nf)

    out = jax.block_until_ready(jax.jit(resnet_forward)(x, params))
    assert out.shape == (N, output_nc, H, W), out.shape

    ref = jax.block_until_ready(jax.jit(resnet_forward_ref)(x, params))
    tol = 5e-3 if MXU_DTYPE is jnp.float32 else 5e-2
    assert jnp.allclose(out, ref, atol=tol, rtol=tol), float(
        jnp.max(jnp.abs(out - ref)))

    print("KERNEL_OK")
</pallas_src>

<mosaic_0001>
module attributes {stable_mosaic.version = 11 : i64} {
  func.func @_resnet_kernel(%arg0: i32, %arg1: memref<2x768xi32, #tpu.memory_space<vmem>>, %arg2: memref<1x8x768xf32, #tpu.memory_space<vmem>>, %arg3: memref<8x392xf32, #tpu.memory_space<vmem>>, %arg4: memref<8x1xf32, #tpu.memory_space<vmem>>, %arg5: memref<9x16x72xf32, #tpu.memory_space<vmem>>, %arg6: memref<9x16x1xf32, #tpu.memory_space<vmem>>, %arg7: memref<8x392xf32, #tpu.memory_space<vmem>>, %arg8: memref<8x1xf32, #tpu.memory_space<vmem>>, %arg9: memref<1x8x768xf32, #tpu.memory_space<vmem>>) attributes {dimension_semantics = [#tpu.dimension_semantics<parallel>], iteration_bounds = array<i64: 2>, scalar_prefetch = 0 : i64, scratch_operands = 0 : i64, tpu.core_type = #tpu.core_type<tc>, window_params = [{pipeline_mode = #tpu.pipeline_mode<synchronous>, transform_indices = @transform_0, window_bounds = array<i64: 2, 768>}, {transform_indices = @transform_1, window_bounds = array<i64: 1, 8, 768>}, {pipeline_mode = #tpu.pipeline_mode<synchronous>, transform_indices = @transform_2, window_bounds = array<i64: 8, 392>}, {pipeline_mode = #tpu.pipeline_mode<synchronous>, transform_indices = @transform_3, window_bounds = array<i64: 8, 1>}, {pipeline_mode = #tpu.pipeline_mode<synchronous>, transform_indices = @transform_4, window_bounds = array<i64: 9, 16, 72>}, {pipeline_mode = #tpu.pipeline_mode<synchronous>, transform_indices = @transform_5, window_bounds = array<i64: 9, 16, 1>}, {pipeline_mode = #tpu.pipeline_mode<synchronous>, transform_indices = @transform_6, window_bounds = array<i64: 8, 392>}, {pipeline_mode = #tpu.pipeline_mode<synchronous>, transform_indices = @transform_7, window_bounds = array<i64: 8, 1>}, {transform_indices = @transform_8, window_bounds = array<i64: 1, 8, 768>}]} {
    %c0 = arith.constant 0 : index
    %c0_0 = arith.constant 0 : index
    %0 = vector.load %arg1[%c0, %c0_0] : memref<2x768xi32, #tpu.memory_space<vmem>>, vector<1x768xi32>
    %c1 = arith.constant 1 : index
    %c0_1 = arith.constant 0 : index
    %1 = vector.load %arg1[%c1, %c0_1] : memref<2x768xi32, #tpu.memory_space<vmem>>, vector<1x768xi32>
    %c0_2 = arith.constant 0 : index
    %c0_3 = arith.constant 0 : index
    %c0_4 = arith.constant 0 : index
    %2 = vector.load %arg2[%c0_2, %c0_3, %c0_4] : memref<1x8x768xf32, #tpu.memory_space<vmem>>, vector<1x8x768xf32>
    %3 = vector.shape_cast %2 : vector<1x8x768xf32> to vector<8x768xf32>
    %c2_i32 = arith.constant 2 : i32
    %4 = vector.broadcast %c2_i32 : i32 to vector<1x768xi32>
    %5 = arith.cmpi eq, %0, %4 : vector<1x768xi32>
    %6 = vector.shape_cast %5 : vector<1x768xi1> to vector<1x768xi1>
    %7 = vector.broadcast %6 : vector<1x768xi1> to vector<8x768xi1>
    %8 = vector.extract_strided_slice %3 {offsets = [0, 48], sizes = [8, 720], strides = [1, 1]} : vector<8x768xf32> to vector<8x720xf32>
    %9 = vector.extract_strided_slice %3 {offsets = [0, 0], sizes = [8, 48], strides = [1, 1]} : vector<8x768xf32> to vector<8x48xf32>
    %10 = tpu.concatenate %8, %9 in 1 : vector<8x720xf32>, vector<8x48xf32> -> vector<8x768xf32>
    %11 = arith.select %7, %10, %3 : vector<8x768xi1>, vector<8x768xf32>
    %c19_i32 = arith.constant 19 : i32
    %12 = vector.broadcast %c19_i32 : i32 to vector<1x768xi32>
    %13 = arith.cmpi eq, %0, %12 : vector<1x768xi32>
    %14 = vector.shape_cast %13 : vector<1x768xi1> to vector<1x768xi1>
    %15 = vector.broadcast %14 : vector<1x768xi1> to vector<8x768xi1>
    %16 = vector.extract_strided_slice %11 {offsets = [0, 720], sizes = [8, 48], strides = [1, 1]} : vector<8x768xf32> to vector<8x48xf32>
    %17 = vector.extract_strided_slice %11 {offsets = [0, 0], sizes = [8, 720], strides = [1, 1]} : vector<8x768xf32> to vector<8x720xf32>
    %18 = tpu.concatenate %16, %17 in 1 : vector<8x48xf32>, vector<8x720xf32> -> vector<8x768xf32>
    %19 = arith.select %15, %18, %11 : vector<8x768xi1>, vector<8x768xf32>
    %c1_i32 = arith.constant 1 : i32
    %20 = vector.broadcast %c1_i32 : i32 to vector<1x768xi32>
    %21 = arith.cmpi eq, %0, %20 : vector<1x768xi32>
    %22 = vector.shape_cast %21 : vector<1x768xi1> to vector<1x768xi1>
    %23 = vector.broadcast %22 : vector<1x768xi1> to vector<8x768xi1>
    %24 = vector.extract_strided_slice %19 {offsets = [0, 96], sizes = [8, 672], strides = [1, 1]} : vector<8x768xf32> to vector<8x672xf32>
    %25 = vector.extract_strided_slice %19 {offsets = [0, 0], sizes = [8, 96], strides = [1, 1]} : vector<8x768xf32> to vector<8x96xf32>
    %26 = tpu.concatenate %24, %25 in 1 : vector<8x672xf32>, vector<8x96xf32> -> vector<8x768xf32>
    %27 = arith.select %23, %26, %19 : vector<8x768xi1>, vector<8x768xf32>
    %c20_i32 = arith.constant 20 : i32
    %28 = vector.broadcast %c20_i32 : i32 to vector<1x768xi32>
    %29 = arith.cmpi eq, %0, %28 : vector<1x768xi32>
    %30 = vector.shape_cast %29 : vector<1x768xi1> to vector<1x768xi1>
    %31 = vector.broadcast %30 : vector<1x768xi1> to vector<8x768xi1>
    %32 = vector.extract_strided_slice %27 {offsets = [0, 672], sizes = [8, 96], strides = [1, 1]} : vector<8x768xf32> to vector<8x96xf32>
    %33 = vector.extract_strided_slice %27 {offsets = [0, 0], sizes = [8, 672], strides = [1, 1]} : vector<8x768xf32> to vector<8x672xf32>
    %34 = tpu.concatenate %32, %33 in 1 : vector<8x96xf32>, vector<8x672xf32> -> vector<8x768xf32>
    %35 = arith.select %31, %34, %27 : vector<8x768xi1>, vector<8x768xf32>
    %c0_i32 = arith.constant 0 : i32
    %36 = vector.broadcast %c0_i32 : i32 to vector<1x768xi32>
    %37 = arith.cmpi eq, %0, %36 : vector<1x768xi32>
    %38 = vector.shape_cast %37 : vector<1x768xi1> to vector<1x768xi1>
    %39 = vector.broadcast %38 : vector<1x768xi1> to vector<8x768xi1>
    %40 = vector.extract_strided_slice %35 {offsets = [0, 144], sizes = [8, 624], strides = [1, 1]} : vector<8x768xf32> to vector<8x624xf32>
    %41 = vector.extract_strided_slice %35 {offsets = [0, 0], sizes = [8, 144], strides = [1, 1]} : vector<8x768xf32> to vector<8x144xf32>
    %42 = tpu.concatenate %40, %41 in 1 : vector<8x624xf32>, vector<8x144xf32> -> vector<8x768xf32>
    %43 = arith.select %39, %42, %35 : vector<8x768xi1>, vector<8x768xf32>
    %c21_i32 = arith.constant 21 : i32
    %44 = vector.broadcast %c21_i32 : i32 to vector<1x768xi32>
    %45 = arith.cmpi eq, %0, %44 : vector<1x768xi32>
    %46 = vector.shape_cast %45 : vector<1x768xi1> to vector<1x768xi1>
    %47 = vector.broadcast %46 : vector<1x768xi1> to vector<8x768xi1>
    %48 = vector.extract_strided_slice %43 {offsets = [0, 624], sizes = [8, 144], strides = [1, 1]} : vector<8x768xf32> to vector<8x144xf32>
    %49 = vector.extract_strided_slice %43 {offsets = [0, 0], sizes = [8, 624], strides = [1, 1]} : vector<8x768xf32> to vector<8x624xf32>
    %50 = tpu.concatenate %48, %49 in 1 : vector<8x144xf32>, vector<8x624xf32> -> vector<8x768xf32>
    %51 = arith.select %47, %50, %43 : vector<8x768xi1>, vector<8x768xf32>
    %c2_i32_5 = arith.constant 2 : i32
    %52 = vector.broadcast %c2_i32_5 : i32 to vector<1x768xi32>
    %53 = arith.cmpi eq, %1, %52 : vector<1x768xi32>
    %54 = vector.shape_cast %53 : vector<1x768xi1> to vector<1x768xi1>
    %55 = vector.broadcast %54 : vector<1x768xi1> to vector<8x768xi1>
    %56 = vector.extract_strided_slice %51 {offsets = [0, 2], sizes = [8, 766], strides = [1, 1]} : vector<8x768xf32> to vector<8x766xf32>
    %57 = vector.extract_strided_slice %51 {offsets = [0, 0], sizes = [8, 2], strides = [1, 1]} : vector<8x768xf32> to vector<8x2xf32>
    %58 = tpu.concatenate %56, %57 in 1 : vector<8x766xf32>, vector<8x2xf32> -> vector<8x768xf32>
    %59 = arith.select %55, %58, %51 : vector<8x768xi1>, vector<8x768xf32>
    %c19_i32_6 = arith.constant 19 : i32
    %60 = vector.broadcast %c19_i32_6 : i32 to vector<1x768xi32>
    %61 = arith.cmpi eq, %1, %60 : vector<1x768xi32>
    %62 = vector.shape_cast %61 : vector<1x768xi1> to vector<1x768xi1>
    %63 = vector.broadcast %62 : vector<1x768xi1> to vector<8x768xi1>
    %64 = vector.extract_strided_slice %59 {offsets = [0, 766], sizes = [8, 2], strides = [1, 1]} : vector<8x768xf32> to vector<8x2xf32>
    %65 = vector.extract_strided_slice %59 {offsets = [0, 0], sizes = [8, 766], strides = [1, 1]} : vector<8x768xf32> to vector<8x766xf32>
    %66 = tpu.concatenate %64, %65 in 1 : vector<8x2xf32>, vector<8x766xf32> -> vector<8x768xf32>
    %67 = arith.select %63, %66, %59 : vector<8x768xi1>, vector<8x768xf32>
    %c1_i32_7 = arith.constant 1 : i32
    %68 = vector.broadcast %c1_i32_7 : i32 to vector<1x768xi32>
    %69 = arith.cmpi eq, %1, %68 : vector<1x768xi32>
    %70 = vector.shape_cast %69 : vector<1x768xi1> to vector<1x768xi1>
    %71 = vector.broadcast %70 : vector<1x768xi1> to vector<8x768xi1>
    %72 = vector.extract_strided_slice %67 {offsets = [0, 4], sizes = [8, 764], strides = [1, 1]} : vector<8x768xf32> to vector<8x764xf32>
    %73 = vector.extract_strided_slice %67 {offsets = [0, 0], sizes = [8, 4], strides = [1, 1]} : vector<8x768xf32> to vector<8x4xf32>
    %74 = tpu.concatenate %72, %73 in 1 : vector<8x764xf32>, vector<8x4xf32> -> vector<8x768xf32>
    %75 = arith.select %71, %74, %67 : vector<8x768xi1>, vector<8x768xf32>
    %c20_i32_8 = arith.constant 20 : i32
    %76 = vector.broadcast %c20_i32_8 : i32 to vector<1x768xi32>
    %77 = arith.cmpi eq, %1, %76 : vector<1x768xi32>
    %78 = vector.shape_cast %77 : vector<1x768xi1> to vector<1x768xi1>
    %79 = vector.broadcast %78 : vector<1x768xi1> to vector<8x768xi1>
    %80 = vector.extract_strided_slice %75 {offsets = [0, 764], sizes = [8, 4], strides = [1, 1]} : vector<8x768xf32> to vector<8x4xf32>
    %81 = vector.extract_strided_slice %75 {offsets = [0, 0], sizes = [8, 764], strides = [1, 1]} : vector<8x768xf32> to vector<8x764xf32>
    %82 = tpu.concatenate %80, %81 in 1 : vector<8x4xf32>, vector<8x764xf32> -> vector<8x768xf32>
    %83 = arith.select %79, %82, %75 : vector<8x768xi1>, vector<8x768xf32>
    %c0_i32_9 = arith.constant 0 : i32
    %84 = vector.broadcast %c0_i32_9 : i32 to vector<1x768xi32>
    %85 = arith.cmpi eq, %1, %84 : vector<1x768xi32>
    %86 = vector.shape_cast %85 : vector<1x768xi1> to vector<1x768xi1>
    %87 = vector.broadcast %86 : vector<1x768xi1> to vector<8x768xi1>
    %88 = vector.extract_strided_slice %83 {offsets = [0, 6], sizes = [8, 762], strides = [1, 1]} : vector<8x768xf32> to vector<8x762xf32>
    %89 = vector.extract_strided_slice %83 {offsets = [0, 0], sizes = [8, 6], strides = [1, 1]} : vector<8x768xf32> to vector<8x6xf32>
    %90 = tpu.concatenate %88, %89 in 1 : vector<8x762xf32>, vector<8x6xf32> -> vector<8x768xf32>
    %91 = arith.select %87, %90, %83 : vector<8x768xi1>, vector<8x768xf32>
    %c21_i32_10 = arith.constant 21 : i32
    %92 = vector.broadcast %c21_i32_10 : i32 to vector<1x768xi32>
    %93 = arith.cmpi eq, %1, %92 : vector<1x768xi32>
    %94 = vector.shape_cast %93 : vector<1x768xi1> to vector<1x768xi1>
    %95 = vector.broadcast %94 : vector<1x768xi1> to vector<8x768xi1>
    %96 = vector.extract_strided_slice %91 {offsets = [0, 762], sizes = [8, 6], strides = [1, 1]} : vector<8x768xf32> to vector<8x6xf32>
    %97 = vector.extract_strided_slice %91 {offsets = [0, 0], sizes = [8, 762], strides = [1, 1]} : vector<8x768xf32> to vector<8x762xf32>
    %98 = tpu.concatenate %96, %97 in 1 : vector<8x6xf32>, vector<8x762xf32> -> vector<8x768xf32>
    %99 = arith.select %95, %98, %91 : vector<8x768xi1>, vector<8x768xf32>
    %c0_11 = arith.constant 0 : index
    %c0_12 = arith.constant 0 : index
    %100 = vector.load %arg3[%c0_11, %c0_12] : memref<8x392xf32, #tpu.memory_space<vmem>>, vector<8x392xf32>
    %c0_13 = arith.constant 0 : index
    %c0_14 = arith.constant 0 : index
    %101 = vector.load %arg4[%c0_13, %c0_14] : memref<8x1xf32, #tpu.memory_space<vmem>>, vector<8x1xf32>
    %102 = vector.extract_strided_slice %99 {offsets = [0, 693], sizes = [8, 75], strides = [1, 1]} : vector<8x768xf32> to vector<8x75xf32>
    %103 = vector.extract_strided_slice %99 {offsets = [0, 0], sizes = [8, 693], strides = [1, 1]} : vector<8x768xf32> to vector<8x693xf32>
    %104 = tpu.concatenate %102, %103 in 1 : vector<8x75xf32>, vector<8x693xf32> -> vector<8x768xf32>
    %105 = vector.extract_strided_slice %99 {offsets = [0, 694], sizes = [8, 74], strides = [1, 1]} : vector<8x768xf32> to vector<8x74xf32>
    %106 = vector.extract_strided_slice %99 {offsets = [0, 0], sizes = [8, 694], strides = [1, 1]} : vector<8x768xf32> to vector<8x694xf32>
    %107 = tpu.concatenate %105, %106 in 1 : vector<8x74xf32>, vector<8x694xf32> -> vector<8x768xf32>
    %108 = vector.extract_strided_slice %99 {offsets = [0, 695], sizes = [8, 73], strides = [1, 1]} : vector<8x768xf32> to vector<8x73xf32>
    %109 = vector.extract_strided_slice %99 {offsets = [0, 0], sizes = [8, 695], strides = [1, 1]} : vector<8x768xf32> to vector<8x695xf32>
    %110 = tpu.concatenate %108, %109 in 1 : vector<8x73xf32>, vector<8x695xf32> -> vector<8x768xf32>
    %111 = vector.extract_strided_slice %99 {offsets = [0, 696], sizes = [8, 72], strides = [1, 1]} : vector<8x768xf32> to vector<8x72xf32>
    %112 = vector.extract_strided_slice %99 {offsets = [0, 0], sizes = [8, 696], strides = [1, 1]} : vector<8x768xf32> to vector<8x696xf32>
    %113 = tpu.concatenate %111, %112 in 1 : vector<8x72xf32>, vector<8x696xf32> -> vector<8x768xf32>
    %114 = vector.extract_strided_slice %99 {offsets = [0, 697], sizes = [8, 71], strides = [1, 1]} : vector<8x768xf32> to vector<8x71xf32>
    %115 = vector.extract_strided_slice %99 {offsets = [0, 0], sizes = [8, 697], strides = [1, 1]} : vector<8x768xf32> to vector<8x697xf32>
    %116 = tpu.concatenate %114, %115 in 1 : vector<8x71xf32>, vector<8x697xf32> -> vector<8x768xf32>
    %117 = vector.extract_strided_slice %99 {offsets = [0, 698], sizes = [8, 70], strides = [1, 1]} : vector<8x768xf32> to vector<8x70xf32>
    %118 = vector.extract_strided_slice %99 {offsets = [0, 0], sizes = [8, 698], strides = [1, 1]} : vector<8x768xf32> to vector<8x698xf32>
    %119 = tpu.concatenate %117, %118 in 1 : vector<8x70xf32>, vector<8x698xf32> -> vector<8x768xf32>
    %120 = vector.extract_strided_slice %99 {offsets = [0, 699], sizes = [8, 69], strides = [1, 1]} : vector<8x768xf32> to vector<8x69xf32>
    %121 = vector.extract_strided_slice %99 {offsets = [0, 0], sizes = [8, 699], strides = [1, 1]} : vector<8x768xf32> to vector<8x699xf32>
    %122 = tpu.concatenate %120, %121 in 1 : vector<8x69xf32>, vector<8x699xf32> -> vector<8x768xf32>
    %123 = vector.extract_strided_slice %99 {offsets = [0, 717], sizes = [8, 51], strides = [1, 1]} : vector<8x768xf32> to vector<8x51xf32>
    %124 = vector.extract_strided_slice %99 {offsets = [0, 0], sizes = [8, 717], strides = [1, 1]} : vector<8x768xf32> to vector<8x717xf32>
    %125 = tpu.concatenate %123, %124 in 1 : vector<8x51xf32>, vector<8x717xf32> -> vector<8x768xf32>
    %126 = vector.extract_strided_slice %99 {offsets = [0, 718], sizes = [8, 50], strides = [1, 1]} : vector<8x768xf32> to vector<8x50xf32>
    %127 = vector.extract_strided_slice %99 {offsets = [0, 0], sizes = [8, 718], strides = [1, 1]} : vector<8x768xf32> to vector<8x718xf32>
    %128 = tpu.concatenate %126, %127 in 1 : vector<8x50xf32>, vector<8x718xf32> -> vector<8x768xf32>
    %129 = vector.extract_strided_slice %99 {offsets = [0, 719], sizes = [8, 49], strides = [1, 1]} : vector<8x768xf32> to vector<8x49xf32>
    %130 = vector.extract_strided_slice %99 {offsets = [0, 0], sizes = [8, 719], strides = [1, 1]} : vector<8x768xf32> to vector<8x719xf32>
    %131 = tpu.concatenate %129, %130 in 1 : vector<8x49xf32>, vector<8x719xf32> -> vector<8x768xf32>
    %132 = vector.extract_strided_slice %99 {offsets = [0, 720], sizes = [8, 48], strides = [1, 1]} : vector<8x768xf32> to vector<8x48xf32>
    %133 = vector.extract_strided_slice %99 {offsets = [0, 0], sizes = [8, 720], strides = [1, 1]} : vector<8x768xf32> to vector<8x720xf32>
    %134 = tpu.concatenate %132, %133 in 1 : vector<8x48xf32>, vector<8x720xf32> -> vector<8x768xf32>
    %135 = vector.extract_strided_slice %99 {offsets = [0, 721], sizes = [8, 47], strides = [1, 1]} : vector<8x768xf32> to vector<8x47xf32>
    %136 = vector.extract_strided_slice %99 {offsets = [0, 0], sizes = [8, 721], strides = [1, 1]} : vector<8x768xf32> to vector<8x721xf32>
    %137 = tpu.concatenate %135, %136 in 1 : vector<8x47xf32>, vector<8x721xf32> -> vector<8x768xf32>
    %138 = vector.extract_strided_slice %99 {offsets = [0, 722], sizes = [8, 46], strides = [1, 1]} : vector<8x768xf32> to vector<8x46xf32>
    %139 = vector.extract_strided_slice %99 {offsets = [0, 0], sizes = [8, 722], strides = [1, 1]} : vector<8x768xf32> to vector<8x722xf32>
    %140 = tpu.concatenate %138, %139 in 1 : vector<8x46xf32>, vector<8x722xf32> -> vector<8x768xf32>
    %141 = vector.extract_strided_slice %99 {offsets = [0, 723], sizes = [8, 45], strides = [1, 1]} : vector<8x768xf32> to vector<8x45xf32>
    %142 = vector.extract_strided_slice %99 {offsets = [0, 0], sizes = [8, 723], strides = [1, 1]} : vector<8x768xf32> to vector<8x723xf32>
    %143 = tpu.concatenate %141, %142 in 1 : vector<8x45xf32>, vector<8x723xf32> -> vector<8x768xf32>
    %144 = vector.extract_strided_slice %99 {offsets = [0, 741], sizes = [8, 27], strides = [1, 1]} : vector<8x768xf32> to vector<8x27xf32>
    %145 = vector.extract_strided_slice %99 {offsets = [0, 0], sizes = [8, 741], strides = [1, 1]} : vector<8x768xf32> to vector<8x741xf32>
    %146 = tpu.concatenate %144, %145 in 1 : vector<8x27xf32>, vector<8x741xf32> -> vector<8x768xf32>
    %147 = vector.extract_strided_slice %99 {offsets = [0, 742], sizes = [8, 26], strides = [1, 1]} : vector<8x768xf32> to vector<8x26xf32>
    %148 = vector.extract_strided_slice %99 {offsets = [0, 0], sizes = [8, 742], strides = [1, 1]} : vector<8x768xf32> to vector<8x742xf32>
    %149 = tpu.concatenate %147, %148 in 1 : vector<8x26xf32>, vector<8x742xf32> -> vector<8x768xf32>
    %150 = vector.extract_strided_slice %99 {offsets = [0, 743], sizes = [8, 25], strides = [1, 1]} : vector<8x768xf32> to vector<8x25xf32>
    %151 = vector.extract_strided_slice %99 {offsets = [0, 0], sizes = [8, 743], strides = [1, 1]} : vector<8x768xf32> to vector<8x743xf32>
    %152 = tpu.concatenate %150, %151 in 1 : vector<8x25xf32>, vector<8x743xf32> -> vector<8x768xf32>
    %153 = vector.extract_strided_slice %99 {offsets = [0, 744], sizes = [8, 24], strides = [1, 1]} : vector<8x768xf32> to vector<8x24xf32>
    %154 = vector.extract_strided_slice %99 {offsets = [0, 0], sizes = [8, 744], strides = [1, 1]} : vector<8x768xf32> to vector<8x744xf32>
    %155 = tpu.concatenate %153, %154 in 1 : vector<8x24xf32>, vector<8x744xf32> -> vector<8x768xf32>
    %156 = vector.extract_strided_slice %99 {offsets = [0, 745], sizes = [8, 23], strides = [1, 1]} : vector<8x768xf32> to vector<8x23xf32>
    %157 = vector.extract_strided_slice %99 {offsets = [0, 0], sizes = [8, 745], strides = [1, 1]} : vector<8x768xf32> to vector<8x745xf32>
    %158 = tpu.concatenate %156, %157 in 1 : vector<8x23xf32>, vector<8x745xf32> -> vector<8x768xf32>
    %159 = vector.extract_strided_slice %99 {offsets = [0, 746], sizes = [8, 22], strides = [1, 1]} : vector<8x768xf32> to vector<8x22xf32>
    %160 = vector.extract_strided_slice %99 {offsets = [0, 0], sizes = [8, 746], strides = [1, 1]} : vector<8x768xf32> to vector<8x746xf32>
    %161 = tpu.concatenate %159, %160 in 1 : vector<8x22xf32>, vector<8x746xf32> -> vector<8x768xf32>
    %162 = vector.extract_strided_slice %99 {offsets = [0, 747], sizes = [8, 21], strides = [1, 1]} : vector<8x768xf32> to vector<8x21xf32>
    %163 = vector.extract_strided_slice %99 {offsets = [0, 0], sizes = [8, 747], strides = [1, 1]} : vector<8x768xf32> to vector<8x747xf32>
    %164 = tpu.concatenate %162, %163 in 1 : vector<8x21xf32>, vector<8x747xf32> -> vector<8x768xf32>
    %165 = vector.extract_strided_slice %99 {offsets = [0, 765], sizes = [8, 3], strides = [1, 1]} : vector<8x768xf32> to vector<8x3xf32>
    %166 = vector.extract_strided_slice %99 {offsets = [0, 0], sizes = [8, 765], strides = [1, 1]} : vector<8x768xf32> to vector<8x765xf32>
    %167 = tpu.concatenate %165, %166 in 1 : vector<8x3xf32>, vector<8x765xf32> -> vector<8x768xf32>
    %168 = vector.extract_strided_slice %99 {offsets = [0, 766], sizes = [8, 2], strides = [1, 1]} : vector<8x768xf32> to vector<8x2xf32>
    %169 = vector.extract_strided_slice %99 {offsets = [0, 0], sizes = [8, 766], strides = [1, 1]} : vector<8x768xf32> to vector<8x766xf32>
    %170 = tpu.concatenate %168, %169 in 1 : vector<8x2xf32>, vector<8x766xf32> -> vector<8x768xf32>
    %171 = vector.extract_strided_slice %99 {offsets = [0, 767], sizes = [8, 1], strides = [1, 1]} : vector<8x768xf32> to vector<8x1xf32>
    %172 = vector.extract_strided_slice %99 {offsets = [0, 0], sizes = [8, 767], strides = [1, 1]} : vector<8x768xf32> to vector<8x767xf32>
    %173 = tpu.concatenate %171, %172 in 1 : vector<8x1xf32>, vector<8x767xf32> -> vector<8x768xf32>
    %174 = vector.extract_strided_slice %99 {offsets = [0, 1], sizes = [8, 767], strides = [1, 1]} : vector<8x768xf32> to vector<8x767xf32>
    %175 = vector.extract_strided_slice %99 {offsets = [0, 0], sizes = [8, 1], strides = [1, 1]} : vector<8x768xf32> to vector<8x1xf32>
    %176 = tpu.concatenate %174, %175 in 1 : vector<8x767xf32>, vector<8x1xf32> -> vector<8x768xf32>
    %177 = vector.extract_strided_slice %99 {offsets = [0, 2], sizes = [8, 766], strides = [1, 1]} : vector<8x768xf32> to vector<8x766xf32>
    %178 = vector.extract_strided_slice %99 {offsets = [0, 0], sizes = [8, 2], strides = [1, 1]} : vector<8x768xf32> to vector<8x2xf32>
    %179 = tpu.concatenate %177, %178 in 1 : vector<8x766xf32>, vector<8x2xf32> -> vector<8x768xf32>
    %180 = vector.extract_strided_slice %99 {offsets = [0, 3], sizes = [8, 765], strides = [1, 1]} : vector<8x768xf32> to vector<8x765xf32>
    %181 = vector.extract_strided_slice %99 {offsets = [0, 0], sizes = [8, 3], strides = [1, 1]} : vector<8x768xf32> to vector<8x3xf32>
    %182 = tpu.concatenate %180, %181 in 1 : vector<8x765xf32>, vector<8x3xf32> -> vector<8x768xf32>
    %183 = vector.extract_strided_slice %99 {offsets = [0, 21], sizes = [8, 747], strides = [1, 1]} : vector<8x768xf32> to vector<8x747xf32>
    %184 = vector.extract_strided_slice %99 {offsets = [0, 0], sizes = [8, 21], strides = [1, 1]} : vector<8x768xf32> to vector<8x21xf32>
    %185 = tpu.concatenate %183, %184 in 1 : vector<8x747xf32>, vector<8x21xf32> -> vector<8x768xf32>
    %186 = vector.extract_strided_slice %99 {offsets = [0, 22], sizes = [8, 746], strides = [1, 1]} : vector<8x768xf32> to vector<8x746xf32>
    %187 = vector.extract_strided_slice %99 {offsets = [0, 0], sizes = [8, 22], strides = [1, 1]} : vector<8x768xf32> to vector<8x22xf32>
    %188 = tpu.concatenate %186, %187 in 1 : vector<8x746xf32>, vector<8x22xf32> -> vector<8x768xf32>
    %189 = vector.extract_strided_slice %99 {offsets = [0, 23], sizes = [8, 745], strides = [1, 1]} : vector<8x768xf32> to vector<8x745xf32>
    %190 = vector.extract_strided_slice %99 {offsets = [0, 0], sizes = [8, 23], strides = [1, 1]} : vector<8x768xf32> to vector<8x23xf32>
    %191 = tpu.concatenate %189, %190 in 1 : vector<8x745xf32>, vector<8x23xf32> -> vector<8x768xf32>
    %192 = vector.extract_strided_slice %99 {offsets = [0, 24], sizes = [8, 744], strides = [1, 1]} : vector<8x768xf32> to vector<8x744xf32>
    %193 = vector.extract_strided_slice %99 {offsets = [0, 0], sizes = [8, 24], strides = [1, 1]} : vector<8x768xf32> to vector<8x24xf32>
    %194 = tpu.concatenate %192, %193 in 1 : vector<8x744xf32>, vector<8x24xf32> -> vector<8x768xf32>
    %195 = vector.extract_strided_slice %99 {offsets = [0, 25], sizes = [8, 743], strides = [1, 1]} : vector<8x768xf32> to vector<8x743xf32>
    %196 = vector.extract_strided_slice %99 {offsets = [0, 0], sizes = [8, 25], strides = [1, 1]} : vector<8x768xf32> to vector<8x25xf32>
    %197 = tpu.concatenate %195, %196 in 1 : vector<8x743xf32>, vector<8x25xf32> -> vector<8x768xf32>
    %198 = vector.extract_strided_slice %99 {offsets = [0, 26], sizes = [8, 742], strides = [1, 1]} : vector<8x768xf32> to vector<8x742xf32>
    %199 = vector.extract_strided_slice %99 {offsets = [0, 0], sizes = [8, 26], strides = [1, 1]} : vector<8x768xf32> to vector<8x26xf32>
    %200 = tpu.concatenate %198, %199 in 1 : vector<8x742xf32>, vector<8x26xf32> -> vector<8x768xf32>
    %201 = vector.extract_strided_slice %99 {offsets = [0, 27], sizes = [8, 741], strides = [1, 1]} : vector<8x768xf32> to vector<8x741xf32>
    %202 = vector.extract_strided_slice %99 {offsets = [0, 0], sizes = [8, 27], strides = [1, 1]} : vector<8x768xf32> to vector<8x27xf32>
    %203 = tpu.concatenate %201, %202 in 1 : vector<8x741xf32>, vector<8x27xf32> -> vector<8x768xf32>
    %204 = vector.extract_strided_slice %99 {offsets = [0, 45], sizes = [8, 723], strides = [1, 1]} : vector<8x768xf32> to vector<8x723xf32>
    %205 = vector.extract_strided_slice %99 {offsets = [0, 0], sizes = [8, 45], strides = [1, 1]} : vector<8x768xf32> to vector<8x45xf32>
    %206 = tpu.concatenate %204, %205 in 1 : vector<8x723xf32>, vector<8x45xf32> -> vector<8x768xf32>
    %207 = vector.extract_strided_slice %99 {offsets = [0, 46], sizes = [8, 722], strides = [1, 1]} : vector<8x768xf32> to vector<8x722xf32>
    %208 = vector.extract_strided_slice %99 {offsets = [0, 0], sizes = [8, 46], strides = [1, 1]} : vector<8x768xf32> to vector<8x46xf32>
    %209 = tpu.concatenate %207, %208 in 1 : vector<8x722xf32>, vector<8x46xf32> -> vector<8x768xf32>
    %210 = vector.extract_strided_slice %99 {offsets = [0, 47], sizes = [8, 721], strides = [1, 1]} : vector<8x768xf32> to vector<8x721xf32>
    %211 = vector.extract_strided_slice %99 {offsets = [0, 0], sizes = [8, 47], strides = [1, 1]} : vector<8x768xf32> to vector<8x47xf32>
    %212 = tpu.concatenate %210, %211 in 1 : vector<8x721xf32>, vector<8x47xf32> -> vector<8x768xf32>
    %213 = vector.extract_strided_slice %99 {offsets = [0, 48], sizes = [8, 720], strides = [1, 1]} : vector<8x768xf32> to vector<8x720xf32>
    %214 = vector.extract_strided_slice %99 {offsets = [0, 0], sizes = [8, 48], strides = [1, 1]} : vector<8x768xf32> to vector<8x48xf32>
    %215 = tpu.concatenate %213, %214 in 1 : vector<8x720xf32>, vector<8x48xf32> -> vector<8x768xf32>
    %216 = vector.extract_strided_slice %99 {offsets = [0, 49], sizes = [8, 719], strides = [1, 1]} : vector<8x768xf32> to vector<8x719xf32>
    %217 = vector.extract_strided_slice %99 {offsets = [0, 0], sizes = [8, 49], strides = [1, 1]} : vector<8x768xf32> to vector<8x49xf32>
    %218 = tpu.concatenate %216, %217 in 1 : vector<8x719xf32>, vector<8x49xf32> -> vector<8x768xf32>
    %219 = vector.extract_strided_slice %99 {offsets = [0, 50], sizes = [8, 718], strides = [1, 1]} : vector<8x768xf32> to vector<8x718xf32>
    %220 = vector.extract_strided_slice %99 {offsets = [0, 0], sizes = [8, 50], strides = [1, 1]} : vector<8x768xf32> to vector<8x50xf32>
    %221 = tpu.concatenate %219, %220 in 1 : vector<8x718xf32>, vector<8x50xf32> -> vector<8x768xf32>
    %222 = vector.extract_strided_slice %99 {offsets = [0, 51], sizes = [8, 717], strides = [1, 1]} : vector<8x768xf32> to vector<8x717xf32>
    %223 = vector.extract_strided_slice %99 {offsets = [0, 0], sizes = [8, 51], strides = [1, 1]} : vector<8x768xf32> to vector<8x51xf32>
    %224 = tpu.concatenate %222, %223 in 1 : vector<8x717xf32>, vector<8x51xf32> -> vector<8x768xf32>
    %225 = vector.extract_strided_slice %99 {offsets = [0, 69], sizes = [8, 699], strides = [1, 1]} : vector<8x768xf32> to vector<8x699xf32>
    %226 = vector.extract_strided_slice %99 {offsets = [0, 0], sizes = [8, 69], strides = [1, 1]} : vector<8x768xf32> to vector<8x69xf32>
    %227 = tpu.concatenate %225, %226 in 1 : vector<8x699xf32>, vector<8x69xf32> -> vector<8x768xf32>
    %228 = vector.extract_strided_slice %99 {offsets = [0, 70], sizes = [8, 698], strides = [1, 1]} : vector<8x768xf32> to vector<8x698xf32>
    %229 = vector.extract_strided_slice %99 {offsets = [0, 0], sizes = [8, 70], strides = [1, 1]} : vector<8x768xf32> to vector<8x70xf32>
    %230 = tpu.concatenate %228, %229 in 1 : vector<8x698xf32>, vector<8x70xf32> -> vector<8x768xf32>
    %231 = vector.extract_strided_slice %99 {offsets = [0, 71], sizes = [8, 697], strides = [1, 1]} : vector<8x768xf32> to vector<8x697xf32>
    %232 = vector.extract_strided_slice %99 {offsets = [0, 0], sizes = [8, 71], strides = [1, 1]} : vector<8x768xf32> to vector<8x71xf32>
    %233 = tpu.concatenate %231, %232 in 1 : vector<8x697xf32>, vector<8x71xf32> -> vector<8x768xf32>
    %234 = vector.extract_strided_slice %99 {offsets = [0, 72], sizes = [8, 696], strides = [1, 1]} : vector<8x768xf32> to vector<8x696xf32>
    %235 = vector.extract_strided_slice %99 {offsets = [0, 0], sizes = [8, 72], strides = [1, 1]} : vector<8x768xf32> to vector<8x72xf32>
    %236 = tpu.concatenate %234, %235 in 1 : vector<8x696xf32>, vector<8x72xf32> -> vector<8x768xf32>
    %237 = vector.extract_strided_slice %99 {offsets = [0, 73], sizes = [8, 695], strides = [1, 1]} : vector<8x768xf32> to vector<8x695xf32>
    %238 = vector.extract_strided_slice %99 {offsets = [0, 0], sizes = [8, 73], strides = [1, 1]} : vector<8x768xf32> to vector<8x73xf32>
    %239 = tpu.concatenate %237, %238 in 1 : vector<8x695xf32>, vector<8x73xf32> -> vector<8x768xf32>
    %240 = vector.extract_strided_slice %99 {offsets = [0, 74], sizes = [8, 694], strides = [1, 1]} : vector<8x768xf32> to vector<8x694xf32>
    %241 = vector.extract_strided_slice %99 {offsets = [0, 0], sizes = [8, 74], strides = [1, 1]} : vector<8x768xf32> to vector<8x74xf32>
    %242 = tpu.concatenate %240, %241 in 1 : vector<8x694xf32>, vector<8x74xf32> -> vector<8x768xf32>
    %243 = vector.extract_strided_slice %99 {offsets = [0, 75], sizes = [8, 693], strides = [1, 1]} : vector<8x768xf32> to vector<8x693xf32>
    %244 = vector.extract_strided_slice %99 {offsets = [0, 0], sizes = [8, 75], strides = [1, 1]} : vector<8x768xf32> to vector<8x75xf32>
    %245 = tpu.concatenate %243, %244 in 1 : vector<8x693xf32>, vector<8x75xf32> -> vector<8x768xf32>
    %246 = tpu.concatenate %104, %107, %110, %113, %116, %119, %122, %125, %128, %131, %134, %137, %140, %143, %146, %149 in 0 : vector<8x768xf32>, vector<8x768xf32>, vector<8x768xf32>, vector<8x768xf32>, vector<8x768xf32>, vector<8x768xf32>, vector<8x768xf32>, vector<8x768xf32>, vector<8x768xf32>, vector<8x768xf32>, vector<8x768xf32>, vector<8x768xf32>, vector<8x768xf32>, vector<8x768xf32>, vector<8x768xf32>, vector<8x768xf32> -> vector<128x768xf32>
    %247 = tpu.concatenate %152, %155, %158, %161, %164, %167, %170, %173, %99, %176, %179, %182, %185, %188, %191, %194 in 0 : vector<8x768xf32>, vector<8x768xf32>, vector<8x768xf32>, vector<8x768xf32>, vector<8x768xf32>, vector<8x768xf32>, vector<8x768xf32>, vector<8x768xf32>, vector<8x768xf32>, vector<8x768xf32>, vector<8x768xf32>, vector<8x768xf32>, vector<8x768xf32>, vector<8x768xf32>, vector<8x768xf32>, vector<8x768xf32> -> vector<128x768xf32>
    %248 = tpu.concatenate %197, %200, %203, %206, %209, %212, %215, %218, %221, %224, %227, %230, %233, %236, %239, %242 in 0 : vector<8x768xf32>, vector<8x768xf32>, vector<8x768xf32>, vector<8x768xf32>, vector<8x768xf32>, vector<8x768xf32>, vector<8x768xf32>, vector<8x768xf32>, vector<8x768xf32>, vector<8x768xf32>, vector<8x768xf32>, vector<8x768xf32>, vector<8x768xf32>, vector<8x768xf32>, vector<8x768xf32>, vector<8x768xf32> -> vector<128x768xf32>
    %249 = tpu.concatenate %246, %247, %248, %245 in 0 : vector<128x768xf32>, vector<128x768xf32>, vector<128x768xf32>, vector<8x768xf32> -> vector<392x768xf32>
    %cst = arith.constant dense<0.000000e+00> : vector<8x768xf32>
    %250 = tpu.matmul %100, %249, %cst {dimension_numbers = #tpu.dot_dimension_numbers<[1], [0], [0], [1], [0, 0, 1, 1], [], []>} : vector<8x392xf32>, vector<392x768xf32>, vector<8x768xf32> -> vector<8x768xf32>
    %251 = vector.broadcast %101 : vector<8x1xf32> to vector<8x768xf32>
    %252 = arith.addf %250, %251 : vector<8x768xf32>
    %cst_15 = arith.constant 0.000000e+00 : f32
    %253 = vector.broadcast %cst_15 : f32 to vector<8x768xf32>
    %254 = arith.maximumf %252, %253 : vector<8x768xf32>
    %c2_i32_16 = arith.constant 2 : i32
    %255 = vector.broadcast %c2_i32_16 : i32 to vector<1x768xi32>
    %256 = arith.cmpi eq, %0, %255 : vector<1x768xi32>
    %257 = vector.shape_cast %256 : vector<1x768xi1> to vector<1x768xi1>
    %258 = vector.broadcast %257 : vector<1x768xi1> to vector<8x768xi1>
    %259 = vector.extract_strided_slice %254 {offsets = [0, 48], sizes = [8, 720], strides = [1, 1]} : vector<8x768xf32> to vector<8x720xf32>
    %260 = vector.extract_strided_slice %254 {offsets = [0, 0], sizes = [8, 48], strides = [1, 1]} : vector<8x768xf32> to vector<8x48xf32>
    %261 = tpu.concatenate %259, %260 in 1 : vector<8x720xf32>, vector<8x48xf32> -> vector<8x768xf32>
    %262 = arith.select %258, %261, %254 : vector<8x768xi1>, vector<8x768xf32>
    %c19_i32_17 = arith.constant 19 : i32
    %263 = vector.broadcast %c19_i32_17 : i32 to vector<1x768xi32>
    %264 = arith.cmpi eq, %0, %263 : vector<1x768xi32>
    %265 = vector.shape_cast %264 : vector<1x768xi1> to vector<1x768xi1>
    %266 = vector.broadcast %265 : vector<1x768xi1> to vector<8x768xi1>
    %267 = vector.extract_strided_slice %262 {offsets = [0, 720], sizes = [8, 48], strides = [1, 1]} : vector<8x768xf32> to vector<8x48xf32>
    %268 = vector.extract_strided_slice %262 {offsets = [0, 0], sizes = [8, 720], strides = [1, 1]} : vector<8x768xf32> to vector<8x720xf32>
    %269 = tpu.concatenate %267, %268 in 1 : vector<8x48xf32>, vector<8x720xf32> -> vector<8x768xf32>
    %270 = arith.select %266, %269, %262 : vector<8x768xi1>, vector<8x768xf32>
    %c2_i32_18 = arith.constant 2 : i32
    %271 = vector.broadcast %c2_i32_18 : i32 to vector<1x768xi32>
    %272 = arith.cmpi eq, %1, %271 : vector<1x768xi32>
    %273 = vector.shape_cast %272 : vector<1x768xi1> to vector<1x768xi1>
    %274 = vector.broadcast %273 : vector<1x768xi1> to vector<8x768xi1>
    %275 = vector.extract_strided_slice %270 {offsets = [0, 2], sizes = [8, 766], strides = [1, 1]} : vector<8x768xf32> to vector<8x766xf32>
    %276 = vector.extract_strided_slice %270 {offsets = [0, 0], sizes = [8, 2], strides = [1, 1]} : vector<8x768xf32> to vector<8x2xf32>
    %277 = tpu.concatenate %275, %276 in 1 : vector<8x766xf32>, vector<8x2xf32> -> vector<8x768xf32>
    %278 = arith.select %274, %277, %270 : vector<8x768xi1>, vector<8x768xf32>
    %c19_i32_19 = arith.constant 19 : i32
    %279 = vector.broadcast %c19_i32_19 : i32 to vector<1x768xi32>
    %280 = arith.cmpi eq, %1, %279 : vector<1x768xi32>
    %281 = vector.shape_cast %280 : vector<1x768xi1> to vector<1x768xi1>
    %282 = vector.broadcast %281 : vector<1x768xi1> to vector<8x768xi1>
    %283 = vector.extract_strided_slice %278 {offsets = [0, 766], sizes = [8, 2], strides = [1, 1]} : vector<8x768xf32> to vector<8x2xf32>
    %284 = vector.extract_strided_slice %278 {offsets = [0, 0], sizes = [8, 766], strides = [1, 1]} : vector<8x768xf32> to vector<8x766xf32>
    %285 = tpu.concatenate %283, %284 in 1 : vector<8x2xf32>, vector<8x766xf32> -> vector<8x768xf32>
    %286 = arith.select %282, %285, %278 : vector<8x768xi1>, vector<8x768xf32>
    %c0_i32_20 = arith.constant 0 : i32
    %c9_i32 = arith.constant 9 : i32
    %287 = arith.addi %c0_i32_20, %c9_i32 : i32
    %c1_i32_21 = arith.constant 1 : i32
    %288 = scf.for %arg10 = %c0_i32_20 to %287 step %c1_i32_21 iter_args(%arg11 = %286) -> (vector<8x768xf32>)  : i32 {
      %541 = arith.index_cast %arg10 : i32 to index
      %c0_43 = arith.constant 0 : index
      %c0_44 = arith.constant 0 : index
      %542 = vector.load %arg5[%541, %c0_43, %c0_44] : memref<9x16x72xf32, #tpu.memory_space<vmem>>, vector<1x16x72xf32>
      %543 = vector.shape_cast %542 : vector<1x16x72xf32> to vector<16x72xf32>
      %544 = arith.index_cast %arg10 : i32 to index
      %c0_45 = arith.constant 0 : index
      %c0_46 = arith.constant 0 : index
      %545 = vector.load %arg6[%544, %c0_45, %c0_46] : memref<9x16x1xf32, #tpu.memory_space<vmem>>, vector<1x16x1xf32>
      %546 = vector.shape_cast %545 : vector<1x16x1xf32> to vector<16x1xf32>
      %547 = vector.extract_strided_slice %543 {offsets = [0, 0], sizes = [8, 72], strides = [1, 1]} : vector<16x72xf32> to vector<8x72xf32>
      %548 = vector.extract_strided_slice %546 {offsets = [0, 0], sizes = [8, 1], strides = [1, 1]} : vector<16x1xf32> to vector<8x1xf32>
      %549 = vector.extract_strided_slice %arg11 {offsets = [0, 743], sizes = [8, 25], strides = [1, 1]} : vector<8x768xf32> to vector<8x25xf32>
      %550 = vector.extract_strided_slice %arg11 {offsets = [0, 0], sizes = [8, 743], strides = [1, 1]} : vector<8x768xf32> to vector<8x743xf32>
      %551 = tpu.concatenate %549, %550 in 1 : vector<8x25xf32>, vector<8x743xf32> -> vector<8x768xf32>
      %552 = vector.extract_strided_slice %arg11 {offsets = [0, 744], sizes = [8, 24], strides = [1, 1]} : vector<8x768xf32> to vector<8x24xf32>
      %553 = vector.extract_strided_slice %arg11 {offsets = [0, 0], sizes = [8, 744], strides = [1, 1]} : vector<8x768xf32> to vector<8x744xf32>
      %554 = tpu.concatenate %552, %553 in 1 : vector<8x24xf32>, vector<8x744xf32> -> vector<8x768xf32>
      %555 = vector.extract_strided_slice %arg11 {offsets = [0, 745], sizes = [8, 23], strides = [1, 1]} : vector<8x768xf32> to vector<8x23xf32>
      %556 = vector.extract_strided_slice %arg11 {offsets = [0, 0], sizes = [8, 745], strides = [1, 1]} : vector<8x768xf32> to vector<8x745xf32>
      %557 = tpu.concatenate %555, %556 in 1 : vector<8x23xf32>, vector<8x745xf32> -> vector<8x768xf32>
      %558 = vector.extract_strided_slice %arg11 {offsets = [0, 767], sizes = [8, 1], strides = [1, 1]} : vector<8x768xf32> to vector<8x1xf32>
      %559 = vector.extract_strided_slice %arg11 {offsets = [0, 0], sizes = [8, 767], strides = [1, 1]} : vector<8x768xf32> to vector<8x767xf32>
      %560 = tpu.concatenate %558, %559 in 1 : vector<8x1xf32>, vector<8x767xf32> -> vector<8x768xf32>
      %561 = vector.extract_strided_slice %arg11 {offsets = [0, 1], sizes = [8, 767], strides = [1, 1]} : vector<8x768xf32> to vector<8x767xf32>
      %562 = vector.extract_strided_slice %arg11 {offsets = [0, 0], sizes = [8, 1], strides = [1, 1]} : vector<8x768xf32> to vector<8x1xf32>
      %563 = tpu.concatenate %561, %562 in 1 : vector<8x767xf32>, vector<8x1xf32> -> vector<8x768xf32>
      %564 = vector.extract_strided_slice %arg11 {offsets = [0, 23], sizes = [8, 745], strides = [1, 1]} : vector<8x768xf32> to vector<8x745xf32>
      %565 = vector.extract_strided_slice %arg11 {offsets = [0, 0], sizes = [8, 23], strides = [1, 1]} : vector<8x768xf32> to vector<8x23xf32>
      %566 = tpu.concatenate %564, %565 in 1 : vector<8x745xf32>, vector<8x23xf32> -> vector<8x768xf32>
      %567 = vector.extract_strided_slice %arg11 {offsets = [0, 24], sizes = [8, 744], strides = [1, 1]} : vector<8x768xf32> to vector<8x744xf32>
      %568 = vector.extract_strided_slice %arg11 {offsets = [0, 0], sizes = [8, 24], strides = [1, 1]} : vector<8x768xf32> to vector<8x24xf32>
      %569 = tpu.concatenate %567, %568 in 1 : vector<8x744xf32>, vector<8x24xf32> -> vector<8x768xf32>
      %570 = vector.extract_strided_slice %arg11 {offsets = [0, 25], sizes = [8, 743], strides = [1, 1]} : vector<8x768xf32> to vector<8x743xf32>
      %571 = vector.extract_strided_slice %arg11 {offsets = [0, 0], sizes = [8, 25], strides = [1, 1]} : vector<8x768xf32> to vector<8x25xf32>
      %572 = tpu.concatenate %570, %571 in 1 : vector<8x743xf32>, vector<8x25xf32> -> vector<8x768xf32>
      %573 = tpu.concatenate %551, %554, %557, %560, %arg11, %563, %566, %569, %572 in 0 : vector<8x768xf32>, vector<8x768xf32>, vector<8x768xf32>, vector<8x768xf32>, vector<8x768xf32>, vector<8x768xf32>, vector<8x768xf32>, vector<8x768xf32>, vector<8x768xf32> -> vector<72x768xf32>
      %cst_47 = arith.constant dense<0.000000e+00> : vector<8x768xf32>
      %574 = tpu.matmul %547, %573, %cst_47 {dimension_numbers = #tpu.dot_dimension_numbers<[1], [0], [0], [1], [0, 0, 1, 1], [], []>} : vector<8x72xf32>, vector<72x768xf32>, vector<8x768xf32> -> vector<8x768xf32>
      %575 = vector.broadcast %548 : vector<8x1xf32> to vector<8x768xf32>
      %576 = arith.addf %574, %575 : vector<8x768xf32>
      %cst_48 = arith.constant 0.000000e+00 : f32
      %577 = vector.broadcast %cst_48 : f32 to vector<8x768xf32>
      %578 = arith.maximumf %576, %577 : vector<8x768xf32>
      %c2_i32_49 = arith.constant 2 : i32
      %579 = vector.broadcast %c2_i32_49 : i32 to vector<1x768xi32>
      %580 = arith.cmpi eq, %0, %579 : vector<1x768xi32>
      %581 = vector.shape_cast %580 : vector<1x768xi1> to vector<1x768xi1>
      %582 = vector.broadcast %581 : vector<1x768xi1> to vector<8x768xi1>
      %583 = vector.extract_strided_slice %578 {offsets = [0, 48], sizes = [8, 720], strides = [1, 1]} : vector<8x768xf32> to vector<8x720xf32>
      %584 = vector.extract_strided_slice %578 {offsets = [0, 0], sizes = [8, 48], strides = [1, 1]} : vector<8x768xf32> to vector<8x48xf32>
      %585 = tpu.concatenate %583, %584 in 1 : vector<8x720xf32>, vector<8x48xf32> -> vector<8x768xf32>
      %586 = arith.select %582, %585, %578 : vector<8x768xi1>, vector<8x768xf32>
      %c19_i32_50 = arith.constant 19 : i32
      %587 = vector.broadcast %c19_i32_50 : i32 to vector<1x768xi32>
      %588 = arith.cmpi eq, %0, %587 : vector<1x768xi32>
      %589 = vector.shape_cast %588 : vector<1x768xi1> to vector<1x768xi1>
      %590 = vector.broadcast %589 : vector<1x768xi1> to vector<8x768xi1>
      %591 = vector.extract_strided_slice %586 {offsets = [0, 720], sizes = [8, 48], strides = [1, 1]} : vector<8x768xf32> to vector<8x48xf32>
      %592 = vector.extract_strided_slice %586 {offsets = [0, 0], sizes = [8, 720], strides = [1, 1]} : vector<8x768xf32> to vector<8x720xf32>
      %593 = tpu.concatenate %591, %592 in 1 : vector<8x48xf32>, vector<8x720xf32> -> vector<8x768xf32>
      %594 = arith.select %590, %593, %586 : vector<8x768xi1>, vector<8x768xf32>
      %c2_i32_51 = arith.constant 2 : i32
      %595 = vector.broadcast %c2_i32_51 : i32 to vector<1x768xi32>
      %596 = arith.cmpi eq, %1, %595 : vector<1x768xi32>
      %597 = vector.shape_cast %596 : vector<1x768xi1> to vector<1x768xi1>
      %598 = vector.broadcast %597 : vector<1x768xi1> to vector<8x768xi1>
      %599 = vector.extract_strided_slice %594 {offsets = [0, 2], sizes = [8, 766], strides = [1, 1]} : vector<8x768xf32> to vector<8x766xf32>
      %600 = vector.extract_strided_slice %594 {offsets = [0, 0], sizes = [8, 2], strides = [1, 1]} : vector<8x768xf32> to vector<8x2xf32>
      %601 = tpu.concatenate %599, %600 in 1 : vector<8x766xf32>, vector<8x2xf32> -> vector<8x768xf32>
      %602 = arith.select %598, %601, %594 : vector<8x768xi1>, vector<8x768xf32>
      %c19_i32_52 = arith.constant 19 : i32
      %603 = vector.broadcast %c19_i32_52 : i32 to vector<1x768xi32>
      %604 = arith.cmpi eq, %1, %603 : vector<1x768xi32>
      %605 = vector.shape_cast %604 : vector<1x768xi1> to vector<1x768xi1>
      %606 = vector.broadcast %605 : vector<1x768xi1> to vector<8x768xi1>
      %607 = vector.extract_strided_slice %602 {offsets = [0, 766], sizes = [8, 2], strides = [1, 1]} : vector<8x768xf32> to vector<8x2xf32>
      %608 = vector.extract_strided_slice %602 {offsets = [0, 0], sizes = [8, 766], strides = [1, 1]} : vector<8x768xf32> to vector<8x766xf32>
      %609 = tpu.concatenate %607, %608 in 1 : vector<8x2xf32>, vector<8x766xf32> -> vector<8x768xf32>
      %610 = arith.select %606, %609, %602 : vector<8x768xi1>, vector<8x768xf32>
      %611 = vector.extract_strided_slice %543 {offsets = [8, 0], sizes = [8, 72], strides = [1, 1]} : vector<16x72xf32> to vector<8x72xf32>
      %612 = vector.extract_strided_slice %546 {offsets = [8, 0], sizes = [8, 1], strides = [1, 1]} : vector<16x1xf32> to vector<8x1xf32>
      %613 = vector.extract_strided_slice %610 {offsets = [0, 743], sizes = [8, 25], strides = [1, 1]} : vector<8x768xf32> to vector<8x25xf32>
      %614 = vector.extract_strided_slice %610 {offsets = [0, 0], sizes = [8, 743], strides = [1, 1]} : vector<8x768xf32> to vector<8x743xf32>
      %615 = tpu.concatenate %613, %614 in 1 : vector<8x25xf32>, vector<8x743xf32> -> vector<8x768xf32>
      %616 = vector.extract_strided_slice %610 {offsets = [0, 744], sizes = [8, 24], strides = [1, 1]} : vector<8x768xf32> to vector<8x24xf32>
      %617 = vector.extract_strided_slice %610 {offsets = [0, 0], sizes = [8, 744], strides = [1, 1]} : vector<8x768xf32> to vector<8x744xf32>
      %618 = tpu.concatenate %616, %617 in 1 : vector<8x24xf32>, vector<8x744xf32> -> vector<8x768xf32>
      %619 = vector.extract_strided_slice %610 {offsets = [0, 745], sizes = [8, 23], strides = [1, 1]} : vector<8x768xf32> to vector<8x23xf32>
      %620 = vector.extract_strided_slice %610 {offsets = [0, 0], sizes = [8, 745], strides = [1, 1]} : vector<8x768xf32> to vector<8x745xf32>
      %621 = tpu.concatenate %619, %620 in 1 : vector<8x23xf32>, vector<8x745xf32> -> vector<8x768xf32>
      %622 = vector.extract_strided_slice %610 {offsets = [0, 767], sizes = [8, 1], strides = [1, 1]} : vector<8x768xf32> to vector<8x1xf32>
      %623 = vector.extract_strided_slice %610 {offsets = [0, 0], sizes = [8, 767], strides = [1, 1]} : vector<8x768xf32> to vector<8x767xf32>
      %624 = tpu.concatenate %622, %623 in 1 : vector<8x1xf32>, vector<8x767xf32> -> vector<8x768xf32>
      %625 = vector.extract_strided_slice %610 {offsets = [0, 1], sizes = [8, 767], strides = [1, 1]} : vector<8x768xf32> to vector<8x767xf32>
      %626 = vector.extract_strided_slice %610 {offsets = [0, 0], sizes = [8, 1], strides = [1, 1]} : vector<8x768xf32> to vector<8x1xf32>
      %627 = tpu.concatenate %625, %626 in 1 : vector<8x767xf32>, vector<8x1xf32> -> vector<8x768xf32>
      %628 = vector.extract_strided_slice %610 {offsets = [0, 23], sizes = [8, 745], strides = [1, 1]} : vector<8x768xf32> to vector<8x745xf32>
      %629 = vector.extract_strided_slice %610 {offsets = [0, 0], sizes = [8, 23], strides = [1, 1]} : vector<8x768xf32> to vector<8x23xf32>
      %630 = tpu.concatenate %628, %629 in 1 : vector<8x745xf32>, vector<8x23xf32> -> vector<8x768xf32>
      %631 = vector.extract_strided_slice %610 {offsets = [0, 24], sizes = [8, 744], strides = [1, 1]} : vector<8x768xf32> to vector<8x744xf32>
      %632 = vector.extract_strided_slice %610 {offsets = [0, 0], sizes = [8, 24], strides = [1, 1]} : vector<8x768xf32> to vector<8x24xf32>
      %633 = tpu.concatenate %631, %632 in 1 : vector<8x744xf32>, vector<8x24xf32> -> vector<8x768xf32>
      %634 = vector.extract_strided_slice %610 {offsets = [0, 25], sizes = [8, 743], strides = [1, 1]} : vector<8x768xf32> to vector<8x743xf32>
      %635 = vector.extract_strided_slice %610 {offsets = [0, 0], sizes = [8, 25], strides = [1, 1]} : vector<8x768xf32> to vector<8x25xf32>
      %636 = tpu.concatenate %634, %635 in 1 : vector<8x743xf32>, vector<8x25xf32> -> vector<8x768xf32>
      %637 = tpu.concatenate %615, %618, %621, %624, %610, %627, %630, %633, %636 in 0 : vector<8x768xf32>, vector<8x768xf32>, vector<8x768xf32>, vector<8x768xf32>, vector<8x768xf32>, vector<8x768xf32>, vector<8x768xf32>, vector<8x768xf32>, vector<8x768xf32> -> vector<72x768xf32>
      %cst_53 = arith.constant dense<0.000000e+00> : vector<8x768xf32>
      %638 = tpu.matmul %611, %637, %cst_53 {dimension_numbers = #tpu.dot_dimension_numbers<[1], [0], [0], [1], [0, 0, 1, 1], [], []>} : vector<8x72xf32>, vector<72x768xf32>, vector<8x768xf32> -> vector<8x768xf32>
      %639 = vector.broadcast %612 : vector<8x1xf32> to vector<8x768xf32>
      %640 = arith.addf %638, %639 : vector<8x768xf32>
      %641 = arith.addf %arg11, %640 : vector<8x768xf32>
      %c2_i32_54 = arith.constant 2 : i32
      %642 = vector.broadcast %c2_i32_54 : i32 to vector<1x768xi32>
      %643 = arith.cmpi eq, %0, %642 : vector<1x768xi32>
      %644 = vector.shape_cast %643 : vector<1x768xi1> to vector<1x768xi1>
      %645 = vector.broadcast %644 : vector<1x768xi1> to vector<8x768xi1>
      %646 = vector.extract_strided_slice %641 {offsets = [0, 48], sizes = [8, 720], strides = [1, 1]} : vector<8x768xf32> to vector<8x720xf32>
      %647 = vector.extract_strided_slice %641 {offsets = [0, 0], sizes = [8, 48], strides = [1, 1]} : vector<8x768xf32> to vector<8x48xf32>
      %648 = tpu.concatenate %646, %647 in 1 : vector<8x720xf32>, vector<8x48xf32> -> vector<8x768xf32>
      %649 = arith.select %645, %648, %641 : vector<8x768xi1>, vector<8x768xf32>
      %c19_i32_55 = arith.constant 19 : i32
      %650 = vector.broadcast %c19_i32_55 : i32 to vector<1x768xi32>
      %651 = arith.cmpi eq, %0, %650 : vector<1x768xi32>
      %652 = vector.shape_cast %651 : vector<1x768xi1> to vector<1x768xi1>
      %653 = vector.broadcast %652 : vector<1x768xi1> to vector<8x768xi1>
      %654 = vector.extract_strided_slice %649 {offsets = [0, 720], sizes = [8, 48], strides = [1, 1]} : vector<8x768xf32> to vector<8x48xf32>
      %655 = vector.extract_strided_slice %649 {offsets = [0, 0], sizes = [8, 720], strides = [1, 1]} : vector<8x768xf32> to vector<8x720xf32>
      %656 = tpu.concatenate %654, %655 in 1 : vector<8x48xf32>, vector<8x720xf32> -> vector<8x768xf32>
      %657 = arith.select %653, %656, %649 : vector<8x768xi1>, vector<8x768xf32>
      %c2_i32_56 = arith.constant 2 : i32
      %658 = vector.broadcast %c2_i32_56 : i32 to vector<1x768xi32>
      %659 = arith.cmpi eq, %1, %658 : vector<1x768xi32>
      %660 = vector.shape_cast %659 : vector<1x768xi1> to vector<1x768xi1>
      %661 = vector.broadcast %660 : vector<1x768xi1> to vector<8x768xi1>
      %662 = vector.extract_strided_slice %657 {offsets = [0, 2], sizes = [8, 766], strides = [1, 1]} : vector<8x768xf32> to vector<8x766xf32>
      %663 = vector.extract_strided_slice %657 {offsets = [0, 0], sizes = [8, 2], strides = [1, 1]} : vector<8x768xf32> to vector<8x2xf32>
      %664 = tpu.concatenate %662, %663 in 1 : vector<8x766xf32>, vector<8x2xf32> -> vector<8x768xf32>
      %665 = arith.select %661, %664, %657 : vector<8x768xi1>, vector<8x768xf32>
      %c19_i32_57 = arith.constant 19 : i32
      %666 = vector.broadcast %c19_i32_57 : i32 to vector<1x768xi32>
      %667 = arith.cmpi eq, %1, %666 : vector<1x768xi32>
      %668 = vector.shape_cast %667 : vector<1x768xi1> to vector<1x768xi1>
      %669 = vector.broadcast %668 : vector<1x768xi1> to vector<8x768xi1>
      %670 = vector.extract_strided_slice %665 {offsets = [0, 766], sizes = [8, 2], strides = [1, 1]} : vector<8x768xf32> to vector<8x2xf32>
      %671 = vector.extract_strided_slice %665 {offsets = [0, 0], sizes = [8, 766], strides = [1, 1]} : vector<8x768xf32> to vector<8x766xf32>
      %672 = tpu.concatenate %670, %671 in 1 : vector<8x2xf32>, vector<8x766xf32> -> vector<8x768xf32>
      %673 = arith.select %669, %672, %665 : vector<8x768xi1>, vector<8x768xf32>
      scf.yield %673 : vector<8x768xf32>
    }
    %c9_i32_22 = arith.constant 9 : i32
    %c2_i32_23 = arith.constant 2 : i32
    %289 = vector.broadcast %c2_i32_23 : i32 to vector<1x768xi32>
    %290 = arith.cmpi eq, %0, %289 : vector<1x768xi32>
    %291 = vector.shape_cast %290 : vector<1x768xi1> to vector<1x768xi1>
    %292 = vector.broadcast %291 : vector<1x768xi1> to vector<8x768xi1>
    %293 = vector.extract_strided_slice %288 {offsets = [0, 48], sizes = [8, 720], strides = [1, 1]} : vector<8x768xf32> to vector<8x720xf32>
    %294 = vector.extract_strided_slice %288 {offsets = [0, 0], sizes = [8, 48], strides = [1, 1]} : vector<8x768xf32> to vector<8x48xf32>
    %295 = tpu.concatenate %293, %294 in 1 : vector<8x720xf32>, vector<8x48xf32> -> vector<8x768xf32>
    %296 = arith.select %292, %295, %288 : vector<8x768xi1>, vector<8x768xf32>
    %c19_i32_24 = arith.constant 19 : i32
    %297 = vector.broadcast %c19_i32_24 : i32 to vector<1x768xi32>
    %298 = arith.cmpi eq, %0, %297 : vector<1x768xi32>
    %299 = vector.shape_cast %298 : vector<1x768xi1> to vector<1x768xi1>
    %300 = vector.broadcast %299 : vector<1x768xi1> to vector<8x768xi1>
    %301 = vector.extract_strided_slice %296 {offsets = [0, 720], sizes = [8, 48], strides = [1, 1]} : vector<8x768xf32> to vector<8x48xf32>
    %302 = vector.extract_strided_slice %296 {offsets = [0, 0], sizes = [8, 720], strides = [1, 1]} : vector<8x768xf32> to vector<8x720xf32>
    %303 = tpu.concatenate %301, %302 in 1 : vector<8x48xf32>, vector<8x720xf32> -> vector<8x768xf32>
    %304 = arith.select %300, %303, %296 : vector<8x768xi1>, vector<8x768xf32>
    %c1_i32_25 = arith.constant 1 : i32
    %305 = vector.broadcast %c1_i32_25 : i32 to vector<1x768xi32>
    %306 = arith.cmpi eq, %0, %305 : vector<1x768xi32>
    %307 = vector.shape_cast %306 : vector<1x768xi1> to vector<1x768xi1>
    %308 = vector.broadcast %307 : vector<1x768xi1> to vector<8x768xi1>
    %309 = vector.extract_strided_slice %304 {offsets = [0, 96], sizes = [8, 672], strides = [1, 1]} : vector<8x768xf32> to vector<8x672xf32>
    %310 = vector.extract_strided_slice %304 {offsets = [0, 0], sizes = [8, 96], strides = [1, 1]} : vector<8x768xf32> to vector<8x96xf32>
    %311 = tpu.concatenate %309, %310 in 1 : vector<8x672xf32>, vector<8x96xf32> -> vector<8x768xf32>
    %312 = arith.select %308, %311, %304 : vector<8x768xi1>, vector<8x768xf32>
    %c20_i32_26 = arith.constant 20 : i32
    %313 = vector.broadcast %c20_i32_26 : i32 to vector<1x768xi32>
    %314 = arith.cmpi eq, %0, %313 : vector<1x768xi32>
    %315 = vector.shape_cast %314 : vector<1x768xi1> to vector<1x768xi1>
    %316 = vector.broadcast %315 : vector<1x768xi1> to vector<8x768xi1>
    %317 = vector.extract_strided_slice %312 {offsets = [0, 672], sizes = [8, 96], strides = [1, 1]} : vector<8x768xf32> to vector<8x96xf32>
    %318 = vector.extract_strided_slice %312 {offsets = [0, 0], sizes = [8, 672], strides = [1, 1]} : vector<8x768xf32> to vector<8x672xf32>
    %319 = tpu.concatenate %317, %318 in 1 : vector<8x96xf32>, vector<8x672xf32> -> vector<8x768xf32>
    %320 = arith.select %316, %319, %312 : vector<8x768xi1>, vector<8x768xf32>
    %c0_i32_27 = arith.constant 0 : i32
    %321 = vector.broadcast %c0_i32_27 : i32 to vector<1x768xi32>
    %322 = arith.cmpi eq, %0, %321 : vector<1x768xi32>
    %323 = vector.shape_cast %322 : vector<1x768xi1> to vector<1x768xi1>
    %324 = vector.broadcast %323 : vector<1x768xi1> to vector<8x768xi1>
    %325 = vector.extract_strided_slice %320 {offsets = [0, 144], sizes = [8, 624], strides = [1, 1]} : vector<8x768xf32> to vector<8x624xf32>
    %326 = vector.extract_strided_slice %320 {offsets = [0, 0], sizes = [8, 144], strides = [1, 1]} : vector<8x768xf32> to vector<8x144xf32>
    %327 = tpu.concatenate %325, %326 in 1 : vector<8x624xf32>, vector<8x144xf32> -> vector<8x768xf32>
    %328 = arith.select %324, %327, %320 : vector<8x768xi1>, vector<8x768xf32>
    %c21_i32_28 = arith.constant 21 : i32
    %329 = vector.broadcast %c21_i32_28 : i32 to vector<1x768xi32>
    %330 = arith.cmpi eq, %0, %329 : vector<1x768xi32>
    %331 = vector.shape_cast %330 : vector<1x768xi1> to vector<1x768xi1>
    %332 = vector.broadcast %331 : vector<1x768xi1> to vector<8x768xi1>
    %333 = vector.extract_strided_slice %328 {offsets = [0, 624], sizes = [8, 144], strides = [1, 1]} : vector<8x768xf32> to vector<8x144xf32>
    %334 = vector.extract_strided_slice %328 {offsets = [0, 0], sizes = [8, 624], strides = [1, 1]} : vector<8x768xf32> to vector<8x624xf32>
    %335 = tpu.concatenate %333, %334 in 1 : vector<8x144xf32>, vector<8x624xf32> -> vector<8x768xf32>
    %336 = arith.select %332, %335, %328 : vector<8x768xi1>, vector<8x768xf32>
    %c2_i32_29 = arith.constant 2 : i32
    %337 = vector.broadcast %c2_i32_29 : i32 to vector<1x768xi32>
    %338 = arith.cmpi eq, %1, %337 : vector<1x768xi32>
    %339 = vector.shape_cast %338 : vector<1x768xi1> to vector<1x768xi1>
    %340 = vector.broadcast %339 : vector<1x768xi1> to vector<8x768xi1>
    %341 = vector.extract_strided_slice %336 {offsets = [0, 2], sizes = [8, 766], strides = [1, 1]} : vector<8x768xf32> to vector<8x766xf32>
    %342 = vector.extract_strided_slice %336 {offsets = [0, 0], sizes = [8, 2], strides = [1, 1]} : vector<8x768xf32> to vector<8x2xf32>
    %343 = tpu.concatenate %341, %342 in 1 : vector<8x766xf32>, vector<8x2xf32> -> vector<8x768xf32>
    %344 = arith.select %340, %343, %336 : vector<8x768xi1>, vector<8x768xf32>
    %c19_i32_30 = arith.constant 19 : i32
    %345 = vector.broadcast %c19_i32_30 : i32 to vector<1x768xi32>
    %346 = arith.cmpi eq, %1, %345 : vector<1x768xi32>
    %347 = vector.shape_cast %346 : vector<1x768xi1> to vector<1x768xi1>
    %348 = vector.broadcast %347 : vector<1x768xi1> to vector<8x768xi1>
    %349 = vector.extract_strided_slice %344 {offsets = [0, 766], sizes = [8, 2], strides = [1, 1]} : vector<8x768xf32> to vector<8x2xf32>
    %350 = vector.extract_strided_slice %344 {offsets = [0, 0], sizes = [8, 766], strides = [1, 1]} : vector<8x768xf32> to vector<8x766xf32>
    %351 = tpu.concatenate %349, %350 in 1 : vector<8x2xf32>, vector<8x766xf32> -> vector<8x768xf32>
    %352 = arith.select %348, %351, %344 : vector<8x768xi1>, vector<8x768xf32>
    %c1_i32_31 = arith.constant 1 : i32
    %353 = vector.broadcast %c1_i32_31 : i32 to vector<1x768xi32>
    %354 = arith.cmpi eq, %1, %353 : vector<1x768xi32>
    %355 = vector.shape_cast %354 : vector<1x768xi1> to vector<1x768xi1>
    %356 = vector.broadcast %355 : vector<1x768xi1> to vector<8x768xi1>
    %357 = vector.extract_strided_slice %352 {offsets = [0, 4], sizes = [8, 764], strides = [1, 1]} : vector<8x768xf32> to vector<8x764xf32>
    %358 = vector.extract_strided_slice %352 {offsets = [0, 0], sizes = [8, 4], strides = [1, 1]} : vector<8x768xf32> to vector<8x4xf32>
    %359 = tpu.concatenate %357, %358 in 1 : vector<8x764xf32>, vector<8x4xf32> -> vector<8x768xf32>
    %360 = arith.select %356, %359, %352 : vector<8x768xi1>, vector<8x768xf32>
    %c20_i32_32 = arith.constant 20 : i32
    %361 = vector.broadcast %c20_i32_32 : i32 to vector<1x768xi32>
    %362 = arith.cmpi eq, %1, %361 : vector<1x768xi32>
    %363 = vector.shape_cast %362 : vector<1x768xi1> to vector<1x768xi1>
    %364 = vector.broadcast %363 : vector<1x768xi1> to vector<8x768xi1>
    %365 = vector.extract_strided_slice %360 {offsets = [0, 764], sizes = [8, 4], strides = [1, 1]} : vector<8x768xf32> to vector<8x4xf32>
    %366 = vector.extract_strided_slice %360 {offsets = [0, 0], sizes = [8, 764], strides = [1, 1]} : vector<8x768xf32> to vector<8x764xf32>
    %367 = tpu.concatenate %365, %366 in 1 : vector<8x4xf32>, vector<8x764xf32> -> vector<8x768xf32>
    %368 = arith.select %364, %367, %360 : vector<8x768xi1>, vector<8x768xf32>
    %c0_i32_33 = arith.constant 0 : i32
    %369 = vector.broadcast %c0_i32_33 : i32 to vector<1x768xi32>
    %370 = arith.cmpi eq, %1, %369 : vector<1x768xi32>
    %371 = vector.shape_cast %370 : vector<1x768xi1> to vector<1x768xi1>
    %372 = vector.broadcast %371 : vector<1x768xi1> to vector<8x768xi1>
    %373 = vector.extract_strided_slice %368 {offsets = [0, 6], sizes = [8, 762], strides = [1, 1]} : vector<8x768xf32> to vector<8x762xf32>
    %374 = vector.extract_strided_slice %368 {offsets = [0, 0], sizes = [8, 6], strides = [1, 1]} : vector<8x768xf32> to vector<8x6xf32>
    %375 = tpu.concatenate %373, %374 in 1 : vector<8x762xf32>, vector<8x6xf32> -> vector<8x768xf32>
    %376 = arith.select %372, %375, %368 : vector<8x768xi1>, vector<8x768xf32>
    %c21_i32_34 = arith.constant 21 : i32
    %377 = vector.broadcast %c21_i32_34 : i32 to vector<1x768xi32>
    %378 = arith.cmpi eq, %1, %377 : vector<1x768xi32>
    %379 = vector.shape_cast %378 : vector<1x768xi1> to vector<1x768xi1>
    %380 = vector.broadcast %379 : vector<1x768xi1> to vector<8x768xi1>
    %381 = vector.extract_strided_slice %376 {offsets = [0, 762], sizes = [8, 6], strides = [1, 1]} : vector<8x768xf32> to vector<8x6xf32>
    %382 = vector.extract_strided_slice %376 {offsets = [0, 0], sizes = [8, 762], strides = [1, 1]} : vector<8x768xf32> to vector<8x762xf32>
    %383 = tpu.concatenate %381, %382 in 1 : vector<8x6xf32>, vector<8x762xf32> -> vector<8x768xf32>
    %384 = arith.select %380, %383, %376 : vector<8x768xi1>, vector<8x768xf32>
    %c0_35 = arith.constant 0 : index
    %c0_36 = arith.constant 0 : index
    %385 = vector.load %arg7[%c0_35, %c0_36] : memref<8x392xf32, #tpu.memory_space<vmem>>, vector<8x392xf32>
    %c0_37 = arith.constant 0 : index
    %c0_38 = arith.constant 0 : index
    %386 = vector.load %arg8[%c0_37, %c0_38] : memref<8x1xf32, #tpu.memory_space<vmem>>, vector<8x1xf32>
    %387 = vector.extract_strided_slice %384 {offsets = [0, 693], sizes = [8, 75], strides = [1, 1]} : vector<8x768xf32> to vector<8x75xf32>
    %388 = vector.extract_strided_slice %384 {offsets = [0, 0], sizes = [8, 693], strides = [1, 1]} : vector<8x768xf32> to vector<8x693xf32>
    %389 = tpu.concatenate %387, %388 in 1 : vector<8x75xf32>, vector<8x693xf32> -> vector<8x768xf32>
    %390 = vector.extract_strided_slice %384 {offsets = [0, 694], sizes = [8, 74], strides = [1, 1]} : vector<8x768xf32> to vector<8x74xf32>
    %391 = vector.extract_strided_slice %384 {offsets = [0, 0], sizes = [8, 694], strides = [1, 1]} : vector<8x768xf32> to vector<8x694xf32>
    %392 = tpu.concatenate %390, %391 in 1 : vector<8x74xf32>, vector<8x694xf32> -> vector<8x768xf32>
    %393 = vector.extract_strided_slice %384 {offsets = [0, 695], sizes = [8, 73], strides = [1, 1]} : vector<8x768xf32> to vector<8x73xf32>
    %394 = vector.extract_strided_slice %384 {offsets = [0, 0], sizes = [8, 695], strides = [1, 1]} : vector<8x768xf32> to vector<8x695xf32>
    %395 = tpu.concatenate %393, %394 in 1 : vector<8x73xf32>, vector<8x695xf32> -> vector<8x768xf32>
    %396 = vector.extract_strided_slice %384 {offsets = [0, 696], sizes = [8, 72], strides = [1, 1]} : vector<8x768xf32> to vector<8x72xf32>
    %397 = vector.extract_strided_slice %384 {offsets = [0, 0], sizes = [8, 696], strides = [1, 1]} : vector<8x768xf32> to vector<8x696xf32>
    %398 = tpu.concatenate %396, %397 in 1 : vector<8x72xf32>, vector<8x696xf32> -> vector<8x768xf32>
    %399 = vector.extract_strided_slice %384 {offsets = [0, 697], sizes = [8, 71], strides = [1, 1]} : vector<8x768xf32> to vector<8x71xf32>
    %400 = vector.extract_strided_slice %384 {offsets = [0, 0], sizes = [8, 697], strides = [1, 1]} : vector<8x768xf32> to vector<8x697xf32>
    %401 = tpu.concatenate %399, %400 in 1 : vector<8x71xf32>, vector<8x697xf32> -> vector<8x768xf32>
    %402 = vector.extract_strided_slice %384 {offsets = [0, 698], sizes = [8, 70], strides = [1, 1]} : vector<8x768xf32> to vector<8x70xf32>
    %403 = vector.extract_strided_slice %384 {offsets = [0, 0], sizes = [8, 698], strides = [1, 1]} : vector<8x768xf32> to vector<8x698xf32>
    %404 = tpu.concatenate %402, %403 in 1 : vector<8x70xf32>, vector<8x698xf32> -> vector<8x768xf32>
    %405 = vector.extract_strided_slice %384 {offsets = [0, 699], sizes = [8, 69], strides = [1, 1]} : vector<8x768xf32> to vector<8x69xf32>
    %406 = vector.extract_strided_slice %384 {offsets = [0, 0], sizes = [8, 699], strides = [1, 1]} : vector<8x768xf32> to vector<8x699xf32>
    %407 = tpu.concatenate %405, %406 in 1 : vector<8x69xf32>, vector<8x699xf32> -> vector<8x768xf32>
    %408 = vector.extract_strided_slice %384 {offsets = [0, 717], sizes = [8, 51], strides = [1, 1]} : vector<8x768xf32> to vector<8x51xf32>
    %409 = vector.extract_strided_slice %384 {offsets = [0, 0], sizes = [8, 717], strides = [1, 1]} : vector<8x768xf32> to vector<8x717xf32>
    %410 = tpu.concatenate %408, %409 in 1 : vector<8x51xf32>, vector<8x717xf32> -> vector<8x768xf32>
    %411 = vector.extract_strided_slice %384 {offsets = [0, 718], sizes = [8, 50], strides = [1, 1]} : vector<8x768xf32> to vector<8x50xf32>
    %412 = vector.extract_strided_slice %384 {offsets = [0, 0], sizes = [8, 718], strides = [1, 1]} : vector<8x768xf32> to vector<8x718xf32>
    %413 = tpu.concatenate %411, %412 in 1 : vector<8x50xf32>, vector<8x718xf32> -> vector<8x768xf32>
    %414 = vector.extract_strided_slice %384 {offsets = [0, 719], sizes = [8, 49], strides = [1, 1]} : vector<8x768xf32> to vector<8x49xf32>
    %415 = vector.extract_strided_slice %384 {offsets = [0, 0], sizes = [8, 719], strides = [1, 1]} : vector<8x768xf32> to vector<8x719xf32>
    %416 = tpu.concatenate %414, %415 in 1 : vector<8x49xf32>, vector<8x719xf32> -> vector<8x768xf32>
    %417 = vector.extract_strided_slice %384 {offsets = [0, 720], sizes = [8, 48], strides = [1, 1]} : vector<8x768xf32> to vector<8x48xf32>
    %418 = vector.extract_strided_slice %384 {offsets = [0, 0], sizes = [8, 720], strides = [1, 1]} : vector<8x768xf32> to vector<8x720xf32>
    %419 = tpu.concatenate %417, %418 in 1 : vector<8x48xf32>, vector<8x720xf32> -> vector<8x768xf32>
    %420 = vector.extract_strided_slice %384 {offsets = [0, 721], sizes = [8, 47], strides = [1, 1]} : vector<8x768xf32> to vector<8x47xf32>
    %421 = vector.extract_strided_slice %384 {offsets = [0, 0], sizes = [8, 721], strides = [1, 1]} : vector<8x768xf32> to vector<8x721xf32>
    %422 = tpu.concatenate %420, %421 in 1 : vector<8x47xf32>, vector<8x721xf32> -> vector<8x768xf32>
    %423 = vector.extract_strided_slice %384 {offsets = [0, 722], sizes = [8, 46], strides = [1, 1]} : vector<8x768xf32> to vector<8x46xf32>
    %424 = vector.extract_strided_slice %384 {offsets = [0, 0], sizes = [8, 722], strides = [1, 1]} : vector<8x768xf32> to vector<8x722xf32>
    %425 = tpu.concatenate %423, %424 in 1 : vector<8x46xf32>, vector<8x722xf32> -> vector<8x768xf32>
    %426 = vector.extract_strided_slice %384 {offsets = [0, 723], sizes = [8, 45], strides = [1, 1]} : vector<8x768xf32> to vector<8x45xf32>
    %427 = vector.extract_strided_slice %384 {offsets = [0, 0], sizes = [8, 723], strides = [1, 1]} : vector<8x768xf32> to vector<8x723xf32>
    %428 = tpu.concatenate %426, %427 in 1 : vector<8x45xf32>, vector<8x723xf32> -> vector<8x768xf32>
    %429 = vector.extract_strided_slice %384 {offsets = [0, 741], sizes = [8, 27], strides = [1, 1]} : vector<8x768xf32> to vector<8x27xf32>
    %430 = vector.extract_strided_slice %384 {offsets = [0, 0], sizes = [8, 741], strides = [1, 1]} : vector<8x768xf32> to vector<8x741xf32>
    %431 = tpu.concatenate %429, %430 in 1 : vector<8x27xf32>, vector<8x741xf32> -> vector<8x768xf32>
    %432 = vector.extract_strided_slice %384 {offsets = [0, 742], sizes = [8, 26], strides = [1, 1]} : vector<8x768xf32> to vector<8x26xf32>
    %433 = vector.extract_strided_slice %384 {offsets = [0, 0], sizes = [8, 742], strides = [1, 1]} : vector<8x768xf32> to vector<8x742xf32>
    %434 = tpu.concatenate %432, %433 in 1 : vector<8x26xf32>, vector<8x742xf32> -> vector<8x768xf32>
    %435 = vector.extract_strided_slice %384 {offsets = [0, 743], sizes = [8, 25], strides = [1, 1]} : vector<8x768xf32> to vector<8x25xf32>
    %436 = vector.extract_strided_slice %384 {offsets = [0, 0], sizes = [8, 743], strides = [1, 1]} : vector<8x768xf32> to vector<8x743xf32>
    %437 = tpu.concatenate %435, %436 in 1 : vector<8x25xf32>, vector<8x743xf32> -> vector<8x768xf32>
    %438 = vector.extract_strided_slice %384 {offsets = [0, 744], sizes = [8, 24], strides = [1, 1]} : vector<8x768xf32> to vector<8x24xf32>
    %439 = vector.extract_strided_slice %384 {offsets = [0, 0], sizes = [8, 744], strides = [1, 1]} : vector<8x768xf32> to vector<8x744xf32>
    %440 = tpu.concatenate %438, %439 in 1 : vector<8x24xf32>, vector<8x744xf32> -> vector<8x768xf32>
    %441 = vector.extract_strided_slice %384 {offsets = [0, 745], sizes = [8, 23], strides = [1, 1]} : vector<8x768xf32> to vector<8x23xf32>
    %442 = vector.extract_strided_slice %384 {offsets = [0, 0], sizes = [8, 745], strides = [1, 1]} : vector<8x768xf32> to vector<8x745xf32>
    %443 = tpu.concatenate %441, %442 in 1 : vector<8x23xf32>, vector<8x745xf32> -> vector<8x768xf32>
    %444 = vector.extract_strided_slice %384 {offsets = [0, 746], sizes = [8, 22], strides = [1, 1]} : vector<8x768xf32> to vector<8x22xf32>
    %445 = vector.extract_strided_slice %384 {offsets = [0, 0], sizes = [8, 746], strides = [1, 1]} : vector<8x768xf32> to vector<8x746xf32>
    %446 = tpu.concatenate %444, %445 in 1 : vector<8x22xf32>, vector<8x746xf32> -> vector<8x768xf32>
    %447 = vector.extract_strided_slice %384 {offsets = [0, 747], sizes = [8, 21], strides = [1, 1]} : vector<8x768xf32> to vector<8x21xf32>
    %448 = vector.extract_strided_slice %384 {offsets = [0, 0], sizes = [8, 747], strides = [1, 1]} : vector<8x768xf32> to vector<8x747xf32>
    %449 = tpu.concatenate %447, %448 in 1 : vector<8x21xf32>, vector<8x747xf32> -> vector<8x768xf32>
    %450 = vector.extract_strided_slice %384 {offsets = [0, 765], sizes = [8, 3], strides = [1, 1]} : vector<8x768xf32> to vector<8x3xf32>
    %451 = vector.extract_strided_slice %384 {offsets = [0, 0], sizes = [8, 765], strides = [1, 1]} : vector<8x768xf32> to vector<8x765xf32>
    %452 = tpu.concatenate %450, %451 in 1 : vector<8x3xf32>, vector<8x765xf32> -> vector<8x768xf32>
    %453 = vector.extract_strided_slice %384 {offsets = [0, 766], sizes = [8, 2], strides = [1, 1]} : vector<8x768xf32> to vector<8x2xf32>
    %454 = vector.extract_strided_slice %384 {offsets = [0, 0], sizes = [8, 766], strides = [1, 1]} : vector<8x768xf32> to vector<8x766xf32>
    %455 = tpu.concatenate %453, %454 in 1 : vector<8x2xf32>, vector<8x766xf32> -> vector<8x768xf32>
    %456 = vector.extract_strided_slice %384 {offsets = [0, 767], sizes = [8, 1], strides = [1, 1]} : vector<8x768xf32> to vector<8x1xf32>
    %457 = vector.extract_strided_slice %384 {offsets = [0, 0], sizes = [8, 767], strides = [1, 1]} : vector<8x768xf32> to vector<8x767xf32>
    %458 = tpu.concatenate %456, %457 in 1 : vector<8x1xf32>, vector<8x767xf32> -> vector<8x768xf32>
    %459 = vector.extract_strided_slice %384 {offsets = [0, 1], sizes = [8, 767], strides = [1, 1]} : vector<8x768xf32> to vector<8x767xf32>
    %460 = vector.extract_strided_slice %384 {offsets = [0, 0], sizes = [8, 1], strides = [1, 1]} : vector<8x768xf32> to vector<8x1xf32>
    %461 = tpu.concatenate %459, %460 in 1 : vector<8x767xf32>, vector<8x1xf32> -> vector<8x768xf32>
    %462 = vector.extract_strided_slice %384 {offsets = [0, 2], sizes = [8, 766], strides = [1, 1]} : vector<8x768xf32> to vector<8x766xf32>
    %463 = vector.extract_strided_slice %384 {offsets = [0, 0], sizes = [8, 2], strides = [1, 1]} : vector<8x768xf32> to vector<8x2xf32>
    %464 = tpu.concatenate %462, %463 in 1 : vector<8x766xf32>, vector<8x2xf32> -> vector<8x768xf32>
    %465 = vector.extract_strided_slice %384 {offsets = [0, 3], sizes = [8, 765], strides = [1, 1]} : vector<8x768xf32> to vector<8x765xf32>
    %466 = vector.extract_strided_slice %384 {offsets = [0, 0], sizes = [8, 3], strides = [1, 1]} : vector<8x768xf32> to vector<8x3xf32>
    %467 = tpu.concatenate %465, %466 in 1 : vector<8x765xf32>, vector<8x3xf32> -> vector<8x768xf32>
    %468 = vector.extract_strided_slice %384 {offsets = [0, 21], sizes = [8, 747], strides = [1, 1]} : vector<8x768xf32> to vector<8x747xf32>
    %469 = vector.extract_strided_slice %384 {offsets = [0, 0], sizes = [8, 21], strides = [1, 1]} : vector<8x768xf32> to vector<8x21xf32>
    %470 = tpu.concatenate %468, %469 in 1 : vector<8x747xf32>, vector<8x21xf32> -> vector<8x768xf32>
    %471 = vector.extract_strided_slice %384 {offsets = [0, 22], sizes = [8, 746], strides = [1, 1]} : vector<8x768xf32> to vector<8x746xf32>
    %472 = vector.extract_strided_slice %384 {offsets = [0, 0], sizes = [8, 22], strides = [1, 1]} : vector<8x768xf32> to vector<8x22xf32>
    %473 = tpu.concatenate %471, %472 in 1 : vector<8x746xf32>, vector<8x22xf32> -> vector<8x768xf32>
    %474 = vector.extract_strided_slice %384 {offsets = [0, 23], sizes = [8, 745], strides = [1, 1]} : vector<8x768xf32> to vector<8x745xf32>
    %475 = vector.extract_strided_slice %384 {offsets = [0, 0], sizes = [8, 23], strides = [1, 1]} : vector<8x768xf32> to vector<8x23xf32>
    %476 = tpu.concatenate %474, %475 in 1 : vector<8x745xf32>, vector<8x23xf32> -> vector<8x768xf32>
    %477 = vector.extract_strided_slice %384 {offsets = [0, 24], sizes = [8, 744], strides = [1, 1]} : vector<8x768xf32> to vector<8x744xf32>
    %478 = vector.extract_strided_slice %384 {offsets = [0, 0], sizes = [8, 24], strides = [1, 1]} : vector<8x768xf32> to vector<8x24xf32>
    %479 = tpu.concatenate %477, %478 in 1 : vector<8x744xf32>, vector<8x24xf32> -> vector<8x768xf32>
    %480 = vector.extract_strided_slice %384 {offsets = [0, 25], sizes = [8, 743], strides = [1, 1]} : vector<8x768xf32> to vector<8x743xf32>
    %481 = vector.extract_strided_slice %384 {offsets = [0, 0], sizes = [8, 25], strides = [1, 1]} : vector<8x768xf32> to vector<8x25xf32>
    %482 = tpu.concatenate %480, %481 in 1 : vector<8x743xf32>, vector<8x25xf32> -> vector<8x768xf32>
    %483 = vector.extract_strided_slice %384 {offsets = [0, 26], sizes = [8, 742], strides = [1, 1]} : vector<8x768xf32> to vector<8x742xf32>
    %484 = vector.extract_strided_slice %384 {offsets = [0, 0], sizes = [8, 26], strides = [1, 1]} : vector<8x768xf32> to vector<8x26xf32>
    %485 = tpu.concatenate %483, %484 in 1 : vector<8x742xf32>, vector<8x26xf32> -> vector<8x768xf32>
    %486 = vector.extract_strided_slice %384 {offsets = [0, 27], sizes = [8, 741], strides = [1, 1]} : vector<8x768xf32> to vector<8x741xf32>
    %487 = vector.extract_strided_slice %384 {offsets = [0, 0], sizes = [8, 27], strides = [1, 1]} : vector<8x768xf32> to vector<8x27xf32>
    %488 = tpu.concatenate %486, %487 in 1 : vector<8x741xf32>, vector<8x27xf32> -> vector<8x768xf32>
    %489 = vector.extract_strided_slice %384 {offsets = [0, 45], sizes = [8, 723], strides = [1, 1]} : vector<8x768xf32> to vector<8x723xf32>
    %490 = vector.extract_strided_slice %384 {offsets = [0, 0], sizes = [8, 45], strides = [1, 1]} : vector<8x768xf32> to vector<8x45xf32>
    %491 = tpu.concatenate %489, %490 in 1 : vector<8x723xf32>, vector<8x45xf32> -> vector<8x768xf32>
    %492 = vector.extract_strided_slice %384 {offsets = [0, 46], sizes = [8, 722], strides = [1, 1]} : vector<8x768xf32> to vector<8x722xf32>
    %493 = vector.extract_strided_slice %384 {offsets = [0, 0], sizes = [8, 46], strides = [1, 1]} : vector<8x768xf32> to vector<8x46xf32>
    %494 = tpu.concatenate %492, %493 in 1 : vector<8x722xf32>, vector<8x46xf32> -> vector<8x768xf32>
    %495 = vector.extract_strided_slice %384 {offsets = [0, 47], sizes = [8, 721], strides = [1, 1]} : vector<8x768xf32> to vector<8x721xf32>
    %496 = vector.extract_strided_slice %384 {offsets = [0, 0], sizes = [8, 47], strides = [1, 1]} : vector<8x768xf32> to vector<8x47xf32>
    %497 = tpu.concatenate %495, %496 in 1 : vector<8x721xf32>, vector<8x47xf32> -> vector<8x768xf32>
    %498 = vector.extract_strided_slice %384 {offsets = [0, 48], sizes = [8, 720], strides = [1, 1]} : vector<8x768xf32> to vector<8x720xf32>
    %499 = vector.extract_strided_slice %384 {offsets = [0, 0], sizes = [8, 48], strides = [1, 1]} : vector<8x768xf32> to vector<8x48xf32>
    %500 = tpu.concatenate %498, %499 in 1 : vector<8x720xf32>, vector<8x48xf32> -> vector<8x768xf32>
    %501 = vector.extract_strided_slice %384 {offsets = [0, 49], sizes = [8, 719], strides = [1, 1]} : vector<8x768xf32> to vector<8x719xf32>
    %502 = vector.extract_strided_slice %384 {offsets = [0, 0], sizes = [8, 49], strides = [1, 1]} : vector<8x768xf32> to vector<8x49xf32>
    %503 = tpu.concatenate %501, %502 in 1 : vector<8x719xf32>, vector<8x49xf32> -> vector<8x768xf32>
    %504 = vector.extract_strided_slice %384 {offsets = [0, 50], sizes = [8, 718], strides = [1, 1]} : vector<8x768xf32> to vector<8x718xf32>
    %505 = vector.extract_strided_slice %384 {offsets = [0, 0], sizes = [8, 50], strides = [1, 1]} : vector<8x768xf32> to vector<8x50xf32>
    %506 = tpu.concatenate %504, %505 in 1 : vector<8x718xf32>, vector<8x50xf32> -> vector<8x768xf32>
    %507 = vector.extract_strided_slice %384 {offsets = [0, 51], sizes = [8, 717], strides = [1, 1]} : vector<8x768xf32> to vector<8x717xf32>
    %508 = vector.extract_strided_slice %384 {offsets = [0, 0], sizes = [8, 51], strides = [1, 1]} : vector<8x768xf32> to vector<8x51xf32>
    %509 = tpu.concatenate %507, %508 in 1 : vector<8x717xf32>, vector<8x51xf32> -> vector<8x768xf32>
    %510 = vector.extract_strided_slice %384 {offsets = [0, 69], sizes = [8, 699], strides = [1, 1]} : vector<8x768xf32> to vector<8x699xf32>
    %511 = vector.extract_strided_slice %384 {offsets = [0, 0], sizes = [8, 69], strides = [1, 1]} : vector<8x768xf32> to vector<8x69xf32>
    %512 = tpu.concatenate %510, %511 in 1 : vector<8x699xf32>, vector<8x69xf32> -> vector<8x768xf32>
    %513 = vector.extract_strided_slice %384 {offsets = [0, 70], sizes = [8, 698], strides = [1, 1]} : vector<8x768xf32> to vector<8x698xf32>
    %514 = vector.extract_strided_slice %384 {offsets = [0, 0], sizes = [8, 70], strides = [1, 1]} : vector<8x768xf32> to vector<8x70xf32>
    %515 = tpu.concatenate %513, %514 in 1 : vector<8x698xf32>, vector<8x70xf32> -> vector<8x768xf32>
    %516 = vector.extract_strided_slice %384 {offsets = [0, 71], sizes = [8, 697], strides = [1, 1]} : vector<8x768xf32> to vector<8x697xf32>
    %517 = vector.extract_strided_slice %384 {offsets = [0, 0], sizes = [8, 71], strides = [1, 1]} : vector<8x768xf32> to vector<8x71xf32>
    %518 = tpu.concatenate %516, %517 in 1 : vector<8x697xf32>, vector<8x71xf32> -> vector<8x768xf32>
    %519 = vector.extract_strided_slice %384 {offsets = [0, 72], sizes = [8, 696], strides = [1, 1]} : vector<8x768xf32> to vector<8x696xf32>
    %520 = vector.extract_strided_slice %384 {offsets = [0, 0], sizes = [8, 72], strides = [1, 1]} : vector<8x768xf32> to vector<8x72xf32>
    %521 = tpu.concatenate %519, %520 in 1 : vector<8x696xf32>, vector<8x72xf32> -> vector<8x768xf32>
    %522 = vector.extract_strided_slice %384 {offsets = [0, 73], sizes = [8, 695], strides = [1, 1]} : vector<8x768xf32> to vector<8x695xf32>
    %523 = vector.extract_strided_slice %384 {offsets = [0, 0], sizes = [8, 73], strides = [1, 1]} : vector<8x768xf32> to vector<8x73xf32>
    %524 = tpu.concatenate %522, %523 in 1 : vector<8x695xf32>, vector<8x73xf32> -> vector<8x768xf32>
    %525 = vector.extract_strided_slice %384 {offsets = [0, 74], sizes = [8, 694], strides = [1, 1]} : vector<8x768xf32> to vector<8x694xf32>
    %526 = vector.extract_strided_slice %384 {offsets = [0, 0], sizes = [8, 74], strides = [1, 1]} : vector<8x768xf32> to vector<8x74xf32>
    %527 = tpu.concatenate %525, %526 in 1 : vector<8x694xf32>, vector<8x74xf32> -> vector<8x768xf32>
    %528 = vector.extract_strided_slice %384 {offsets = [0, 75], sizes = [8, 693], strides = [1, 1]} : vector<8x768xf32> to vector<8x693xf32>
    %529 = vector.extract_strided_slice %384 {offsets = [0, 0], sizes = [8, 75], strides = [1, 1]} : vector<8x768xf32> to vector<8x75xf32>
    %530 = tpu.concatenate %528, %529 in 1 : vector<8x693xf32>, vector<8x75xf32> -> vector<8x768xf32>
    %531 = tpu.concatenate %389, %392, %395, %398, %401, %404, %407, %410, %413, %416, %419, %422, %425, %428, %431, %434 in 0 : vector<8x768xf32>, vector<8x768xf32>, vector<8x768xf32>, vector<8x768xf32>, vector<8x768xf32>, vector<8x768xf32>, vector<8x768xf32>, vector<8x768xf32>, vector<8x768xf32>, vector<8x768xf32>, vector<8x768xf32>, vector<8x768xf32>, vector<8x768xf32>, vector<8x768xf32>, vector<8x768xf32>, vector<8x768xf32> -> vector<128x768xf32>
    %532 = tpu.concatenate %437, %440, %443, %446, %449, %452, %455, %458, %384, %461, %464, %467, %470, %473, %476, %479 in 0 : vector<8x768xf32>, vector<8x768xf32>, vector<8x768xf32>, vector<8x768xf32>, vector<8x768xf32>, vector<8x768xf32>, vector<8x768xf32>, vector<8x768xf32>, vector<8x768xf32>, vector<8x768xf32>, vector<8x768xf32>, vector<8x768xf32>, vector<8x768xf32>, vector<8x768xf32>, vector<8x768xf32>, vector<8x768xf32> -> vector<128x768xf32>
    %533 = tpu.concatenate %482, %485, %488, %491, %494, %497, %500, %503, %506, %509, %512, %515, %518, %521, %524, %527 in 0 : vector<8x768xf32>, vector<8x768xf32>, vector<8x768xf32>, vector<8x768xf32>, vector<8x768xf32>, vector<8x768xf32>, vector<8x768xf32>, vector<8x768xf32>, vector<8x768xf32>, vector<8x768xf32>, vector<8x768xf32>, vector<8x768xf32>, vector<8x768xf32>, vector<8x768xf32>, vector<8x768xf32>, vector<8x768xf32> -> vector<128x768xf32>
    %534 = tpu.concatenate %531, %532, %533, %530 in 0 : vector<128x768xf32>, vector<128x768xf32>, vector<128x768xf32>, vector<8x768xf32> -> vector<392x768xf32>
    %cst_39 = arith.constant dense<0.000000e+00> : vector<8x768xf32>
    %535 = tpu.matmul %385, %534, %cst_39 {dimension_numbers = #tpu.dot_dimension_numbers<[1], [0], [0], [1], [0, 0, 1, 1], [], []>} : vector<8x392xf32>, vector<392x768xf32>, vector<8x768xf32> -> vector<8x768xf32>
    %536 = vector.broadcast %386 : vector<8x1xf32> to vector<8x768xf32>
    %537 = arith.addf %535, %536 : vector<8x768xf32>
    %c0_40 = arith.constant 0 : index
    %c0_41 = arith.constant 0 : index
    %c0_42 = arith.constant 0 : index
    %538 = vector.load %arg9[%c0_40, %c0_41, %c0_42] : memref<1x8x768xf32, #tpu.memory_space<vmem>>, vector<1x8x768xf32>
    %539 = vector.shape_cast %538 : vector<1x8x768xf32> to vector<8x768xf32>
    %540 = vector.shape_cast %537 : vector<8x768xf32> to vector<1x8x768xf32>
    tpu.vector_store %arg9[%c0_40, %c0_41, %c0_42], %540 {strides = array<i32>} : memref<1x8x768xf32, #tpu.memory_space<vmem>>, vector<1x8x768xf32>,
    return
  }
  func.func @transform_0(%arg0: i32) -> (i32, i32) {
    %c0_i32 = arith.constant 0 : i32
    %c0_i32_0 = arith.constant 0 : i32
    %c0_i32_1 = arith.constant 0 : i32
    return %c0_i32, %c0_i32_0 : i32, i32
  }
  func.func @transform_1(%arg0: i32) -> (i32, i32, i32) {
    %c0_i32 = arith.constant 0 : i32
    %c0_i32_0 = arith.constant 0 : i32
    %c0_i32_1 = arith.constant 0 : i32
    return %arg0, %c0_i32, %c0_i32_0 : i32, i32, i32
  }
  func.func @transform_2(%arg0: i32) -> (i32, i32) {
    %c0_i32 = arith.constant 0 : i32
    %c0_i32_0 = arith.constant 0 : i32
    %c0_i32_1 = arith.constant 0 : i32
    return %c0_i32, %c0_i32_0 : i32, i32
  }
  func.func @transform_3(%arg0: i32) -> (i32, i32) {
    %c0_i32 = arith.constant 0 : i32
    %c0_i32_0 = arith.constant 0 : i32
    %c0_i32_1 = arith.constant 0 : i32
    return %c0_i32, %c0_i32_0 : i32, i32
  }
  func.func @transform_4(%arg0: i32) -> (i32, i32, i32) {
    %c0_i32 = arith.constant 0 : i32
    %c0_i32_0 = arith.constant 0 : i32
    %c0_i32_1 = arith.constant 0 : i32
    %c0_i32_2 = arith.constant 0 : i32
    return %c0_i32, %c0_i32_0, %c0_i32_1 : i32, i32, i32
  }
  func.func @transform_5(%arg0: i32) -> (i32, i32, i32) {
    %c0_i32 = arith.constant 0 : i32
    %c0_i32_0 = arith.constant 0 : i32
    %c0_i32_1 = arith.constant 0 : i32
    %c0_i32_2 = arith.constant 0 : i32
    return %c0_i32, %c0_i32_0, %c0_i32_1 : i32, i32, i32
  }
  func.func @transform_6(%arg0: i32) -> (i32, i32) {
    %c0_i32 = arith.constant 0 : i32
    %c0_i32_0 = arith.constant 0 : i32
    %c0_i32_1 = arith.constant 0 : i32
    return %c0_i32, %c0_i32_0 : i32, i32
  }
  func.func @transform_7(%arg0: i32) -> (i32, i32) {
    %c0_i32 = arith.constant 0 : i32
    %c0_i32_0 = arith.constant 0 : i32
    %c0_i32_1 = arith.constant 0 : i32
    return %c0_i32, %c0_i32_0 : i32, i32
  }
  func.func @transform_8(%arg0: i32) -> (i32, i32, i32) {
    %c0_i32 = arith.constant 0 : i32
    %c0_i32_0 = arith.constant 0 : i32
    %c0_i32_1 = arith.constant 0 : i32
    return %arg0, %c0_i32, %c0_i32_0 : i32, i32, i32
  }
}

</mosaic_0001>

<llo_original>
// kernel: resnet_forward.1
$region0: #{resnet_forward.1}
  #allocation0 [shape = 'u32[]', space=smem, size = 0x4, offset = 0x4, fixed_abs, tag = 'smem constant byte address 0x4 - core index']
  #allocation1 [shape = 'u32[144,128]{1,0:T(1,128)}', space=vmem, size = 0x12000, scoped, tag = 'internal scratch']
  %s0 = inlined_call_operand.vmem [shape: s32[2,768], index: 0, kind: input, shape index: {}]
  %s1 = inlined_call_operand.vmem [shape: f32[2,8,768], index: 1, kind: input, shape index: {}]
  %s2 = inlined_call_operand.vmem [shape: f32[8,392], index: 2, kind: input, shape index: {}]
  %s3 = inlined_call_operand.vmem [shape: f32[8,1], index: 3, kind: input, shape index: {}]
  %s4 = inlined_call_operand.vmem [shape: f32[9,16,72], index: 4, kind: input, shape index: {}]
  %s5 = inlined_call_operand.vmem [shape: f32[9,16,1], index: 5, kind: input, shape index: {}]
  %s6 = inlined_call_operand.vmem [shape: f32[8,392], index: 6, kind: input, shape index: {}]
  %s7 = inlined_call_operand.vmem [shape: f32[8,1], index: 7, kind: input, shape index: {}]
  %s8 = inlined_call_operand.vmem [shape: f32[2,8,768], index: 8, kind: output, shape index: {}]
  %s9 = sld [smem:[#allocation0]]
  $region72: #{resnet_forward.1} parent=0
    _
  %s11 = ssub.s32 1, %s9
  %s12 = scalar_select 0, %s11, %s9
  loop: start=0, step=1, limit=4
  $region2: #{resnet_forward.1} parent=0 // loop_pre_header
    _
  $region3: #{resnet_forward.1} parent=0 // loop_header
    %s14 = sphi 0, %s18
    %p15 = scmp.ge.s32.totalorder %s14, 4
    %s22 = sphi 0, %s22
    %s24 = sphi 0, %s22
    %s25 = sphi 0, %s24
    %s39 = sphi 0, %s25
    %s45 = sphi 0, %s47
    %s48 = sphi 0, %s45
    %s49 = sphi 0, %s48
    %s65 = sphi 0, %s49
    %s69 = sphi 0, %s69
    %s71 = sphi 0, %s69
    %s72 = sphi 0, %s71
    %s86 = sphi 0, %s72
    %s90 = sphi 0, %s90
    %s92 = sphi 0, %s90
    %s93 = sphi 0, %s92
    %s107 = sphi 0, %s93
    %s111 = sphi 0, %s111
    %s113 = sphi 0, %s111
    %s114 = sphi 0, %s113
    %s128 = sphi 0, %s114
    %s132 = sphi 0, %s132
    %s134 = sphi 0, %s132
    %s135 = sphi 0, %s134
    %s149 = sphi 0, %s135
    %s153 = sphi 0, %s153
    %s155 = sphi 0, %s153
    %s156 = sphi 0, %s155
    %s170 = sphi 0, %s156
    %s174 = sphi 0, %s174
    %s176 = sphi 0, %s174
    %s177 = sphi 0, %s176
    %s191 = sphi 0, %s177
    %s197 = sphi 0, %s199
    %s200 = sphi 0, %s197
    %s201 = sphi 0, %s200
    %s217 = sphi 0, %s201
  $region4: #{resnet_forward.1} parent=0 // loop_header_branch
    %17 = sbr.rel (%p15) target = $region8
  $region5: #{resnet_forward.1} parent=0 // loop_body
    %s19 = ssub.s32 %s14, 1
    %s20 = ssub.s32 %s14, 2
    %s21 = sadd.s32 %s14, 1
    %s23 = sadd.s32 %s22, 1
    %p26 = scmp.eq.s32.totalorder %s14, 1
    %p27 = scmp.ne.s32.totalorder %s22, %s24
    %p28 = scmp.eq.s32.totalorder %s14, 0
    %p29 = por %p27, %p28
    %p30 = scmp.ne.s32.totalorder %s22, %s24
    %p31 = scmp.eq.s32.totalorder %s19, 1
    %p32 = por %p30, %p31
    %p33 = scmp.ne.s32.totalorder %s24, %s25
    %p34 = scmp.eq.s32.totalorder %s19, 0
    %p35 = por %p33, %p34
    %p36 = scmp.ne.s32.totalorder %s24, %s25
    %p37 = scmp.eq.s32.totalorder %s20, 1
    %p38 = por %p36, %p37
    %p40 = scmp.ne.s32.totalorder %s25, %s39
    %p41 = scmp.eq.s32.totalorder %s20, 0
    %p42 = por %p40, %p41
    %s43 = ssub.s32 %s14, %s21
    %p44 = scmp.eq.s32.totalorder %s43, 0
    %s46 = sadd.s32 %s45, 1
    %s47 = scalar_select %p44, %s45, %s46
    %p50 = pneg %p44
    %p51 = scmp.eq.s32.totalorder %s14, 1
    %p52 = por %p50, %p51
    %p53 = scmp.ne.s32.totalorder %s45, %s48
    %p54 = scmp.eq.s32.totalorder %s14, 0
    %p55 = por %p53, %p54
    %p56 = scmp.ne.s32.totalorder %s45, %s48
    %p57 = scmp.eq.s32.totalorder %s19, 1
    %p58 = por %p56, %p57
    %p59 = scmp.ne.s32.totalorder %s48, %s49
    %p60 = scmp.eq.s32.totalorder %s19, 0
    %p61 = por %p59, %p60
    %p62 = scmp.ne.s32.totalorder %s48, %s49
    %p63 = scmp.eq.s32.totalorder %s20, 1
    %p64 = por %p62, %p63
    %p66 = scmp.ne.s32.totalorder %s49, %s65
    %p67 = scmp.eq.s32.totalorder %s20, 0
    %p68 = por %p66, %p67
    %s70 = sadd.s32 %s69, 1
    %p73 = scmp.eq.s32.totalorder %s14, 1
    %p74 = scmp.ne.s32.totalorder %s69, %s71
    %p75 = scmp.eq.s32.totalorder %s14, 0
    %p76 = por %p74, %p75
    %p77 = scmp.ne.s32.totalorder %s69, %s71
    %p78 = scmp.eq.s32.totalorder %s19, 1
    %p79 = por %p77, %p78
    %p80 = scmp.ne.s32.totalorder %s71, %s72
    %p81 = scmp.eq.s32.totalorder %s19, 0
    %p82 = por %p80, %p81
    %p83 = scmp.ne.s32.totalorder %s71, %s72
    %p84 = scmp.eq.s32.totalorder %s20, 1
    %p85 = por %p83, %p84
    %p87 = scmp.ne.s32.totalorder %s72, %s86
    %p88 = scmp.eq.s32.totalorder %s20, 0
    %p89 = por %p87, %p88
    %s91 = sadd.s32 %s90, 1
    %p94 = scmp.eq.s32.totalorder %s14, 1
    %p95 = scmp.ne.s32.totalorder %s90, %s92
    %p96 = scmp.eq.s32.totalorder %s14, 0
    %p97 = por %p95, %p96
    %p98 = scmp.ne.s32.totalorder %s90, %s92
    %p99 = scmp.eq.s32.totalorder %s19, 1
    %p100 = por %p98, %p99
    %p101 = scmp.ne.s32.totalorder %s92, %s93
    %p102 = scmp.eq.s32.totalorder %s19, 0
    %p103 = por %p101, %p102
    %p104 = scmp.ne.s32.totalorder %s92, %s93
    %p105 = scmp.eq.s32.totalorder %s20, 1
    %p106 = por %p104, %p105
    %p108 = scmp.ne.s32.totalorder %s93, %s107
    %p109 = scmp.eq.s32.totalorder %s20, 0
    %p110 = por %p108, %p109
    %s112 = sadd.s32 %s111, 1
    %p115 = scmp.eq.s32.totalorder %s14, 1
    %p116 = scmp.ne.s32.totalorder %s111, %s113
    %p117 = scmp.eq.s32.totalorder %s14, 0
    %p118 = por %p116, %p117
    %p119 = scmp.ne.s32.totalorder %s111, %s113
    %p120 = scmp.eq.s32.totalorder %s19, 1
    %p121 = por %p119, %p120
    %p122 = scmp.ne.s32.totalorder %s113, %s114
    %p123 = scmp.eq.s32.totalorder %s19, 0
    %p124 = por %p122, %p123
    %p125 = scmp.ne.s32.totalorder %s113, %s114
    %p126 = scmp.eq.s32.totalorder %s20, 1
    %p127 = por %p125, %p126
    %p129 = scmp.ne.s32.totalorder %s114, %s128
    %p130 = scmp.eq.s32.totalorder %s20, 0
    %p131 = por %p129, %p130
    %s133 = sadd.s32 %s132, 1
    %p136 = scmp.eq.s32.totalorder %s14, 1
    %p137 = scmp.ne.s32.totalorder %s132, %s134
    %p138 = scmp.eq.s32.totalorder %s14, 0
    %p139 = por %p137, %p138
    %p140 = scmp.ne.s32.totalorder %s132, %s134
    %p141 = scmp.eq.s32.totalorder %s19, 1
    %p142 = por %p140, %p141
    %p143 = scmp.ne.s32.totalorder %s134, %s135
    %p144 = scmp.eq.s32.totalorder %s19, 0
    %p145 = por %p143, %p144
    %p146 = scmp.ne.s32.totalorder %s134, %s135
    %p147 = scmp.eq.s32.totalorder %s20, 1
    %p148 = por %p146, %p147
    %p150 = scmp.ne.s32.totalorder %s135, %s149
    %p151 = scmp.eq.s32.totalorder %s20, 0
    %p152 = por %p150, %p151
    %s154 = sadd.s32 %s153, 1
    %p157 = scmp.eq.s32.totalorder %s14, 1
    %p158 = scmp.ne.s32.totalorder %s153, %s155
    %p159 = scmp.eq.s32.totalorder %s14, 0
    %p160 = por %p158, %p159
    %p161 = scmp.ne.s32.totalorder %s153, %s155
    %p162 = scmp.eq.s32.totalorder %s19, 1
    %p163 = por %p161, %p162
    %p164 = scmp.ne.s32.totalorder %s155, %s156
    %p165 = scmp.eq.s32.totalorder %s19, 0
    %p166 = por %p164, %p165
    %p167 = scmp.ne.s32.totalorder %s155, %s156
    %p168 = scmp.eq.s32.totalorder %s20, 1
    %p169 = por %p167, %p168
    %p171 = scmp.ne.s32.totalorder %s156, %s170
    %p172 = scmp.eq.s32.totalorder %s20, 0
    %p173 = por %p171, %p172
    %s175 = sadd.s32 %s174, 1
    %p178 = scmp.eq.s32.totalorder %s14, 1
    %p179 = scmp.ne.s32.totalorder %s174, %s176
    %p180 = scmp.eq.s32.totalorder %s14, 0
    %p181 = por %p179, %p180
    %p182 = scmp.ne.s32.totalorder %s174, %s176
    %p183 = scmp.eq.s32.totalorder %s19, 1
    %p184 = por %p182, %p183
    %p185 = scmp.ne.s32.totalorder %s176, %s177
    %p186 = scmp.eq.s32.totalorder %s19, 0
    %p187 = por %p185, %p186
    %p188 = scmp.ne.s32.totalorder %s176, %s177
    %p189 = scmp.eq.s32.totalorder %s20, 1
    %p190 = por %p188, %p189
    %p192 = scmp.ne.s32.totalorder %s177, %s191
    %p193 = scmp.eq.s32.totalorder %s20, 0
    %p194 = por %p192, %p193
    %s195 = ssub.s32 %s14, %s21
    %p196 = scmp.eq.s32.totalorder %s195, 0
    %s198 = sadd.s32 %s197, 1
    %s199 = scalar_select %p196, %s197, %s198
    %p202 = pneg %p196
    %p203 = scmp.eq.s32.totalorder %s14, 1
    %p204 = por %p202, %p203
    %p205 = scmp.ne.s32.totalorder %s197, %s200
    %p206 = scmp.eq.s32.totalorder %s14, 0
    %p207 = por %p205, %p206
    %p208 = scmp.ne.s32.totalorder %s197, %s200
    %p209 = scmp.eq.s32.totalorder %s19, 1
    %p210 = por %p208, %p209
    %p211 = scmp.ne.s32.totalorder %s200, %s201
    %p212 = scmp.eq.s32.totalorder %s19, 0
    %p213 = por %p211, %p212
    %p214 = scmp.ne.s32.totalorder %s200, %s201
    %p215 = scmp.eq.s32.totalorder %s20, 1
    %p216 = por %p214, %p215
    %p218 = scmp.ne.s32.totalorder %s201, %s217
    %p219 = scmp.eq.s32.totalorder %s20, 0
    %p220 = por %p218, %p219
    %p221 = scmp.le.s32.totalorder 1, %s14
    %p222 = scmp.lt.s32.totalorder %s14, 3
    %p223 = pnand %p221, %p222
    %p224 = pneg %p223
    // Predicated region
    $region9: #{resnet_forward.1} parent=5 // pred_check
      _
    $region10: #{resnet_forward.1} parent=5 // pred_check_branch
      %226 = sbr.rel (%p223) target = $region12
    $region11: #{resnet_forward.1} parent=5 // pred_region
      %s227 = ssub.s32 %s14, 1
      // Predicated region
      $region13: #{resnet_forward.1} parent=11 // pred_check
        %p228 = pneg %p35
      $region14: #{resnet_forward.1} parent=11 // pred_check_branch
        %230 = sbr.rel (%p228) target = $region16
      $region15: #{resnet_forward.1} parent=11 // pred_region
        _
      $region16: #{resnet_forward.1} parent=11 // pred_fallthru
        _
      // Predicated region
      $region17: #{resnet_forward.1} parent=11 // pred_check
        %p231 = pneg %p82
      $region18: #{resnet_forward.1} parent=11 // pred_check_branch
        %233 = sbr.rel (%p231) target = $region20
      $region19: #{resnet_forward.1} parent=11 // pred_region
        _
      $region20: #{resnet_forward.1} parent=11 // pred_fallthru
        _
      // Predicated region
      $region21: #{resnet_forward.1} parent=11 // pred_check
        %p234 = pneg %p103
      $region22: #{resnet_forward.1} parent=11 // pred_check_branch
        %236 = sbr.rel (%p234) target = $region24
      $region23: #{resnet_forward.1} parent=11 // pred_region
        _
      $region24: #{resnet_forward.1} parent=11 // pred_fallthru
        _
      // Predicated region
      $region25: #{resnet_forward.1} parent=11 // pred_check
        %p237 = pneg %p124
      $region26: #{resnet_forward.1} parent=11 // pred_check_branch
        %239 = sbr.rel (%p237) target = $region28
      $region27: #{resnet_forward.1} parent=11 // pred_region
        _
      $region28: #{resnet_forward.1} parent=11 // pred_fallthru
        _
      // Predicated region
      $region29: #{resnet_forward.1} parent=11 // pred_check
        %p240 = pneg %p145
      $region30: #{resnet_forward.1} parent=11 // pred_check_branch
        %242 = sbr.rel (%p240) target = $region32
      $region31: #{resnet_forward.1} parent=11 // pred_region
        _
      $region32: #{resnet_forward.1} parent=11 // pred_fallthru
        _
      // Predicated region
      $region33: #{resnet_forward.1} parent=11 // pred_check
        %p243 = pneg %p166
      $region34: #{resnet_forward.1} parent=11 // pred_check_branch
        %245 = sbr.rel (%p243) target = $region36
      $region35: #{resnet_forward.1} parent=11 // pred_region
        _
      $region36: #{resnet_forward.1} parent=11 // pred_fallthru
        _
      // Predicated region
      $region37: #{resnet_forward.1} parent=11 // pred_check
        %p246 = pneg %p187
      $region38: #{resnet_forward.1} parent=11 // pred_check_branch
        %248 = sbr.rel (%p246) target = $region40
      $region39: #{resnet_forward.1} parent=11 // pred_region
        _
      $region40: #{resnet_forward.1} parent=11 // pred_fallthru
        _
    $region12: #{resnet_forward.1} parent=5 // pred_fallthru
      _
    %p249 = scmp.lt.s32.totalorder %s14, 2
    // Predicated region
    $region41: #{resnet_forward.1} parent=5 // pred_check
      %p250 = pneg %p249
    $region42: #{resnet_forward.1} parent=5 // pred_check_branch
      %252 = sbr.rel (%p250) target = $region44
    $region43: #{resnet_forward.1} parent=5 // pred_region
      // Predicated region
      $region45: #{resnet_forward.1} parent=43 // pred_check
        %p253 = pneg %p55
      $region46: #{resnet_forward.1} parent=43 // pred_check_branch
        %255 = sbr.rel (%p253) target = $region48
      $region47: #{resnet_forward.1} parent=43 // pred_region
        %p256 = scmp.lt.s32.totalorder %s14, 1
        %s257 = scalar_select %p256, %s14, 1
        %s258 = smul.addr %s257, 6
        %s259 = smul.addr %s258, 8
        %s260 = scalar_lea.vmem %s1, %s259
      $region48: #{resnet_forward.1} parent=43 // pred_fallthru
        _
    $region44: #{resnet_forward.1} parent=5 // pred_fallthru
      _
    %p261 = scmp.le.s32.totalorder 1, %s14
    %p262 = scmp.lt.s32.totalorder %s14, 3
    %p263 = pnand %p261, %p262
    %p264 = pneg %p263
    // Predicated region
    $region49: #{resnet_forward.1} parent=5 // pred_check
      _
    $region50: #{resnet_forward.1} parent=5 // pred_check_branch
      %266 = sbr.rel (%p263) target = $region52
    $region51: #{resnet_forward.1} parent=5 // pred_region
      %s267 = ssub.s32 %s14, 1
      %p268 = pneg %p35
      %p269 = pneg %p32
      %p270 = scmp.lt.s32.totalorder %s19, 1
      %s271 = scalar_select %p270, %s19, 1
      %s272 = smul.addr %s271, 6
      %s273 = smul.addr %s272, 8
      %s274 = scalar_lea.vmem %s1, %s273
      %p275 = pneg %p61
      %p276 = pneg %p58
      %p277 = pneg %p82
      %p278 = pneg %p79
      %p279 = pneg %p103
      %p280 = pneg %p100
      %p281 = pneg %p124
      %p282 = pneg %p121
      %p283 = pneg %p145
      %p284 = pneg %p142
      %p285 = pneg %p166
      %p286 = pneg %p163
      %p287 = pneg %p187
      %p288 = pneg %p184
      %p289 = pneg %p213
      %p290 = pneg %p210
      %p291 = scmp.lt.s32.totalorder %s19, 1
      %s292 = scalar_select %p291, %s19, 1
      %s293 = smul.addr %s292, 6
      %s294 = smul.addr %s293, 8
      %s295 = scalar_lea.vmem %s8, %s294
      %p296 = scmp.lt.s32.totalorder %s19, 1
      %s297 = scalar_select %p296, %s19, 1
      %s298 = smul.addr %s297, 6
      %s299 = smul.addr %s298, 8
      %s300 = scalar_lea.vmem %s1, %s299
      %p301 = scmp.lt.s32.totalorder %s19, 1
      %s302 = scalar_select %p301, %s19, 1
      %s303 = smul.addr %s302, 6
      %s304 = smul.addr %s303, 8
      %s305 = scalar_lea.vmem %s8, %s304
      %v306 = vld [vmem:[%s0] ss:$2 sm:$0x3f]
      %s307 = scalar_lea.vmem %s0, 1
      %v308 = vld [vmem:[%s307] ss:$2 sm:$0x3f]
      %v309 = vld [vmem:[%s300] sm:$0xff]
      %v310 = vld [vmem:[%s300 + $0x8] sm:$0xff]
      %v311 = vld [vmem:[%s300 + $0x10] sm:$0xff]
      %v312 = vld [vmem:[%s300 + $0x18] sm:$0xff]
      %v313 = vld [vmem:[%s300 + $0x20] sm:$0xff]
      %v314 = vld [vmem:[%s300 + $0x28] sm:$0xff]
      %vm315 = vcmp.eq.s32.totalorder %v306, 2
      %v316 = vsel %vm315, 1, 0
      %v317 = vlaneseq
      %v318 = vshrl.u32 %v317, 7
      %v319 = vsub.s32 0, %v318
      %v320 = vrot.slane %v316, %v319
      %v321 = vlaneseq
      %v322 = vshrl.u32 %v321, 7
      %v323 = vsub.s32 1, %v322
      %v324 = vrot.slane %v316, %v323
      %v325 = vlaneseq
      %v326 = vshrl.u32 %v325, 7
      %v327 = vsub.s32 2, %v326
      %v328 = vrot.slane %v316, %v327
      %v329 = vlaneseq
      %v330 = vshrl.u32 %v329, 7
      %v331 = vsub.s32 3, %v330
      %v332 = vrot.slane %v316, %v331
      %v333 = vlaneseq
      %v334 = vshrl.u32 %v333, 7
      %v335 = vsub.s32 4, %v334
      %v336 = vrot.slane %v316, %v335
      %v337 = vlaneseq
      %v338 = vshrl.u32 %v337, 7
      %v339 = vsub.s32 5, %v338
      %v340 = vrot.slane %v316, %v339
      %vm341 = vcmp.eq.s32.totalorder %v320, 1
      %vm342 = vcmp.eq.s32.totalorder %v324, 1
      %vm343 = vcmp.eq.s32.totalorder %v328, 1
      %vm344 = vcmp.eq.s32.totalorder %v332, 1
      %vm345 = vcmp.eq.s32.totalorder %v336, 1
      %vm346 = vcmp.eq.s32.totalorder %v340, 1
      %353 = vrot.lane.b32.xlu0 %v309, 80
      %v354 = vpop.permute.xlu0 %353
      %355 = vrot.lane.b32.xlu0 %v310, 80
      %v356 = vpop.permute.xlu0 %355
      %357 = vrot.lane.b32.xlu0 %v311, 80
      %v358 = vpop.permute.xlu0 %357
      %359 = vrot.lane.b32.xlu0 %v312, 80
      %v360 = vpop.permute.xlu0 %359
      %361 = vrot.lane.b32.xlu0 %v313, 80
      %v362 = vpop.permute.xlu0 %361
      %363 = vrot.lane.b32.xlu0 %v314, 80
      %v364 = vpop.permute.xlu0 %363
      %vm365 = vcmask 654336
      %v366 = vsel %vm365, %v354, %v356
      %v367 = vsel %vm365, %v356, %v358
      %v368 = vsel %vm365, %v358, %v360
      %v369 = vsel %vm365, %v360, %v362
      %v370 = vsel %vm365, %v362, %v364
      %v378 = vsel %vm365, %v364, %v354
      %v379 = vsel %vm341, %v366, %v309
      %v380 = vsel %vm342, %v367, %v310
      %v381 = vsel %vm343, %v368, %v311
      %v382 = vsel %vm344, %v369, %v312
      %v383 = vsel %vm345, %v370, %v313
      %v384 = vsel %vm346, %v378, %v314
      %vm385 = vcmp.eq.s32.totalorder %v306, 19
      %v386 = vsel %vm385, 1, 0
      %v387 = vlaneseq
      %v388 = vshrl.u32 %v387, 7
      %v389 = vsub.s32 0, %v388
      %v390 = vrot.slane %v386, %v389
      %v391 = vlaneseq
      %v392 = vshrl.u32 %v391, 7
      %v393 = vsub.s32 1, %v392
      %v394 = vrot.slane %v386, %v393
      %v395 = vlaneseq
      %v396 = vshrl.u32 %v395, 7
      %v397 = vsub.s32 2, %v396
      %v398 = vrot.slane %v386, %v397
      %v399 = vlaneseq
      %v400 = vshrl.u32 %v399, 7
      %v401 = vsub.s32 3, %v400
      %v402 = vrot.slane %v386, %v401
      %v403 = vlaneseq
      %v404 = vshrl.u32 %v403, 7
      %v405 = vsub.s32 4, %v404
      %v406 = vrot.slane %v386, %v405
      %v407 = vlaneseq
      %v408 = vshrl.u32 %v407, 7
      %v409 = vsub.s32 5, %v408
      %v410 = vrot.slane %v386, %v409
      %vm411 = vcmp.eq.s32.totalorder %v390, 1
      %vm412 = vcmp.eq.s32.totalorder %v394, 1
      %vm413 = vcmp.eq.s32.totalorder %v398, 1
      %vm414 = vcmp.eq.s32.totalorder %v402, 1
      %vm415 = vcmp.eq.s32.totalorder %v406, 1
      %vm416 = vcmp.eq.s32.totalorder %v410, 1
      %418 = vrot.lane.b32.xlu0 %v384, 48
      %v419 = vpop.permute.xlu0 %418
      %426 = vrot.lane.b32.xlu0 %v379, 48
      %v427 = vpop.permute.xlu0 %426
      %428 = vrot.lane.b32.xlu0 %v380, 48
      %v429 = vpop.permute.xlu0 %428
      %430 = vrot.lane.b32.xlu0 %v381, 48
      %v431 = vpop.permute.xlu0 %430
      %432 = vrot.lane.b32.xlu0 %v382, 48
      %v433 = vpop.permute.xlu0 %432
      %434 = vrot.lane.b32.xlu0 %v383, 48
      %v435 = vpop.permute.xlu0 %434
      %vm436 = vcmask 392192
      %v437 = vsel %vm436, %v427, %v429
      %v438 = vsel %vm436, %v429, %v431
      %v439 = vsel %vm436, %v431, %v433
      %v440 = vsel %vm436, %v433, %v435
      %v441 = vsel %vm436, %v435, %v419
      %v448 = vsel %vm436, %v419, %v427
      %v449 = vsel %vm411, %v448, %v379
      %v450 = vsel %vm412, %v437, %v380
      %v451 = vsel %vm413, %v438, %v381
      %v452 = vsel %vm414, %v439, %v382
      %v453 = vsel %vm415, %v440, %v383
      %v454 = vsel %vm416, %v441, %v384
      %vm455 = vcmp.eq.s32.totalorder %v306, 1
      %v456 = vsel %vm455, 1, 0
      %v457 = vlaneseq
      %v458 = vshrl.u32 %v457, 7
      %v459 = vsub.s32 0, %v458
      %v460 = vrot.slane %v456, %v459
      %v461 = vlaneseq
      %v462 = vshrl.u32 %v461, 7
      %v463 = vsub.s32 1, %v462
      %v464 = vrot.slane %v456, %v463
      %v465 = vlaneseq
      %v466 = vshrl.u32 %v465, 7
      %v467 = vsub.s32 2, %v466
      %v468 = vrot.slane %v456, %v467
      %v469 = vlaneseq
      %v470 = vshrl.u32 %v469, 7
      %v471 = vsub.s32 3, %v470
      %v472 = vrot.slane %v456, %v471
      %v473 = vlaneseq
      %v474 = vshrl.u32 %v473, 7
      %v475 = vsub.s32 4, %v474
      %v476 = vrot.slane %v456, %v475
      %v477 = vlaneseq
      %v478 = vshrl.u32 %v477, 7
      %v479 = vsub.s32 5, %v478
      %v480 = vrot.slane %v456, %v479
      %vm481 = vcmp.eq.s32.totalorder %v460, 1
      %vm482 = vcmp.eq.s32.totalorder %v464, 1
      %vm483 = vcmp.eq.s32.totalorder %v468, 1
      %vm484 = vcmp.eq.s32.totalorder %v472, 1
      %vm485 = vcmp.eq.s32.totalorder %v476, 1
      %vm486 = vcmp.eq.s32.totalorder %v480, 1
      %493 = vrot.lane.b32.xlu0 %v449, 32
      %v494 = vpop.permute.xlu0 %493
      %495 = vrot.lane.b32.xlu0 %v450, 32
      %v496 = vpop.permute.xlu0 %495
      %497 = vrot.lane.b32.xlu0 %v451, 32
      %v498 = vpop.permute.xlu0 %497
      %499 = vrot.lane.b32.xlu0 %v452, 32
      %v500 = vpop.permute.xlu0 %499
      %501 = vrot.lane.b32.xlu0 %v453, 32
      %v502 = vpop.permute.xlu0 %501
      %503 = vrot.lane.b32.xlu0 %v454, 32
      %v504 = vpop.permute.xlu0 %503
      %vm505 = vcmask 261120
      %v506 = vsel %vm505, %v494, %v496
      %v507 = vsel %vm505, %v496, %v498
      %v508 = vsel %vm505, %v498, %v500
      %v509 = vsel %vm505, %v500, %v502
      %v510 = vsel %vm505, %v502, %v504
      %v518 = vsel %vm505, %v504, %v494
      %v519 = vsel %vm481, %v506, %v449
      %v520 = vsel %vm482, %v507, %v450
      %v521 = vsel %vm483, %v508, %v451
      %v522 = vsel %vm484, %v509, %v452
      %v523 = vsel %vm485, %v510, %v453
      %v524 = vsel %vm486, %v518, %v454
      %vm525 = vcmp.eq.s32.totalorder %v306, 20
      %v526 = vsel %vm525, 1, 0
      %v527 = vlaneseq
      %v528 = vshrl.u32 %v527, 7
      %v529 = vsub.s32 0, %v528
      %v530 = vrot.slane %v526, %v529
      %v531 = vlaneseq
      %v532 = vshrl.u32 %v531, 7
      %v533 = vsub.s32 1, %v532
      %v534 = vrot.slane %v526, %v533
      %v535 = vlaneseq
      %v536 = vshrl.u32 %v535, 7
      %v537 = vsub.s32 2, %v536
      %v538 = vrot.slane %v526, %v537
      %v539 = vlaneseq
      %v540 = vshrl.u32 %v539, 7
      %v541 = vsub.s32 3, %v540
      %v542 = vrot.slane %v526, %v541
      %v543 = vlaneseq
      %v544 = vshrl.u32 %v543, 7
      %v545 = vsub.s32 4, %v544
      %v546 = vrot.slane %v526, %v545
      %v547 = vlaneseq
      %v548 = vshrl.u32 %v547, 7
      %v549 = vsub.s32 5, %v548
      %v550 = vrot.slane %v526, %v549
      %vm551 = vcmp.eq.s32.totalorder %v530, 1
      %vm552 = vcmp.eq.s32.totalorder %v534, 1
      %vm553 = vcmp.eq.s32.totalorder %v538, 1
      %vm554 = vcmp.eq.s32.totalorder %v542, 1
      %vm555 = vcmp.eq.s32.totalorder %v546, 1
      %vm556 = vcmp.eq.s32.totalorder %v550, 1
      %558 = vrot.lane.b32.xlu0 %v524, 96
      %v559 = vpop.permute.xlu0 %558
      %566 = vrot.lane.b32.xlu0 %v519, 96
      %v567 = vpop.permute.xlu0 %566
      %568 = vrot.lane.b32.xlu0 %v520, 96
      %v569 = vpop.permute.xlu0 %568
      %570 = vrot.lane.b32.xlu0 %v521, 96
      %v571 = vpop.permute.xlu0 %570
      %572 = vrot.lane.b32.xlu0 %v522, 96
      %v573 = vpop.permute.xlu0 %572
      %574 = vrot.lane.b32.xlu0 %v523, 96
      %v575 = vpop.permute.xlu0 %574
      %vm576 = vcmask 785408
      %v577 = vsel %vm576, %v567, %v569
      %v578 = vsel %vm576, %v569, %v571
      %v579 = vsel %vm576, %v571, %v573
      %v580 = vsel %vm576, %v573, %v575
      %v581 = vsel %vm576, %v575, %v559
      %v588 = vsel %vm576, %v559, %v567
      %v589 = vsel %vm551, %v588, %v519
      %v590 = vsel %vm552, %v577, %v520
      %v591 = vsel %vm553, %v578, %v521
      %v592 = vsel %vm554, %v579, %v522
      %v593 = vsel %vm555, %v580, %v523
      %v594 = vsel %vm556, %v581, %v524
      %vm595 = vcmp.eq.s32.totalorder %v306, 0
      %v596 = vsel %vm595, 1, 0
      %v597 = vlaneseq
      %v598 = vshrl.u32 %v597, 7
      %v599 = vsub.s32 0, %v598
      %v600 = vrot.slane %v596, %v599
      %v601 = vlaneseq
      %v602 = vshrl.u32 %v601, 7
      %v603 = vsub.s32 1, %v602
      %v604 = vrot.slane %v596, %v603
      %v605 = vlaneseq
      %v606 = vshrl.u32 %v605, 7
      %v607 = vsub.s32 2, %v606
      %v608 = vrot.slane %v596, %v607
      %v609 = vlaneseq
      %v610 = vshrl.u32 %v609, 7
      %v611 = vsub.s32 3, %v610
      %v612 = vrot.slane %v596, %v611
      %v613 = vlaneseq
      %v614 = vshrl.u32 %v613, 7
      %v615 = vsub.s32 4, %v614
      %v616 = vrot.slane %v596, %v615
      %v617 = vlaneseq
      %v618 = vshrl.u32 %v617, 7
      %v619 = vsub.s32 5, %v618
      %v620 = vrot.slane %v596, %v619
      %vm621 = vcmp.eq.s32.totalorder %v600, 1
      %vm622 = vcmp.eq.s32.totalorder %v604, 1
      %vm623 = vcmp.eq.s32.totalorder %v608, 1
      %vm624 = vcmp.eq.s32.totalorder %v612, 1
      %vm625 = vcmp.eq.s32.totalorder %v616, 1
      %vm626 = vcmp.eq.s32.totalorder %v620, 1
      %632 = vrot.lane.b32.xlu0 %v590, 112
      %v633 = vpop.permute.xlu0 %632
      %634 = vrot.lane.b32.xlu0 %v591, 112
      %v635 = vpop.permute.xlu0 %634
      %636 = vrot.lane.b32.xlu0 %v592, 112
      %v637 = vpop.permute.xlu0 %636
      %638 = vrot.lane.b32.xlu0 %v593, 112
      %v639 = vpop.permute.xlu0 %638
      %640 = vrot.lane.b32.xlu0 %v594, 112
      %v641 = vpop.permute.xlu0 %640
      %vm642 = vcmask 916480
      %v643 = vsel %vm642, %v633, %v635
      %v644 = vsel %vm642, %v635, %v637
      %v645 = vsel %vm642, %v637, %v639
      %v646 = vsel %vm642, %v639, %v641
      %653 = vrot.lane.b32.xlu0 %v589, 112
      %v654 = vpop.permute.xlu0 %653
      %v655 = vsel %vm642, %v654, %v633
      %v658 = vsel %vm642, %v641, %v654
      %v659 = vsel %vm621, %v643, %v589
      %v660 = vsel %vm622, %v644, %v590
      %v661 = vsel %vm623, %v645, %v591
      %v662 = vsel %vm624, %v646, %v592
      %v663 = vsel %vm625, %v658, %v593
      %v664 = vsel %vm626, %v655, %v594
      %vm665 = vcmp.eq.s32.totalorder %v306, 21
      %v666 = vsel %vm665, 1, 0
      %v667 = vlaneseq
      %v668 = vshrl.u32 %v667, 7
      %v669 = vsub.s32 0, %v668
      %v670 = vrot.slane %v666, %v669
      %v671 = vlaneseq
      %v672 = vshrl.u32 %v671, 7
      %v673 = vsub.s32 1, %v672
      %v674 = vrot.slane %v666, %v673
      %v675 = vlaneseq
      %v676 = vshrl.u32 %v675, 7
      %v677 = vsub.s32 2, %v676
      %v678 = vrot.slane %v666, %v677
      %v679 = vlaneseq
      %v680 = vshrl.u32 %v679, 7
      %v681 = vsub.s32 3, %v680
      %v682 = vrot.slane %v666, %v681
      %v683 = vlaneseq
      %v684 = vshrl.u32 %v683, 7
      %v685 = vsub.s32 4, %v684
      %v686 = vrot.slane %v666, %v685
      %v687 = vlaneseq
      %v688 = vshrl.u32 %v687, 7
      %v689 = vsub.s32 5, %v688
      %v690 = vrot.slane %v666, %v689
      %vm691 = vcmp.eq.s32.totalorder %v670, 1
      %vm692 = vcmp.eq.s32.totalorder %v674, 1
      %vm693 = vcmp.eq.s32.totalorder %v678, 1
      %vm694 = vcmp.eq.s32.totalorder %v682, 1
      %vm695 = vcmp.eq.s32.totalorder %v686, 1
      %vm696 = vcmp.eq.s32.totalorder %v690, 1
      %699 = vrot.lane.b32.xlu0 %v663, 16
      %v700 = vpop.permute.xlu0 %699
      %701 = vrot.lane.b32.xlu0 %v664, 16
      %v702 = vpop.permute.xlu0 %701
      %vm703 = vcmask 130048
      %v704 = vsel %vm703, %v700, %v702
      %711 = vrot.lane.b32.xlu0 %v659, 16
      %v712 = vpop.permute.xlu0 %711
      %713 = vrot.lane.b32.xlu0 %v660, 16
      %v714 = vpop.permute.xlu0 %713
      %715 = vrot.lane.b32.xlu0 %v661, 16
      %v716 = vpop.permute.xlu0 %715
      %717 = vrot.lane.b32.xlu0 %v662, 16
      %v718 = vpop.permute.xlu0 %717
      %v719 = vsel %vm703, %v712, %v714
      %v720 = vsel %vm703, %v714, %v716
      %v721 = vsel %vm703, %v716, %v718
      %v722 = vsel %vm703, %v718, %v700
      %v728 = vsel %vm703, %v702, %v712
      %v729 = vsel %vm691, %v704, %v659
      %v730 = vsel %vm692, %v728, %v660
      %v731 = vsel %vm693, %v719, %v661
      %v732 = vsel %vm694, %v720, %v662
      %v733 = vsel %vm695, %v721, %v663
      %v734 = vsel %vm696, %v722, %v664
      %vm735 = vcmp.eq.s32.totalorder %v308, 2
      %v736 = vsel %vm735, 1, 0
      %v737 = vlaneseq
      %v738 = vshrl.u32 %v737, 7
      %v739 = vsub.s32 0, %v738
      %v740 = vrot.slane %v736, %v739
      %v741 = vlaneseq
      %v742 = vshrl.u32 %v741, 7
      %v743 = vsub.s32 1, %v742
      %v744 = vrot.slane %v736, %v743
      %v745 = vlaneseq
      %v746 = vshrl.u32 %v745, 7
      %v747 = vsub.s32 2, %v746
      %v748 = vrot.slane %v736, %v747
      %v749 = vlaneseq
      %v750 = vshrl.u32 %v749, 7
      %v751 = vsub.s32 3, %v750
      %v752 = vrot.slane %v736, %v751
      %v753 = vlaneseq
      %v754 = vshrl.u32 %v753, 7
      %v755 = vsub.s32 4, %v754
      %v756 = vrot.slane %v736, %v755
      %v757 = vlaneseq
      %v758 = vshrl.u32 %v757, 7
      %v759 = vsub.s32 5, %v758
      %v760 = vrot.slane %v736, %v759
      %vm761 = vcmp.eq.s32.totalorder %v740, 1
      %vm762 = vcmp.eq.s32.totalorder %v744, 1
      %vm763 = vcmp.eq.s32.totalorder %v748, 1
      %vm764 = vcmp.eq.s32.totalorder %v752, 1
      %vm765 = vcmp.eq.s32.totalorder %v756, 1
      %vm766 = vcmp.eq.s32.totalorder %v760, 1
      %773 = vrot.lane.b32.xlu0 %v729, 126
      %v774 = vpop.permute.xlu0 %773
      %775 = vrot.lane.b32.xlu0 %v730, 126
      %v776 = vpop.permute.xlu0 %775
      %777 = vrot.lane.b32.xlu0 %v731, 126
      %v778 = vpop.permute.xlu0 %777
      %779 = vrot.lane.b32.xlu0 %v732, 126
      %v780 = vpop.permute.xlu0 %779
      %781 = vrot.lane.b32.xlu0 %v733, 126
      %v782 = vpop.permute.xlu0 %781
      %783 = vrot.lane.b32.xlu0 %v734, 126
      %v784 = vpop.permute.xlu0 %783
      %vm785 = vcmask 1031168
      %v786 = vsel %vm785, %v774, %v776
      %v787 = vsel %vm785, %v776, %v778
      %v788 = vsel %vm785, %v778, %v780
      %v789 = vsel %vm785, %v780, %v782
      %v790 = vsel %vm785, %v782, %v784
      %v798 = vsel %vm785, %v784, %v774
      %v799 = vsel %vm761, %v786, %v729
      %v800 = vsel %vm762, %v787, %v730
      %v801 = vsel %vm763, %v788, %v731
      %v802 = vsel %vm764, %v789, %v732
      %v803 = vsel %vm765, %v790, %v733
      %v804 = vsel %vm766, %v798, %v734
      %vm805 = vcmp.eq.s32.totalorder %v308, 19
      %v806 = vsel %vm805, 1, 0
      %v807 = vlaneseq
      %v808 = vshrl.u32 %v807, 7
      %v809 = vsub.s32 0, %v808
      %v810 = vrot.slane %v806, %v809
      %v811 = vlaneseq
      %v812 = vshrl.u32 %v811, 7
      %v813 = vsub.s32 1, %v812
      %v814 = vrot.slane %v806, %v813
      %v815 = vlaneseq
      %v816 = vshrl.u32 %v815, 7
      %v817 = vsub.s32 2, %v816
      %v818 = vrot.slane %v806, %v817
      %v819 = vlaneseq
      %v820 = vshrl.u32 %v819, 7
      %v821 = vsub.s32 3, %v820
      %v822 = vrot.slane %v806, %v821
      %v823 = vlaneseq
      %v824 = vshrl.u32 %v823, 7
      %v825 = vsub.s32 4, %v824
      %v826 = vrot.slane %v806, %v825
      %v827 = vlaneseq
      %v828 = vshrl.u32 %v827, 7
      %v829 = vsub.s32 5, %v828
      %v830 = vrot.slane %v806, %v829
      %vm831 = vcmp.eq.s32.totalorder %v810, 1
      %vm832 = vcmp.eq.s32.totalorder %v814, 1
      %vm833 = vcmp.eq.s32.totalorder %v818, 1
      %vm834 = vcmp.eq.s32.totalorder %v822, 1
      %vm835 = vcmp.eq.s32.totalorder %v826, 1
      %vm836 = vcmp.eq.s32.totalorder %v830, 1
      %838 = vrot.lane.b32.xlu0 %v804, 2
      %v839 = vpop.permute.xlu0 %838
      %846 = vrot.lane.b32.xlu0 %v799, 2
      %v847 = vpop.permute.xlu0 %846
      %848 = vrot.lane.b32.xlu0 %v800, 2
      %v849 = vpop.permute.xlu0 %848
      %850 = vrot.lane.b32.xlu0 %v801, 2
      %v851 = vpop.permute.xlu0 %850
      %852 = vrot.lane.b32.xlu0 %v802, 2
      %v853 = vpop.permute.xlu0 %852
      %854 = vrot.lane.b32.xlu0 %v803, 2
      %v855 = vpop.permute.xlu0 %854
      %vm856 = vcmask 15360
      %v857 = vsel %vm856, %v847, %v849
      %v858 = vsel %vm856, %v849, %v851
      %v859 = vsel %vm856, %v851, %v853
      %v860 = vsel %vm856, %v853, %v855
      %v861 = vsel %vm856, %v855, %v839
      %v868 = vsel %vm856, %v839, %v847
      %v869 = vsel %vm831, %v868, %v799
      %v870 = vsel %vm832, %v857, %v800
      %v871 = vsel %vm833, %v858, %v801
      %v872 = vsel %vm834, %v859, %v802
      %v873 = vsel %vm835, %v860, %v803
      %v874 = vsel %vm836, %v861, %v804
      %vm875 = vcmp.eq.s32.totalorder %v308, 1
      %v876 = vsel %vm875, 1, 0
      %v877 = vlaneseq
      %v878 = vshrl.u32 %v877, 7
      %v879 = vsub.s32 0, %v878
      %v880 = vrot.slane %v876, %v879
      %v881 = vlaneseq
      %v882 = vshrl.u32 %v881, 7
      %v883 = vsub.s32 1, %v882
      %v884 = vrot.slane %v876, %v883
      %v885 = vlaneseq
      %v886 = vshrl.u32 %v885, 7
      %v887 = vsub.s32 2, %v886
      %v888 = vrot.slane %v876, %v887
      %v889 = vlaneseq
      %v890 = vshrl.u32 %v889, 7
      %v891 = vsub.s32 3, %v890
      %v892 = vrot.slane %v876, %v891
      %v893 = vlaneseq
      %v894 = vshrl.u32 %v893, 7
      %v895 = vsub.s32 4, %v894
      %v896 = vrot.slane %v876, %v895
      %v897 = vlaneseq
      %v898 = vshrl.u32 %v897, 7
      %v899 = vsub.s32 5, %v898
      %v900 = vrot.slane %v876, %v899
      %vm901 = vcmp.eq.s32.totalorder %v880, 1
      %vm902 = vcmp.eq.s32.totalorder %v884, 1
      %vm903 = vcmp.eq.s32.totalorder %v888, 1
      %vm904 = vcmp.eq.s32.totalorder %v892, 1
      %vm905 = vcmp.eq.s32.totalorder %v896, 1
      %vm906 = vcmp.eq.s32.totalorder %v900, 1
      %913 = vrot.lane.b32.xlu0 %v869, 124
      %v914 = vpop.permute.xlu0 %913
      %915 = vrot.lane.b32.xlu0 %v870, 124
      %v916 = vpop.permute.xlu0 %915
      %917 = vrot.lane.b32.xlu0 %v871, 124
      %v918 = vpop.permute.xlu0 %917
      %919 = vrot.lane.b32.xlu0 %v872, 124
      %v920 = vpop.permute.xlu0 %919
      %921 = vrot.lane.b32.xlu0 %v873, 124
      %v922 = vpop.permute.xlu0 %921
      %923 = vrot.lane.b32.xlu0 %v874, 124
      %v924 = vpop.permute.xlu0 %923
      %vm925 = vcmask 1014784
      %v926 = vsel %vm925, %v914, %v916
      %v927 = vsel %vm925, %v916, %v918
      %v928 = vsel %vm925, %v918, %v920
      %v929 = vsel %vm925, %v920, %v922
      %v930 = vsel %vm925, %v922, %v924
      %v938 = vsel %vm925, %v924, %v914
      %v939 = vsel %vm901, %v926, %v869
      %v940 = vsel %vm902, %v927, %v870
      %v941 = vsel %vm903, %v928, %v871
      %v942 = vsel %vm904, %v929, %v872
      %v943 = vsel %vm905, %v930, %v873
      %v944 = vsel %vm906, %v938, %v874
      %vm945 = vcmp.eq.s32.totalorder %v308, 20
      %v946 = vsel %vm945, 1, 0
      %v947 = vlaneseq
      %v948 = vshrl.u32 %v947, 7
      %v949 = vsub.s32 0, %v948
      %v950 = vrot.slane %v946, %v949
      %v951 = vlaneseq
      %v952 = vshrl.u32 %v951, 7
      %v953 = vsub.s32 1, %v952
      %v954 = vrot.slane %v946, %v953
      %v955 = vlaneseq
      %v956 = vshrl.u32 %v955, 7
      %v957 = vsub.s32 2, %v956
      %v958 = vrot.slane %v946, %v957
      %v959 = vlaneseq
      %v960 = vshrl.u32 %v959, 7
      %v961 = vsub.s32 3, %v960
      %v962 = vrot.slane %v946, %v961
      %v963 = vlaneseq
      %v964 = vshrl.u32 %v963, 7
      %v965 = vsub.s32 4, %v964
      %v966 = vrot.slane %v946, %v965
      %v967 = vlaneseq
      %v968 = vshrl.u32 %v967, 7
      %v969 = vsub.s32 5, %v968
      %v970 = vrot.slane %v946, %v969
      %vm971 = vcmp.eq.s32.totalorder %v950, 1
      %vm972 = vcmp.eq.s32.totalorder %v954, 1
      %vm973 = vcmp.eq.s32.totalorder %v958, 1
      %vm974 = vcmp.eq.s32.totalorder %v962, 1
      %vm975 = vcmp.eq.s32.totalorder %v966, 1
      %vm976 = vcmp.eq.s32.totalorder %v970, 1
      %978 = vrot.lane.b32.xlu0 %v944, 4
      %v979 = vpop.permute.xlu0 %978
      %986 = vrot.lane.b32.xlu0 %v939, 4
      %v987 = vpop.permute.xlu0 %986
      %988 = vrot.lane.b32.xlu0 %v940, 4
      %v989 = vpop.permute.xlu0 %988
      %990 = vrot.lane.b32.xlu0 %v941, 4
      %v991 = vpop.permute.xlu0 %990
      %992 = vrot.lane.b32.xlu0 %v942, 4
      %v993 = vpop.permute.xlu0 %992
      %994 = vrot.lane.b32.xlu0 %v943, 4
      %v995 = vpop.permute.xlu0 %994
      %vm996 = vcmask 31744
      %v997 = vsel %vm996, %v987, %v989
      %v998 = vsel %vm996, %v989, %v991
      %v999 = vsel %vm996, %v991, %v993
      %v1000 = vsel %vm996, %v993, %v995
      %v1001 = vsel %vm996, %v995, %v979
      %v1008 = vsel %vm996, %v979, %v987
      %v1009 = vsel %vm971, %v1008, %v939
      %v1010 = vsel %vm972, %v997, %v940
      %v1011 = vsel %vm973, %v998, %v941
      %v1012 = vsel %vm974, %v999, %v942
      %v1013 = vsel %vm975, %v1000, %v943
      %v1014 = vsel %vm976, %v1001, %v944
      %vm1015 = vcmp.eq.s32.totalorder %v308, 0
      %v1016 = vsel %vm1015, 1, 0
      %v1017 = vlaneseq
      %v1018 = vshrl.u32 %v1017, 7
      %v1019 = vsub.s32 0, %v1018
      %v1020 = vrot.slane %v1016, %v1019
      %v1021 = vlaneseq
      %v1022 = vshrl.u32 %v1021, 7
      %v1023 = vsub.s32 1, %v1022
      %v1024 = vrot.slane %v1016, %v1023
      %v1025 = vlaneseq
      %v1026 = vshrl.u32 %v1025, 7
      %v1027 = vsub.s32 2, %v1026
      %v1028 = vrot.slane %v1016, %v1027
      %v1029 = vlaneseq
      %v1030 = vshrl.u32 %v1029, 7
      %v1031 = vsub.s32 3, %v1030
      %v1032 = vrot.slane %v1016, %v1031
      %v1033 = vlaneseq
      %v1034 = vshrl.u32 %v1033, 7
      %v1035 = vsub.s32 4, %v1034
      %v1036 = vrot.slane %v1016, %v1035
      %v1037 = vlaneseq
      %v1038 = vshrl.u32 %v1037, 7
      %v1039 = vsub.s32 5, %v1038
      %v1040 = vrot.slane %v1016, %v1039
      %vm1041 = vcmp.eq.s32.totalorder %v1020, 1
      %vm1042 = vcmp.eq.s32.totalorder %v1024, 1
      %vm1043 = vcmp.eq.s32.totalorder %v1028, 1
      %vm1044 = vcmp.eq.s32.totalorder %v1032, 1
      %vm1045 = vcmp.eq.s32.totalorder %v1036, 1
      %vm1046 = vcmp.eq.s32.totalorder %v1040, 1
      %1053 = vrot.lane.b32.xlu0 %v1009, 122
      %v1054 = vpop.permute.xlu0 %1053
      %1055 = vrot.lane.b32.xlu0 %v1010, 122
      %v1056 = vpop.permute.xlu0 %1055
      %1057 = vrot.lane.b32.xlu0 %v1011, 122
      %v1058 = vpop.permute.xlu0 %1057
      %1059 = vrot.lane.b32.xlu0 %v1012, 122
      %v1060 = vpop.permute.xlu0 %1059
      %1061 = vrot.lane.b32.xlu0 %v1013, 122
      %v1062 = vpop.permute.xlu0 %1061
      %1063 = vrot.lane.b32.xlu0 %v1014, 122
      %v1064 = vpop.permute.xlu0 %1063
      %vm1065 = vcmask 998400
      %v1066 = vsel %vm1065, %v1054, %v1056
      %v1067 = vsel %vm1065, %v1056, %v1058
      %v1068 = vsel %vm1065, %v1058, %v1060
      %v1069 = vsel %vm1065, %v1060, %v1062
      %v1070 = vsel %vm1065, %v1062, %v1064
      %v1078 = vsel %vm1065, %v1064, %v1054
      %v1079 = vsel %vm1041, %v1066, %v1009
      %v1080 = vsel %vm1042, %v1067, %v1010
      %v1081 = vsel %vm1043, %v1068, %v1011
      %v1082 = vsel %vm1044, %v1069, %v1012
      %v1083 = vsel %vm1045, %v1070, %v1013
      %v1084 = vsel %vm1046, %v1078, %v1014
      %vm1085 = vcmp.eq.s32.totalorder %v308, 21
      %v1086 = vsel %vm1085, 1, 0
      %v1087 = vlaneseq
      %v1088 = vshrl.u32 %v1087, 7
      %v1089 = vsub.s32 0, %v1088
      %v1090 = vrot.slane %v1086, %v1089
      %v1091 = vlaneseq
      %v1092 = vshrl.u32 %v1091, 7
      %v1093 = vsub.s32 1, %v1092
      %v1094 = vrot.slane %v1086, %v1093
      %v1095 = vlaneseq
      %v1096 = vshrl.u32 %v1095, 7
      %v1097 = vsub.s32 2, %v1096
      %v1098 = vrot.slane %v1086, %v1097
      %v1099 = vlaneseq
      %v1100 = vshrl.u32 %v1099, 7
      %v1101 = vsub.s32 3, %v1100
      %v1102 = vrot.slane %v1086, %v1101
      %v1103 = vlaneseq
      %v1104 = vshrl.u32 %v1103, 7
      %v1105 = vsub.s32 4, %v1104
      %v1106 = vrot.slane %v1086, %v1105
      %v1107 = vlaneseq
      %v1108 = vshrl.u32 %v1107, 7
      %v1109 = vsub.s32 5, %v1108
      %v1110 = vrot.slane %v1086, %v1109
      %vm1111 = vcmp.eq.s32.totalorder %v1090, 1
      %vm1112 = vcmp.eq.s32.totalorder %v1094, 1
      %vm1113 = vcmp.eq.s32.totalorder %v1098, 1
      %vm1114 = vcmp.eq.s32.totalorder %v1102, 1
      %vm1115 = vcmp.eq.s32.totalorder %v1106, 1
      %vm1116 = vcmp.eq.s32.totalorder %v1110, 1
      %1118 = vrot.lane.b32.xlu0 %v1084, 6
      %v1119 = vpop.permute.xlu0 %1118
      %1126 = vrot.lane.b32.xlu0 %v1079, 6
      %v1127 = vpop.permute.xlu0 %1126
      %1128 = vrot.lane.b32.xlu0 %v1080, 6
      %v1129 = vpop.permute.xlu0 %1128
      %1130 = vrot.lane.b32.xlu0 %v1081, 6
      %v1131 = vpop.permute.xlu0 %1130
      %1132 = vrot.lane.b32.xlu0 %v1082, 6
      %v1133 = vpop.permute.xlu0 %1132
      %1134 = vrot.lane.b32.xlu0 %v1083, 6
      %v1135 = vpop.permute.xlu0 %1134
      %vm1136 = vcmask 48128
      %v1137 = vsel %vm1136, %v1127, %v1129
      %v1138 = vsel %vm1136, %v1129, %v1131
      %v1139 = vsel %vm1136, %v1131, %v1133
      %v1140 = vsel %vm1136, %v1133, %v1135
      %v1141 = vsel %vm1136, %v1135, %v1119
      %v1148 = vsel %vm1136, %v1119, %v1127
      %v1149 = vsel %vm1111, %v1148, %v1079
      %v1150 = vsel %vm1112, %v1137, %v1080
      %v1151 = vsel %vm1113, %v1138, %v1081
      %v1152 = vsel %vm1114, %v1139, %v1082
      %v1153 = vsel %vm1115, %v1140, %v1083
      %v1154 = vsel %vm1116, %v1141, %v1084
      %v1155 = vld [vmem:[%s2] sm:$0xff]
      %v1156 = vld [vmem:[%s2 + $0x8] sm:$0xff]
      %v1157 = vld [vmem:[%s2 + $0x10] sm:$0xff]
      %v1158 = vld [vmem:[%s2 + $0x18] sm:$0xff]
      %v1159 = vld [vmem:[%s3] sm:$0xff]
      %1161 = vrot.lane.b32.xlu0 %v1154, 75
      %v1162 = vpop.permute.xlu0 %1161
      %1169 = vrot.lane.b32.xlu0 %v1149, 75
      %v1170 = vpop.permute.xlu0 %1169
      %1171 = vrot.lane.b32.xlu0 %v1150, 75
      %v1172 = vpop.permute.xlu0 %1171
      %1173 = vrot.lane.b32.xlu0 %v1151, 75
      %v1174 = vpop.permute.xlu0 %1173
      %1175 = vrot.lane.b32.xlu0 %v1152, 75
      %v1176 = vpop.permute.xlu0 %1175
      %1177 = vrot.lane.b32.xlu0 %v1153, 75
      %v1178 = vpop.permute.xlu0 %1177
      %vm1179 = vcmask 613376
      %v1180 = vsel %vm1179, %v1170, %v1172
      %v1181 = vsel %vm1179, %v1172, %v1174
      %v1182 = vsel %vm1179, %v1174, %v1176
      %v1183 = vsel %vm1179, %v1176, %v1178
      %v1184 = vsel %vm1179, %v1178, %v1162
      %v1191 = vsel %vm1179, %v1162, %v1170
      %1192 = vrot.lane.b32.xlu0 %v1154, 74
      %v1193 = vpop.permute.xlu0 %1192
      %1195 = vrot.lane.b32.xlu0 %v1149, 74
      %v1196 = vpop.permute.xlu0 %1195
      %1197 = vrot.lane.b32.xlu0 %v1150, 74
      %v1198 = vpop.permute.xlu0 %1197
      %1199 = vrot.lane.b32.xlu0 %v1151, 74
      %v1200 = vpop.permute.xlu0 %1199
      %1201 = vrot.lane.b32.xlu0 %v1152, 74
      %v1202 = vpop.permute.xlu0 %1201
      %1203 = vrot.lane.b32.xlu0 %v1153, 74
      %v1204 = vpop.permute.xlu0 %1203
      %vm1205 = vcmask 605184
      %v1206 = vsel %vm1205, %v1196, %v1198
      %v1207 = vsel %vm1205, %v1198, %v1200
      %v1208 = vsel %vm1205, %v1200, %v1202
      %v1209 = vsel %vm1205, %v1202, %v1204
      %v1210 = vsel %vm1205, %v1204, %v1193
      %v1217 = vsel %vm1205, %v1193, %v1196
      %1218 = vrot.lane.b32.xlu0 %v1154, 73
      %v1219 = vpop.permute.xlu0 %1218
      %1221 = vrot.lane.b32.xlu0 %v1149, 73
      %v1222 = vpop.permute.xlu0 %1221
      %1223 = vrot.lane.b32.xlu0 %v1150, 73
      %v1224 = vpop.permute.xlu0 %1223
      %1225 = vrot.lane.b32.xlu0 %v1151, 73
      %v1226 = vpop.permute.xlu0 %1225
      %1227 = vrot.lane.b32.xlu0 %v1152, 73
      %v1228 = vpop.permute.xlu0 %1227
      %1229 = vrot.lane.b32.xlu0 %v1153, 73
      %v1230 = vpop.permute.xlu0 %1229
      %vm1231 = vcmask 596992
      %v1232 = vsel %vm1231, %v1222, %v1224
      %v1233 = vsel %vm1231, %v1224, %v1226
      %v1234 = vsel %vm1231, %v1226, %v1228
      %v1235 = vsel %vm1231, %v1228, %v1230
      %v1236 = vsel %vm1231, %v1230, %v1219
      %v1243 = vsel %vm1231, %v1219, %v1222
      %1244 = vrot.lane.b32.xlu0 %v1154, 72
      %v1245 = vpop.permute.xlu0 %1244
      %1247 = vrot.lane.b32.xlu0 %v1149, 72
      %v1248 = vpop.permute.xlu0 %1247
      %1249 = vrot.lane.b32.xlu0 %v1150, 72
      %v1250 = vpop.permute.xlu0 %1249
      %1251 = vrot.lane.b32.xlu0 %v1151, 72
      %v1252 = vpop.permute.xlu0 %1251
      %1253 = vrot.lane.b32.xlu0 %v1152, 72
      %v1254 = vpop.permute.xlu0 %1253
      %1255 = vrot.lane.b32.xlu0 %v1153, 72
      %v1256 = vpop.permute.xlu0 %1255
      %vm1257 = vcmask 588800
      %v1258 = vsel %vm1257, %v1248, %v1250
      %v1259 = vsel %vm1257, %v1250, %v1252
      %v1260 = vsel %vm1257, %v1252, %v1254
      %v1261 = vsel %vm1257, %v1254, %v1256
      %v1262 = vsel %vm1257, %v1256, %v1245
      %v1269 = vsel %vm1257, %v1245, %v1248
      %1270 = vrot.lane.b32.xlu0 %v1154, 71
      %v1271 = vpop.permute.xlu0 %1270
      %1273 = vrot.lane.b32.xlu0 %v1149, 71
      %v1274 = vpop.permute.xlu0 %1273
      %1275 = vrot.lane.b32.xlu0 %v1150, 71
      %v1276 = vpop.permute.xlu0 %1275
      %1277 = vrot.lane.b32.xlu0 %v1151, 71
      %v1278 = vpop.permute.xlu0 %1277
      %1279 = vrot.lane.b32.xlu0 %v1152, 71
      %v1280 = vpop.permute.xlu0 %1279
      %1281 = vrot.lane.b32.xlu0 %v1153, 71
      %v1282 = vpop.permute.xlu0 %1281
      %vm1283 = vcmask 580608
      %v1284 = vsel %vm1283, %v1274, %v1276
      %v1285 = vsel %vm1283, %v1276, %v1278
      %v1286 = vsel %vm1283, %v1278, %v1280
      %v1287 = vsel %vm1283, %v1280, %v1282
      %v1288 = vsel %vm1283, %v1282, %v1271
      %v1295 = vsel %vm1283, %v1271, %v1274
      %1296 = vrot.lane.b32.xlu0 %v1154, 70
      %v1297 = vpop.permute.xlu0 %1296
      %1299 = vrot.lane.b32.xlu0 %v1149, 70
      %v1300 = vpop.permute.xlu0 %1299
      %1301 = vrot.lane.b32.xlu0 %v1150, 70
      %v1302 = vpop.permute.xlu0 %1301
      %1303 = vrot.lane.b32.xlu0 %v1151, 70
      %v1304 = vpop.permute.xlu0 %1303
      %1305 = vrot.lane.b32.xlu0 %v1152, 70
      %v1306 = vpop.permute.xlu0 %1305
      %1307 = vrot.lane.b32.xlu0 %v1153, 70
      %v1308 = vpop.permute.xlu0 %1307
      %vm1309 = vcmask 572416
      %v1310 = vsel %vm1309, %v1300, %v1302
      %v1311 = vsel %vm1309, %v1302, %v1304
      %v1312 = vsel %vm1309, %v1304, %v1306
      %v1313 = vsel %vm1309, %v1306, %v1308
      %v1314 = vsel %vm1309, %v1308, %v1297
      %v1321 = vsel %vm1309, %v1297, %v1300
      %1322 = vrot.lane.b32.xlu0 %v1154, 69
      %v1323 = vpop.permute.xlu0 %1322
      %1325 = vrot.lane.b32.xlu0 %v1149, 69
      %v1326 = vpop.permute.xlu0 %1325
      %1327 = vrot.lane.b32.xlu0 %v1150, 69
      %v1328 = vpop.permute.xlu0 %1327
      %1329 = vrot.lane.b32.xlu0 %v1151, 69
      %v1330 = vpop.permute.xlu0 %1329
      %1331 = vrot.lane.b32.xlu0 %v1152, 69
      %v1332 = vpop.permute.xlu0 %1331
      %1333 = vrot.lane.b32.xlu0 %v1153, 69
      %v1334 = vpop.permute.xlu0 %1333
      %vm1335 = vcmask 564224
      %v1336 = vsel %vm1335, %v1326, %v1328
      %v1337 = vsel %vm1335, %v1328, %v1330
      %v1338 = vsel %vm1335, %v1330, %v1332
      %v1339 = vsel %vm1335, %v1332, %v1334
      %v1340 = vsel %vm1335, %v1334, %v1323
      %v1347 = vsel %vm1335, %v1323, %v1326
      %1348 = vrot.lane.b32.xlu0 %v1154, 51
      %v1349 = vpop.permute.xlu0 %1348
      %1351 = vrot.lane.b32.xlu0 %v1149, 51
      %v1352 = vpop.permute.xlu0 %1351
      %1353 = vrot.lane.b32.xlu0 %v1150, 51
      %v1354 = vpop.permute.xlu0 %1353
      %1355 = vrot.lane.b32.xlu0 %v1151, 51
      %v1356 = vpop.permute.xlu0 %1355
      %1357 = vrot.lane.b32.xlu0 %v1152, 51
      %v1358 = vpop.permute.xlu0 %1357
      %1359 = vrot.lane.b32.xlu0 %v1153, 51
      %v1360 = vpop.permute.xlu0 %1359
      %vm1361 = vcmask 416768
      %v1362 = vsel %vm1361, %v1352, %v1354
      %v1363 = vsel %vm1361, %v1354, %v1356
      %v1364 = vsel %vm1361, %v1356, %v1358
      %v1365 = vsel %vm1361, %v1358, %v1360
      %v1366 = vsel %vm1361, %v1360, %v1349
      %v1373 = vsel %vm1361, %v1349, %v1352
      %1374 = vrot.lane.b32.xlu0 %v1154, 50
      %v1375 = vpop.permute.xlu0 %1374
      %1377 = vrot.lane.b32.xlu0 %v1149, 50
      %v1378 = vpop.permute.xlu0 %1377
      %1379 = vrot.lane.b32.xlu0 %v1150, 50
      %v1380 = vpop.permute.xlu0 %1379
      %1381 = vrot.lane.b32.xlu0 %v1151, 50
      %v1382 = vpop.permute.xlu0 %1381
      %1383 = vrot.lane.b32.xlu0 %v1152, 50
      %v1384 = vpop.permute.xlu0 %1383
      %1385 = vrot.lane.b32.xlu0 %v1153, 50
      %v1386 = vpop.permute.xlu0 %1385
      %vm1387 = vcmask 408576
      %v1388 = vsel %vm1387, %v1378, %v1380
      %v1389 = vsel %vm1387, %v1380, %v1382
      %v1390 = vsel %vm1387, %v1382, %v1384
      %v1391 = vsel %vm1387, %v1384, %v1386
      %v1392 = vsel %vm1387, %v1386, %v1375
      %v1399 = vsel %vm1387, %v1375, %v1378
      %1400 = vrot.lane.b32.xlu0 %v1154, 49
      %v1401 = vpop.permute.xlu0 %1400
      %1403 = vrot.lane.b32.xlu0 %v1149, 49
      %v1404 = vpop.permute.xlu0 %1403
      %1405 = vrot.lane.b32.xlu0 %v1150, 49
      %v1406 = vpop.permute.xlu0 %1405
      %1407 = vrot.lane.b32.xlu0 %v1151, 49
      %v1408 = vpop.permute.xlu0 %1407
      %1409 = vrot.lane.b32.xlu0 %v1152, 49
      %v1410 = vpop.permute.xlu0 %1409
      %1411 = vrot.lane.b32.xlu0 %v1153, 49
      %v1412 = vpop.permute.xlu0 %1411
      %vm1413 = vcmask 400384
      %v1414 = vsel %vm1413, %v1404, %v1406
      %v1415 = vsel %vm1413, %v1406, %v1408
      %v1416 = vsel %vm1413, %v1408, %v1410
      %v1417 = vsel %vm1413, %v1410, %v1412
      %v1418 = vsel %vm1413, %v1412, %v1401
      %v1425 = vsel %vm1413, %v1401, %v1404
      %1426 = vrot.lane.b32.xlu0 %v1154, 48
      %v1427 = vpop.permute.xlu0 %1426
      %1429 = vrot.lane.b32.xlu0 %v1149, 48
      %v1430 = vpop.permute.xlu0 %1429
      %1431 = vrot.lane.b32.xlu0 %v1150, 48
      %v1432 = vpop.permute.xlu0 %1431
      %1433 = vrot.lane.b32.xlu0 %v1151, 48
      %v1434 = vpop.permute.xlu0 %1433
      %1435 = vrot.lane.b32.xlu0 %v1152, 48
      %v1436 = vpop.permute.xlu0 %1435
      %1437 = vrot.lane.b32.xlu0 %v1153, 48
      %v1438 = vpop.permute.xlu0 %1437
      %v1439 = vsel %vm436, %v1430, %v1432
      %v1440 = vsel %vm436, %v1432, %v1434
      %v1441 = vsel %vm436, %v1434, %v1436
      %v1442 = vsel %vm436, %v1436, %v1438
      %v1443 = vsel %vm436, %v1438, %v1427
      %v1450 = vsel %vm436, %v1427, %v1430
      %1451 = vrot.lane.b32.xlu0 %v1154, 47
      %v1452 = vpop.permute.xlu0 %1451
      %1454 = vrot.lane.b32.xlu0 %v1149, 47
      %v1455 = vpop.permute.xlu0 %1454
      %1456 = vrot.lane.b32.xlu0 %v1150, 47
      %v1457 = vpop.permute.xlu0 %1456
      %1458 = vrot.lane.b32.xlu0 %v1151, 47
      %v1459 = vpop.permute.xlu0 %1458
      %1460 = vrot.lane.b32.xlu0 %v1152, 47
      %v1461 = vpop.permute.xlu0 %1460
      %1462 = vrot.lane.b32.xlu0 %v1153, 47
      %v1463 = vpop.permute.xlu0 %1462
      %vm1464 = vcmask 384000
      %v1465 = vsel %vm1464, %v1455, %v1457
      %v1466 = vsel %vm1464, %v1457, %v1459
      %v1467 = vsel %vm1464, %v1459, %v1461
      %v1468 = vsel %vm1464, %v1461, %v1463
      %v1469 = vsel %vm1464, %v1463, %v1452
      %v1476 = vsel %vm1464, %v1452, %v1455
      %1477 = vrot.lane.b32.xlu0 %v1154, 46
      %v1478 = vpop.permute.xlu0 %1477
      %1480 = vrot.lane.b32.xlu0 %v1149, 46
      %v1481 = vpop.permute.xlu0 %1480
      %1482 = vrot.lane.b32.xlu0 %v1150, 46
      %v1483 = vpop.permute.xlu0 %1482
      %1484 = vrot.lane.b32.xlu0 %v1151, 46
      %v1485 = vpop.permute.xlu0 %1484
      %1486 = vrot.lane.b32.xlu0 %v1152, 46
      %v1487 = vpop.permute.xlu0 %1486
      %1488 = vrot.lane.b32.xlu0 %v1153, 46
      %v1489 = vpop.permute.xlu0 %1488
      %vm1490 = vcmask 375808
      %v1491 = vsel %vm1490, %v1481, %v1483
      %v1492 = vsel %vm1490, %v1483, %v1485
      %v1493 = vsel %vm1490, %v1485, %v1487
      %v1494 = vsel %vm1490, %v1487, %v1489
      %v1495 = vsel %vm1490, %v1489, %v1478
      %v1502 = vsel %vm1490, %v1478, %v1481
      %1503 = vrot.lane.b32.xlu0 %v1154, 45
      %v1504 = vpop.permute.xlu0 %1503
      %1506 = vrot.lane.b32.xlu0 %v1149, 45
      %v1507 = vpop.permute.xlu0 %1506
      %1508 = vrot.lane.b32.xlu0 %v1150, 45
      %v1509 = vpop.permute.xlu0 %1508
      %1510 = vrot.lane.b32.xlu0 %v1151, 45
      %v1511 = vpop.permute.xlu0 %1510
      %1512 = vrot.lane.b32.xlu0 %v1152, 45
      %v1513 = vpop.permute.xlu0 %1512
      %1514 = vrot.lane.b32.xlu0 %v1153, 45
      %v1515 = vpop.permute.xlu0 %1514
      %vm1516 = vcmask 367616
      %v1517 = vsel %vm1516, %v1507, %v1509
      %v1518 = vsel %vm1516, %v1509, %v1511
      %v1519 = vsel %vm1516, %v1511, %v1513
      %v1520 = vsel %vm1516, %v1513, %v1515
      %v1521 = vsel %vm1516, %v1515, %v1504
      %v1528 = vsel %vm1516, %v1504, %v1507
      %1529 = vrot.lane.b32.xlu0 %v1154, 27
      %v1530 = vpop.permute.xlu0 %1529
      %1532 = vrot.lane.b32.xlu0 %v1149, 27
      %v1533 = vpop.permute.xlu0 %1532
      %1534 = vrot.lane.b32.xlu0 %v1150, 27
      %v1535 = vpop.permute.xlu0 %1534
      %1536 = vrot.lane.b32.xlu0 %v1151, 27
      %v1537 = vpop.permute.xlu0 %1536
      %1538 = vrot.lane.b32.xlu0 %v1152, 27
      %v1539 = vpop.permute.xlu0 %1538
      %1540 = vrot.lane.b32.xlu0 %v1153, 27
      %v1541 = vpop.permute.xlu0 %1540
      %vm1542 = vcmask 220160
      %v1543 = vsel %vm1542, %v1533, %v1535
      %v1544 = vsel %vm1542, %v1535, %v1537
      %v1545 = vsel %vm1542, %v1537, %v1539
      %v1546 = vsel %vm1542, %v1539, %v1541
      %v1547 = vsel %vm1542, %v1541, %v1530
      %v1554 = vsel %vm1542, %v1530, %v1533
      %1555 = vrot.lane.b32.xlu0 %v1154, 26
      %v1556 = vpop.permute.xlu0 %1555
      %1558 = vrot.lane.b32.xlu0 %v1149, 26
      %v1559 = vpop.permute.xlu0 %1558
      %1560 = vrot.lane.b32.xlu0 %v1150, 26
      %v1561 = vpop.permute.xlu0 %1560
      %1562 = vrot.lane.b32.xlu0 %v1151, 26
      %v1563 = vpop.permute.xlu0 %1562
      %1564 = vrot.lane.b32.xlu0 %v1152, 26
      %v1565 = vpop.permute.xlu0 %1564
      %1566 = vrot.lane.b32.xlu0 %v1153, 26
      %v1567 = vpop.permute.xlu0 %1566
      %vm1568 = vcmask 211968
      %v1569 = vsel %vm1568, %v1559, %v1561
      %v1570 = vsel %vm1568, %v1561, %v1563
      %v1571 = vsel %vm1568, %v1563, %v1565
      %v1572 = vsel %vm1568, %v1565, %v1567
      %v1573 = vsel %vm1568, %v1567, %v1556
      %v1580 = vsel %vm1568, %v1556, %v1559
      %1581 = vrot.lane.b32.xlu0 %v1154, 25
      %v1582 = vpop.permute.xlu0 %1581
      %1584 = vrot.lane.b32.xlu0 %v1149, 25
      %v1585 = vpop.permute.xlu0 %1584
      %1586 = vrot.lane.b32.xlu0 %v1150, 25
      %v1587 = vpop.permute.xlu0 %1586
      %1588 = vrot.lane.b32.xlu0 %v1151, 25
      %v1589 = vpop.permute.xlu0 %1588
      %1590 = vrot.lane.b32.xlu0 %v1152, 25
      %v1591 = vpop.permute.xlu0 %1590
      %1592 = vrot.lane.b32.xlu0 %v1153, 25
      %v1593 = vpop.permute.xlu0 %1592
      %vm1594 = vcmask 203776
      %v1595 = vsel %vm1594, %v1585, %v1587
      %v1596 = vsel %vm1594, %v1587, %v1589
      %v1597 = vsel %vm1594, %v1589, %v1591
      %v1598 = vsel %vm1594, %v1591, %v1593
      %v1599 = vsel %vm1594, %v1593, %v1582
      %v1606 = vsel %vm1594, %v1582, %v1585
      %1607 = vrot.lane.b32.xlu0 %v1154, 24
      %v1608 = vpop.permute.xlu0 %1607
      %1610 = vrot.lane.b32.xlu0 %v1149, 24
      %v1611 = vpop.permute.xlu0 %1610
      %1612 = vrot.lane.b32.xlu0 %v1150, 24
      %v1613 = vpop.permute.xlu0 %1612
      %1614 = vrot.lane.b32.xlu0 %v1151, 24
      %v1615 = vpop.permute.xlu0 %1614
      %1616 = vrot.lane.b32.xlu0 %v1152, 24
      %v1617 = vpop.permute.xlu0 %1616
      %1618 = vrot.lane.b32.xlu0 %v1153, 24
      %v1619 = vpop.permute.xlu0 %1618
      %vm1620 = vcmask 195584
      %v1621 = vsel %vm1620, %v1611, %v1613
      %v1622 = vsel %vm1620, %v1613, %v1615
      %v1623 = vsel %vm1620, %v1615, %v1617
      %v1624 = vsel %vm1620, %v1617, %v1619
      %v1625 = vsel %vm1620, %v1619, %v1608
      %v1632 = vsel %vm1620, %v1608, %v1611
      %1633 = vrot.lane.b32.xlu0 %v1154, 23
      %v1634 = vpop.permute.xlu0 %1633
      %1636 = vrot.lane.b32.xlu0 %v1149, 23
      %v1637 = vpop.permute.xlu0 %1636
      %1638 = vrot.lane.b32.xlu0 %v1150, 23
      %v1639 = vpop.permute.xlu0 %1638
      %1640 = vrot.lane.b32.xlu0 %v1151, 23
      %v1641 = vpop.permute.xlu0 %1640
      %1642 = vrot.lane.b32.xlu0 %v1152, 23
      %v1643 = vpop.permute.xlu0 %1642
      %1644 = vrot.lane.b32.xlu0 %v1153, 23
      %v1645 = vpop.permute.xlu0 %1644
      %vm1646 = vcmask 187392
      %v1647 = vsel %vm1646, %v1637, %v1639
      %v1648 = vsel %vm1646, %v1639, %v1641
      %v1649 = vsel %vm1646, %v1641, %v1643
      %v1650 = vsel %vm1646, %v1643, %v1645
      %v1651 = vsel %vm1646, %v1645, %v1634
      %v1658 = vsel %vm1646, %v1634, %v1637
      %1659 = vrot.lane.b32.xlu0 %v1154, 22
      %v1660 = vpop.permute.xlu0 %1659
      %1662 = vrot.lane.b32.xlu0 %v1149, 22
      %v1663 = vpop.permute.xlu0 %1662
      %1664 = vrot.lane.b32.xlu0 %v1150, 22
      %v1665 = vpop.permute.xlu0 %1664
      %1666 = vrot.lane.b32.xlu0 %v1151, 22
      %v1667 = vpop.permute.xlu0 %1666
      %1668 = vrot.lane.b32.xlu0 %v1152, 22
      %v1669 = vpop.permute.xlu0 %1668
      %1670 = vrot.lane.b32.xlu0 %v1153, 22
      %v1671 = vpop.permute.xlu0 %1670
      %vm1672 = vcmask 179200
      %v1673 = vsel %vm1672, %v1663, %v1665
      %v1674 = vsel %vm1672, %v1665, %v1667
      %v1675 = vsel %vm1672, %v1667, %v1669
      %v1676 = vsel %vm1672, %v1669, %v1671
      %v1677 = vsel %vm1672, %v1671, %v1660
      %v1684 = vsel %vm1672, %v1660, %v1663
      %1685 = vrot.lane.b32.xlu0 %v1154, 21
      %v1686 = vpop.permute.xlu0 %1685
      %1688 = vrot.lane.b32.xlu0 %v1149, 21
      %v1689 = vpop.permute.xlu0 %1688
      %1690 = vrot.lane.b32.xlu0 %v1150, 21
      %v1691 = vpop.permute.xlu0 %1690
      %1692 = vrot.lane.b32.xlu0 %v1151, 21
      %v1693 = vpop.permute.xlu0 %1692
      %1694 = vrot.lane.b32.xlu0 %v1152, 21
      %v1695 = vpop.permute.xlu0 %1694
      %1696 = vrot.lane.b32.xlu0 %v1153, 21
      %v1697 = vpop.permute.xlu0 %1696
      %vm1698 = vcmask 171008
      %v1699 = vsel %vm1698, %v1689, %v1691
      %v1700 = vsel %vm1698, %v1691, %v1693
      %v1701 = vsel %vm1698, %v1693, %v1695
      %v1702 = vsel %vm1698, %v1695, %v1697
      %v1703 = vsel %vm1698, %v1697, %v1686
      %v1710 = vsel %vm1698, %v1686, %v1689
      %1711 = vrot.lane.b32.xlu0 %v1154, 3
      %v1712 = vpop.permute.xlu0 %1711
      %1714 = vrot.lane.b32.xlu0 %v1149, 3
      %v1715 = vpop.permute.xlu0 %1714
      %1716 = vrot.lane.b32.xlu0 %v1150, 3
      %v1717 = vpop.permute.xlu0 %1716
      %1718 = vrot.lane.b32.xlu0 %v1151, 3
      %v1719 = vpop.permute.xlu0 %1718
      %1720 = vrot.lane.b32.xlu0 %v1152, 3
      %v1721 = vpop.permute.xlu0 %1720
      %1722 = vrot.lane.b32.xlu0 %v1153, 3
      %v1723 = vpop.permute.xlu0 %1722
      %vm1724 = vcmask 23552
      %v1725 = vsel %vm1724, %v1715, %v1717
      %v1726 = vsel %vm1724, %v1717, %v1719
      %v1727 = vsel %vm1724, %v1719, %v1721
      %v1728 = vsel %vm1724, %v1721, %v1723
      %v1729 = vsel %vm1724, %v1723, %v1712
      %v1736 = vsel %vm1724, %v1712, %v1715
      %1737 = vrot.lane.b32.xlu0 %v1154, 2
      %v1738 = vpop.permute.xlu0 %1737
      %1740 = vrot.lane.b32.xlu0 %v1149, 2
      %v1741 = vpop.permute.xlu0 %1740
      %1742 = vrot.lane.b32.xlu0 %v1150, 2
      %v1743 = vpop.permute.xlu0 %1742
      %1744 = vrot.lane.b32.xlu0 %v1151, 2
      %v1745 = vpop.permute.xlu0 %1744
      %1746 = vrot.lane.b32.xlu0 %v1152, 2
      %v1747 = vpop.permute.xlu0 %1746
      %1748 = vrot.lane.b32.xlu0 %v1153, 2
      %v1749 = vpop.permute.xlu0 %1748
      %v1750 = vsel %vm856, %v1741, %v1743
      %v1751 = vsel %vm856, %v1743, %v1745
      %v1752 = vsel %vm856, %v1745, %v1747
      %v1753 = vsel %vm856, %v1747, %v1749
      %v1754 = vsel %vm856, %v1749, %v1738
      %v1761 = vsel %vm856, %v1738, %v1741
      %1762 = vrot.lane.b32.xlu0 %v1154, 1
      %v1763 = vpop.permute.xlu0 %1762
      %1765 = vrot.lane.b32.xlu0 %v1149, 1
      %v1766 = vpop.permute.xlu0 %1765
      %1767 = vrot.lane.b32.xlu0 %v1150, 1
      %v1768 = vpop.permute.xlu0 %1767
      %1769 = vrot.lane.b32.xlu0 %v1151, 1
      %v1770 = vpop.permute.xlu0 %1769
      %1771 = vrot.lane.b32.xlu0 %v1152, 1
      %v1772 = vpop.permute.xlu0 %1771
      %1773 = vrot.lane.b32.xlu0 %v1153, 1
      %v1774 = vpop.permute.xlu0 %1773
      %vm1775 = vcmask 7168
      %v1776 = vsel %vm1775, %v1766, %v1768
      %v1777 = vsel %vm1775, %v1768, %v1770
      %v1778 = vsel %vm1775, %v1770, %v1772
      %v1779 = vsel %vm1775, %v1772, %v1774
      %v1780 = vsel %vm1775, %v1774, %v1763
      %v1787 = vsel %vm1775, %v1763, %v1766
      %1788 = vrot.lane.b32.xlu0 %v1149, 127
      %v1789 = vpop.permute.xlu0 %1788
      %1790 = vrot.lane.b32.xlu0 %v1150, 127
      %v1791 = vpop.permute.xlu0 %1790
      %1792 = vrot.lane.b32.xlu0 %v1151, 127
      %v1793 = vpop.permute.xlu0 %1792
      %1794 = vrot.lane.b32.xlu0 %v1152, 127
      %v1795 = vpop.permute.xlu0 %1794
      %1796 = vrot.lane.b32.xlu0 %v1153, 127
      %v1797 = vpop.permute.xlu0 %1796
      %1798 = vrot.lane.b32.xlu0 %v1154, 127
      %v1799 = vpop.permute.xlu0 %1798
      %vm1800 = vcmask 1039360
      %v1801 = vsel %vm1800, %v1789, %v1791
      %v1802 = vsel %vm1800, %v1791, %v1793
      %v1803 = vsel %vm1800, %v1793, %v1795
      %v1804 = vsel %vm1800, %v1795, %v1797
      %v1805 = vsel %vm1800, %v1797, %v1799
      %v1813 = vsel %vm1800, %v1799, %v1789
      %1814 = vrot.lane.b32.xlu0 %v1149, 126
      %v1815 = vpop.permute.xlu0 %1814
      %1816 = vrot.lane.b32.xlu0 %v1150, 126
      %v1817 = vpop.permute.xlu0 %1816
      %1818 = vrot.lane.b32.xlu0 %v1151, 126
      %v1819 = vpop.permute.xlu0 %1818
      %1820 = vrot.lane.b32.xlu0 %v1152, 126
      %v1821 = vpop.permute.xlu0 %1820
      %1822 = vrot.lane.b32.xlu0 %v1153, 126
      %v1823 = vpop.permute.xlu0 %1822
      %1824 = vrot.lane.b32.xlu0 %v1154, 126
      %v1825 = vpop.permute.xlu0 %1824
      %v1826 = vsel %vm785, %v1815, %v1817
      %v1827 = vsel %vm785, %v1817, %v1819
      %v1828 = vsel %vm785, %v1819, %v1821
      %v1829 = vsel %vm785, %v1821, %v1823
      %v1830 = vsel %vm785, %v1823, %v1825
      %v1838 = vsel %vm785, %v1825, %v1815
      %1839 = vrot.lane.b32.xlu0 %v1149, 125
      %v1840 = vpop.permute.xlu0 %1839
      %1841 = vrot.lane.b32.xlu0 %v1150, 125
      %v1842 = vpop.permute.xlu0 %1841
      %1843 = vrot.lane.b32.xlu0 %v1151, 125
      %v1844 = vpop.permute.xlu0 %1843
      %1845 = vrot.lane.b32.xlu0 %v1152, 125
      %v1846 = vpop.permute.xlu0 %1845
      %1847 = vrot.lane.b32.xlu0 %v1153, 125
      %v1848 = vpop.permute.xlu0 %1847
      %1849 = vrot.lane.b32.xlu0 %v1154, 125
      %v1850 = vpop.permute.xlu0 %1849
      %vm1851 = vcmask 1022976
      %v1852 = vsel %vm1851, %v1840, %v1842
      %v1853 = vsel %vm1851, %v1842, %v1844
      %v1854 = vsel %vm1851, %v1844, %v1846
      %v1855 = vsel %vm1851, %v1846, %v1848
      %v1856 = vsel %vm1851, %v1848, %v1850
      %v1864 = vsel %vm1851, %v1850, %v1840
      %1865 = vrot.lane.b32.xlu0 %v1149, 107
      %v1866 = vpop.permute.xlu0 %1865
      %1867 = vrot.lane.b32.xlu0 %v1150, 107
      %v1868 = vpop.permute.xlu0 %1867
      %1869 = vrot.lane.b32.xlu0 %v1151, 107
      %v1870 = vpop.permute.xlu0 %1869
      %1871 = vrot.lane.b32.xlu0 %v1152, 107
      %v1872 = vpop.permute.xlu0 %1871
      %1873 = vrot.lane.b32.xlu0 %v1153, 107
      %v1874 = vpop.permute.xlu0 %1873
      %1875 = vrot.lane.b32.xlu0 %v1154, 107
      %v1876 = vpop.permute.xlu0 %1875
      %vm1877 = vcmask 875520
      %v1878 = vsel %vm1877, %v1866, %v1868
      %v1879 = vsel %vm1877, %v1868, %v1870
      %v1880 = vsel %vm1877, %v1870, %v1872
      %v1881 = vsel %vm1877, %v1872, %v1874
      %v1882 = vsel %vm1877, %v1874, %v1876
      %v1890 = vsel %vm1877, %v1876, %v1866
      %1891 = vrot.lane.b32.xlu0 %v1149, 106
      %v1892 = vpop.permute.xlu0 %1891
      %1893 = vrot.lane.b32.xlu0 %v1150, 106
      %v1894 = vpop.permute.xlu0 %1893
      %1895 = vrot.lane.b32.xlu0 %v1151, 106
      %v1896 = vpop.permute.xlu0 %1895
      %1897 = vrot.lane.b32.xlu0 %v1152, 106
      %v1898 = vpop.permute.xlu0 %1897
      %1899 = vrot.lane.b32.xlu0 %v1153, 106
      %v1900 = vpop.permute.xlu0 %1899
      %1901 = vrot.lane.b32.xlu0 %v1154, 106
      %v1902 = vpop.permute.xlu0 %1901
      %vm1903 = vcmask 867328
      %v1904 = vsel %vm1903, %v1892, %v1894
      %v1905 = vsel %vm1903, %v1894, %v1896
      %v1906 = vsel %vm1903, %v1896, %v1898
      %v1907 = vsel %vm1903, %v1898, %v1900
      %v1908 = vsel %vm1903, %v1900, %v1902
      %v1916 = vsel %vm1903, %v1902, %v1892
      %1917 = vrot.lane.b32.xlu0 %v1149, 105
      %v1918 = vpop.permute.xlu0 %1917
      %1919 = vrot.lane.b32.xlu0 %v1150, 105
      %v1920 = vpop.permute.xlu0 %1919
      %1921 = vrot.lane.b32.xlu0 %v1151, 105
      %v1922 = vpop.permute.xlu0 %1921
      %1923 = vrot.lane.b32.xlu0 %v1152, 105
      %v1924 = vpop.permute.xlu0 %1923
      %1925 = vrot.lane.b32.xlu0 %v1153, 105
      %v1926 = vpop.permute.xlu0 %1925
      %1927 = vrot.lane.b32.xlu0 %v1154, 105
      %v1928 = vpop.permute.xlu0 %1927
      %vm1929 = vcmask 859136
      %v1930 = vsel %vm1929, %v1918, %v1920
      %v1931 = vsel %vm1929, %v1920, %v1922
      %v1932 = vsel %vm1929, %v1922, %v1924
      %v1933 = vsel %vm1929, %v1924, %v1926
      %v1934 = vsel %vm1929, %v1926, %v1928
      %v1942 = vsel %vm1929, %v1928, %v1918
      %1943 = vrot.lane.b32.xlu0 %v1149, 104
      %v1944 = vpop.permute.xlu0 %1943
      %1945 = vrot.lane.b32.xlu0 %v1150, 104
      %v1946 = vpop.permute.xlu0 %1945
      %1947 = vrot.lane.b32.xlu0 %v1151, 104
      %v1948 = vpop.permute.xlu0 %1947
      %1949 = vrot.lane.b32.xlu0 %v1152, 104
      %v1950 = vpop.permute.xlu0 %1949
      %1951 = vrot.lane.b32.xlu0 %v1153, 104
      %v1952 = vpop.permute.xlu0 %1951
      %1953 = vrot.lane.b32.xlu0 %v1154, 104
      %v1954 = vpop.permute.xlu0 %1953
      %vm1955 = vcmask 850944
      %v1956 = vsel %vm1955, %v1944, %v1946
      %v1957 = vsel %vm1955, %v1946, %v1948
      %v1958 = vsel %vm1955, %v1948, %v1950
      %v1959 = vsel %vm1955, %v1950, %v1952
      %v1960 = vsel %vm1955, %v1952, %v1954
      %v1968 = vsel %vm1955, %v1954, %v1944
      %1969 = vrot.lane.b32.xlu0 %v1149, 103
      %v1970 = vpop.permute.xlu0 %1969
      %1971 = vrot.lane.b32.xlu0 %v1150, 103
      %v1972 = vpop.permute.xlu0 %1971
      %1973 = vrot.lane.b32.xlu0 %v1151, 103
      %v1974 = vpop.permute.xlu0 %1973
      %1975 = vrot.lane.b32.xlu0 %v1152, 103
      %v1976 = vpop.permute.xlu0 %1975
      %1977 = vrot.lane.b32.xlu0 %v1153, 103
      %v1978 = vpop.permute.xlu0 %1977
      %1979 = vrot.lane.b32.xlu0 %v1154, 103
      %v1980 = vpop.permute.xlu0 %1979
      %vm1981 = vcmask 842752
      %v1982 = vsel %vm1981, %v1970, %v1972
      %v1983 = vsel %vm1981, %v1972, %v1974
      %v1984 = vsel %vm1981, %v1974, %v1976
      %v1985 = vsel %vm1981, %v1976, %v1978
      %v1986 = vsel %vm1981, %v1978, %v1980
      %v1994 = vsel %vm1981, %v1980, %v1970
      %1995 = vrot.lane.b32.xlu0 %v1149, 102
      %v1996 = vpop.permute.xlu0 %1995
      %1997 = vrot.lane.b32.xlu0 %v1150, 102
      %v1998 = vpop.permute.xlu0 %1997
      %1999 = vrot.lane.b32.xlu0 %v1151, 102
      %v2000 = vpop.permute.xlu0 %1999
      %2001 = vrot.lane.b32.xlu0 %v1152, 102
      %v2002 = vpop.permute.xlu0 %2001
      %2003 = vrot.lane.b32.xlu0 %v1153, 102
      %v2004 = vpop.permute.xlu0 %2003
      %2005 = vrot.lane.b32.xlu0 %v1154, 102
      %v2006 = vpop.permute.xlu0 %2005
      %vm2007 = vcmask 834560
      %v2008 = vsel %vm2007, %v1996, %v1998
      %v2009 = vsel %vm2007, %v1998, %v2000
      %v2010 = vsel %vm2007, %v2000, %v2002
      %v2011 = vsel %vm2007, %v2002, %v2004
      %v2012 = vsel %vm2007, %v2004, %v2006
      %v2020 = vsel %vm2007, %v2006, %v1996
      %2021 = vrot.lane.b32.xlu0 %v1149, 101
      %v2022 = vpop.permute.xlu0 %2021
      %2023 = vrot.lane.b32.xlu0 %v1150, 101
      %v2024 = vpop.permute.xlu0 %2023
      %2025 = vrot.lane.b32.xlu0 %v1151, 101
      %v2026 = vpop.permute.xlu0 %2025
      %2027 = vrot.lane.b32.xlu0 %v1152, 101
      %v2028 = vpop.permute.xlu0 %2027
      %2029 = vrot.lane.b32.xlu0 %v1153, 101
      %v2030 = vpop.permute.xlu0 %2029
      %2031 = vrot.lane.b32.xlu0 %v1154, 101
      %v2032 = vpop.permute.xlu0 %2031
      %vm2033 = vcmask 826368
      %v2034 = vsel %vm2033, %v2022, %v2024
      %v2035 = vsel %vm2033, %v2024, %v2026
      %v2036 = vsel %vm2033, %v2026, %v2028
      %v2037 = vsel %vm2033, %v2028, %v2030
      %v2038 = vsel %vm2033, %v2030, %v2032
      %v2046 = vsel %vm2033, %v2032, %v2022
      %2047 = vrot.lane.b32.xlu0 %v1149, 83
      %v2048 = vpop.permute.xlu0 %2047
      %2049 = vrot.lane.b32.xlu0 %v1150, 83
      %v2050 = vpop.permute.xlu0 %2049
      %2051 = vrot.lane.b32.xlu0 %v1151, 83
      %v2052 = vpop.permute.xlu0 %2051
      %2053 = vrot.lane.b32.xlu0 %v1152, 83
      %v2054 = vpop.permute.xlu0 %2053
      %2055 = vrot.lane.b32.xlu0 %v1153, 83
      %v2056 = vpop.permute.xlu0 %2055
      %2057 = vrot.lane.b32.xlu0 %v1154, 83
      %v2058 = vpop.permute.xlu0 %2057
      %vm2059 = vcmask 678912
      %v2060 = vsel %vm2059, %v2048, %v2050
      %v2061 = vsel %vm2059, %v2050, %v2052
      %v2062 = vsel %vm2059, %v2052, %v2054
      %v2063 = vsel %vm2059, %v2054, %v2056
      %v2064 = vsel %vm2059, %v2056, %v2058
      %v2072 = vsel %vm2059, %v2058, %v2048
      %2073 = vrot.lane.b32.xlu0 %v1149, 82
      %v2074 = vpop.permute.xlu0 %2073
      %2075 = vrot.lane.b32.xlu0 %v1150, 82
      %v2076 = vpop.permute.xlu0 %2075
      %2077 = vrot.lane.b32.xlu0 %v1151, 82
      %v2078 = vpop.permute.xlu0 %2077
      %2079 = vrot.lane.b32.xlu0 %v1152, 82
      %v2080 = vpop.permute.xlu0 %2079
      %2081 = vrot.lane.b32.xlu0 %v1153, 82
      %v2082 = vpop.permute.xlu0 %2081
      %2083 = vrot.lane.b32.xlu0 %v1154, 82
      %v2084 = vpop.permute.xlu0 %2083
      %vm2085 = vcmask 670720
      %v2086 = vsel %vm2085, %v2074, %v2076
      %v2087 = vsel %vm2085, %v2076, %v2078
      %v2088 = vsel %vm2085, %v2078, %v2080
      %v2089 = vsel %vm2085, %v2080, %v2082
      %v2090 = vsel %vm2085, %v2082, %v2084
      %v2098 = vsel %vm2085, %v2084, %v2074
      %2099 = vrot.lane.b32.xlu0 %v1149, 81
      %v2100 = vpop.permute.xlu0 %2099
      %2101 = vrot.lane.b32.xlu0 %v1150, 81
      %v2102 = vpop.permute.xlu0 %2101
      %2103 = vrot.lane.b32.xlu0 %v1151, 81
      %v2104 = vpop.permute.xlu0 %2103
      %2105 = vrot.lane.b32.xlu0 %v1152, 81
      %v2106 = vpop.permute.xlu0 %2105
      %2107 = vrot.lane.b32.xlu0 %v1153, 81
      %v2108 = vpop.permute.xlu0 %2107
      %2109 = vrot.lane.b32.xlu0 %v1154, 81
      %v2110 = vpop.permute.xlu0 %2109
      %vm2111 = vcmask 662528
      %v2112 = vsel %vm2111, %v2100, %v2102
      %v2113 = vsel %vm2111, %v2102, %v2104
      %v2114 = vsel %vm2111, %v2104, %v2106
      %v2115 = vsel %vm2111, %v2106, %v2108
      %v2116 = vsel %vm2111, %v2108, %v2110
      %v2124 = vsel %vm2111, %v2110, %v2100
      %2125 = vrot.lane.b32.xlu0 %v1149, 80
      %v2126 = vpop.permute.xlu0 %2125
      %2127 = vrot.lane.b32.xlu0 %v1150, 80
      %v2128 = vpop.permute.xlu0 %2127
      %2129 = vrot.lane.b32.xlu0 %v1151, 80
      %v2130 = vpop.permute.xlu0 %2129
      %2131 = vrot.lane.b32.xlu0 %v1152, 80
      %v2132 = vpop.permute.xlu0 %2131
      %2133 = vrot.lane.b32.xlu0 %v1153, 80
      %v2134 = vpop.permute.xlu0 %2133
      %2135 = vrot.lane.b32.xlu0 %v1154, 80
      %v2136 = vpop.permute.xlu0 %2135
      %v2137 = vsel %vm365, %v2126, %v2128
      %v2138 = vsel %vm365, %v2128, %v2130
      %v2139 = vsel %vm365, %v2130, %v2132
      %v2140 = vsel %vm365, %v2132, %v2134
      %v2141 = vsel %vm365, %v2134, %v2136
      %v2149 = vsel %vm365, %v2136, %v2126
      %2150 = vrot.lane.b32.xlu0 %v1149, 79
      %v2151 = vpop.permute.xlu0 %2150
      %2152 = vrot.lane.b32.xlu0 %v1150, 79
      %v2153 = vpop.permute.xlu0 %2152
      %2154 = vrot.lane.b32.xlu0 %v1151, 79
      %v2155 = vpop.permute.xlu0 %2154
      %2156 = vrot.lane.b32.xlu0 %v1152, 79
      %v2157 = vpop.permute.xlu0 %2156
      %2158 = vrot.lane.b32.xlu0 %v1153, 79
      %v2159 = vpop.permute.xlu0 %2158
      %2160 = vrot.lane.b32.xlu0 %v1154, 79
      %v2161 = vpop.permute.xlu0 %2160
      %vm2162 = vcmask 646144
      %v2163 = vsel %vm2162, %v2151, %v2153
      %v2164 = vsel %vm2162, %v2153, %v2155
      %v2165 = vsel %vm2162, %v2155, %v2157
      %v2166 = vsel %vm2162, %v2157, %v2159
      %v2167 = vsel %vm2162, %v2159, %v2161
      %v2175 = vsel %vm2162, %v2161, %v2151
      %2176 = vrot.lane.b32.xlu0 %v1149, 78
      %v2177 = vpop.permute.xlu0 %2176
      %2178 = vrot.lane.b32.xlu0 %v1150, 78
      %v2179 = vpop.permute.xlu0 %2178
      %2180 = vrot.lane.b32.xlu0 %v1151, 78
      %v2181 = vpop.permute.xlu0 %2180
      %2182 = vrot.lane.b32.xlu0 %v1152, 78
      %v2183 = vpop.permute.xlu0 %2182
      %2184 = vrot.lane.b32.xlu0 %v1153, 78
      %v2185 = vpop.permute.xlu0 %2184
      %2186 = vrot.lane.b32.xlu0 %v1154, 78
      %v2187 = vpop.permute.xlu0 %2186
      %vm2188 = vcmask 637952
      %v2189 = vsel %vm2188, %v2177, %v2179
      %v2190 = vsel %vm2188, %v2179, %v2181
      %v2191 = vsel %vm2188, %v2181, %v2183
      %v2192 = vsel %vm2188, %v2183, %v2185
      %v2193 = vsel %vm2188, %v2185, %v2187
      %v2201 = vsel %vm2188, %v2187, %v2177
      %2202 = vrot.lane.b32.xlu0 %v1149, 77
      %v2203 = vpop.permute.xlu0 %2202
      %2204 = vrot.lane.b32.xlu0 %v1150, 77
      %v2205 = vpop.permute.xlu0 %2204
      %2206 = vrot.lane.b32.xlu0 %v1151, 77
      %v2207 = vpop.permute.xlu0 %2206
      %2208 = vrot.lane.b32.xlu0 %v1152, 77
      %v2209 = vpop.permute.xlu0 %2208
      %2210 = vrot.lane.b32.xlu0 %v1153, 77
      %v2211 = vpop.permute.xlu0 %2210
      %2212 = vrot.lane.b32.xlu0 %v1154, 77
      %v2213 = vpop.permute.xlu0 %2212
      %vm2214 = vcmask 629760
      %v2215 = vsel %vm2214, %v2203, %v2205
      %v2216 = vsel %vm2214, %v2205, %v2207
      %v2217 = vsel %vm2214, %v2207, %v2209
      %v2218 = vsel %vm2214, %v2209, %v2211
      %v2219 = vsel %vm2214, %v2211, %v2213
      %v2227 = vsel %vm2214, %v2213, %v2203
      %2228 = vrot.lane.b32.xlu0 %v1149, 59
      %v2229 = vpop.permute.xlu0 %2228
      %2230 = vrot.lane.b32.xlu0 %v1150, 59
      %v2231 = vpop.permute.xlu0 %2230
      %2232 = vrot.lane.b32.xlu0 %v1151, 59
      %v2233 = vpop.permute.xlu0 %2232
      %2234 = vrot.lane.b32.xlu0 %v1152, 59
      %v2235 = vpop.permute.xlu0 %2234
      %2236 = vrot.lane.b32.xlu0 %v1153, 59
      %v2237 = vpop.permute.xlu0 %2236
      %2238 = vrot.lane.b32.xlu0 %v1154, 59
      %v2239 = vpop.permute.xlu0 %2238
      %vm2240 = vcmask 482304
      %v2241 = vsel %vm2240, %v2229, %v2231
      %v2242 = vsel %vm2240, %v2231, %v2233
      %v2243 = vsel %vm2240, %v2233, %v2235
      %v2244 = vsel %vm2240, %v2235, %v2237
      %v2245 = vsel %vm2240, %v2237, %v2239
      %v2253 = vsel %vm2240, %v2239, %v2229
      %2254 = vrot.lane.b32.xlu0 %v1149, 58
      %v2255 = vpop.permute.xlu0 %2254
      %2256 = vrot.lane.b32.xlu0 %v1150, 58
      %v2257 = vpop.permute.xlu0 %2256
      %2258 = vrot.lane.b32.xlu0 %v1151, 58
      %v2259 = vpop.permute.xlu0 %2258
      %2260 = vrot.lane.b32.xlu0 %v1152, 58
      %v2261 = vpop.permute.xlu0 %2260
      %2262 = vrot.lane.b32.xlu0 %v1153, 58
      %v2263 = vpop.permute.xlu0 %2262
      %2264 = vrot.lane.b32.xlu0 %v1154, 58
      %v2265 = vpop.permute.xlu0 %2264
      %vm2266 = vcmask 474112
      %v2267 = vsel %vm2266, %v2255, %v2257
      %v2268 = vsel %vm2266, %v2257, %v2259
      %v2269 = vsel %vm2266, %v2259, %v2261
      %v2270 = vsel %vm2266, %v2261, %v2263
      %v2271 = vsel %vm2266, %v2263, %v2265
      %v2279 = vsel %vm2266, %v2265, %v2255
      %2280 = vrot.lane.b32.xlu0 %v1149, 57
      %v2281 = vpop.permute.xlu0 %2280
      %2282 = vrot.lane.b32.xlu0 %v1150, 57
      %v2283 = vpop.permute.xlu0 %2282
      %2284 = vrot.lane.b32.xlu0 %v1151, 57
      %v2285 = vpop.permute.xlu0 %2284
      %2286 = vrot.lane.b32.xlu0 %v1152, 57
      %v2287 = vpop.permute.xlu0 %2286
      %2288 = vrot.lane.b32.xlu0 %v1153, 57
      %v2289 = vpop.permute.xlu0 %2288
      %2290 = vrot.lane.b32.xlu0 %v1154, 57
      %v2291 = vpop.permute.xlu0 %2290
      %vm2292 = vcmask 465920
      %v2293 = vsel %vm2292, %v2281, %v2283
      %v2294 = vsel %vm2292, %v2283, %v2285
      %v2295 = vsel %vm2292, %v2285, %v2287
      %v2296 = vsel %vm2292, %v2287, %v2289
      %v2297 = vsel %vm2292, %v2289, %v2291
      %v2305 = vsel %vm2292, %v2291, %v2281
      %2306 = vrot.lane.b32.xlu0 %v1149, 56
      %v2307 = vpop.permute.xlu0 %2306
      %2308 = vrot.lane.b32.xlu0 %v1150, 56
      %v2309 = vpop.permute.xlu0 %2308
      %2310 = vrot.lane.b32.xlu0 %v1151, 56
      %v2311 = vpop.permute.xlu0 %2310
      %2312 = vrot.lane.b32.xlu0 %v1152, 56
      %v2313 = vpop.permute.xlu0 %2312
      %2314 = vrot.lane.b32.xlu0 %v1153, 56
      %v2315 = vpop.permute.xlu0 %2314
      %2316 = vrot.lane.b32.xlu0 %v1154, 56
      %v2317 = vpop.permute.xlu0 %2316
      %vm2318 = vcmask 457728
      %v2319 = vsel %vm2318, %v2307, %v2309
      %v2320 = vsel %vm2318, %v2309, %v2311
      %v2321 = vsel %vm2318, %v2311, %v2313
      %v2322 = vsel %vm2318, %v2313, %v2315
      %v2323 = vsel %vm2318, %v2315, %v2317
      %v2331 = vsel %vm2318, %v2317, %v2307
      %2332 = vrot.lane.b32.xlu0 %v1149, 55
      %v2333 = vpop.permute.xlu0 %2332
      %2334 = vrot.lane.b32.xlu0 %v1150, 55
      %v2335 = vpop.permute.xlu0 %2334
      %2336 = vrot.lane.b32.xlu0 %v1151, 55
      %v2337 = vpop.permute.xlu0 %2336
      %2338 = vrot.lane.b32.xlu0 %v1152, 55
      %v2339 = vpop.permute.xlu0 %2338
      %2340 = vrot.lane.b32.xlu0 %v1153, 55
      %v2341 = vpop.permute.xlu0 %2340
      %2342 = vrot.lane.b32.xlu0 %v1154, 55
      %v2343 = vpop.permute.xlu0 %2342
      %vm2344 = vcmask 449536
      %v2345 = vsel %vm2344, %v2333, %v2335
      %v2346 = vsel %vm2344, %v2335, %v2337
      %v2347 = vsel %vm2344, %v2337, %v2339
      %v2348 = vsel %vm2344, %v2339, %v2341
      %v2349 = vsel %vm2344, %v2341, %v2343
      %v2357 = vsel %vm2344, %v2343, %v2333
      %2358 = vrot.lane.b32.xlu0 %v1149, 54
      %v2359 = vpop.permute.xlu0 %2358
      %2360 = vrot.lane.b32.xlu0 %v1150, 54
      %v2361 = vpop.permute.xlu0 %2360
      %2362 = vrot.lane.b32.xlu0 %v1151, 54
      %v2363 = vpop.permute.xlu0 %2362
      %2364 = vrot.lane.b32.xlu0 %v1152, 54
      %v2365 = vpop.permute.xlu0 %2364
      %2366 = vrot.lane.b32.xlu0 %v1153, 54
      %v2367 = vpop.permute.xlu0 %2366
      %2368 = vrot.lane.b32.xlu0 %v1154, 54
      %v2369 = vpop.permute.xlu0 %2368
      %vm2370 = vcmask 441344
      %v2371 = vsel %vm2370, %v2359, %v2361
      %v2372 = vsel %vm2370, %v2361, %v2363
      %v2373 = vsel %vm2370, %v2363, %v2365
      %v2374 = vsel %vm2370, %v2365, %v2367
      %v2375 = vsel %vm2370, %v2367, %v2369
      %v2383 = vsel %vm2370, %v2369, %v2359
      %2384 = vrot.lane.b32.xlu0 %v1149, 53
      %v2385 = vpop.permute.xlu0 %2384
      %2386 = vrot.lane.b32.xlu0 %v1150, 53
      %v2387 = vpop.permute.xlu0 %2386
      %2388 = vrot.lane.b32.xlu0 %v1151, 53
      %v2389 = vpop.permute.xlu0 %2388
      %2390 = vrot.lane.b32.xlu0 %v1152, 53
      %v2391 = vpop.permute.xlu0 %2390
      %2392 = vrot.lane.b32.xlu0 %v1153, 53
      %v2393 = vpop.permute.xlu0 %2392
      %2394 = vrot.lane.b32.xlu0 %v1154, 53
      %v2395 = vpop.permute.xlu0 %2394
      %vm2396 = vcmask 433152
      %v2397 = vsel %vm2396, %v2385, %v2387
      %v2398 = vsel %vm2396, %v2387, %v2389
      %v2399 = vsel %vm2396, %v2389, %v2391
      %v2400 = vsel %vm2396, %v2391, %v2393
      %v2401 = vsel %vm2396, %v2393, %v2395
      %v2409 = vsel %vm2396, %v2395, %v2385
      %2411 = vset.pattern.permute.xlu0 0
      %2412 = vperm.xlu0 %2411, %v1159
      %v2413 = vpop.permute.xlu0 %2412
      %vm2415 = vcmask 64512
      %v2417 = vsel %vm2415, %v1158, 0
      %2419 = vmatprep.subr.mxu0 %v1180
      %2420 = vmatpush1.msra.mxu0 %v1191
      %2421 = vmatprep.subr.mxu0 %v1206
      %2422 = vmatpush1.msra.mxu0 %v1217
      %2423 = vmatprep.subr.mxu0 %v1232
      %2424 = vmatpush1.msra.mxu0 %v1243
      %2425 = vmatprep.subr.mxu0 %v1258
      %2426 = vmatpush1.msra.mxu0 %v1269
      %2427 = vmatprep.subr.mxu0 %v1284
      %2428 = vmatpush1.msra.mxu0 %v1295
      %2429 = vmatprep.subr.mxu0 %v1310
      %2430 = vmatpush1.msra.mxu0 %v1321
      %2431 = vmatprep.subr.mxu0 %v1336
      %2432 = vmatpush1.msra.mxu0 %v1347
      %2433 = vmatprep.subr.mxu0 %v1362
      %2434 = vmatpush1.msra.mxu0 %v1373
      %2435 = vmatprep.subr.mxu0 %v1388
      %2436 = vmatpush1.msra.mxu0 %v1399
      %2437 = vmatprep.subr.mxu0 %v1414
      %2438 = vmatpush1.msra.mxu0 %v1425
      %2439 = vmatprep.subr.mxu0 %v1439
      %2440 = vmatpush1.msra.mxu0 %v1450
      %2441 = vmatprep.subr.mxu0 %v1465
      %2442 = vmatpush1.msra.mxu0 %v1476
      %2443 = vmatprep.subr.mxu0 %v1491
      %2444 = vmatpush1.msra.mxu0 %v1502
      %2445 = vmatprep.subr.mxu0 %v1517
      %2446 = vmatpush1.msra.mxu0 %v1528
      %2447 = vmatprep.subr.mxu0 %v1543
      %2448 = vmatpush1.msra.mxu0 %v1554
      %2449 = vmatprep.subr.mxu0 %v1569
      %2450 = vmatpush1.msra.mxu0 %v1580
      %2451 = vmatprep.subr.mxu0 %v1595
      %2452 = vmatpush1.msra.mxu0 %v1606
      %2453 = vmatprep.subr.mxu0 %v1621
      %2454 = vmatpush1.msra.mxu0 %v1632
      %2455 = vmatprep.subr.mxu0 %v1647
      %2456 = vmatpush1.msra.mxu0 %v1658
      %2457 = vmatprep.subr.mxu0 %v1673
      %2458 = vmatpush1.msra.mxu0 %v1684
      %2459 = vmatprep.subr.mxu0 %v1699
      %2460 = vmatpush1.msra.mxu0 %v1710
      %2461 = vmatprep.subr.mxu0 %v1725
      %2462 = vmatpush1.msra.mxu0 %v1736
      %2463 = vmatprep.subr.mxu0 %v1750
      %2464 = vmatpush1.msra.mxu0 %v1761
      %2465 = vmatprep.subr.mxu0 %v1776
      %2466 = vmatpush1.msra.mxu0 %v1787
      %2467 = vmatprep.subr.mxu0 %v1150
      %2468 = vmatpush1.msra.mxu0 %v1149
      %2469 = vmatprep.subr.mxu0 %v1802
      %2470 = vmatpush1.msra.mxu0 %v1801
      %2471 = vmatprep.subr.mxu0 %v1827
      %2472 = vmatpush1.msra.mxu0 %v1826
      %2473 = vmatprep.subr.mxu0 %v1853
      %2474 = vmatpush1.msra.mxu0 %v1852
      %2475 = vmatprep.subr.mxu0 %v1879
      %2476 = vmatpush1.msra.mxu0 %v1878
      %2477 = vmatprep.subr.mxu0 %v1905
      %2478 = vmatpush1.msra.mxu0 %v1904
      %2479 = vmatprep.subr.mxu0 %v1931
      %2480 = vmatpush1.msra.mxu0 %v1930
      %2481 = vmatprep.subr.mxu0 %v1957
      %2482 = vmatpush1.msra.mxu0 %v1956
      %2483 = vmatprep.mubr.f32.mxu0 %v1156
      %2484 = vmatmul.mubr.f32.gmra.mrb[0].mxu0 %v1155
      %v2485 = vpop.f32.mrb[0].mxu0
      %v2486 = vadd.f32 %v2413, %v2485
      %v2487 = vpop.f32.mrb[0].mxu0
      %v2488 = vadd.f32 %v2413, %v2487
      %2489 = vdwg.mxu0
      %2490 = vmatprep.subr.mxu0 %v1983
      %2491 = vmatpush1.msra.mxu0 %v1982
      %2492 = vmatprep.subr.mxu0 %v2009
      %2493 = vmatpush1.msra.mxu0 %v2008
      %2494 = vmatprep.subr.mxu0 %v2035
      %2495 = vmatpush1.msra.mxu0 %v2034
      %2496 = vmatprep.subr.mxu0 %v2061
      %2497 = vmatpush1.msra.mxu0 %v2060
      %2498 = vmatprep.subr.mxu0 %v2087
      %2499 = vmatpush1.msra.mxu0 %v2086
      %2500 = vmatprep.subr.mxu0 %v2113
      %2501 = vmatpush1.msra.mxu0 %v2112
      %2502 = vmatprep.subr.mxu0 %v2138
      %2503 = vmatpush1.msra.mxu0 %v2137
      %2504 = vmatprep.subr.mxu0 %v2164
      %2505 = vmatpush1.msra.mxu0 %v2163
      %2506 = vmatprep.subr.mxu0 %v2190
      %2507 = vmatpush1.msra.mxu0 %v2189
      %2508 = vmatprep.subr.mxu0 %v2216
      %2509 = vmatpush1.msra.mxu0 %v2215
      %2510 = vmatprep.subr.mxu0 %v2242
      %2511 = vmatpush1.msra.mxu0 %v2241
      %2512 = vmatprep.subr.mxu0 %v2268
      %2513 = vmatpush1.msra.mxu0 %v2267
      %2514 = vmatprep.subr.mxu0 %v2294
      %2515 = vmatpush1.msra.mxu0 %v2293
      %2516 = vmatprep.subr.mxu0 %v2320
      %2517 = vmatpush1.msra.mxu0 %v2319
      %2518 = vmatprep.subr.mxu0 %v2346
      %2519 = vmatpush1.msra.mxu0 %v2345
      %2520 = vmatprep.subr.mxu0 %v2372
      %2521 = vmatpush1.msra.mxu0 %v2371
      %2522 = vmatprep.subr.mxu0 %v2398
      %2523 = vmatpush1.msra.mxu0 %v2397
      %2524 = vmatprep.subr.mxu0 0.0
      %2525 = vmatpush1.msra.mxu0 0.0
      %2526 = vmatprep.subr.mxu0 0.0
      %2527 = vmatpush1.msra.mxu0 0.0
      %2528 = vmatprep.subr.mxu0 0.0
      %2529 = vmatpush1.msra.mxu0 0.0
      %2530 = vmatprep.subr.mxu0 0.0
      %2531 = vmatpush1.msra.mxu0 0.0
      %2532 = vmatprep.subr.mxu0 0.0
      %2533 = vmatpush1.msra.mxu0 0.0
      %2534 = vmatprep.subr.mxu0 0.0
      %2535 = vmatpush1.msra.mxu0 0.0
      %2536 = vmatprep.subr.mxu0 0.0
      %2537 = vmatpush1.msra.mxu0 0.0
      %2538 = vmatprep.subr.mxu0 0.0
      %2539 = vmatpush1.msra.mxu0 0.0
      %2540 = vmatprep.subr.mxu0 0.0
      %2541 = vmatpush1.msra.mxu0 0.0
      %2542 = vmatprep.subr.mxu0 0.0
      %2543 = vmatpush1.msra.mxu0 0.0
      %2544 = vmatprep.subr.mxu0 0.0
      %2545 = vmatpush1.msra.mxu0 0.0
      %2546 = vmatprep.subr.mxu0 0.0
      %2547 = vmatpush1.msra.mxu0 0.0
      %2548 = vmatprep.subr.mxu0 0.0
      %2549 = vmatpush1.msra.mxu0 0.0
      %2550 = vmatprep.subr.mxu0 0.0
      %2551 = vmatpush1.msra.mxu0 0.0
      %2552 = vmatprep.subr.mxu0 0.0
      %2553 = vmatpush1.msra.mxu0 0.0
      %2554 = vmatprep.mubr.f32.mxu0 %v2417
      %2555 = vmatmul.mubr.f32.gmra.mrb[0].mxu0 %v1157
      %v2556 = vpop.f32.mrb[0].mxu0
      %v2557 = vadd.f32 %v2486, %v2556
      %v2558 = vpop.f32.mrb[0].mxu0
      %v2559 = vadd.f32 %v2488, %v2558
      %2560 = vdwg.mxu0
      %2561 = vmatprep.subr.mxu0 %v1182
      %2562 = vmatpush1.msra.mxu0 %v1181
      %2563 = vmatprep.subr.mxu0 %v1208
      %2564 = vmatpush1.msra.mxu0 %v1207
      %2565 = vmatprep.subr.mxu0 %v1234
      %2566 = vmatpush1.msra.mxu0 %v1233
      %2567 = vmatprep.subr.mxu0 %v1260
      %2568 = vmatpush1.msra.mxu0 %v1259
      %2569 = vmatprep.subr.mxu0 %v1286
      %2570 = vmatpush1.msra.mxu0 %v1285
      %2571 = vmatprep.subr.mxu0 %v1312
      %2572 = vmatpush1.msra.mxu0 %v1311
      %2573 = vmatprep.subr.mxu0 %v1338
      %2574 = vmatpush1.msra.mxu0 %v1337
      %2575 = vmatprep.subr.mxu0 %v1364
      %2576 = vmatpush1.msra.mxu0 %v1363
      %2577 = vmatprep.subr.mxu0 %v1390
      %2578 = vmatpush1.msra.mxu0 %v1389
      %2579 = vmatprep.subr.mxu0 %v1416
      %2580 = vmatpush1.msra.mxu0 %v1415
      %2581 = vmatprep.subr.mxu0 %v1441
      %2582 = vmatpush1.msra.mxu0 %v1440
      %2583 = vmatprep.subr.mxu0 %v1467
      %2584 = vmatpush1.msra.mxu0 %v1466
      %2585 = vmatprep.subr.mxu0 %v1493
      %2586 = vmatpush1.msra.mxu0 %v1492
      %2587 = vmatprep.subr.mxu0 %v1519
      %2588 = vmatpush1.msra.mxu0 %v1518
      %2589 = vmatprep.subr.mxu0 %v1545
      %2590 = vmatpush1.msra.mxu0 %v1544
      %2591 = vmatprep.subr.mxu0 %v1571
      %2592 = vmatpush1.msra.mxu0 %v1570
      %2593 = vmatprep.subr.mxu0 %v1597
      %2594 = vmatpush1.msra.mxu0 %v1596
      %2595 = vmatprep.subr.mxu0 %v1623
      %2596 = vmatpush1.msra.mxu0 %v1622
      %2597 = vmatprep.subr.mxu0 %v1649
      %2598 = vmatpush1.msra.mxu0 %v1648
      %2599 = vmatprep.subr.mxu0 %v1675
      %2600 = vmatpush1.msra.mxu0 %v1674
      %2601 = vmatprep.subr.mxu0 %v1701
      %2602 = vmatpush1.msra.mxu0 %v1700
      %2603 = vmatprep.subr.mxu0 %v1727
      %2604 = vmatpush1.msra.mxu0 %v1726
      %2605 = vmatprep.subr.mxu0 %v1752
      %2606 = vmatpush1.msra.mxu0 %v1751
      %2607 = vmatprep.subr.mxu0 %v1778
      %2608 = vmatpush1.msra.mxu0 %v1777
      %2609 = vmatprep.subr.mxu0 %v1152
      %2610 = vmatpush1.msra.mxu0 %v1151
      %2611 = vmatprep.subr.mxu0 %v1804
      %2612 = vmatpush1.msra.mxu0 %v1803
      %2613 = vmatprep.subr.mxu0 %v1829
      %2614 = vmatpush1.msra.mxu0 %v1828
      %2615 = vmatprep.subr.mxu0 %v1855
      %2616 = vmatpush1.msra.mxu0 %v1854
      %2617 = vmatprep.subr.mxu0 %v1881
      %2618 = vmatpush1.msra.mxu0 %v1880
      %2619 = vmatprep.subr.mxu0 %v1907
      %2620 = vmatpush1.msra.mxu0 %v1906
      %2621 = vmatprep.subr.mxu0 %v1933
      %2622 = vmatpush1.msra.mxu0 %v1932
      %2623 = vmatprep.subr.mxu0 %v1959
      %2624 = vmatpush1.msra.mxu0 %v1958
      %2625 = vmatprep.mubr.f32.mxu0 %v1156
      %2626 = vmatmul.mubr.f32.gmra.mrb[0].mxu0 %v1155
      %v2627 = vpop.f32.mrb[0].mxu0
      %v2628 = vadd.f32 %v2413, %v2627
      %v2629 = vpop.f32.mrb[0].mxu0
      %v2630 = vadd.f32 %v2413, %v2629
      %2631 = vdwg.mxu0
      %2632 = vmatprep.subr.mxu0 %v1985
      %2633 = vmatpush1.msra.mxu0 %v1984
      %2634 = vmatprep.subr.mxu0 %v2011
      %2635 = vmatpush1.msra.mxu0 %v2010
      %2636 = vmatprep.subr.mxu0 %v2037
      %2637 = vmatpush1.msra.mxu0 %v2036
      %2638 = vmatprep.subr.mxu0 %v2063
      %2639 = vmatpush1.msra.mxu0 %v2062
      %2640 = vmatprep.subr.mxu0 %v2089
      %2641 = vmatpush1.msra.mxu0 %v2088
      %2642 = vmatprep.subr.mxu0 %v2115
      %2643 = vmatpush1.msra.mxu0 %v2114
      %2644 = vmatprep.subr.mxu0 %v2140
      %2645 = vmatpush1.msra.mxu0 %v2139
      %2646 = vmatprep.subr.mxu0 %v2166
      %2647 = vmatpush1.msra.mxu0 %v2165
      %2648 = vmatprep.subr.mxu0 %v2192
      %2649 = vmatpush1.msra.mxu0 %v2191
      %2650 = vmatprep.subr.mxu0 %v2218
      %2651 = vmatpush1.msra.mxu0 %v2217
      %2652 = vmatprep.subr.mxu0 %v2244
      %2653 = vmatpush1.msra.mxu0 %v2243
      %2654 = vmatprep.subr.mxu0 %v2270
      %2655 = vmatpush1.msra.mxu0 %v2269
      %2656 = vmatprep.subr.mxu0 %v2296
      %2657 = vmatpush1.msra.mxu0 %v2295
      %2658 = vmatprep.subr.mxu0 %v2322
      %2659 = vmatpush1.msra.mxu0 %v2321
      %2660 = vmatprep.subr.mxu0 %v2348
      %2661 = vmatpush1.msra.mxu0 %v2347
      %2662 = vmatprep.subr.mxu0 %v2374
      %2663 = vmatpush1.msra.mxu0 %v2373
      %2664 = vmatprep.subr.mxu0 %v2400
      %2665 = vmatpush1.msra.mxu0 %v2399
      %2666 = vmatprep.subr.mxu0 0.0
      %2667 = vmatpush1.msra.mxu0 0.0
      %2668 = vmatprep.subr.mxu0 0.0
      %2669 = vmatpush1.msra.mxu0 0.0
      %2670 = vmatprep.subr.mxu0 0.0
      %2671 = vmatpush1.msra.mxu0 0.0
      %2672 = vmatprep.subr.mxu0 0.0
      %2673 = vmatpush1.msra.mxu0 0.0
      %2674 = vmatprep.subr.mxu0 0.0
      %2675 = vmatpush1.msra.mxu0 0.0
      %2676 = vmatprep.subr.mxu0 0.0
      %2677 = vmatpush1.msra.mxu0 0.0
      %2678 = vmatprep.subr.mxu0 0.0
      %2679 = vmatpush1.msra.mxu0 0.0
      %2680 = vmatprep.subr.mxu0 0.0
      %2681 = vmatpush1.msra.mxu0 0.0
      %2682 = vmatprep.subr.mxu0 0.0
      %2683 = vmatpush1.msra.mxu0 0.0
      %2684 = vmatprep.subr.mxu0 0.0
      %2685 = vmatpush1.msra.mxu0 0.0
      %2686 = vmatprep.subr.mxu0 0.0
      %2687 = vmatpush1.msra.mxu0 0.0
      %2688 = vmatprep.subr.mxu0 0.0
      %2689 = vmatpush1.msra.mxu0 0.0
      %2690 = vmatprep.subr.mxu0 0.0
      %2691 = vmatpush1.msra.mxu0 0.0
      %2692 = vmatprep.subr.mxu0 0.0
      %2693 = vmatpush1.msra.mxu0 0.0
      %2694 = vmatprep.subr.mxu0 0.0
      %2695 = vmatpush1.msra.mxu0 0.0
      %2696 = vmatprep.mubr.f32.mxu0 %v2417
      %2697 = vmatmul.mubr.f32.gmra.mrb[0].mxu0 %v1157
      %v2698 = vpop.f32.mrb[0].mxu0
      %v2699 = vadd.f32 %v2628, %v2698
      %v2700 = vpop.f32.mrb[0].mxu0
      %v2701 = vadd.f32 %v2630, %v2700
      %2702 = vdwg.mxu0
      %2703 = vmatprep.subr.mxu0 %v1184
      %2704 = vmatpush1.msra.mxu0 %v1183
      %2705 = vmatprep.subr.mxu0 %v1210
      %2706 = vmatpush1.msra.mxu0 %v1209
      %2707 = vmatprep.subr.mxu0 %v1236
      %2708 = vmatpush1.msra.mxu0 %v1235
      %2709 = vmatprep.subr.mxu0 %v1262
      %2710 = vmatpush1.msra.mxu0 %v1261
      %2711 = vmatprep.subr.mxu0 %v1288
      %2712 = vmatpush1.msra.mxu0 %v1287
      %2713 = vmatprep.subr.mxu0 %v1314
      %2714 = vmatpush1.msra.mxu0 %v1313
      %2715 = vmatprep.subr.mxu0 %v1340
      %2716 = vmatpush1.msra.mxu0 %v1339
      %2717 = vmatprep.subr.mxu0 %v1366
      %2718 = vmatpush1.msra.mxu0 %v1365
      %2719 = vmatprep.subr.mxu0 %v1392
      %2720 = vmatpush1.msra.mxu0 %v1391
      %2721 = vmatprep.subr.mxu0 %v1418
      %2722 = vmatpush1.msra.mxu0 %v1417
      %2723 = vmatprep.subr.mxu0 %v1443
      %2724 = vmatpush1.msra.mxu0 %v1442
      %2725 = vmatprep.subr.mxu0 %v1469
      %2726 = vmatpush1.msra.mxu0 %v1468
      %2727 = vmatprep.subr.mxu0 %v1495
      %2728 = vmatpush1.msra.mxu0 %v1494
      %2729 = vmatprep.subr.mxu0 %v1521
      %2730 = vmatpush1.msra.mxu0 %v1520
      %2731 = vmatprep.subr.mxu0 %v1547
      %2732 = vmatpush1.msra.mxu0 %v1546
      %2733 = vmatprep.subr.mxu0 %v1573
      %2734 = vmatpush1.msra.mxu0 %v1572
      %2735 = vmatprep.subr.mxu0 %v1599
      %2736 = vmatpush1.msra.mxu0 %v1598
      %2737 = vmatprep.subr.mxu0 %v1625
      %2738 = vmatpush1.msra.mxu0 %v1624
      %2739 = vmatprep.subr.mxu0 %v1651
      %2740 = vmatpush1.msra.mxu0 %v1650
      %2741 = vmatprep.subr.mxu0 %v1677
      %2742 = vmatpush1.msra.mxu0 %v1676
      %2743 = vmatprep.subr.mxu0 %v1703
      %2744 = vmatpush1.msra.mxu0 %v1702
      %2745 = vmatprep.subr.mxu0 %v1729
      %2746 = vmatpush1.msra.mxu0 %v1728
      %2747 = vmatprep.subr.mxu0 %v1754
      %2748 = vmatpush1.msra.mxu0 %v1753
      %2749 = vmatprep.subr.mxu0 %v1780
      %2750 = vmatpush1.msra.mxu0 %v1779
      %2751 = vmatprep.subr.mxu0 %v1154
      %2752 = vmatpush1.msra.mxu0 %v1153
      %2753 = vmatprep.subr.mxu0 %v1813
      %2754 = vmatpush1.msra.mxu0 %v1805
      %2755 = vmatprep.subr.mxu0 %v1838
      %2756 = vmatpush1.msra.mxu0 %v1830
      %2757 = vmatprep.subr.mxu0 %v1864
      %2758 = vmatpush1.msra.mxu0 %v1856
      %2759 = vmatprep.subr.mxu0 %v1890
      %2760 = vmatpush1.msra.mxu0 %v1882
      %2761 = vmatprep.subr.mxu0 %v1916
      %2762 = vmatpush1.msra.mxu0 %v1908
      %2763 = vmatprep.subr.mxu0 %v1942
      %2764 = vmatpush1.msra.mxu0 %v1934
      %2765 = vmatprep.subr.mxu0 %v1968
      %2766 = vmatpush1.msra.mxu0 %v1960
      %2767 = vmatprep.mubr.f32.mxu0 %v1156
      %2768 = vmatmul.mubr.f32.gmra.mrb[0].mxu0 %v1155
      %v2769 = vpop.f32.mrb[0].mxu0
      %v2770 = vadd.f32 %v2413, %v2769
      %v2771 = vpop.f32.mrb[0].mxu0
      %v2772 = vadd.f32 %v2413, %v2771
      %2773 = vdwg.mxu0
      %2774 = vmatprep.subr.mxu0 %v1994
      %2775 = vmatpush1.msra.mxu0 %v1986
      %2776 = vmatprep.subr.mxu0 %v2020
      %2777 = vmatpush1.msra.mxu0 %v2012
      %2778 = vmatprep.subr.mxu0 %v2046
      %2779 = vmatpush1.msra.mxu0 %v2038
      %2780 = vmatprep.subr.mxu0 %v2072
      %2781 = vmatpush1.msra.mxu0 %v2064
      %2782 = vmatprep.subr.mxu0 %v2098
      %2783 = vmatpush1.msra.mxu0 %v2090
      %2784 = vmatprep.subr.mxu0 %v2124
      %2785 = vmatpush1.msra.mxu0 %v2116
      %2786 = vmatprep.subr.mxu0 %v2149
      %2787 = vmatpush1.msra.mxu0 %v2141
      %2788 = vmatprep.subr.mxu0 %v2175
      %2789 = vmatpush1.msra.mxu0 %v2167
      %2790 = vmatprep.subr.mxu0 %v2201
      %2791 = vmatpush1.msra.mxu0 %v2193
      %2792 = vmatprep.subr.mxu0 %v2227
      %2793 = vmatpush1.msra.mxu0 %v2219
      %2794 = vmatprep.subr.mxu0 %v2253
      %2795 = vmatpush1.msra.mxu0 %v2245
      %2796 = vmatprep.subr.mxu0 %v2279
      %2797 = vmatpush1.msra.mxu0 %v2271
      %2798 = vmatprep.subr.mxu0 %v2305
      %2799 = vmatpush1.msra.mxu0 %v2297
      %2800 = vmatprep.subr.mxu0 %v2331
      %2801 = vmatpush1.msra.mxu0 %v2323
      %2802 = vmatprep.subr.mxu0 %v2357
      %2803 = vmatpush1.msra.mxu0 %v2349
      %2804 = vmatprep.subr.mxu0 %v2383
      %2805 = vmatpush1.msra.mxu0 %v2375
      %2806 = vmatprep.subr.mxu0 %v2409
      %2807 = vmatpush1.msra.mxu0 %v2401
      %2808 = vmatprep.subr.mxu0 0.0
      %2809 = vmatpush1.msra.mxu0 0.0
      %2810 = vmatprep.subr.mxu0 0.0
      %2811 = vmatpush1.msra.mxu0 0.0
      %2812 = vmatprep.subr.mxu0 0.0
      %2813 = vmatpush1.msra.mxu0 0.0
      %2814 = vmatprep.subr.mxu0 0.0
      %2815 = vmatpush1.msra.mxu0 0.0
      %2816 = vmatprep.subr.mxu0 0.0
      %2817 = vmatpush1.msra.mxu0 0.0
      %2818 = vmatprep.subr.mxu0 0.0
      %2819 = vmatpush1.msra.mxu0 0.0
      %2820 = vmatprep.subr.mxu0 0.0
      %2821 = vmatpush1.msra.mxu0 0.0
      %2822 = vmatprep.subr.mxu0 0.0
      %2823 = vmatpush1.msra.mxu0 0.0
      %2824 = vmatprep.subr.mxu0 0.0
      %2825 = vmatpush1.msra.mxu0 0.0
      %2826 = vmatprep.subr.mxu0 0.0
      %2827 = vmatpush1.msra.mxu0 0.0
      %2828 = vmatprep.subr.mxu0 0.0
      %2829 = vmatpush1.msra.mxu0 0.0
      %2830 = vmatprep.subr.mxu0 0.0
      %2831 = vmatpush1.msra.mxu0 0.0
      %2832 = vmatprep.subr.mxu0 0.0
      %2833 = vmatpush1.msra.mxu0 0.0
      %2834 = vmatprep.subr.mxu0 0.0
      %2835 = vmatpush1.msra.mxu0 0.0
      %2836 = vmatprep.subr.mxu0 0.0
      %2837 = vmatpush1.msra.mxu0 0.0
      %2838 = vmatprep.mubr.f32.mxu0 %v2417
      %2839 = vmatmul.mubr.f32.gmra.mrb[0].mxu0 %v1157
      %v2840 = vpop.f32.mrb[0].mxu0
      %v2841 = vadd.f32 %v2770, %v2840
      %v2842 = vpop.f32.mrb[0].mxu0
      %v2843 = vadd.f32 %v2772, %v2842
      %2844 = vdwg.mxu0
      %v2845 = vmax.f32 %v2557, 0.0
      %v2846 = vmax.f32 %v2559, 0.0
      %v2847 = vmax.f32 %v2699, 0.0
      %v2848 = vmax.f32 %v2701, 0.0
      %v2849 = vmax.f32 %v2841, 0.0
      %v2850 = vmax.f32 %v2843, 0.0
      %2857 = vrot.lane.b32.xlu0 %v2845, 80
      %v2858 = vpop.permute.xlu0 %2857
      %2859 = vrot.lane.b32.xlu0 %v2846, 80
      %v2860 = vpop.permute.xlu0 %2859
      %2861 = vrot.lane.b32.xlu0 %v2847, 80
      %v2862 = vpop.permute.xlu0 %2861
      %2863 = vrot.lane.b32.xlu0 %v2848, 80
      %v2864 = vpop.permute.xlu0 %2863
      %2865 = vrot.lane.b32.xlu0 %v2849, 80
      %v2866 = vpop.permute.xlu0 %2865
      %2867 = vrot.lane.b32.xlu0 %v2850, 80
      %v2868 = vpop.permute.xlu0 %2867
      %v2869 = vsel %vm365, %v2858, %v2860
      %v2870 = vsel %vm365, %v2860, %v2862
      %v2871 = vsel %vm365, %v2862, %v2864
      %v2872 = vsel %vm365, %v2864, %v2866
      %v2873 = vsel %vm365, %v2866, %v2868
      %v2881 = vsel %vm365, %v2868, %v2858
      %v2882 = vsel %vm341, %v2869, %v2845
      %v2883 = vsel %vm342, %v2870, %v2846
      %v2884 = vsel %vm343, %v2871, %v2847
      %v2885 = vsel %vm344, %v2872, %v2848
      %v2886 = vsel %vm345, %v2873, %v2849
      %v2887 = vsel %vm346, %v2881, %v2850
      %2889 = vrot.lane.b32.xlu0 %v2887, 48
      %v2890 = vpop.permute.xlu0 %2889
      %2897 = vrot.lane.b32.xlu0 %v2882, 48
      %v2898 = vpop.permute.xlu0 %2897
      %2899 = vrot.lane.b32.xlu0 %v2883, 48
      %v2900 = vpop.permute.xlu0 %2899
      %2901 = vrot.lane.b32.xlu0 %v2884, 48
      %v2902 = vpop.permute.xlu0 %2901
      %2903 = vrot.lane.b32.xlu0 %v2885, 48
      %v2904 = vpop.permute.xlu0 %2903
      %2905 = vrot.lane.b32.xlu0 %v2886, 48
      %v2906 = vpop.permute.xlu0 %2905
      %v2907 = vsel %vm436, %v2898, %v2900
      %v2908 = vsel %vm436, %v2900, %v2902
      %v2909 = vsel %vm436, %v2902, %v2904
      %v2910 = vsel %vm436, %v2904, %v2906
      %v2911 = vsel %vm436, %v2906, %v2890
      %v2918 = vsel %vm436, %v2890, %v2898
      %v2919 = vsel %vm411, %v2918, %v2882
      %v2920 = vsel %vm412, %v2907, %v2883
      %v2921 = vsel %vm413, %v2908, %v2884
      %v2922 = vsel %vm414, %v2909, %v2885
      %v2923 = vsel %vm415, %v2910, %v2886
      %v2924 = vsel %vm416, %v2911, %v2887
      %2931 = vrot.lane.b32.xlu0 %v2919, 126
      %v2932 = vpop.permute.xlu0 %2931
      %2933 = vrot.lane.b32.xlu0 %v2920, 126
      %v2934 = vpop.permute.xlu0 %2933
      %2935 = vrot.lane.b32.xlu0 %v2921, 126
      %v2936 = vpop.permute.xlu0 %2935
      %2937 = vrot.lane.b32.xlu0 %v2922, 126
      %v2938 = vpop.permute.xlu0 %2937
      %2939 = vrot.lane.b32.xlu0 %v2923, 126
      %v2940 = vpop.permute.xlu0 %2939
      %2941 = vrot.lane.b32.xlu0 %v2924, 126
      %v2942 = vpop.permute.xlu0 %2941
      %v2943 = vsel %vm785, %v2932, %v2934
      %v2944 = vsel %vm785, %v2934, %v2936
      %v2945 = vsel %vm785, %v2936, %v2938
      %v2946 = vsel %vm785, %v2938, %v2940
      %v2947 = vsel %vm785, %v2940, %v2942
      %v2955 = vsel %vm785, %v2942, %v2932
      %v2956 = vsel %vm761, %v2943, %v2919
      %v2957 = vsel %vm762, %v2944, %v2920
      %v2958 = vsel %vm763, %v2945, %v2921
      %v2959 = vsel %vm764, %v2946, %v2922
      %v2960 = vsel %vm765, %v2947, %v2923
      %v2961 = vsel %vm766, %v2955, %v2924
      %2963 = vrot.lane.b32.xlu0 %v2961, 2
      %v2964 = vpop.permute.xlu0 %2963
      %2971 = vrot.lane.b32.xlu0 %v2956, 2
      %v2972 = vpop.permute.xlu0 %2971
      %2973 = vrot.lane.b32.xlu0 %v2957, 2
      %v2974 = vpop.permute.xlu0 %2973
      %2975 = vrot.lane.b32.xlu0 %v2958, 2
      %v2976 = vpop.permute.xlu0 %2975
      %2977 = vrot.lane.b32.xlu0 %v2959, 2
      %v2978 = vpop.permute.xlu0 %2977
      %2979 = vrot.lane.b32.xlu0 %v2960, 2
      %v2980 = vpop.permute.xlu0 %2979
      %v2981 = vsel %vm856, %v2972, %v2974
      %v2982 = vsel %vm856, %v2974, %v2976
      %v2983 = vsel %vm856, %v2976, %v2978
      %v2984 = vsel %vm856, %v2978, %v2980
      %v2985 = vsel %vm856, %v2980, %v2964
      %v2992 = vsel %vm856, %v2964, %v2972
      %v2993 = vsel %vm831, %v2992, %v2956
      %v2994 = vsel %vm832, %v2981, %v2957
      %v2995 = vsel %vm833, %v2982, %v2958
      %v2996 = vsel %vm834, %v2983, %v2959
      %v2997 = vsel %vm835, %v2984, %v2960
      %v2998 = vsel %vm836, %v2985, %v2961
      loop: start=0, step=1, limit=9
      $region53: #{resnet_forward.1} parent=51 // loop_pre_header
        _
      $region54: #{resnet_forward.1} parent=51 // loop_header
        %s3000 = sphi 0, %s3004
        %p3001 = scmp.ge.s32.totalorder %s3000, 9
        %v3005 = vphi %v2993, %v4174
        %v3006 = vphi %v2994, %v4175
        %v3007 = vphi %v2995, %v4176
        %v3008 = vphi %v2996, %v4177
        %v3009 = vphi %v2997, %v4178
        %v3010 = vphi %v2998, %v4179
      $region55: #{resnet_forward.1} parent=51 // loop_header_branch
        %3003 = sbr.rel (%p3001) target = $region59
      $region56: #{resnet_forward.1} parent=51 // loop_body
        %s3011 = smul.u32 %s3000, 16
        %s3012 = scalar_lea.vmem %s4, %s3011
        %v3013 = vld [vmem:[%s3012] sm:$0xff]
        %v3014 = vld [vmem:[%s3012 + $0x8] sm:$0xff]
        %s3015 = scalar_lea.vmem %s5, %s3011
        %v3016 = vld [vmem:[%s3015] sm:$0xff]
        %v3017 = vld [vmem:[%s3015 + $0x8] sm:$0xff]
        %3019 = vrot.lane.b32.xlu0 %v3010, 25
        %v3020 = vpop.permute.xlu0 %3019
        %3027 = vrot.lane.b32.xlu0 %v3005, 25
        %v3028 = vpop.permute.xlu0 %3027
        %3029 = vrot.lane.b32.xlu0 %v3006, 25
        %v3030 = vpop.permute.xlu0 %3029
        %3031 = vrot.lane.b32.xlu0 %v3007, 25
        %v3032 = vpop.permute.xlu0 %3031
        %3033 = vrot.lane.b32.xlu0 %v3008, 25
        %v3034 = vpop.permute.xlu0 %3033
        %3035 = vrot.lane.b32.xlu0 %v3009, 25
        %v3036 = vpop.permute.xlu0 %3035
        %v3037 = vsel %vm1594, %v3028, %v3030
        %v3038 = vsel %vm1594, %v3030, %v3032
        %v3039 = vsel %vm1594, %v3032, %v3034
        %v3040 = vsel %vm1594, %v3034, %v3036
        %v3041 = vsel %vm1594, %v3036, %v3020
        %v3048 = vsel %vm1594, %v3020, %v3028
        %3049 = vrot.lane.b32.xlu0 %v3010, 24
        %v3050 = vpop.permute.xlu0 %3049
        %3052 = vrot.lane.b32.xlu0 %v3005, 24
        %v3053 = vpop.permute.xlu0 %3052
        %3054 = vrot.lane.b32.xlu0 %v3006, 24
        %v3055 = vpop.permute.xlu0 %3054
        %3056 = vrot.lane.b32.xlu0 %v3007, 24
        %v3057 = vpop.permute.xlu0 %3056
        %3058 = vrot.lane.b32.xlu0 %v3008, 24
        %v3059 = vpop.permute.xlu0 %3058
        %3060 = vrot.lane.b32.xlu0 %v3009, 24
        %v3061 = vpop.permute.xlu0 %3060
        %v3062 = vsel %vm1620, %v3053, %v3055
        %v3063 = vsel %vm1620, %v3055, %v3057
        %v3064 = vsel %vm1620, %v3057, %v3059
        %v3065 = vsel %vm1620, %v3059, %v3061
        %v3066 = vsel %vm1620, %v3061, %v3050
        %v3073 = vsel %vm1620, %v3050, %v3053
        %3074 = vrot.lane.b32.xlu0 %v3010, 23
        %v3075 = vpop.permute.xlu0 %3074
        %3077 = vrot.lane.b32.xlu0 %v3005, 23
        %v3078 = vpop.permute.xlu0 %3077
        %3079 = vrot.lane.b32.xlu0 %v3006, 23
        %v3080 = vpop.permute.xlu0 %3079
        %3081 = vrot.lane.b32.xlu0 %v3007, 23
        %v3082 = vpop.permute.xlu0 %3081
        %3083 = vrot.lane.b32.xlu0 %v3008, 23
        %v3084 = vpop.permute.xlu0 %3083
        %3085 = vrot.lane.b32.xlu0 %v3009, 23
        %v3086 = vpop.permute.xlu0 %3085
        %v3087 = vsel %vm1646, %v3078, %v3080
        %v3088 = vsel %vm1646, %v3080, %v3082
        %v3089 = vsel %vm1646, %v3082, %v3084
        %v3090 = vsel %vm1646, %v3084, %v3086
        %v3091 = vsel %vm1646, %v3086, %v3075
        %v3098 = vsel %vm1646, %v3075, %v3078
        %3099 = vrot.lane.b32.xlu0 %v3010, 1
        %v3100 = vpop.permute.xlu0 %3099
        %3102 = vrot.lane.b32.xlu0 %v3005, 1
        %v3103 = vpop.permute.xlu0 %3102
        %3104 = vrot.lane.b32.xlu0 %v3006, 1
        %v3105 = vpop.permute.xlu0 %3104
        %3106 = vrot.lane.b32.xlu0 %v3007, 1
        %v3107 = vpop.permute.xlu0 %3106
        %3108 = vrot.lane.b32.xlu0 %v3008, 1
        %v3109 = vpop.permute.xlu0 %3108
        %3110 = vrot.lane.b32.xlu0 %v3009, 1
        %v3111 = vpop.permute.xlu0 %3110
        %v3112 = vsel %vm1775, %v3103, %v3105
        %v3113 = vsel %vm1775, %v3105, %v3107
        %v3114 = vsel %vm1775, %v3107, %v3109
        %v3115 = vsel %vm1775, %v3109, %v3111
        %v3116 = vsel %vm1775, %v3111, %v3100
        %v3123 = vsel %vm1775, %v3100, %v3103
        %3124 = vrot.lane.b32.xlu0 %v3005, 127
        %v3125 = vpop.permute.xlu0 %3124
        %3126 = vrot.lane.b32.xlu0 %v3006, 127
        %v3127 = vpop.permute.xlu0 %3126
        %3128 = vrot.lane.b32.xlu0 %v3007, 127
        %v3129 = vpop.permute.xlu0 %3128
        %3130 = vrot.lane.b32.xlu0 %v3008, 127
        %v3131 = vpop.permute.xlu0 %3130
        %3132 = vrot.lane.b32.xlu0 %v3009, 127
        %v3133 = vpop.permute.xlu0 %3132
        %3134 = vrot.lane.b32.xlu0 %v3010, 127
        %v3135 = vpop.permute.xlu0 %3134
        %v3136 = vsel %vm1800, %v3125, %v3127
        %v3137 = vsel %vm1800, %v3127, %v3129
        %v3138 = vsel %vm1800, %v3129, %v3131
        %v3139 = vsel %vm1800, %v3131, %v3133
        %v3140 = vsel %vm1800, %v3133, %v3135
        %v3148 = vsel %vm1800, %v3135, %v3125
        %3149 = vrot.lane.b32.xlu0 %v3005, 105
        %v3150 = vpop.permute.xlu0 %3149
        %3151 = vrot.lane.b32.xlu0 %v3006, 105
        %v3152 = vpop.permute.xlu0 %3151
        %3153 = vrot.lane.b32.xlu0 %v3007, 105
        %v3154 = vpop.permute.xlu0 %3153
        %3155 = vrot.lane.b32.xlu0 %v3008, 105
        %v3156 = vpop.permute.xlu0 %3155
        %3157 = vrot.lane.b32.xlu0 %v3009, 105
        %v3158 = vpop.permute.xlu0 %3157
        %3159 = vrot.lane.b32.xlu0 %v3010, 105
        %v3160 = vpop.permute.xlu0 %3159
        %v3161 = vsel %vm1929, %v3150, %v3152
        %v3162 = vsel %vm1929, %v3152, %v3154
        %v3163 = vsel %vm1929, %v3154, %v3156
        %v3164 = vsel %vm1929, %v3156, %v3158
        %v3165 = vsel %vm1929, %v3158, %v3160
        %v3173 = vsel %vm1929, %v3160, %v3150
        %3174 = vrot.lane.b32.xlu0 %v3005, 104
        %v3175 = vpop.permute.xlu0 %3174
        %3176 = vrot.lane.b32.xlu0 %v3006, 104
        %v3177 = vpop.permute.xlu0 %3176
        %3178 = vrot.lane.b32.xlu0 %v3007, 104
        %v3179 = vpop.permute.xlu0 %3178
        %3180 = vrot.lane.b32.xlu0 %v3008, 104
        %v3181 = vpop.permute.xlu0 %3180
        %3182 = vrot.lane.b32.xlu0 %v3009, 104
        %v3183 = vpop.permute.xlu0 %3182
        %3184 = vrot.lane.b32.xlu0 %v3010, 104
        %v3185 = vpop.permute.xlu0 %3184
        %v3186 = vsel %vm1955, %v3175, %v3177
        %v3187 = vsel %vm1955, %v3177, %v3179
        %v3188 = vsel %vm1955, %v3179, %v3181
        %v3189 = vsel %vm1955, %v3181, %v3183
        %v3190 = vsel %vm1955, %v3183, %v3185
        %v3198 = vsel %vm1955, %v3185, %v3175
        %3199 = vrot.lane.b32.xlu0 %v3005, 103
        %v3200 = vpop.permute.xlu0 %3199
        %3201 = vrot.lane.b32.xlu0 %v3006, 103
        %v3202 = vpop.permute.xlu0 %3201
        %3203 = vrot.lane.b32.xlu0 %v3007, 103
        %v3204 = vpop.permute.xlu0 %3203
        %3205 = vrot.lane.b32.xlu0 %v3008, 103
        %v3206 = vpop.permute.xlu0 %3205
        %3207 = vrot.lane.b32.xlu0 %v3009, 103
        %v3208 = vpop.permute.xlu0 %3207
        %3209 = vrot.lane.b32.xlu0 %v3010, 103
        %v3210 = vpop.permute.xlu0 %3209
        %v3211 = vsel %vm1981, %v3200, %v3202
        %v3212 = vsel %vm1981, %v3202, %v3204
        %v3213 = vsel %vm1981, %v3204, %v3206
        %v3214 = vsel %vm1981, %v3206, %v3208
        %v3215 = vsel %vm1981, %v3208, %v3210
        %v3223 = vsel %vm1981, %v3210, %v3200
        %3225 = vset.pattern.permute.xlu0 0
        %3226 = vperm.xlu0 %3225, %v3016
        %v3227 = vpop.permute.xlu0 %3226
        %v3230 = vsel %vm1257, %v3013, 0
        %3232 = vmatprep.subr.mxu0 %v3037
        %3233 = vmatpush1.msra.mxu0 %v3048
        %3234 = vmatprep.subr.mxu0 %v3062
        %3235 = vmatpush1.msra.mxu0 %v3073
        %3236 = vmatprep.subr.mxu0 %v3087
        %3237 = vmatpush1.msra.mxu0 %v3098
        %3238 = vmatprep.subr.mxu0 %v3112
        %3239 = vmatpush1.msra.mxu0 %v3123
        %3240 = vmatprep.subr.mxu0 %v3006
        %3241 = vmatpush1.msra.mxu0 %v3005
        %3242 = vmatprep.subr.mxu0 %v3137
        %3243 = vmatpush1.msra.mxu0 %v3136
        %3244 = vmatprep.subr.mxu0 %v3162
        %3245 = vmatpush1.msra.mxu0 %v3161
        %3246 = vmatprep.subr.mxu0 %v3187
        %3247 = vmatpush1.msra.mxu0 %v3186
        %3248 = vmatprep.subr.mxu0 %v3212
        %3249 = vmatpush1.msra.mxu0 %v3211
        %3250 = vmatprep.subr.mxu0 0.0
        %3251 = vmatpush1.msra.mxu0 0.0
        %3252 = vmatprep.subr.mxu0 0.0
        %3253 = vmatpush1.msra.mxu0 0.0
        %3254 = vmatprep.subr.mxu0 0.0
        %3255 = vmatpush1.msra.mxu0 0.0
        %3256 = vmatprep.subr.mxu0 0.0
        %3257 = vmatpush1.msra.mxu0 0.0
        %3258 = vmatprep.subr.mxu0 0.0
        %3259 = vmatpush1.msra.mxu0 0.0
        %3260 = vmatprep.subr.mxu0 0.0
        %3261 = vmatpush1.msra.mxu0 0.0
        %3262 = vmatprep.subr.mxu0 0.0
        %3263 = vmatpush1.msra.mxu0 0.0
        %3264 = vmatprep.subr.mxu0 0.0
        %3265 = vmatpush1.msra.mxu0 0.0
        %3266 = vmatprep.subr.mxu0 0.0
        %3267 = vmatpush1.msra.mxu0 0.0
        %3268 = vmatprep.subr.mxu0 0.0
        %3269 = vmatpush1.msra.mxu0 0.0
        %3270 = vmatprep.subr.mxu0 0.0
        %3271 = vmatpush1.msra.mxu0 0.0
        %3272 = vmatprep.subr.mxu0 0.0
        %3273 = vmatpush1.msra.mxu0 0.0
        %3274 = vmatprep.subr.mxu0 0.0
        %3275 = vmatpush1.msra.mxu0 0.0
        %3276 = vmatprep.subr.mxu0 0.0
        %3277 = vmatpush1.msra.mxu0 0.0
        %3278 = vmatprep.subr.mxu0 0.0
        %3279 = vmatpush1.msra.mxu0 0.0
        %3280 = vmatprep.subr.mxu0 0.0
        %3281 = vmatpush1.msra.mxu0 0.0
        %3282 = vmatprep.subr.mxu0 0.0
        %3283 = vmatpush1.msra.mxu0 0.0
        %3284 = vmatprep.subr.mxu0 0.0
        %3285 = vmatpush1.msra.mxu0 0.0
        %3286 = vmatprep.subr.mxu0 0.0
        %3287 = vmatpush1.msra.mxu0 0.0
        %3288 = vmatprep.subr.mxu0 0.0
        %3289 = vmatpush1.msra.mxu0 0.0
        %3290 = vmatprep.subr.mxu0 0.0
        %3291 = vmatpush1.msra.mxu0 0.0
        %3292 = vmatprep.subr.mxu0 0.0
        %3293 = vmatpush1.msra.mxu0 0.0
        %3294 = vmatprep.subr.mxu0 0.0
        %3295 = vmatpush1.msra.mxu0 0.0
        %3296 = vmatprep.mubr.f32.mxu0 0.0
        %3297 = vmatmul.mubr.f32.gmra.mrb[0].mxu0 %v3230
        %v3298 = vpop.f32.mrb[0].mxu0
        %v3299 = vadd.f32 %v3227, %v3298
        %v3300 = vpop.f32.mrb[0].mxu0
        %v3301 = vadd.f32 %v3227, %v3300
        %3302 = vdwg.mxu0
        %3303 = vmatprep.subr.mxu0 %v3039
        %3304 = vmatpush1.msra.mxu0 %v3038
        %3305 = vmatprep.subr.mxu0 %v3064
        %3306 = vmatpush1.msra.mxu0 %v3063
        %3307 = vmatprep.subr.mxu0 %v3089
        %3308 = vmatpush1.msra.mxu0 %v3088
        %3309 = vmatprep.subr.mxu0 %v3114
        %3310 = vmatpush1.msra.mxu0 %v3113
        %3311 = vmatprep.subr.mxu0 %v3008
        %3312 = vmatpush1.msra.mxu0 %v3007
        %3313 = vmatprep.subr.mxu0 %v3139
        %3314 = vmatpush1.msra.mxu0 %v3138
        %3315 = vmatprep.subr.mxu0 %v3164
        %3316 = vmatpush1.msra.mxu0 %v3163
        %3317 = vmatprep.subr.mxu0 %v3189
        %3318 = vmatpush1.msra.mxu0 %v3188
        %3319 = vmatprep.subr.mxu0 %v3214
        %3320 = vmatpush1.msra.mxu0 %v3213
        %3321 = vmatprep.subr.mxu0 0.0
        %3322 = vmatpush1.msra.mxu0 0.0
        %3323 = vmatprep.subr.mxu0 0.0
        %3324 = vmatpush1.msra.mxu0 0.0
        %3325 = vmatprep.subr.mxu0 0.0
        %3326 = vmatpush1.msra.mxu0 0.0
        %3327 = vmatprep.subr.mxu0 0.0
        %3328 = vmatpush1.msra.mxu0 0.0
        %3329 = vmatprep.subr.mxu0 0.0
        %3330 = vmatpush1.msra.mxu0 0.0
        %3331 = vmatprep.subr.mxu0 0.0
        %3332 = vmatpush1.msra.mxu0 0.0
        %3333 = vmatprep.subr.mxu0 0.0
        %3334 = vmatpush1.msra.mxu0 0.0
        %3335 = vmatprep.subr.mxu0 0.0
        %3336 = vmatpush1.msra.mxu0 0.0
        %3337 = vmatprep.subr.mxu0 0.0
        %3338 = vmatpush1.msra.mxu0 0.0
        %3339 = vmatprep.subr.mxu0 0.0
        %3340 = vmatpush1.msra.mxu0 0.0
        %3341 = vmatprep.subr.mxu0 0.0
        %3342 = vmatpush1.msra.mxu0 0.0
        %3343 = vmatprep.subr.mxu0 0.0
        %3344 = vmatpush1.msra.mxu0 0.0
        %3345 = vmatprep.subr.mxu0 0.0
        %3346 = vmatpush1.msra.mxu0 0.0
        %3347 = vmatprep.subr.mxu0 0.0
        %3348 = vmatpush1.msra.mxu0 0.0
        %3349 = vmatprep.subr.mxu0 0.0
        %3350 = vmatpush1.msra.mxu0 0.0
        %3351 = vmatprep.subr.mxu0 0.0
        %3352 = vmatpush1.msra.mxu0 0.0
        %3353 = vmatprep.subr.mxu0 0.0
        %3354 = vmatpush1.msra.mxu0 0.0
        %3355 = vmatprep.subr.mxu0 0.0
        %3356 = vmatpush1.msra.mxu0 0.0
        %3357 = vmatprep.subr.mxu0 0.0
        %3358 = vmatpush1.msra.mxu0 0.0
        %3359 = vmatprep.subr.mxu0 0.0
        %3360 = vmatpush1.msra.mxu0 0.0
        %3361 = vmatprep.subr.mxu0 0.0
        %3362 = vmatpush1.msra.mxu0 0.0
        %3363 = vmatprep.subr.mxu0 0.0
        %3364 = vmatpush1.msra.mxu0 0.0
        %3365 = vmatprep.subr.mxu0 0.0
        %3366 = vmatpush1.msra.mxu0 0.0
        %3367 = vmatprep.mubr.f32.mxu0 0.0
        %3368 = vmatmul.mubr.f32.gmra.mrb[0].mxu0 %v3230
        %v3369 = vpop.f32.mrb[0].mxu0
        %v3370 = vadd.f32 %v3227, %v3369
        %v3371 = vpop.f32.mrb[0].mxu0
        %v3372 = vadd.f32 %v3227, %v3371
        %3373 = vdwg.mxu0
        %3374 = vmatprep.subr.mxu0 %v3041
        %3375 = vmatpush1.msra.mxu0 %v3040
        %3376 = vmatprep.subr.mxu0 %v3066
        %3377 = vmatpush1.msra.mxu0 %v3065
        %3378 = vmatprep.subr.mxu0 %v3091
        %3379 = vmatpush1.msra.mxu0 %v3090
        %3380 = vmatprep.subr.mxu0 %v3116
        %3381 = vmatpush1.msra.mxu0 %v3115
        %3382 = vmatprep.subr.mxu0 %v3010
        %3383 = vmatpush1.msra.mxu0 %v3009
        %3384 = vmatprep.subr.mxu0 %v3148
        %3385 = vmatpush1.msra.mxu0 %v3140
        %3386 = vmatprep.subr.mxu0 %v3173
        %3387 = vmatpush1.msra.mxu0 %v3165
        %3388 = vmatprep.subr.mxu0 %v3198
        %3389 = vmatpush1.msra.mxu0 %v3190
        %3390 = vmatprep.subr.mxu0 %v3223
        %3391 = vmatpush1.msra.mxu0 %v3215
        %3392 = vmatprep.subr.mxu0 0.0
        %3393 = vmatpush1.msra.mxu0 0.0
        %3394 = vmatprep.subr.mxu0 0.0
        %3395 = vmatpush1.msra.mxu0 0.0
        %3396 = vmatprep.subr.mxu0 0.0
        %3397 = vmatpush1.msra.mxu0 0.0
        %3398 = vmatprep.subr.mxu0 0.0
        %3399 = vmatpush1.msra.mxu0 0.0
        %3400 = vmatprep.subr.mxu0 0.0
        %3401 = vmatpush1.msra.mxu0 0.0
        %3402 = vmatprep.subr.mxu0 0.0
        %3403 = vmatpush1.msra.mxu0 0.0
        %3404 = vmatprep.subr.mxu0 0.0
        %3405 = vmatpush1.msra.mxu0 0.0
        %3406 = vmatprep.subr.mxu0 0.0
        %3407 = vmatpush1.msra.mxu0 0.0
        %3408 = vmatprep.subr.mxu0 0.0
        %3409 = vmatpush1.msra.mxu0 0.0
        %3410 = vmatprep.subr.mxu0 0.0
        %3411 = vmatpush1.msra.mxu0 0.0
        %3412 = vmatprep.subr.mxu0 0.0
        %3413 = vmatpush1.msra.mxu0 0.0
        %3414 = vmatprep.subr.mxu0 0.0
        %3415 = vmatpush1.msra.mxu0 0.0
        %3416 = vmatprep.subr.mxu0 0.0
        %3417 = vmatpush1.msra.mxu0 0.0
        %3418 = vmatprep.subr.mxu0 0.0
        %3419 = vmatpush1.msra.mxu0 0.0
        %3420 = vmatprep.subr.mxu0 0.0
        %3421 = vmatpush1.msra.mxu0 0.0
        %3422 = vmatprep.subr.mxu0 0.0
        %3423 = vmatpush1.msra.mxu0 0.0
        %3424 = vmatprep.subr.mxu0 0.0
        %3425 = vmatpush1.msra.mxu0 0.0
        %3426 = vmatprep.subr.mxu0 0.0
        %3427 = vmatpush1.msra.mxu0 0.0
        %3428 = vmatprep.subr.mxu0 0.0
        %3429 = vmatpush1.msra.mxu0 0.0
        %3430 = vmatprep.subr.mxu0 0.0
        %3431 = vmatpush1.msra.mxu0 0.0
        %3432 = vmatprep.subr.mxu0 0.0
        %3433 = vmatpush1.msra.mxu0 0.0
        %3434 = vmatprep.subr.mxu0 0.0
        %3435 = vmatpush1.msra.mxu0 0.0
        %3436 = vmatprep.subr.mxu0 0.0
        %3437 = vmatpush1.msra.mxu0 0.0
        %3438 = vmatprep.mubr.f32.mxu0 0.0
        %3439 = vmatmul.mubr.f32.gmra.mrb[0].mxu0 %v3230
        %v3440 = vpop.f32.mrb[0].mxu0
        %v3441 = vadd.f32 %v3227, %v3440
        %v3442 = vpop.f32.mrb[0].mxu0
        %v3443 = vadd.f32 %v3227, %v3442
        %3444 = vdwg.mxu0
        %v3445 = vmax.f32 %v3299, 0.0
        %v3446 = vmax.f32 %v3301, 0.0
        %v3447 = vmax.f32 %v3370, 0.0
        %v3448 = vmax.f32 %v3372, 0.0
        %v3449 = vmax.f32 %v3441, 0.0
        %v3450 = vmax.f32 %v3443, 0.0
        %3457 = vrot.lane.b32.xlu0 %v3445, 80
        %v3458 = vpop.permute.xlu0 %3457
        %3459 = vrot.lane.b32.xlu0 %v3446, 80
        %v3460 = vpop.permute.xlu0 %3459
        %3461 = vrot.lane.b32.xlu0 %v3447, 80
        %v3462 = vpop.permute.xlu0 %3461
        %3463 = vrot.lane.b32.xlu0 %v3448, 80
        %v3464 = vpop.permute.xlu0 %3463
        %3465 = vrot.lane.b32.xlu0 %v3449, 80
        %v3466 = vpop.permute.xlu0 %3465
        %3467 = vrot.lane.b32.xlu0 %v3450, 80
        %v3468 = vpop.permute.xlu0 %3467
        %v3469 = vsel %vm365, %v3458, %v3460
        %v3470 = vsel %vm365, %v3460, %v3462
        %v3471 = vsel %vm365, %v3462, %v3464
        %v3472 = vsel %vm365, %v3464, %v3466
        %v3473 = vsel %vm365, %v3466, %v3468
        %v3481 = vsel %vm365, %v3468, %v3458
        %v3482 = vsel %vm341, %v3469, %v3445
        %v3483 = vsel %vm342, %v3470, %v3446
        %v3484 = vsel %vm343, %v3471, %v3447
        %v3485 = vsel %vm344, %v3472, %v3448
        %v3486 = vsel %vm345, %v3473, %v3449
        %v3487 = vsel %vm346, %v3481, %v3450
        %3489 = vrot.lane.b32.xlu0 %v3487, 48
        %v3490 = vpop.permute.xlu0 %3489
        %3497 = vrot.lane.b32.xlu0 %v3482, 48
        %v3498 = vpop.permute.xlu0 %3497
        %3499 = vrot.lane.b32.xlu0 %v3483, 48
        %v3500 = vpop.permute.xlu0 %3499
        %3501 = vrot.lane.b32.xlu0 %v3484, 48
        %v3502 = vpop.permute.xlu0 %3501
        %3503 = vrot.lane.b32.xlu0 %v3485, 48
        %v3504 = vpop.permute.xlu0 %3503
        %3505 = vrot.lane.b32.xlu0 %v3486, 48
        %v3506 = vpop.permute.xlu0 %3505
        %v3507 = vsel %vm436, %v3498, %v3500
        %v3508 = vsel %vm436, %v3500, %v3502
        %v3509 = vsel %vm436, %v3502, %v3504
        %v3510 = vsel %vm436, %v3504, %v3506
        %v3511 = vsel %vm436, %v3506, %v3490
        %v3518 = vsel %vm436, %v3490, %v3498
        %v3519 = vsel %vm411, %v3518, %v3482
        %v3520 = vsel %vm412, %v3507, %v3483
        %v3521 = vsel %vm413, %v3508, %v3484
        %v3522 = vsel %vm414, %v3509, %v3485
        %v3523 = vsel %vm415, %v3510, %v3486
        %v3524 = vsel %vm416, %v3511, %v3487
        %3531 = vrot.lane.b32.xlu0 %v3519, 126
        %v3532 = vpop.permute.xlu0 %3531
        %3533 = vrot.lane.b32.xlu0 %v3520, 126
        %v3534 = vpop.permute.xlu0 %3533
        %3535 = vrot.lane.b32.xlu0 %v3521, 126
        %v3536 = vpop.permute.xlu0 %3535
        %3537 = vrot.lane.b32.xlu0 %v3522, 126
        %v3538 = vpop.permute.xlu0 %3537
        %3539 = vrot.lane.b32.xlu0 %v3523, 126
        %v3540 = vpop.permute.xlu0 %3539
        %3541 = vrot.lane.b32.xlu0 %v3524, 126
        %v3542 = vpop.permute.xlu0 %3541
        %v3543 = vsel %vm785, %v3532, %v3534
        %v3544 = vsel %vm785, %v3534, %v3536
        %v3545 = vsel %vm785, %v3536, %v3538
        %v3546 = vsel %vm785, %v3538, %v3540
        %v3547 = vsel %vm785, %v3540, %v3542
        %v3555 = vsel %vm785, %v3542, %v3532
        %v3556 = vsel %vm761, %v3543, %v3519
        %v3557 = vsel %vm762, %v3544, %v3520
        %v3558 = vsel %vm763, %v3545, %v3521
        %v3559 = vsel %vm764, %v3546, %v3522
        %v3560 = vsel %vm765, %v3547, %v3523
        %v3561 = vsel %vm766, %v3555, %v3524
        %3563 = vrot.lane.b32.xlu0 %v3561, 2
        %v3564 = vpop.permute.xlu0 %3563
        %3571 = vrot.lane.b32.xlu0 %v3556, 2
        %v3572 = vpop.permute.xlu0 %3571
        %3573 = vrot.lane.b32.xlu0 %v3557, 2
        %v3574 = vpop.permute.xlu0 %3573
        %3575 = vrot.lane.b32.xlu0 %v3558, 2
        %v3576 = vpop.permute.xlu0 %3575
        %3577 = vrot.lane.b32.xlu0 %v3559, 2
        %v3578 = vpop.permute.xlu0 %3577
        %3579 = vrot.lane.b32.xlu0 %v3560, 2
        %v3580 = vpop.permute.xlu0 %3579
        %v3581 = vsel %vm856, %v3572, %v3574
        %v3582 = vsel %vm856, %v3574, %v3576
        %v3583 = vsel %vm856, %v3576, %v3578
        %v3584 = vsel %vm856, %v3578, %v3580
        %v3585 = vsel %vm856, %v3580, %v3564
        %v3592 = vsel %vm856, %v3564, %v3572
        %v3593 = vsel %vm831, %v3592, %v3556
        %v3594 = vsel %vm832, %v3581, %v3557
        %v3595 = vsel %vm833, %v3582, %v3558
        %v3596 = vsel %vm834, %v3583, %v3559
        %v3597 = vsel %vm835, %v3584, %v3560
        %v3598 = vsel %vm836, %v3585, %v3561
        %3600 = vrot.lane.b32.xlu0 %v3598, 25
        %v3601 = vpop.permute.xlu0 %3600
        %3608 = vrot.lane.b32.xlu0 %v3593, 25
        %v3609 = vpop.permute.xlu0 %3608
        %3610 = vrot.lane.b32.xlu0 %v3594, 25
        %v3611 = vpop.permute.xlu0 %3610
        %3612 = vrot.lane.b32.xlu0 %v3595, 25
        %v3613 = vpop.permute.xlu0 %3612
        %3614 = vrot.lane.b32.xlu0 %v3596, 25
        %v3615 = vpop.permute.xlu0 %3614
        %3616 = vrot.lane.b32.xlu0 %v3597, 25
        %v3617 = vpop.permute.xlu0 %3616
        %v3618 = vsel %vm1594, %v3609, %v3611
        %v3619 = vsel %vm1594, %v3611, %v3613
        %v3620 = vsel %vm1594, %v3613, %v3615
        %v3621 = vsel %vm1594, %v3615, %v3617
        %v3622 = vsel %vm1594, %v3617, %v3601
        %v3629 = vsel %vm1594, %v3601, %v3609
        %3630 = vrot.lane.b32.xlu0 %v3598, 24
        %v3631 = vpop.permute.xlu0 %3630
        %3633 = vrot.lane.b32.xlu0 %v3593, 24
        %v3634 = vpop.permute.xlu0 %3633
        %3635 = vrot.lane.b32.xlu0 %v3594, 24
        %v3636 = vpop.permute.xlu0 %3635
        %3637 = vrot.lane.b32.xlu0 %v3595, 24
        %v3638 = vpop.permute.xlu0 %3637
        %3639 = vrot.lane.b32.xlu0 %v3596, 24
        %v3640 = vpop.permute.xlu0 %3639
        %3641 = vrot.lane.b32.xlu0 %v3597, 24
        %v3642 = vpop.permute.xlu0 %3641
        %v3643 = vsel %vm1620, %v3634, %v3636
        %v3644 = vsel %vm1620, %v3636, %v3638
        %v3645 = vsel %vm1620, %v3638, %v3640
        %v3646 = vsel %vm1620, %v3640, %v3642
        %v3647 = vsel %vm1620, %v3642, %v3631
        %v3654 = vsel %vm1620, %v3631, %v3634
        %3655 = vrot.lane.b32.xlu0 %v3598, 23
        %v3656 = vpop.permute.xlu0 %3655
        %3658 = vrot.lane.b32.xlu0 %v3593, 23
        %v3659 = vpop.permute.xlu0 %3658
        %3660 = vrot.lane.b32.xlu0 %v3594, 23
        %v3661 = vpop.permute.xlu0 %3660
        %3662 = vrot.lane.b32.xlu0 %v3595, 23
        %v3663 = vpop.permute.xlu0 %3662
        %3664 = vrot.lane.b32.xlu0 %v3596, 23
        %v3665 = vpop.permute.xlu0 %3664
        %3666 = vrot.lane.b32.xlu0 %v3597, 23
        %v3667 = vpop.permute.xlu0 %3666
        %v3668 = vsel %vm1646, %v3659, %v3661
        %v3669 = vsel %vm1646, %v3661, %v3663
        %v3670 = vsel %vm1646, %v3663, %v3665
        %v3671 = vsel %vm1646, %v3665, %v3667
        %v3672 = vsel %vm1646, %v3667, %v3656
        %v3679 = vsel %vm1646, %v3656, %v3659
        %3680 = vrot.lane.b32.xlu0 %v3598, 1
        %v3681 = vpop.permute.xlu0 %3680
        %3683 = vrot.lane.b32.xlu0 %v3593, 1
        %v3684 = vpop.permute.xlu0 %3683
        %3685 = vrot.lane.b32.xlu0 %v3594, 1
        %v3686 = vpop.permute.xlu0 %3685
        %3687 = vrot.lane.b32.xlu0 %v3595, 1
        %v3688 = vpop.permute.xlu0 %3687
        %3689 = vrot.lane.b32.xlu0 %v3596, 1
        %v3690 = vpop.permute.xlu0 %3689
        %3691 = vrot.lane.b32.xlu0 %v3597, 1
        %v3692 = vpop.permute.xlu0 %3691
        %v3693 = vsel %vm1775, %v3684, %v3686
        %v3694 = vsel %vm1775, %v3686, %v3688
        %v3695 = vsel %vm1775, %v3688, %v3690
        %v3696 = vsel %vm1775, %v3690, %v3692
        %v3697 = vsel %vm1775, %v3692, %v3681
        %v3704 = vsel %vm1775, %v3681, %v3684
        %3705 = vrot.lane.b32.xlu0 %v3593, 127
        %v3706 = vpop.permute.xlu0 %3705
        %3707 = vrot.lane.b32.xlu0 %v3594, 127
        %v3708 = vpop.permute.xlu0 %3707
        %3709 = vrot.lane.b32.xlu0 %v3595, 127
        %v3710 = vpop.permute.xlu0 %3709
        %3711 = vrot.lane.b32.xlu0 %v3596, 127
        %v3712 = vpop.permute.xlu0 %3711
        %3713 = vrot.lane.b32.xlu0 %v3597, 127
        %v3714 = vpop.permute.xlu0 %3713
        %3715 = vrot.lane.b32.xlu0 %v3598, 127
        %v3716 = vpop.permute.xlu0 %3715
        %v3717 = vsel %vm1800, %v3706, %v3708
        %v3718 = vsel %vm1800, %v3708, %v3710
        %v3719 = vsel %vm1800, %v3710, %v3712
        %v3720 = vsel %vm1800, %v3712, %v3714
        %v3721 = vsel %vm1800, %v3714, %v3716
        %v3729 = vsel %vm1800, %v3716, %v3706
        %3730 = vrot.lane.b32.xlu0 %v3593, 105
        %v3731 = vpop.permute.xlu0 %3730
        %3732 = vrot.lane.b32.xlu0 %v3594, 105
        %v3733 = vpop.permute.xlu0 %3732
        %3734 = vrot.lane.b32.xlu0 %v3595, 105
        %v3735 = vpop.permute.xlu0 %3734
        %3736 = vrot.lane.b32.xlu0 %v3596, 105
        %v3737 = vpop.permute.xlu0 %3736
        %3738 = vrot.lane.b32.xlu0 %v3597, 105
        %v3739 = vpop.permute.xlu0 %3738
        %3740 = vrot.lane.b32.xlu0 %v3598, 105
        %v3741 = vpop.permute.xlu0 %3740
        %v3742 = vsel %vm1929, %v3731, %v3733
        %v3743 = vsel %vm1929, %v3733, %v3735
        %v3744 = vsel %vm1929, %v3735, %v3737
        %v3745 = vsel %vm1929, %v3737, %v3739
        %v3746 = vsel %vm1929, %v3739, %v3741
        %v3754 = vsel %vm1929, %v3741, %v3731
        %3755 = vrot.lane.b32.xlu0 %v3593, 104
        %v3756 = vpop.permute.xlu0 %3755
        %3757 = vrot.lane.b32.xlu0 %v3594, 104
        %v3758 = vpop.permute.xlu0 %3757
        %3759 = vrot.lane.b32.xlu0 %v3595, 104
        %v3760 = vpop.permute.xlu0 %3759
        %3761 = vrot.lane.b32.xlu0 %v3596, 104
        %v3762 = vpop.permute.xlu0 %3761
        %3763 = vrot.lane.b32.xlu0 %v3597, 104
        %v3764 = vpop.permute.xlu0 %3763
        %3765 = vrot.lane.b32.xlu0 %v3598, 104
        %v3766 = vpop.permute.xlu0 %3765
        %v3767 = vsel %vm1955, %v3756, %v3758
        %v3768 = vsel %vm1955, %v3758, %v3760
        %v3769 = vsel %vm1955, %v3760, %v3762
        %v3770 = vsel %vm1955, %v3762, %v3764
        %v3771 = vsel %vm1955, %v3764, %v3766
        %v3779 = vsel %vm1955, %v3766, %v3756
        %3780 = vrot.lane.b32.xlu0 %v3593, 103
        %v3781 = vpop.permute.xlu0 %3780
        %3782 = vrot.lane.b32.xlu0 %v3594, 103
        %v3783 = vpop.permute.xlu0 %3782
        %3784 = vrot.lane.b32.xlu0 %v3595, 103
        %v3785 = vpop.permute.xlu0 %3784
        %3786 = vrot.lane.b32.xlu0 %v3596, 103
        %v3787 = vpop.permute.xlu0 %3786
        %3788 = vrot.lane.b32.xlu0 %v3597, 103
        %v3789 = vpop.permute.xlu0 %3788
        %3790 = vrot.lane.b32.xlu0 %v3598, 103
        %v3791 = vpop.permute.xlu0 %3790
        %v3792 = vsel %vm1981, %v3781, %v3783
        %v3793 = vsel %vm1981, %v3783, %v3785
        %v3794 = vsel %vm1981, %v3785, %v3787
        %v3795 = vsel %vm1981, %v3787, %v3789
        %v3796 = vsel %vm1981, %v3789, %v3791
        %v3804 = vsel %vm1981, %v3791, %v3781
        %3806 = vset.pattern.permute.xlu0 0
        %3807 = vperm.xlu0 %3806, %v3017
        %v3808 = vpop.permute.xlu0 %3807
        %v3811 = vsel %vm1257, %v3014, 0
        %3813 = vmatprep.subr.mxu0 %v3618
        %3814 = vmatpush1.msra.mxu0 %v3629
        %3815 = vmatprep.subr.mxu0 %v3643
        %3816 = vmatpush1.msra.mxu0 %v3654
        %3817 = vmatprep.subr.mxu0 %v3668
        %3818 = vmatpush1.msra.mxu0 %v3679
        %3819 = vmatprep.subr.mxu0 %v3693
        %3820 = vmatpush1.msra.mxu0 %v3704
        %3821 = vmatprep.subr.mxu0 %v3594
        %3822 = vmatpush1.msra.mxu0 %v3593
        %3823 = vmatprep.subr.mxu0 %v3718
        %3824 = vmatpush1.msra.mxu0 %v3717
        %3825 = vmatprep.subr.mxu0 %v3743
        %3826 = vmatpush1.msra.mxu0 %v3742
        %3827 = vmatprep.subr.mxu0 %v3768
        %3828 = vmatpush1.msra.mxu0 %v3767
        %3829 = vmatprep.subr.mxu0 %v3793
        %3830 = vmatpush1.msra.mxu0 %v3792
        %3831 = vmatprep.subr.mxu0 0.0
        %3832 = vmatpush1.msra.mxu0 0.0
        %3833 = vmatprep.subr.mxu0 0.0
        %3834 = vmatpush1.msra.mxu0 0.0
        %3835 = vmatprep.subr.mxu0 0.0
        %3836 = vmatpush1.msra.mxu0 0.0
        %3837 = vmatprep.subr.mxu0 0.0
        %3838 = vmatpush1.msra.mxu0 0.0
        %3839 = vmatprep.subr.mxu0 0.0
        %3840 = vmatpush1.msra.mxu0 0.0
        %3841 = vmatprep.subr.mxu0 0.0
        %3842 = vmatpush1.msra.mxu0 0.0
        %3843 = vmatprep.subr.mxu0 0.0
        %3844 = vmatpush1.msra.mxu0 0.0
        %3845 = vmatprep.subr.mxu0 0.0
        %3846 = vmatpush1.msra.mxu0 0.0
        %3847 = vmatprep.subr.mxu0 0.0
        %3848 = vmatpush1.msra.mxu0 0.0
        %3849 = vmatprep.subr.mxu0 0.0
        %3850 = vmatpush1.msra.mxu0 0.0
        %3851 = vmatprep.subr.mxu0 0.0
        %3852 = vmatpush1.msra.mxu0 0.0
        %3853 = vmatprep.subr.mxu0 0.0
        %3854 = vmatpush1.msra.mxu0 0.0
        %3855 = vmatprep.subr.mxu0 0.0
        %3856 = vmatpush1.msra.mxu0 0.0
        %3857 = vmatprep.subr.mxu0 0.0
        %3858 = vmatpush1.msra.mxu0 0.0
        %3859 = vmatprep.subr.mxu0 0.0
        %3860 = vmatpush1.msra.mxu0 0.0
        %3861 = vmatprep.subr.mxu0 0.0
        %3862 = vmatpush1.msra.mxu0 0.0
        %3863 = vmatprep.subr.mxu0 0.0
        %3864 = vmatpush1.msra.mxu0 0.0
        %3865 = vmatprep.subr.mxu0 0.0
        %3866 = vmatpush1.msra.mxu0 0.0
        %3867 = vmatprep.subr.mxu0 0.0
        %3868 = vmatpush1.msra.mxu0 0.0
        %3869 = vmatprep.subr.mxu0 0.0
        %3870 = vmatpush1.msra.mxu0 0.0
        %3871 = vmatprep.subr.mxu0 0.0
        %3872 = vmatpush1.msra.mxu0 0.0
        %3873 = vmatprep.subr.mxu0 0.0
        %3874 = vmatpush1.msra.mxu0 0.0
        %3875 = vmatprep.subr.mxu0 0.0
        %3876 = vmatpush1.msra.mxu0 0.0
        %3877 = vmatprep.mubr.f32.mxu0 0.0
        %3878 = vmatmul.mubr.f32.gmra.mrb[0].mxu0 %v3811
        %v3879 = vpop.f32.mrb[0].mxu0
        %v3880 = vadd.f32 %v3808, %v3879
        %v3881 = vpop.f32.mrb[0].mxu0
        %v3882 = vadd.f32 %v3808, %v3881
        %3883 = vdwg.mxu0
        %3884 = vmatprep.subr.mxu0 %v3620
        %3885 = vmatpush1.msra.mxu0 %v3619
        %3886 = vmatprep.subr.mxu0 %v3645
        %3887 = vmatpush1.msra.mxu0 %v3644
        %3888 = vmatprep.subr.mxu0 %v3670
        %3889 = vmatpush1.msra.mxu0 %v3669
        %3890 = vmatprep.subr.mxu0 %v3695
        %3891 = vmatpush1.msra.mxu0 %v3694
        %3892 = vmatprep.subr.mxu0 %v3596
        %3893 = vmatpush1.msra.mxu0 %v3595
        %3894 = vmatprep.subr.mxu0 %v3720
        %3895 = vmatpush1.msra.mxu0 %v3719
        %3896 = vmatprep.subr.mxu0 %v3745
        %3897 = vmatpush1.msra.mxu0 %v3744
        %3898 = vmatprep.subr.mxu0 %v3770
        %3899 = vmatpush1.msra.mxu0 %v3769
        %3900 = vmatprep.subr.mxu0 %v3795
        %3901 = vmatpush1.msra.mxu0 %v3794
        %3902 = vmatprep.subr.mxu0 0.0
        %3903 = vmatpush1.msra.mxu0 0.0
        %3904 = vmatprep.subr.mxu0 0.0
        %3905 = vmatpush1.msra.mxu0 0.0
        %3906 = vmatprep.subr.mxu0 0.0
        %3907 = vmatpush1.msra.mxu0 0.0
        %3908 = vmatprep.subr.mxu0 0.0
        %3909 = vmatpush1.msra.mxu0 0.0
        %3910 = vmatprep.subr.mxu0 0.0
        %3911 = vmatpush1.msra.mxu0 0.0
        %3912 = vmatprep.subr.mxu0 0.0
        %3913 = vmatpush1.msra.mxu0 0.0
        %3914 = vmatprep.subr.mxu0 0.0
        %3915 = vmatpush1.msra.mxu0 0.0
        %3916 = vmatprep.subr.mxu0 0.0
        %3917 = vmatpush1.msra.mxu0 0.0
        %3918 = vmatprep.subr.mxu0 0.0
        %3919 = vmatpush1.msra.mxu0 0.0
        %3920 = vmatprep.subr.mxu0 0.0
        %3921 = vmatpush1.msra.mxu0 0.0
        %3922 = vmatprep.subr.mxu0 0.0
        %3923 = vmatpush1.msra.mxu0 0.0
        %3924 = vmatprep.subr.mxu0 0.0
        %3925 = vmatpush1.msra.mxu0 0.0
        %3926 = vmatprep.subr.mxu0 0.0
        %3927 = vmatpush1.msra.mxu0 0.0
        %3928 = vmatprep.subr.mxu0 0.0
        %3929 = vmatpush1.msra.mxu0 0.0
        %3930 = vmatprep.subr.mxu0 0.0
        %3931 = vmatpush1.msra.mxu0 0.0
        %3932 = vmatprep.subr.mxu0 0.0
        %3933 = vmatpush1.msra.mxu0 0.0
        %3934 = vmatprep.subr.mxu0 0.0
        %3935 = vmatpush1.msra.mxu0 0.0
        %3936 = vmatprep.subr.mxu0 0.0
        %3937 = vmatpush1.msra.mxu0 0.0
        %3938 = vmatprep.subr.mxu0 0.0
        %3939 = vmatpush1.msra.mxu0 0.0
        %3940 = vmatprep.subr.mxu0 0.0
        %3941 = vmatpush1.msra.mxu0 0.0
        %3942 = vmatprep.subr.mxu0 0.0
        %3943 = vmatpush1.msra.mxu0 0.0
        %3944 = vmatprep.subr.mxu0 0.0
        %3945 = vmatpush1.msra.mxu0 0.0
        %3946 = vmatprep.subr.mxu0 0.0
        %3947 = vmatpush1.msra.mxu0 0.0
        %3948 = vmatprep.mubr.f32.mxu0 0.0
        %3949 = vmatmul.mubr.f32.gmra.mrb[0].mxu0 %v3811
        %v3950 = vpop.f32.mrb[0].mxu0
        %v3951 = vadd.f32 %v3808, %v3950
        %v3952 = vpop.f32.mrb[0].mxu0
        %v3953 = vadd.f32 %v3808, %v3952
        %3954 = vdwg.mxu0
        %3955 = vmatprep.subr.mxu0 %v3622
        %3956 = vmatpush1.msra.mxu0 %v3621
        %3957 = vmatprep.subr.mxu0 %v3647
        %3958 = vmatpush1.msra.mxu0 %v3646
        %3959 = vmatprep.subr.mxu0 %v3672
        %3960 = vmatpush1.msra.mxu0 %v3671
        %3961 = vmatprep.subr.mxu0 %v3697
        %3962 = vmatpush1.msra.mxu0 %v3696
        %3963 = vmatprep.subr.mxu0 %v3598
        %3964 = vmatpush1.msra.mxu0 %v3597
        %3965 = vmatprep.subr.mxu0 %v3729
        %3966 = vmatpush1.msra.mxu0 %v3721
        %3967 = vmatprep.subr.mxu0 %v3754
        %3968 = vmatpush1.msra.mxu0 %v3746
        %3969 = vmatprep.subr.mxu0 %v3779
        %3970 = vmatpush1.msra.mxu0 %v3771
        %3971 = vmatprep.subr.mxu0 %v3804
        %3972 = vmatpush1.msra.mxu0 %v3796
        %3973 = vmatprep.subr.mxu0 0.0
        %3974 = vmatpush1.msra.mxu0 0.0
        %3975 = vmatprep.subr.mxu0 0.0
        %3976 = vmatpush1.msra.mxu0 0.0
        %3977 = vmatprep.subr.mxu0 0.0
        %3978 = vmatpush1.msra.mxu0 0.0
        %3979 = vmatprep.subr.mxu0 0.0
        %3980 = vmatpush1.msra.mxu0 0.0
        %3981 = vmatprep.subr.mxu0 0.0
        %3982 = vmatpush1.msra.mxu0 0.0
        %3983 = vmatprep.subr.mxu0 0.0
        %3984 = vmatpush1.msra.mxu0 0.0
        %3985 = vmatprep.subr.mxu0 0.0
        %3986 = vmatpush1.msra.mxu0 0.0
        %3987 = vmatprep.subr.mxu0 0.0
        %3988 = vmatpush1.msra.mxu0 0.0
        %3989 = vmatprep.subr.mxu0 0.0
        %3990 = vmatpush1.msra.mxu0 0.0
        %3991 = vmatprep.subr.mxu0 0.0
        %3992 = vmatpush1.msra.mxu0 0.0
        %3993 = vmatprep.subr.mxu0 0.0
        %3994 = vmatpush1.msra.mxu0 0.0
        %3995 = vmatprep.subr.mxu0 0.0
        %3996 = vmatpush1.msra.mxu0 0.0
        %3997 = vmatprep.subr.mxu0 0.0
        %3998 = vmatpush1.msra.mxu0 0.0
        %3999 = vmatprep.subr.mxu0 0.0
        %4000 = vmatpush1.msra.mxu0 0.0
        %4001 = vmatprep.subr.mxu0 0.0
        %4002 = vmatpush1.msra.mxu0 0.0
        %4003 = vmatprep.subr.mxu0 0.0
        %4004 = vmatpush1.msra.mxu0 0.0
        %4005 = vmatprep.subr.mxu0 0.0
        %4006 = vmatpush1.msra.mxu0 0.0
        %4007 = vmatprep.subr.mxu0 0.0
        %4008 = vmatpush1.msra.mxu0 0.0
        %4009 = vmatprep.subr.mxu0 0.0
        %4010 = vmatpush1.msra.mxu0 0.0
        %4011 = vmatprep.subr.mxu0 0.0
        %4012 = vmatpush1.msra.mxu0 0.0
        %4013 = vmatprep.subr.mxu0 0.0
        %4014 = vmatpush1.msra.mxu0 0.0
        %4015 = vmatprep.subr.mxu0 0.0
        %4016 = vmatpush1.msra.mxu0 0.0
        %4017 = vmatprep.subr.mxu0 0.0
        %4018 = vmatpush1.msra.mxu0 0.0
        %4019 = vmatprep.mubr.f32.mxu0 0.0
        %4020 = vmatmul.mubr.f32.gmra.mrb[0].mxu0 %v3811
        %v4021 = vpop.f32.mrb[0].mxu0
        %v4022 = vadd.f32 %v3808, %v4021
        %v4023 = vpop.f32.mrb[0].mxu0
        %v4024 = vadd.f32 %v3808, %v4023
        %4025 = vdwg.mxu0
        %v4026 = vadd.f32 %v3005, %v3880
        %v4027 = vadd.f32 %v3006, %v3882
        %v4028 = vadd.f32 %v3007, %v3951
        %v4029 = vadd.f32 %v3008, %v3953
        %v4030 = vadd.f32 %v3009, %v4022
        %v4031 = vadd.f32 %v3010, %v4024
        %4038 = vrot.lane.b32.xlu0 %v4026, 80
        %v4039 = vpop.permute.xlu0 %4038
        %4040 = vrot.lane.b32.xlu0 %v4027, 80
        %v4041 = vpop.permute.xlu0 %4040
        %4042 = vrot.lane.b32.xlu0 %v4028, 80
        %v4043 = vpop.permute.xlu0 %4042
        %4044 = vrot.lane.b32.xlu0 %v4029, 80
        %v4045 = vpop.permute.xlu0 %4044
        %4046 = vrot.lane.b32.xlu0 %v4030, 80
        %v4047 = vpop.permute.xlu0 %4046
        %4048 = vrot.lane.b32.xlu0 %v4031, 80
        %v4049 = vpop.permute.xlu0 %4048
        %v4050 = vsel %vm365, %v4039, %v4041
        %v4051 = vsel %vm365, %v4041, %v4043
        %v4052 = vsel %vm365, %v4043, %v4045
        %v4053 = vsel %vm365, %v4045, %v4047
        %v4054 = vsel %vm365, %v4047, %v4049
        %v4062 = vsel %vm365, %v4049, %v4039
        %v4063 = vsel %vm341, %v4050, %v4026
        %v4064 = vsel %vm342, %v4051, %v4027
        %v4065 = vsel %vm343, %v4052, %v4028
        %v4066 = vsel %vm344, %v4053, %v4029
        %v4067 = vsel %vm345, %v4054, %v4030
        %v4068 = vsel %vm346, %v4062, %v4031
        %4070 = vrot.lane.b32.xlu0 %v4068, 48
        %v4071 = vpop.permute.xlu0 %4070
        %4078 = vrot.lane.b32.xlu0 %v4063, 48
        %v4079 = vpop.permute.xlu0 %4078
        %4080 = vrot.lane.b32.xlu0 %v4064, 48
        %v4081 = vpop.permute.xlu0 %4080
        %4082 = vrot.lane.b32.xlu0 %v4065, 48
        %v4083 = vpop.permute.xlu0 %4082
        %4084 = vrot.lane.b32.xlu0 %v4066, 48
        %v4085 = vpop.permute.xlu0 %4084
        %4086 = vrot.lane.b32.xlu0 %v4067, 48
        %v4087 = vpop.permute.xlu0 %4086
        %v4088 = vsel %vm436, %v4079, %v4081
        %v4089 = vsel %vm436, %v4081, %v4083
        %v4090 = vsel %vm436, %v4083, %v4085
        %v4091 = vsel %vm436, %v4085, %v4087
        %v4092 = vsel %vm436, %v4087, %v4071
        %v4099 = vsel %vm436, %v4071, %v4079
        %v4100 = vsel %vm411, %v4099, %v4063
        %v4101 = vsel %vm412, %v4088, %v4064
        %v4102 = vsel %vm413, %v4089, %v4065
        %v4103 = vsel %vm414, %v4090, %v4066
        %v4104 = vsel %vm415, %v4091, %v4067
        %v4105 = vsel %vm416, %v4092, %v4068
        %4112 = vrot.lane.b32.xlu0 %v4100, 126
        %v4113 = vpop.permute.xlu0 %4112
        %4114 = vrot.lane.b32.xlu0 %v4101, 126
        %v4115 = vpop.permute.xlu0 %4114
        %4116 = vrot.lane.b32.xlu0 %v4102, 126
        %v4117 = vpop.permute.xlu0 %4116
        %4118 = vrot.lane.b32.xlu0 %v4103, 126
        %v4119 = vpop.permute.xlu0 %4118
        %4120 = vrot.lane.b32.xlu0 %v4104, 126
        %v4121 = vpop.permute.xlu0 %4120
        %4122 = vrot.lane.b32.xlu0 %v4105, 126
        %v4123 = vpop.permute.xlu0 %4122
        %v4124 = vsel %vm785, %v4113, %v4115
        %v4125 = vsel %vm785, %v4115, %v4117
        %v4126 = vsel %vm785, %v4117, %v4119
        %v4127 = vsel %vm785, %v4119, %v4121
        %v4128 = vsel %vm785, %v4121, %v4123
        %v4136 = vsel %vm785, %v4123, %v4113
        %v4137 = vsel %vm761, %v4124, %v4100
        %v4138 = vsel %vm762, %v4125, %v4101
        %v4139 = vsel %vm763, %v4126, %v4102
        %v4140 = vsel %vm764, %v4127, %v4103
        %v4141 = vsel %vm765, %v4128, %v4104
        %v4142 = vsel %vm766, %v4136, %v4105
        %4144 = vrot.lane.b32.xlu0 %v4142, 2
        %v4145 = vpop.permute.xlu0 %4144
        %4152 = vrot.lane.b32.xlu0 %v4137, 2
        %v4153 = vpop.permute.xlu0 %4152
        %4154 = vrot.lane.b32.xlu0 %v4138, 2
        %v4155 = vpop.permute.xlu0 %4154
        %4156 = vrot.lane.b32.xlu0 %v4139, 2
        %v4157 = vpop.permute.xlu0 %4156
        %4158 = vrot.lane.b32.xlu0 %v4140, 2
        %v4159 = vpop.permute.xlu0 %4158
        %4160 = vrot.lane.b32.xlu0 %v4141, 2
        %v4161 = vpop.permute.xlu0 %4160
        %v4162 = vsel %vm856, %v4153, %v4155
        %v4163 = vsel %vm856, %v4155, %v4157
        %v4164 = vsel %vm856, %v4157, %v4159
        %v4165 = vsel %vm856, %v4159, %v4161
        %v4166 = vsel %vm856, %v4161, %v4145
        %v4173 = vsel %vm856, %v4145, %v4153
        %v4174 = vsel %vm831, %v4173, %v4137
        %v4175 = vsel %vm832, %v4162, %v4138
        %v4176 = vsel %vm833, %v4163, %v4139
        %v4177 = vsel %vm834, %v4164, %v4140
        %v4178 = vsel %vm835, %v4165, %v4141
        %v4179 = vsel %vm836, %v4166, %v4142
      $region57: #{resnet_forward.1} parent=51 // loop_footer
        %s3004 = sadd.s32 1, %s3000
      $region58: #{resnet_forward.1} parent=51 // loop_footer_branch
        %2999 = sbr.rel target = $region54
      $region59: #{resnet_forward.1} parent=51 // loop_exit
        _
      %4186 = vrot.lane.b32.xlu0 %v3005, 80
      %v4187 = vpop.permute.xlu0 %4186
      %4188 = vrot.lane.b32.xlu0 %v3006, 80
      %v4189 = vpop.permute.xlu0 %4188
      %4190 = vrot.lane.b32.xlu0 %v3007, 80
      %v4191 = vpop.permute.xlu0 %4190
      %4192 = vrot.lane.b32.xlu0 %v3008, 80
      %v4193 = vpop.permute.xlu0 %4192
      %4194 = vrot.lane.b32.xlu0 %v3009, 80
      %v4195 = vpop.permute.xlu0 %4194
      %4196 = vrot.lane.b32.xlu0 %v3010, 80
      %v4197 = vpop.permute.xlu0 %4196
      %v4198 = vsel %vm365, %v4187, %v4189
      %v4199 = vsel %vm365, %v4189, %v4191
      %v4200 = vsel %vm365, %v4191, %v4193
      %v4201 = vsel %vm365, %v4193, %v4195
      %v4202 = vsel %vm365, %v4195, %v4197
      %v4210 = vsel %vm365, %v4197, %v4187
      %v4211 = vsel %vm341, %v4198, %v3005
      %v4212 = vsel %vm342, %v4199, %v3006
      %v4213 = vsel %vm343, %v4200, %v3007
      %v4214 = vsel %vm344, %v4201, %v3008
      %v4215 = vsel %vm345, %v4202, %v3009
      %v4216 = vsel %vm346, %v4210, %v3010
      %4218 = vrot.lane.b32.xlu0 %v4216, 48
      %v4219 = vpop.permute.xlu0 %4218
      %4226 = vrot.lane.b32.xlu0 %v4211, 48
      %v4227 = vpop.permute.xlu0 %4226
      %4228 = vrot.lane.b32.xlu0 %v4212, 48
      %v4229 = vpop.permute.xlu0 %4228
      %4230 = vrot.lane.b32.xlu0 %v4213, 48
      %v4231 = vpop.permute.xlu0 %4230
      %4232 = vrot.lane.b32.xlu0 %v4214, 48
      %v4233 = vpop.permute.xlu0 %4232
      %4234 = vrot.lane.b32.xlu0 %v4215, 48
      %v4235 = vpop.permute.xlu0 %4234
      %v4236 = vsel %vm436, %v4227, %v4229
      %v4237 = vsel %vm436, %v4229, %v4231
      %v4238 = vsel %vm436, %v4231, %v4233
      %v4239 = vsel %vm436, %v4233, %v4235
      %v4240 = vsel %vm436, %v4235, %v4219
      %v4247 = vsel %vm436, %v4219, %v4227
      %v4248 = vsel %vm411, %v4247, %v4211
      %v4249 = vsel %vm412, %v4236, %v4212
      %v4250 = vsel %vm413, %v4237, %v4213
      %v4251 = vsel %vm414, %v4238, %v4214
      %v4252 = vsel %vm415, %v4239, %v4215
      %v4253 = vsel %vm416, %v4240, %v4216
      %4260 = vrot.lane.b32.xlu0 %v4248, 32
      %v4261 = vpop.permute.xlu0 %4260
      %4262 = vrot.lane.b32.xlu0 %v4249, 32
      %v4263 = vpop.permute.xlu0 %4262
      %4264 = vrot.lane.b32.xlu0 %v4250, 32
      %v4265 = vpop.permute.xlu0 %4264
      %4266 = vrot.lane.b32.xlu0 %v4251, 32
      %v4267 = vpop.permute.xlu0 %4266
      %4268 = vrot.lane.b32.xlu0 %v4252, 32
      %v4269 = vpop.permute.xlu0 %4268
      %4270 = vrot.lane.b32.xlu0 %v4253, 32
      %v4271 = vpop.permute.xlu0 %4270
      %v4272 = vsel %vm505, %v4261, %v4263
      %v4273 = vsel %vm505, %v4263, %v4265
      %v4274 = vsel %vm505, %v4265, %v4267
      %v4275 = vsel %vm505, %v4267, %v4269
      %v4276 = vsel %vm505, %v4269, %v4271
      %v4284 = vsel %vm505, %v4271, %v4261
      %v4285 = vsel %vm481, %v4272, %v4248
      %v4286 = vsel %vm482, %v4273, %v4249
      %v4287 = vsel %vm483, %v4274, %v4250
      %v4288 = vsel %vm484, %v4275, %v4251
      %v4289 = vsel %vm485, %v4276, %v4252
      %v4290 = vsel %vm486, %v4284, %v4253
      %4292 = vrot.lane.b32.xlu0 %v4290, 96
      %v4293 = vpop.permute.xlu0 %4292
      %4300 = vrot.lane.b32.xlu0 %v4285, 96
      %v4301 = vpop.permute.xlu0 %4300
      %4302 = vrot.lane.b32.xlu0 %v4286, 96
      %v4303 = vpop.permute.xlu0 %4302
      %4304 = vrot.lane.b32.xlu0 %v4287, 96
      %v4305 = vpop.permute.xlu0 %4304
      %4306 = vrot.lane.b32.xlu0 %v4288, 96
      %v4307 = vpop.permute.xlu0 %4306
      %4308 = vrot.lane.b32.xlu0 %v4289, 96
      %v4309 = vpop.permute.xlu0 %4308
      %v4310 = vsel %vm576, %v4301, %v4303
      %v4311 = vsel %vm576, %v4303, %v4305
      %v4312 = vsel %vm576, %v4305, %v4307
      %v4313 = vsel %vm576, %v4307, %v4309
      %v4314 = vsel %vm576, %v4309, %v4293
      %v4321 = vsel %vm576, %v4293, %v4301
      %v4322 = vsel %vm551, %v4321, %v4285
      %v4323 = vsel %vm552, %v4310, %v4286
      %v4324 = vsel %vm553, %v4311, %v4287
      %v4325 = vsel %vm554, %v4312, %v4288
      %v4326 = vsel %vm555, %v4313, %v4289
      %v4327 = vsel %vm556, %v4314, %v4290
      %4333 = vrot.lane.b32.xlu0 %v4323, 112
      %v4334 = vpop.permute.xlu0 %4333
      %4335 = vrot.lane.b32.xlu0 %v4324, 112
      %v4336 = vpop.permute.xlu0 %4335
      %4337 = vrot.lane.b32.xlu0 %v4325, 112
      %v4338 = vpop.permute.xlu0 %4337
      %4339 = vrot.lane.b32.xlu0 %v4326, 112
      %v4340 = vpop.permute.xlu0 %4339
      %4341 = vrot.lane.b32.xlu0 %v4327, 112
      %v4342 = vpop.permute.xlu0 %4341
      %v4343 = vsel %vm642, %v4334, %v4336
      %v4344 = vsel %vm642, %v4336, %v4338
      %v4345 = vsel %vm642, %v4338, %v4340
      %v4346 = vsel %vm642, %v4340, %v4342
      %4353 = vrot.lane.b32.xlu0 %v4322, 112
      %v4354 = vpop.permute.xlu0 %4353
      %v4355 = vsel %vm642, %v4354, %v4334
      %v4358 = vsel %vm642, %v4342, %v4354
      %v4359 = vsel %vm621, %v4343, %v4322
      %v4360 = vsel %vm622, %v4344, %v4323
      %v4361 = vsel %vm623, %v4345, %v4324
      %v4362 = vsel %vm624, %v4346, %v4325
      %v4363 = vsel %vm625, %v4358, %v4326
      %v4364 = vsel %vm626, %v4355, %v4327
      %4367 = vrot.lane.b32.xlu0 %v4363, 16
      %v4368 = vpop.permute.xlu0 %4367
      %4369 = vrot.lane.b32.xlu0 %v4364, 16
      %v4370 = vpop.permute.xlu0 %4369
      %v4371 = vsel %vm703, %v4368, %v4370
      %4378 = vrot.lane.b32.xlu0 %v4359, 16
      %v4379 = vpop.permute.xlu0 %4378
      %4380 = vrot.lane.b32.xlu0 %v4360, 16
      %v4381 = vpop.permute.xlu0 %4380
      %4382 = vrot.lane.b32.xlu0 %v4361, 16
      %v4383 = vpop.permute.xlu0 %4382
      %4384 = vrot.lane.b32.xlu0 %v4362, 16
      %v4385 = vpop.permute.xlu0 %4384
      %v4386 = vsel %vm703, %v4379, %v4381
      %v4387 = vsel %vm703, %v4381, %v4383
      %v4388 = vsel %vm703, %v4383, %v4385
      %v4389 = vsel %vm703, %v4385, %v4368
      %v4395 = vsel %vm703, %v4370, %v4379
      %v4396 = vsel %vm691, %v4371, %v4359
      %v4397 = vsel %vm692, %v4395, %v4360
      %v4398 = vsel %vm693, %v4386, %v4361
      %v4399 = vsel %vm694, %v4387, %v4362
      %v4400 = vsel %vm695, %v4388, %v4363
      %v4401 = vsel %vm696, %v4389, %v4364
      %4408 = vrot.lane.b32.xlu0 %v4396, 126
      %v4409 = vpop.permute.xlu0 %4408
      %4410 = vrot.lane.b32.xlu0 %v4397, 126
      %v4411 = vpop.permute.xlu0 %4410
      %4412 = vrot.lane.b32.xlu0 %v4398, 126
      %v4413 = vpop.permute.xlu0 %4412
      %4414 = vrot.lane.b32.xlu0 %v4399, 126
      %v4415 = vpop.permute.xlu0 %4414
      %4416 = vrot.lane.b32.xlu0 %v4400, 126
      %v4417 = vpop.permute.xlu0 %4416
      %4418 = vrot.lane.b32.xlu0 %v4401, 126
      %v4419 = vpop.permute.xlu0 %4418
      %v4420 = vsel %vm785, %v4409, %v4411
      %v4421 = vsel %vm785, %v4411, %v4413
      %v4422 = vsel %vm785, %v4413, %v4415
      %v4423 = vsel %vm785, %v4415, %v4417
      %v4424 = vsel %vm785, %v4417, %v4419
      %v4432 = vsel %vm785, %v4419, %v4409
      %v4433 = vsel %vm761, %v4420, %v4396
      %v4434 = vsel %vm762, %v4421, %v4397
      %v4435 = vsel %vm763, %v4422, %v4398
      %v4436 = vsel %vm764, %v4423, %v4399
      %v4437 = vsel %vm765, %v4424, %v4400
      %v4438 = vsel %vm766, %v4432, %v4401
      %4440 = vrot.lane.b32.xlu0 %v4438, 2
      %v4441 = vpop.permute.xlu0 %4440
      %4448 = vrot.lane.b32.xlu0 %v4433, 2
      %v4449 = vpop.permute.xlu0 %4448
      %4450 = vrot.lane.b32.xlu0 %v4434, 2
      %v4451 = vpop.permute.xlu0 %4450
      %4452 = vrot.lane.b32.xlu0 %v4435, 2
      %v4453 = vpop.permute.xlu0 %4452
      %4454 = vrot.lane.b32.xlu0 %v4436, 2
      %v4455 = vpop.permute.xlu0 %4454
      %4456 = vrot.lane.b32.xlu0 %v4437, 2
      %v4457 = vpop.permute.xlu0 %4456
      %v4458 = vsel %vm856, %v4449, %v4451
      %v4459 = vsel %vm856, %v4451, %v4453
      %v4460 = vsel %vm856, %v4453, %v4455
      %v4461 = vsel %vm856, %v4455, %v4457
      %v4462 = vsel %vm856, %v4457, %v4441
      %v4469 = vsel %vm856, %v4441, %v4449
      %v4470 = vsel %vm831, %v4469, %v4433
      %v4471 = vsel %vm832, %v4458, %v4434
      %v4472 = vsel %vm833, %v4459, %v4435
      %v4473 = vsel %vm834, %v4460, %v4436
      %v4474 = vsel %vm835, %v4461, %v4437
      %v4475 = vsel %vm836, %v4462, %v4438
      %4482 = vrot.lane.b32.xlu0 %v4470, 124
      %v4483 = vpop.permute.xlu0 %4482
      %4484 = vrot.lane.b32.xlu0 %v4471, 124
      %v4485 = vpop.permute.xlu0 %4484
      %4486 = vrot.lane.b32.xlu0 %v4472, 124
      %v4487 = vpop.permute.xlu0 %4486
      %4488 = vrot.lane.b32.xlu0 %v4473, 124
      %v4489 = vpop.permute.xlu0 %4488
      %4490 = vrot.lane.b32.xlu0 %v4474, 124
      %v4491 = vpop.permute.xlu0 %4490
      %4492 = vrot.lane.b32.xlu0 %v4475, 124
      %v4493 = vpop.permute.xlu0 %4492
      %v4494 = vsel %vm925, %v4483, %v4485
      %v4495 = vsel %vm925, %v4485, %v4487
      %v4496 = vsel %vm925, %v4487, %v4489
      %v4497 = vsel %vm925, %v4489, %v4491
      %v4498 = vsel %vm925, %v4491, %v4493
      %v4506 = vsel %vm925, %v4493, %v4483
      %v4507 = vsel %vm901, %v4494, %v4470
      %v4508 = vsel %vm902, %v4495, %v4471
      %v4509 = vsel %vm903, %v4496, %v4472
      %v4510 = vsel %vm904, %v4497, %v4473
      %v4511 = vsel %vm905, %v4498, %v4474
      %v4512 = vsel %vm906, %v4506, %v4475
      %4514 = vrot.lane.b32.xlu0 %v4512, 4
      %v4515 = vpop.permute.xlu0 %4514
      %4522 = vrot.lane.b32.xlu0 %v4507, 4
      %v4523 = vpop.permute.xlu0 %4522
      %4524 = vrot.lane.b32.xlu0 %v4508, 4
      %v4525 = vpop.permute.xlu0 %4524
      %4526 = vrot.lane.b32.xlu0 %v4509, 4
      %v4527 = vpop.permute.xlu0 %4526
      %4528 = vrot.lane.b32.xlu0 %v4510, 4
      %v4529 = vpop.permute.xlu0 %4528
      %4530 = vrot.lane.b32.xlu0 %v4511, 4
      %v4531 = vpop.permute.xlu0 %4530
      %v4532 = vsel %vm996, %v4523, %v4525
      %v4533 = vsel %vm996, %v4525, %v4527
      %v4534 = vsel %vm996, %v4527, %v4529
      %v4535 = vsel %vm996, %v4529, %v4531
      %v4536 = vsel %vm996, %v4531, %v4515
      %v4543 = vsel %vm996, %v4515, %v4523
      %v4544 = vsel %vm971, %v4543, %v4507
      %v4545 = vsel %vm972, %v4532, %v4508
      %v4546 = vsel %vm973, %v4533, %v4509
      %v4547 = vsel %vm974, %v4534, %v4510
      %v4548 = vsel %vm975, %v4535, %v4511
      %v4549 = vsel %vm976, %v4536, %v4512
      %4556 = vrot.lane.b32.xlu0 %v4544, 122
      %v4557 = vpop.permute.xlu0 %4556
      %4558 = vrot.lane.b32.xlu0 %v4545, 122
      %v4559 = vpop.permute.xlu0 %4558
      %4560 = vrot.lane.b32.xlu0 %v4546, 122
      %v4561 = vpop.permute.xlu0 %4560
      %4562 = vrot.lane.b32.xlu0 %v4547, 122
      %v4563 = vpop.permute.xlu0 %4562
      %4564 = vrot.lane.b32.xlu0 %v4548, 122
      %v4565 = vpop.permute.xlu0 %4564
      %4566 = vrot.lane.b32.xlu0 %v4549, 122
      %v4567 = vpop.permute.xlu0 %4566
      %v4568 = vsel %vm1065, %v4557, %v4559
      %v4569 = vsel %vm1065, %v4559, %v4561
      %v4570 = vsel %vm1065, %v4561, %v4563
      %v4571 = vsel %vm1065, %v4563, %v4565
      %v4572 = vsel %vm1065, %v4565, %v4567
      %v4580 = vsel %vm1065, %v4567, %v4557
      %v4581 = vsel %vm1041, %v4568, %v4544
      %v4582 = vsel %vm1042, %v4569, %v4545
      %v4583 = vsel %vm1043, %v4570, %v4546
      %v4584 = vsel %vm1044, %v4571, %v4547
      %v4585 = vsel %vm1045, %v4572, %v4548
      %v4586 = vsel %vm1046, %v4580, %v4549
      %4588 = vrot.lane.b32.xlu0 %v4586, 6
      %v4589 = vpop.permute.xlu0 %4588
      %4596 = vrot.lane.b32.xlu0 %v4581, 6
      %v4597 = vpop.permute.xlu0 %4596
      %4598 = vrot.lane.b32.xlu0 %v4582, 6
      %v4599 = vpop.permute.xlu0 %4598
      %4600 = vrot.lane.b32.xlu0 %v4583, 6
      %v4601 = vpop.permute.xlu0 %4600
      %4602 = vrot.lane.b32.xlu0 %v4584, 6
      %v4603 = vpop.permute.xlu0 %4602
      %4604 = vrot.lane.b32.xlu0 %v4585, 6
      %v4605 = vpop.permute.xlu0 %4604
      %v4606 = vsel %vm1136, %v4597, %v4599
      %v4607 = vsel %vm1136, %v4599, %v4601
      %v4608 = vsel %vm1136, %v4601, %v4603
      %v4609 = vsel %vm1136, %v4603, %v4605
      %v4610 = vsel %vm1136, %v4605, %v4589
      %v4617 = vsel %vm1136, %v4589, %v4597
      %v4618 = vsel %vm1111, %v4617, %v4581
      %v4619 = vsel %vm1112, %v4606, %v4582
      %v4620 = vsel %vm1113, %v4607, %v4583
      %v4621 = vsel %vm1114, %v4608, %v4584
      %v4622 = vsel %vm1115, %v4609, %v4585
      %v4623 = vsel %vm1116, %v4610, %v4586
      %v4624 = vld [vmem:[%s6] sm:$0xff]
      %v4625 = vld [vmem:[%s6 + $0x8] sm:$0xff]
      %v4626 = vld [vmem:[%s6 + $0x10] sm:$0xff]
      %v4627 = vld [vmem:[%s6 + $0x18] sm:$0xff]
      %v4628 = vld [vmem:[%s7] sm:$0xff]
      %4630 = vrot.lane.b32.xlu0 %v4623, 75
      %v4631 = vpop.permute.xlu0 %4630
      %4638 = vrot.lane.b32.xlu0 %v4618, 75
      %v4639 = vpop.permute.xlu0 %4638
      %4640 = vrot.lane.b32.xlu0 %v4619, 75
      %v4641 = vpop.permute.xlu0 %4640
      %4642 = vrot.lane.b32.xlu0 %v4620, 75
      %v4643 = vpop.permute.xlu0 %4642
      %4644 = vrot.lane.b32.xlu0 %v4621, 75
      %v4645 = vpop.permute.xlu0 %4644
      %4646 = vrot.lane.b32.xlu0 %v4622, 75
      %v4647 = vpop.permute.xlu0 %4646
      %v4648 = vsel %vm1179, %v4639, %v4641
      %v4649 = vsel %vm1179, %v4641, %v4643
      %v4650 = vsel %vm1179, %v4643, %v4645
      %v4651 = vsel %vm1179, %v4645, %v4647
      %v4652 = vsel %vm1179, %v4647, %v4631
      %v4659 = vsel %vm1179, %v4631, %v4639
      %4660 = vrot.lane.b32.xlu0 %v4623, 74
      %v4661 = vpop.permute.xlu0 %4660
      %4663 = vrot.lane.b32.xlu0 %v4618, 74
      %v4664 = vpop.permute.xlu0 %4663
      %4665 = vrot.lane.b32.xlu0 %v4619, 74
      %v4666 = vpop.permute.xlu0 %4665
      %4667 = vrot.lane.b32.xlu0 %v4620, 74
      %v4668 = vpop.permute.xlu0 %4667
      %4669 = vrot.lane.b32.xlu0 %v4621, 74
      %v4670 = vpop.permute.xlu0 %4669
      %4671 = vrot.lane.b32.xlu0 %v4622, 74
      %v4672 = vpop.permute.xlu0 %4671
      %v4673 = vsel %vm1205, %v4664, %v4666
      %v4674 = vsel %vm1205, %v4666, %v4668
      %v4675 = vsel %vm1205, %v4668, %v4670
      %v4676 = vsel %vm1205, %v4670, %v4672
      %v4677 = vsel %vm1205, %v4672, %v4661
      %v4684 = vsel %vm1205, %v4661, %v4664
      %4685 = vrot.lane.b32.xlu0 %v4623, 73
      %v4686 = vpop.permute.xlu0 %4685
      %4688 = vrot.lane.b32.xlu0 %v4618, 73
      %v4689 = vpop.permute.xlu0 %4688
      %4690 = vrot.lane.b32.xlu0 %v4619, 73
      %v4691 = vpop.permute.xlu0 %4690
      %4692 = vrot.lane.b32.xlu0 %v4620, 73
      %v4693 = vpop.permute.xlu0 %4692
      %4694 = vrot.lane.b32.xlu0 %v4621, 73
      %v4695 = vpop.permute.xlu0 %4694
      %4696 = vrot.lane.b32.xlu0 %v4622, 73
      %v4697 = vpop.permute.xlu0 %4696
      %v4698 = vsel %vm1231, %v4689, %v4691
      %v4699 = vsel %vm1231, %v4691, %v4693
      %v4700 = vsel %vm1231, %v4693, %v4695
      %v4701 = vsel %vm1231, %v4695, %v4697
      %v4702 = vsel %vm1231, %v4697, %v4686
      %v4709 = vsel %vm1231, %v4686, %v4689
      %4710 = vrot.lane.b32.xlu0 %v4623, 72
      %v4711 = vpop.permute.xlu0 %4710
      %4713 = vrot.lane.b32.xlu0 %v4618, 72
      %v4714 = vpop.permute.xlu0 %4713
      %4715 = vrot.lane.b32.xlu0 %v4619, 72
      %v4716 = vpop.permute.xlu0 %4715
      %4717 = vrot.lane.b32.xlu0 %v4620, 72
      %v4718 = vpop.permute.xlu0 %4717
      %4719 = vrot.lane.b32.xlu0 %v4621, 72
      %v4720 = vpop.permute.xlu0 %4719
      %4721 = vrot.lane.b32.xlu0 %v4622, 72
      %v4722 = vpop.permute.xlu0 %4721
      %v4723 = vsel %vm1257, %v4714, %v4716
      %v4724 = vsel %vm1257, %v4716, %v4718
      %v4725 = vsel %vm1257, %v4718, %v4720
      %v4726 = vsel %vm1257, %v4720, %v4722
      %v4727 = vsel %vm1257, %v4722, %v4711
      %v4734 = vsel %vm1257, %v4711, %v4714
      %4735 = vrot.lane.b32.xlu0 %v4623, 71
      %v4736 = vpop.permute.xlu0 %4735
      %4738 = vrot.lane.b32.xlu0 %v4618, 71
      %v4739 = vpop.permute.xlu0 %4738
      %4740 = vrot.lane.b32.xlu0 %v4619, 71
      %v4741 = vpop.permute.xlu0 %4740
      %4742 = vrot.lane.b32.xlu0 %v4620, 71
      %v4743 = vpop.permute.xlu0 %4742
      %4744 = vrot.lane.b32.xlu0 %v4621, 71
      %v4745 = vpop.permute.xlu0 %4744
      %4746 = vrot.lane.b32.xlu0 %v4622, 71
      %v4747 = vpop.permute.xlu0 %4746
      %v4748 = vsel %vm1283, %v4739, %v4741
      %v4749 = vsel %vm1283, %v4741, %v4743
      %v4750 = vsel %vm1283, %v4743, %v4745
      %v4751 = vsel %vm1283, %v4745, %v4747
      %v4752 = vsel %vm1283, %v4747, %v4736
      %v4759 = vsel %vm1283, %v4736, %v4739
      %4760 = vrot.lane.b32.xlu0 %v4623, 70
      %v4761 = vpop.permute.xlu0 %4760
      %4763 = vrot.lane.b32.xlu0 %v4618, 70
      %v4764 = vpop.permute.xlu0 %4763
      %4765 = vrot.lane.b32.xlu0 %v4619, 70
      %v4766 = vpop.permute.xlu0 %4765
      %4767 = vrot.lane.b32.xlu0 %v4620, 70
      %v4768 = vpop.permute.xlu0 %4767
      %4769 = vrot.lane.b32.xlu0 %v4621, 70
      %v4770 = vpop.permute.xlu0 %4769
      %4771 = vrot.lane.b32.xlu0 %v4622, 70
      %v4772 = vpop.permute.xlu0 %4771
      %v4773 = vsel %vm1309, %v4764, %v4766
      %v4774 = vsel %vm1309, %v4766, %v4768
      %v4775 = vsel %vm1309, %v4768, %v4770
      %v4776 = vsel %vm1309, %v4770, %v4772
      %v4777 = vsel %vm1309, %v4772, %v4761
      %v4784 = vsel %vm1309, %v4761, %v4764
      %4785 = vrot.lane.b32.xlu0 %v4623, 69
      %v4786 = vpop.permute.xlu0 %4785
      %4788 = vrot.lane.b32.xlu0 %v4618, 69
      %v4789 = vpop.permute.xlu0 %4788
      %4790 = vrot.lane.b32.xlu0 %v4619, 69
      %v4791 = vpop.permute.xlu0 %4790
      %4792 = vrot.lane.b32.xlu0 %v4620, 69
      %v4793 = vpop.permute.xlu0 %4792
      %4794 = vrot.lane.b32.xlu0 %v4621, 69
      %v4795 = vpop.permute.xlu0 %4794
      %4796 = vrot.lane.b32.xlu0 %v4622, 69
      %v4797 = vpop.permute.xlu0 %4796
      %v4798 = vsel %vm1335, %v4789, %v4791
      %v4799 = vsel %vm1335, %v4791, %v4793
      %v4800 = vsel %vm1335, %v4793, %v4795
      %v4801 = vsel %vm1335, %v4795, %v4797
      %v4802 = vsel %vm1335, %v4797, %v4786
      %v4809 = vsel %vm1335, %v4786, %v4789
      %4810 = vrot.lane.b32.xlu0 %v4623, 51
      %v4811 = vpop.permute.xlu0 %4810
      %4813 = vrot.lane.b32.xlu0 %v4618, 51
      %v4814 = vpop.permute.xlu0 %4813
      %4815 = vrot.lane.b32.xlu0 %v4619, 51
      %v4816 = vpop.permute.xlu0 %4815
      %4817 = vrot.lane.b32.xlu0 %v4620, 51
      %v4818 = vpop.permute.xlu0 %4817
      %4819 = vrot.lane.b32.xlu0 %v4621, 51
      %v4820 = vpop.permute.xlu0 %4819
      %4821 = vrot.lane.b32.xlu0 %v4622, 51
      %v4822 = vpop.permute.xlu0 %4821
      %v4823 = vsel %vm1361, %v4814, %v4816
      %v4824 = vsel %vm1361, %v4816, %v4818
      %v4825 = vsel %vm1361, %v4818, %v4820
      %v4826 = vsel %vm1361, %v4820, %v4822
      %v4827 = vsel %vm1361, %v4822, %v4811
      %v4834 = vsel %vm1361, %v4811, %v4814
      %4835 = vrot.lane.b32.xlu0 %v4623, 50
      %v4836 = vpop.permute.xlu0 %4835
      %4838 = vrot.lane.b32.xlu0 %v4618, 50
      %v4839 = vpop.permute.xlu0 %4838
      %4840 = vrot.lane.b32.xlu0 %v4619, 50
      %v4841 = vpop.permute.xlu0 %4840
      %4842 = vrot.lane.b32.xlu0 %v4620, 50
      %v4843 = vpop.permute.xlu0 %4842
      %4844 = vrot.lane.b32.xlu0 %v4621, 50
      %v4845 = vpop.permute.xlu0 %4844
      %4846 = vrot.lane.b32.xlu0 %v4622, 50
      %v4847 = vpop.permute.xlu0 %4846
      %v4848 = vsel %vm1387, %v4839, %v4841
      %v4849 = vsel %vm1387, %v4841, %v4843
      %v4850 = vsel %vm1387, %v4843, %v4845
      %v4851 = vsel %vm1387, %v4845, %v4847
      %v4852 = vsel %vm1387, %v4847, %v4836
      %v4859 = vsel %vm1387, %v4836, %v4839
      %4860 = vrot.lane.b32.xlu0 %v4623, 49
      %v4861 = vpop.permute.xlu0 %4860
      %4863 = vrot.lane.b32.xlu0 %v4618, 49
      %v4864 = vpop.permute.xlu0 %4863
      %4865 = vrot.lane.b32.xlu0 %v4619, 49
      %v4866 = vpop.permute.xlu0 %4865
      %4867 = vrot.lane.b32.xlu0 %v4620, 49
      %v4868 = vpop.permute.xlu0 %4867
      %4869 = vrot.lane.b32.xlu0 %v4621, 49
      %v4870 = vpop.permute.xlu0 %4869
      %4871 = vrot.lane.b32.xlu0 %v4622, 49
      %v4872 = vpop.permute.xlu0 %4871
      %v4873 = vsel %vm1413, %v4864, %v4866
      %v4874 = vsel %vm1413, %v4866, %v4868
      %v4875 = vsel %vm1413, %v4868, %v4870
      %v4876 = vsel %vm1413, %v4870, %v4872
      %v4877 = vsel %vm1413, %v4872, %v4861
      %v4884 = vsel %vm1413, %v4861, %v4864
      %4885 = vrot.lane.b32.xlu0 %v4623, 48
      %v4886 = vpop.permute.xlu0 %4885
      %4888 = vrot.lane.b32.xlu0 %v4618, 48
      %v4889 = vpop.permute.xlu0 %4888
      %4890 = vrot.lane.b32.xlu0 %v4619, 48
      %v4891 = vpop.permute.xlu0 %4890
      %4892 = vrot.lane.b32.xlu0 %v4620, 48
      %v4893 = vpop.permute.xlu0 %4892
      %4894 = vrot.lane.b32.xlu0 %v4621, 48
      %v4895 = vpop.permute.xlu0 %4894
      %4896 = vrot.lane.b32.xlu0 %v4622, 48
      %v4897 = vpop.permute.xlu0 %4896
      %v4898 = vsel %vm436, %v4889, %v4891
      %v4899 = vsel %vm436, %v4891, %v4893
      %v4900 = vsel %vm436, %v4893, %v4895
      %v4901 = vsel %vm436, %v4895, %v4897
      %v4902 = vsel %vm436, %v4897, %v4886
      %v4909 = vsel %vm436, %v4886, %v4889
      %4910 = vrot.lane.b32.xlu0 %v4623, 47
      %v4911 = vpop.permute.xlu0 %4910
      %4913 = vrot.lane.b32.xlu0 %v4618, 47
      %v4914 = vpop.permute.xlu0 %4913
      %4915 = vrot.lane.b32.xlu0 %v4619, 47
      %v4916 = vpop.permute.xlu0 %4915
      %4917 = vrot.lane.b32.xlu0 %v4620, 47
      %v4918 = vpop.permute.xlu0 %4917
      %4919 = vrot.lane.b32.xlu0 %v4621, 47
      %v4920 = vpop.permute.xlu0 %4919
      %4921 = vrot.lane.b32.xlu0 %v4622, 47
      %v4922 = vpop.permute.xlu0 %4921
      %v4923 = vsel %vm1464, %v4914, %v4916
      %v4924 = vsel %vm1464, %v4916, %v4918
      %v4925 = vsel %vm1464, %v4918, %v4920
      %v4926 = vsel %vm1464, %v4920, %v4922
      %v4927 = vsel %vm1464, %v4922, %v4911
      %v4934 = vsel %vm1464, %v4911, %v4914
      %4935 = vrot.lane.b32.xlu0 %v4623, 46
      %v4936 = vpop.permute.xlu0 %4935
      %4938 = vrot.lane.b32.xlu0 %v4618, 46
      %v4939 = vpop.permute.xlu0 %4938
      %4940 = vrot.lane.b32.xlu0 %v4619, 46
      %v4941 = vpop.permute.xlu0 %4940
      %4942 = vrot.lane.b32.xlu0 %v4620, 46
      %v4943 = vpop.permute.xlu0 %4942
      %4944 = vrot.lane.b32.xlu0 %v4621, 46
      %v4945 = vpop.permute.xlu0 %4944
      %4946 = vrot.lane.b32.xlu0 %v4622, 46
      %v4947 = vpop.permute.xlu0 %4946
      %v4948 = vsel %vm1490, %v4939, %v4941
      %v4949 = vsel %vm1490, %v4941, %v4943
      %v4950 = vsel %vm1490, %v4943, %v4945
      %v4951 = vsel %vm1490, %v4945, %v4947
      %v4952 = vsel %vm1490, %v4947, %v4936
      %v4959 = vsel %vm1490, %v4936, %v4939
      %4960 = vrot.lane.b32.xlu0 %v4623, 45
      %v4961 = vpop.permute.xlu0 %4960
      %4963 = vrot.lane.b32.xlu0 %v4618, 45
      %v4964 = vpop.permute.xlu0 %4963
      %4965 = vrot.lane.b32.xlu0 %v4619, 45
      %v4966 = vpop.permute.xlu0 %4965
      %4967 = vrot.lane.b32.xlu0 %v4620, 45
      %v4968 = vpop.permute.xlu0 %4967
      %4969 = vrot.lane.b32.xlu0 %v4621, 45
      %v4970 = vpop.permute.xlu0 %4969
      %4971 = vrot.lane.b32.xlu0 %v4622, 45
      %v4972 = vpop.permute.xlu0 %4971
      %v4973 = vsel %vm1516, %v4964, %v4966
      %v4974 = vsel %vm1516, %v4966, %v4968
      %v4975 = vsel %vm1516, %v4968, %v4970
      %v4976 = vsel %vm1516, %v4970, %v4972
      %v4977 = vsel %vm1516, %v4972, %v4961
      %v4984 = vsel %vm1516, %v4961, %v4964
      %4985 = vrot.lane.b32.xlu0 %v4623, 27
      %v4986 = vpop.permute.xlu0 %4985
      %4988 = vrot.lane.b32.xlu0 %v4618, 27
      %v4989 = vpop.permute.xlu0 %4988
      %4990 = vrot.lane.b32.xlu0 %v4619, 27
      %v4991 = vpop.permute.xlu0 %4990
      %4992 = vrot.lane.b32.xlu0 %v4620, 27
      %v4993 = vpop.permute.xlu0 %4992
      %4994 = vrot.lane.b32.xlu0 %v4621, 27
      %v4995 = vpop.permute.xlu0 %4994
      %4996 = vrot.lane.b32.xlu0 %v4622, 27
      %v4997 = vpop.permute.xlu0 %4996
      %v4998 = vsel %vm1542, %v4989, %v4991
      %v4999 = vsel %vm1542, %v4991, %v4993
      %v5000 = vsel %vm1542, %v4993, %v4995
      %v5001 = vsel %vm1542, %v4995, %v4997
      %v5002 = vsel %vm1542, %v4997, %v4986
      %v5009 = vsel %vm1542, %v4986, %v4989
      %5010 = vrot.lane.b32.xlu0 %v4623, 26
      %v5011 = vpop.permute.xlu0 %5010
      %5013 = vrot.lane.b32.xlu0 %v4618, 26
      %v5014 = vpop.permute.xlu0 %5013
      %5015 = vrot.lane.b32.xlu0 %v4619, 26
      %v5016 = vpop.permute.xlu0 %5015
      %5017 = vrot.lane.b32.xlu0 %v4620, 26
      %v5018 = vpop.permute.xlu0 %5017
      %5019 = vrot.lane.b32.xlu0 %v4621, 26
      %v5020 = vpop.permute.xlu0 %5019
      %5021 = vrot.lane.b32.xlu0 %v4622, 26
      %v5022 = vpop.permute.xlu0 %5021
      %v5023 = vsel %vm1568, %v5014, %v5016
      %v5024 = vsel %vm1568, %v5016, %v5018
      %v5025 = vsel %vm1568, %v5018, %v5020
      %v5026 = vsel %vm1568, %v5020, %v5022
      %v5027 = vsel %vm1568, %v5022, %v5011
      %v5034 = vsel %vm1568, %v5011, %v5014
      %5035 = vrot.lane.b32.xlu0 %v4623, 25
      %v5036 = vpop.permute.xlu0 %5035
      %5038 = vrot.lane.b32.xlu0 %v4618, 25
      %v5039 = vpop.permute.xlu0 %5038
      %5040 = vrot.lane.b32.xlu0 %v4619, 25
      %v5041 = vpop.permute.xlu0 %5040
      %5042 = vrot.lane.b32.xlu0 %v4620, 25
      %v5043 = vpop.permute.xlu0 %5042
      %5044 = vrot.lane.b32.xlu0 %v4621, 25
      %v5045 = vpop.permute.xlu0 %5044
      %5046 = vrot.lane.b32.xlu0 %v4622, 25
      %v5047 = vpop.permute.xlu0 %5046
      %v5048 = vsel %vm1594, %v5039, %v5041
      %v5049 = vsel %vm1594, %v5041, %v5043
      %v5050 = vsel %vm1594, %v5043, %v5045
      %v5051 = vsel %vm1594, %v5045, %v5047
      %v5052 = vsel %vm1594, %v5047, %v5036
      %v5059 = vsel %vm1594, %v5036, %v5039
      %5060 = vrot.lane.b32.xlu0 %v4623, 24
      %v5061 = vpop.permute.xlu0 %5060
      %5063 = vrot.lane.b32.xlu0 %v4618, 24
      %v5064 = vpop.permute.xlu0 %5063
      %5065 = vrot.lane.b32.xlu0 %v4619, 24
      %v5066 = vpop.permute.xlu0 %5065
      %5067 = vrot.lane.b32.xlu0 %v4620, 24
      %v5068 = vpop.permute.xlu0 %5067
      %5069 = vrot.lane.b32.xlu0 %v4621, 24
      %v5070 = vpop.permute.xlu0 %5069
      %5071 = vrot.lane.b32.xlu0 %v4622, 24
      %v5072 = vpop.permute.xlu0 %5071
      %v5073 = vsel %vm1620, %v5064, %v5066
      %v5074 = vsel %vm1620, %v5066, %v5068
      %v5075 = vsel %vm1620, %v5068, %v5070
      %v5076 = vsel %vm1620, %v5070, %v5072
      %v5077 = vsel %vm1620, %v5072, %v5061
      %v5084 = vsel %vm1620, %v5061, %v5064
      %5085 = vrot.lane.b32.xlu0 %v4623, 23
      %v5086 = vpop.permute.xlu0 %5085
      %5088 = vrot.lane.b32.xlu0 %v4618, 23
      %v5089 = vpop.permute.xlu0 %5088
      %5090 = vrot.lane.b32.xlu0 %v4619, 23
      %v5091 = vpop.permute.xlu0 %5090
      %5092 = vrot.lane.b32.xlu0 %v4620, 23
      %v5093 = vpop.permute.xlu0 %5092
      %5094 = vrot.lane.b32.xlu0 %v4621, 23
      %v5095 = vpop.permute.xlu0 %5094
      %5096 = vrot.lane.b32.xlu0 %v4622, 23
      %v5097 = vpop.permute.xlu0 %5096
      %v5098 = vsel %vm1646, %v5089, %v5091
      %v5099 = vsel %vm1646, %v5091, %v5093
      %v5100 = vsel %vm1646, %v5093, %v5095
      %v5101 = vsel %vm1646, %v5095, %v5097
      %v5102 = vsel %vm1646, %v5097, %v5086
      %v5109 = vsel %vm1646, %v5086, %v5089
      %5110 = vrot.lane.b32.xlu0 %v4623, 22
      %v5111 = vpop.permute.xlu0 %5110
      %5113 = vrot.lane.b32.xlu0 %v4618, 22
      %v5114 = vpop.permute.xlu0 %5113
      %5115 = vrot.lane.b32.xlu0 %v4619, 22
      %v5116 = vpop.permute.xlu0 %5115
      %5117 = vrot.lane.b32.xlu0 %v4620, 22
      %v5118 = vpop.permute.xlu0 %5117
      %5119 = vrot.lane.b32.xlu0 %v4621, 22
      %v5120 = vpop.permute.xlu0 %5119
      %5121 = vrot.lane.b32.xlu0 %v4622, 22
      %v5122 = vpop.permute.xlu0 %5121
      %v5123 = vsel %vm1672, %v5114, %v5116
      %v5124 = vsel %vm1672, %v5116, %v5118
      %v5125 = vsel %vm1672, %v5118, %v5120
      %v5126 = vsel %vm1672, %v5120, %v5122
      %v5127 = vsel %vm1672, %v5122, %v5111
      %v5134 = vsel %vm1672, %v5111, %v5114
      %5135 = vrot.lane.b32.xlu0 %v4623, 21
      %v5136 = vpop.permute.xlu0 %5135
      %5138 = vrot.lane.b32.xlu0 %v4618, 21
      %v5139 = vpop.permute.xlu0 %5138
      %5140 = vrot.lane.b32.xlu0 %v4619, 21
      %v5141 = vpop.permute.xlu0 %5140
      %5142 = vrot.lane.b32.xlu0 %v4620, 21
      %v5143 = vpop.permute.xlu0 %5142
      %5144 = vrot.lane.b32.xlu0 %v4621, 21
      %v5145 = vpop.permute.xlu0 %5144
      %5146 = vrot.lane.b32.xlu0 %v4622, 21
      %v5147 = vpop.permute.xlu0 %5146
      %v5148 = vsel %vm1698, %v5139, %v5141
      %v5149 = vsel %vm1698, %v5141, %v5143
      %v5150 = vsel %vm1698, %v5143, %v5145
      %v5151 = vsel %vm1698, %v5145, %v5147
      %v5152 = vsel %vm1698, %v5147, %v5136
      %v5159 = vsel %vm1698, %v5136, %v5139
      %5160 = vrot.lane.b32.xlu0 %v4623, 3
      %v5161 = vpop.permute.xlu0 %5160
      %5163 = vrot.lane.b32.xlu0 %v4618, 3
      %v5164 = vpop.permute.xlu0 %5163
      %5165 = vrot.lane.b32.xlu0 %v4619, 3
      %v5166 = vpop.permute.xlu0 %5165
      %5167 = vrot.lane.b32.xlu0 %v4620, 3
      %v5168 = vpop.permute.xlu0 %5167
      %5169 = vrot.lane.b32.xlu0 %v4621, 3
      %v5170 = vpop.permute.xlu0 %5169
      %5171 = vrot.lane.b32.xlu0 %v4622, 3
      %v5172 = vpop.permute.xlu0 %5171
      %v5173 = vsel %vm1724, %v5164, %v5166
      %v5174 = vsel %vm1724, %v5166, %v5168
      %v5175 = vsel %vm1724, %v5168, %v5170
      %v5176 = vsel %vm1724, %v5170, %v5172
      %v5177 = vsel %vm1724, %v5172, %v5161
      %v5184 = vsel %vm1724, %v5161, %v5164
      %5185 = vrot.lane.b32.xlu0 %v4623, 2
      %v5186 = vpop.permute.xlu0 %5185
      %5188 = vrot.lane.b32.xlu0 %v4618, 2
      %v5189 = vpop.permute.xlu0 %5188
      %5190 = vrot.lane.b32.xlu0 %v4619, 2
      %v5191 = vpop.permute.xlu0 %5190
      %5192 = vrot.lane.b32.xlu0 %v4620, 2
      %v5193 = vpop.permute.xlu0 %5192
      %5194 = vrot.lane.b32.xlu0 %v4621, 2
      %v5195 = vpop.permute.xlu0 %5194
      %5196 = vrot.lane.b32.xlu0 %v4622, 2
      %v5197 = vpop.permute.xlu0 %5196
      %v5198 = vsel %vm856, %v5189, %v5191
      %v5199 = vsel %vm856, %v5191, %v5193
      %v5200 = vsel %vm856, %v5193, %v5195
      %v5201 = vsel %vm856, %v5195, %v5197
      %v5202 = vsel %vm856, %v5197, %v5186
      %v5209 = vsel %vm856, %v5186, %v5189
      %5210 = vrot.lane.b32.xlu0 %v4623, 1
      %v5211 = vpop.permute.xlu0 %5210
      %5213 = vrot.lane.b32.xlu0 %v4618, 1
      %v5214 = vpop.permute.xlu0 %5213
      %5215 = vrot.lane.b32.xlu0 %v4619, 1
      %v5216 = vpop.permute.xlu0 %5215
      %5217 = vrot.lane.b32.xlu0 %v4620, 1
      %v5218 = vpop.permute.xlu0 %5217
      %5219 = vrot.lane.b32.xlu0 %v4621, 1
      %v5220 = vpop.permute.xlu0 %5219
      %5221 = vrot.lane.b32.xlu0 %v4622, 1
      %v5222 = vpop.permute.xlu0 %5221
      %v5223 = vsel %vm1775, %v5214, %v5216
      %v5224 = vsel %vm1775, %v5216, %v5218
      %v5225 = vsel %vm1775, %v5218, %v5220
      %v5226 = vsel %vm1775, %v5220, %v5222
      %v5227 = vsel %vm1775, %v5222, %v5211
      %v5234 = vsel %vm1775, %v5211, %v5214
      %5235 = vrot.lane.b32.xlu0 %v4618, 127
      %v5236 = vpop.permute.xlu0 %5235
      %5237 = vrot.lane.b32.xlu0 %v4619, 127
      %v5238 = vpop.permute.xlu0 %5237
      %5239 = vrot.lane.b32.xlu0 %v4620, 127
      %v5240 = vpop.permute.xlu0 %5239
      %5241 = vrot.lane.b32.xlu0 %v4621, 127
      %v5242 = vpop.permute.xlu0 %5241
      %5243 = vrot.lane.b32.xlu0 %v4622, 127
      %v5244 = vpop.permute.xlu0 %5243
      %5245 = vrot.lane.b32.xlu0 %v4623, 127
      %v5246 = vpop.permute.xlu0 %5245
      %v5247 = vsel %vm1800, %v5236, %v5238
      %v5248 = vsel %vm1800, %v5238, %v5240
      %v5249 = vsel %vm1800, %v5240, %v5242
      %v5250 = vsel %vm1800, %v5242, %v5244
      %v5251 = vsel %vm1800, %v5244, %v5246
      %v5259 = vsel %vm1800, %v5246, %v5236
      %5260 = vrot.lane.b32.xlu0 %v4618, 126
      %v5261 = vpop.permute.xlu0 %5260
      %5262 = vrot.lane.b32.xlu0 %v4619, 126
      %v5263 = vpop.permute.xlu0 %5262
      %5264 = vrot.lane.b32.xlu0 %v4620, 126
      %v5265 = vpop.permute.xlu0 %5264
      %5266 = vrot.lane.b32.xlu0 %v4621, 126
      %v5267 = vpop.permute.xlu0 %5266
      %5268 = vrot.lane.b32.xlu0 %v4622, 126
      %v5269 = vpop.permute.xlu0 %5268
      %5270 = vrot.lane.b32.xlu0 %v4623, 126
      %v5271 = vpop.permute.xlu0 %5270
      %v5272 = vsel %vm785, %v5261, %v5263
      %v5273 = vsel %vm785, %v5263, %v5265
      %v5274 = vsel %vm785, %v5265, %v5267
      %v5275 = vsel %vm785, %v5267, %v5269
      %v5276 = vsel %vm785, %v5269, %v5271
      %v5284 = vsel %vm785, %v5271, %v5261
      %5285 = vrot.lane.b32.xlu0 %v4618, 125
      %v5286 = vpop.permute.xlu0 %5285
      %5287 = vrot.lane.b32.xlu0 %v4619, 125
      %v5288 = vpop.permute.xlu0 %5287
      %5289 = vrot.lane.b32.xlu0 %v4620, 125
      %v5290 = vpop.permute.xlu0 %5289
      %5291 = vrot.lane.b32.xlu0 %v4621, 125
      %v5292 = vpop.permute.xlu0 %5291
      %5293 = vrot.lane.b32.xlu0 %v4622, 125
      %v5294 = vpop.permute.xlu0 %5293
      %5295 = vrot.lane.b32.xlu0 %v4623, 125
      %v5296 = vpop.permute.xlu0 %5295
      %v5297 = vsel %vm1851, %v5286, %v5288
      %v5298 = vsel %vm1851, %v5288, %v5290
      %v5299 = vsel %vm1851, %v5290, %v5292
      %v5300 = vsel %vm1851, %v5292, %v5294
      %v5301 = vsel %vm1851, %v5294, %v5296
      %v5309 = vsel %vm1851, %v5296, %v5286
      %5310 = vrot.lane.b32.xlu0 %v4618, 107
      %v5311 = vpop.permute.xlu0 %5310
      %5312 = vrot.lane.b32.xlu0 %v4619, 107
      %v5313 = vpop.permute.xlu0 %5312
      %5314 = vrot.lane.b32.xlu0 %v4620, 107
      %v5315 = vpop.permute.xlu0 %5314
      %5316 = vrot.lane.b32.xlu0 %v4621, 107
      %v5317 = vpop.permute.xlu0 %5316
      %5318 = vrot.lane.b32.xlu0 %v4622, 107
      %v5319 = vpop.permute.xlu0 %5318
      %5320 = vrot.lane.b32.xlu0 %v4623, 107
      %v5321 = vpop.permute.xlu0 %5320
      %v5322 = vsel %vm1877, %v5311, %v5313
      %v5323 = vsel %vm1877, %v5313, %v5315
      %v5324 = vsel %vm1877, %v5315, %v5317
      %v5325 = vsel %vm1877, %v5317, %v5319
      %v5326 = vsel %vm1877, %v5319, %v5321
      %v5334 = vsel %vm1877, %v5321, %v5311
      %5335 = vrot.lane.b32.xlu0 %v4618, 106
      %v5336 = vpop.permute.xlu0 %5335
      %5337 = vrot.lane.b32.xlu0 %v4619, 106
      %v5338 = vpop.permute.xlu0 %5337
      %5339 = vrot.lane.b32.xlu0 %v4620, 106
      %v5340 = vpop.permute.xlu0 %5339
      %5341 = vrot.lane.b32.xlu0 %v4621, 106
      %v5342 = vpop.permute.xlu0 %5341
      %5343 = vrot.lane.b32.xlu0 %v4622, 106
      %v5344 = vpop.permute.xlu0 %5343
      %5345 = vrot.lane.b32.xlu0 %v4623, 106
      %v5346 = vpop.permute.xlu0 %5345
      %v5347 = vsel %vm1903, %v5336, %v5338
      %v5348 = vsel %vm1903, %v5338, %v5340
      %v5349 = vsel %vm1903, %v5340, %v5342
      %v5350 = vsel %vm1903, %v5342, %v5344
      %v5351 = vsel %vm1903, %v5344, %v5346
      %v5359 = vsel %vm1903, %v5346, %v5336
      %5360 = vrot.lane.b32.xlu0 %v4618, 105
      %v5361 = vpop.permute.xlu0 %5360
      %5362 = vrot.lane.b32.xlu0 %v4619, 105
      %v5363 = vpop.permute.xlu0 %5362
      %5364 = vrot.lane.b32.xlu0 %v4620, 105
      %v5365 = vpop.permute.xlu0 %5364
      %5366 = vrot.lane.b32.xlu0 %v4621, 105
      %v5367 = vpop.permute.xlu0 %5366
      %5368 = vrot.lane.b32.xlu0 %v4622, 105
      %v5369 = vpop.permute.xlu0 %5368
      %5370 = vrot.lane.b32.xlu0 %v4623, 105
      %v5371 = vpop.permute.xlu0 %5370
      %v5372 = vsel %vm1929, %v5361, %v5363
      %v5373 = vsel %vm1929, %v5363, %v5365
      %v5374 = vsel %vm1929, %v5365, %v5367
      %v5375 = vsel %vm1929, %v5367, %v5369
      %v5376 = vsel %vm1929, %v5369, %v5371
      %v5384 = vsel %vm1929, %v5371, %v5361
      %5385 = vrot.lane.b32.xlu0 %v4618, 104
      %v5386 = vpop.permute.xlu0 %5385
      %5387 = vrot.lane.b32.xlu0 %v4619, 104
      %v5388 = vpop.permute.xlu0 %5387
      %5389 = vrot.lane.b32.xlu0 %v4620, 104
      %v5390 = vpop.permute.xlu0 %5389
      %5391 = vrot.lane.b32.xlu0 %v4621, 104
      %v5392 = vpop.permute.xlu0 %5391
      %5393 = vrot.lane.b32.xlu0 %v4622, 104
      %v5394 = vpop.permute.xlu0 %5393
      %5395 = vrot.lane.b32.xlu0 %v4623, 104
      %v5396 = vpop.permute.xlu0 %5395
      %v5397 = vsel %vm1955, %v5386, %v5388
      %v5398 = vsel %vm1955, %v5388, %v5390
      %v5399 = vsel %vm1955, %v5390, %v5392
      %v5400 = vsel %vm1955, %v5392, %v5394
      %v5401 = vsel %vm1955, %v5394, %v5396
      %v5409 = vsel %vm1955, %v5396, %v5386
      %5410 = vrot.lane.b32.xlu0 %v4618, 103
      %v5411 = vpop.permute.xlu0 %5410
      %5412 = vrot.lane.b32.xlu0 %v4619, 103
      %v5413 = vpop.permute.xlu0 %5412
      %5414 = vrot.lane.b32.xlu0 %v4620, 103
      %v5415 = vpop.permute.xlu0 %5414
      %5416 = vrot.lane.b32.xlu0 %v4621, 103
      %v5417 = vpop.permute.xlu0 %5416
      %5418 = vrot.lane.b32.xlu0 %v4622, 103
      %v5419 = vpop.permute.xlu0 %5418
      %5420 = vrot.lane.b32.xlu0 %v4623, 103
      %v5421 = vpop.permute.xlu0 %5420
      %v5422 = vsel %vm1981, %v5411, %v5413
      %v5423 = vsel %vm1981, %v5413, %v5415
      %v5424 = vsel %vm1981, %v5415, %v5417
      %v5425 = vsel %vm1981, %v5417, %v5419
      %v5426 = vsel %vm1981, %v5419, %v5421
      %v5434 = vsel %vm1981, %v5421, %v5411
      %5435 = vrot.lane.b32.xlu0 %v4618, 102
      %v5436 = vpop.permute.xlu0 %5435
      %5437 = vrot.lane.b32.xlu0 %v4619, 102
      %v5438 = vpop.permute.xlu0 %5437
      %5439 = vrot.lane.b32.xlu0 %v4620, 102
      %v5440 = vpop.permute.xlu0 %5439
      %5441 = vrot.lane.b32.xlu0 %v4621, 102
      %v5442 = vpop.permute.xlu0 %5441
      %5443 = vrot.lane.b32.xlu0 %v4622, 102
      %v5444 = vpop.permute.xlu0 %5443
      %5445 = vrot.lane.b32.xlu0 %v4623, 102
      %v5446 = vpop.permute.xlu0 %5445
      %v5447 = vsel %vm2007, %v5436, %v5438
      %v5448 = vsel %vm2007, %v5438, %v5440
      %v5449 = vsel %vm2007, %v5440, %v5442
      %v5450 = vsel %vm2007, %v5442, %v5444
      %v5451 = vsel %vm2007, %v5444, %v5446
      %v5459 = vsel %vm2007, %v5446, %v5436
      %5460 = vrot.lane.b32.xlu0 %v4618, 101
      %v5461 = vpop.permute.xlu0 %5460
      %5462 = vrot.lane.b32.xlu0 %v4619, 101
      %v5463 = vpop.permute.xlu0 %5462
      %5464 = vrot.lane.b32.xlu0 %v4620, 101
      %v5465 = vpop.permute.xlu0 %5464
      %5466 = vrot.lane.b32.xlu0 %v4621, 101
      %v5467 = vpop.permute.xlu0 %5466
      %5468 = vrot.lane.b32.xlu0 %v4622, 101
      %v5469 = vpop.permute.xlu0 %5468
      %5470 = vrot.lane.b32.xlu0 %v4623, 101
      %v5471 = vpop.permute.xlu0 %5470
      %v5472 = vsel %vm2033, %v5461, %v5463
      %v5473 = vsel %vm2033, %v5463, %v5465
      %v5474 = vsel %vm2033, %v5465, %v5467
      %v5475 = vsel %vm2033, %v5467, %v5469
      %v5476 = vsel %vm2033, %v5469, %v5471
      %v5484 = vsel %vm2033, %v5471, %v5461
      %5485 = vrot.lane.b32.xlu0 %v4618, 83
      %v5486 = vpop.permute.xlu0 %5485
      %5487 = vrot.lane.b32.xlu0 %v4619, 83
      %v5488 = vpop.permute.xlu0 %5487
      %5489 = vrot.lane.b32.xlu0 %v4620, 83
      %v5490 = vpop.permute.xlu0 %5489
      %5491 = vrot.lane.b32.xlu0 %v4621, 83
      %v5492 = vpop.permute.xlu0 %5491
      %5493 = vrot.lane.b32.xlu0 %v4622, 83
      %v5494 = vpop.permute.xlu0 %5493
      %5495 = vrot.lane.b32.xlu0 %v4623, 83
      %v5496 = vpop.permute.xlu0 %5495
      %v5497 = vsel %vm2059, %v5486, %v5488
      %v5498 = vsel %vm2059, %v5488, %v5490
      %v5499 = vsel %vm2059, %v5490, %v5492
      %v5500 = vsel %vm2059, %v5492, %v5494
      %v5501 = vsel %vm2059, %v5494, %v5496
      %v5509 = vsel %vm2059, %v5496, %v5486
      %5510 = vrot.lane.b32.xlu0 %v4618, 82
      %v5511 = vpop.permute.xlu0 %5510
      %5512 = vrot.lane.b32.xlu0 %v4619, 82
      %v5513 = vpop.permute.xlu0 %5512
      %5514 = vrot.lane.b32.xlu0 %v4620, 82
      %v5515 = vpop.permute.xlu0 %5514
      %5516 = vrot.lane.b32.xlu0 %v4621, 82
      %v5517 = vpop.permute.xlu0 %5516
      %5518 = vrot.lane.b32.xlu0 %v4622, 82
      %v5519 = vpop.permute.xlu0 %5518
      %5520 = vrot.lane.b32.xlu0 %v4623, 82
      %v5521 = vpop.permute.xlu0 %5520
      %v5522 = vsel %vm2085, %v5511, %v5513
      %v5523 = vsel %vm2085, %v5513, %v5515
      %v5524 = vsel %vm2085, %v5515, %v5517
      %v5525 = vsel %vm2085, %v5517, %v5519
      %v5526 = vsel %vm2085, %v5519, %v5521
      %v5534 = vsel %vm2085, %v5521, %v5511
      %5535 = vrot.lane.b32.xlu0 %v4618, 81
      %v5536 = vpop.permute.xlu0 %5535
      %5537 = vrot.lane.b32.xlu0 %v4619, 81
      %v5538 = vpop.permute.xlu0 %5537
      %5539 = vrot.lane.b32.xlu0 %v4620, 81
      %v5540 = vpop.permute.xlu0 %5539
      %5541 = vrot.lane.b32.xlu0 %v4621, 81
      %v5542 = vpop.permute.xlu0 %5541
      %5543 = vrot.lane.b32.xlu0 %v4622, 81
      %v5544 = vpop.permute.xlu0 %5543
      %5545 = vrot.lane.b32.xlu0 %v4623, 81
      %v5546 = vpop.permute.xlu0 %5545
      %v5547 = vsel %vm2111, %v5536, %v5538
      %v5548 = vsel %vm2111, %v5538, %v5540
      %v5549 = vsel %vm2111, %v5540, %v5542
      %v5550 = vsel %vm2111, %v5542, %v5544
      %v5551 = vsel %vm2111, %v5544, %v5546
      %v5559 = vsel %vm2111, %v5546, %v5536
      %5560 = vrot.lane.b32.xlu0 %v4618, 80
      %v5561 = vpop.permute.xlu0 %5560
      %5562 = vrot.lane.b32.xlu0 %v4619, 80
      %v5563 = vpop.permute.xlu0 %5562
      %5564 = vrot.lane.b32.xlu0 %v4620, 80
      %v5565 = vpop.permute.xlu0 %5564
      %5566 = vrot.lane.b32.xlu0 %v4621, 80
      %v5567 = vpop.permute.xlu0 %5566
      %5568 = vrot.lane.b32.xlu0 %v4622, 80
      %v5569 = vpop.permute.xlu0 %5568
      %5570 = vrot.lane.b32.xlu0 %v4623, 80
      %v5571 = vpop.permute.xlu0 %5570
      %v5572 = vsel %vm365, %v5561, %v5563
      %v5573 = vsel %vm365, %v5563, %v5565
      %v5574 = vsel %vm365, %v5565, %v5567
      %v5575 = vsel %vm365, %v5567, %v5569
      %v5576 = vsel %vm365, %v5569, %v5571
      %v5584 = vsel %vm365, %v5571, %v5561
      %5585 = vrot.lane.b32.xlu0 %v4618, 79
      %v5586 = vpop.permute.xlu0 %5585
      %5587 = vrot.lane.b32.xlu0 %v4619, 79
      %v5588 = vpop.permute.xlu0 %5587
      %5589 = vrot.lane.b32.xlu0 %v4620, 79
      %v5590 = vpop.permute.xlu0 %5589
      %5591 = vrot.lane.b32.xlu0 %v4621, 79
      %v5592 = vpop.permute.xlu0 %5591
      %5593 = vrot.lane.b32.xlu0 %v4622, 79
      %v5594 = vpop.permute.xlu0 %5593
      %5595 = vrot.lane.b32.xlu0 %v4623, 79
      %v5596 = vpop.permute.xlu0 %5595
      %v5597 = vsel %vm2162, %v5586, %v5588
      %v5598 = vsel %vm2162, %v5588, %v5590
      %v5599 = vsel %vm2162, %v5590, %v5592
      %v5600 = vsel %vm2162, %v5592, %v5594
      %v5601 = vsel %vm2162, %v5594, %v5596
      %v5609 = vsel %vm2162, %v5596, %v5586
      %5610 = vrot.lane.b32.xlu0 %v4618, 78
      %v5611 = vpop.permute.xlu0 %5610
      %5612 = vrot.lane.b32.xlu0 %v4619, 78
      %v5613 = vpop.permute.xlu0 %5612
      %5614 = vrot.lane.b32.xlu0 %v4620, 78
      %v5615 = vpop.permute.xlu0 %5614
      %5616 = vrot.lane.b32.xlu0 %v4621, 78
      %v5617 = vpop.permute.xlu0 %5616
      %5618 = vrot.lane.b32.xlu0 %v4622, 78
      %v5619 = vpop.permute.xlu0 %5618
      %5620 = vrot.lane.b32.xlu0 %v4623, 78
      %v5621 = vpop.permute.xlu0 %5620
      %v5622 = vsel %vm2188, %v5611, %v5613
      %v5623 = vsel %vm2188, %v5613, %v5615
      %v5624 = vsel %vm2188, %v5615, %v5617
      %v5625 = vsel %vm2188, %v5617, %v5619
      %v5626 = vsel %vm2188, %v5619, %v5621
      %v5634 = vsel %vm2188, %v5621, %v5611
      %5635 = vrot.lane.b32.xlu0 %v4618, 77
      %v5636 = vpop.permute.xlu0 %5635
      %5637 = vrot.lane.b32.xlu0 %v4619, 77
      %v5638 = vpop.permute.xlu0 %5637
      %5639 = vrot.lane.b32.xlu0 %v4620, 77
      %v5640 = vpop.permute.xlu0 %5639
      %5641 = vrot.lane.b32.xlu0 %v4621, 77
      %v5642 = vpop.permute.xlu0 %5641
      %5643 = vrot.lane.b32.xlu0 %v4622, 77
      %v5644 = vpop.permute.xlu0 %5643
      %5645 = vrot.lane.b32.xlu0 %v4623, 77
      %v5646 = vpop.permute.xlu0 %5645
      %v5647 = vsel %vm2214, %v5636, %v5638
      %v5648 = vsel %vm2214, %v5638, %v5640
      %v5649 = vsel %vm2214, %v5640, %v5642
      %v5650 = vsel %vm2214, %v5642, %v5644
      %v5651 = vsel %vm2214, %v5644, %v5646
      %v5659 = vsel %vm2214, %v5646, %v5636
      %5660 = vrot.lane.b32.xlu0 %v4618, 59
      %v5661 = vpop.permute.xlu0 %5660
      %5662 = vrot.lane.b32.xlu0 %v4619, 59
      %v5663 = vpop.permute.xlu0 %5662
      %5664 = vrot.lane.b32.xlu0 %v4620, 59
      %v5665 = vpop.permute.xlu0 %5664
      %5666 = vrot.lane.b32.xlu0 %v4621, 59
      %v5667 = vpop.permute.xlu0 %5666
      %5668 = vrot.lane.b32.xlu0 %v4622, 59
      %v5669 = vpop.permute.xlu0 %5668
      %5670 = vrot.lane.b32.xlu0 %v4623, 59
      %v5671 = vpop.permute.xlu0 %5670
      %v5672 = vsel %vm2240, %v5661, %v5663
      %v5673 = vsel %vm2240, %v5663, %v5665
      %v5674 = vsel %vm2240, %v5665, %v5667
      %v5675 = vsel %vm2240, %v5667, %v5669
      %v5676 = vsel %vm2240, %v5669, %v5671
      %v5684 = vsel %vm2240, %v5671, %v5661
      %5685 = vrot.lane.b32.xlu0 %v4618, 58
      %v5686 = vpop.permute.xlu0 %5685
      %5687 = vrot.lane.b32.xlu0 %v4619, 58
      %v5688 = vpop.permute.xlu0 %5687
      %5689 = vrot.lane.b32.xlu0 %v4620, 58
      %v5690 = vpop.permute.xlu0 %5689
      %5691 = vrot.lane.b32.xlu0 %v4621, 58
      %v5692 = vpop.permute.xlu0 %5691
      %5693 = vrot.lane.b32.xlu0 %v4622, 58
      %v5694 = vpop.permute.xlu0 %5693
      %5695 = vrot.lane.b32.xlu0 %v4623, 58
      %v5696 = vpop.permute.xlu0 %5695
      %v5697 = vsel %vm2266, %v5686, %v5688
      %v5698 = vsel %vm2266, %v5688, %v5690
      %v5699 = vsel %vm2266, %v5690, %v5692
      %v5700 = vsel %vm2266, %v5692, %v5694
      %v5701 = vsel %vm2266, %v5694, %v5696
      %v5709 = vsel %vm2266, %v5696, %v5686
      %5710 = vrot.lane.b32.xlu0 %v4618, 57
      %v5711 = vpop.permute.xlu0 %5710
      %5712 = vrot.lane.b32.xlu0 %v4619, 57
      %v5713 = vpop.permute.xlu0 %5712
      %5714 = vrot.lane.b32.xlu0 %v4620, 57
      %v5715 = vpop.permute.xlu0 %5714
      %5716 = vrot.lane.b32.xlu0 %v4621, 57
      %v5717 = vpop.permute.xlu0 %5716
      %5718 = vrot.lane.b32.xlu0 %v4622, 57
      %v5719 = vpop.permute.xlu0 %5718
      %5720 = vrot.lane.b32.xlu0 %v4623, 57
      %v5721 = vpop.permute.xlu0 %5720
      %v5722 = vsel %vm2292, %v5711, %v5713
      %v5723 = vsel %vm2292, %v5713, %v5715
      %v5724 = vsel %vm2292, %v5715, %v5717
      %v5725 = vsel %vm2292, %v5717, %v5719
      %v5726 = vsel %vm2292, %v5719, %v5721
      %v5734 = vsel %vm2292, %v5721, %v5711
      %5735 = vrot.lane.b32.xlu0 %v4618, 56
      %v5736 = vpop.permute.xlu0 %5735
      %5737 = vrot.lane.b32.xlu0 %v4619, 56
      %v5738 = vpop.permute.xlu0 %5737
      %5739 = vrot.lane.b32.xlu0 %v4620, 56
      %v5740 = vpop.permute.xlu0 %5739
      %5741 = vrot.lane.b32.xlu0 %v4621, 56
      %v5742 = vpop.permute.xlu0 %5741
      %5743 = vrot.lane.b32.xlu0 %v4622, 56
      %v5744 = vpop.permute.xlu0 %5743
      %5745 = vrot.lane.b32.xlu0 %v4623, 56
      %v5746 = vpop.permute.xlu0 %5745
      %v5747 = vsel %vm2318, %v5736, %v5738
      %v5748 = vsel %vm2318, %v5738, %v5740
      %v5749 = vsel %vm2318, %v5740, %v5742
      %v5750 = vsel %vm2318, %v5742, %v5744
      %v5751 = vsel %vm2318, %v5744, %v5746
      %v5759 = vsel %vm2318, %v5746, %v5736
      %5760 = vrot.lane.b32.xlu0 %v4618, 55
      %v5761 = vpop.permute.xlu0 %5760
      %5762 = vrot.lane.b32.xlu0 %v4619, 55
      %v5763 = vpop.permute.xlu0 %5762
      %5764 = vrot.lane.b32.xlu0 %v4620, 55
      %v5765 = vpop.permute.xlu0 %5764
      %5766 = vrot.lane.b32.xlu0 %v4621, 55
      %v5767 = vpop.permute.xlu0 %5766
      %5768 = vrot.lane.b32.xlu0 %v4622, 55
      %v5769 = vpop.permute.xlu0 %5768
      %5770 = vrot.lane.b32.xlu0 %v4623, 55
      %v5771 = vpop.permute.xlu0 %5770
      %v5772 = vsel %vm2344, %v5761, %v5763
      %v5773 = vsel %vm2344, %v5763, %v5765
      %v5774 = vsel %vm2344, %v5765, %v5767
      %v5775 = vsel %vm2344, %v5767, %v5769
      %v5776 = vsel %vm2344, %v5769, %v5771
      %v5784 = vsel %vm2344, %v5771, %v5761
      %5785 = vrot.lane.b32.xlu0 %v4618, 54
      %v5786 = vpop.permute.xlu0 %5785
      %5787 = vrot.lane.b32.xlu0 %v4619, 54
      %v5788 = vpop.permute.xlu0 %5787
      %5789 = vrot.lane.b32.xlu0 %v4620, 54
      %v5790 = vpop.permute.xlu0 %5789
      %5791 = vrot.lane.b32.xlu0 %v4621, 54
      %v5792 = vpop.permute.xlu0 %5791
      %5793 = vrot.lane.b32.xlu0 %v4622, 54
      %v5794 = vpop.permute.xlu0 %5793
      %5795 = vrot.lane.b32.xlu0 %v4623, 54
      %v5796 = vpop.permute.xlu0 %5795
      %v5797 = vsel %vm2370, %v5786, %v5788
      %v5798 = vsel %vm2370, %v5788, %v5790
      %v5799 = vsel %vm2370, %v5790, %v5792
      %v5800 = vsel %vm2370, %v5792, %v5794
      %v5801 = vsel %vm2370, %v5794, %v5796
      %v5809 = vsel %vm2370, %v5796, %v5786
      %5810 = vrot.lane.b32.xlu0 %v4618, 53
      %v5811 = vpop.permute.xlu0 %5810
      %5812 = vrot.lane.b32.xlu0 %v4619, 53
      %v5813 = vpop.permute.xlu0 %5812
      %5814 = vrot.lane.b32.xlu0 %v4620, 53
      %v5815 = vpop.permute.xlu0 %5814
      %5816 = vrot.lane.b32.xlu0 %v4621, 53
      %v5817 = vpop.permute.xlu0 %5816
      %5818 = vrot.lane.b32.xlu0 %v4622, 53
      %v5819 = vpop.permute.xlu0 %5818
      %5820 = vrot.lane.b32.xlu0 %v4623, 53
      %v5821 = vpop.permute.xlu0 %5820
      %v5822 = vsel %vm2396, %v5811, %v5813
      %v5823 = vsel %vm2396, %v5813, %v5815
      %v5824 = vsel %vm2396, %v5815, %v5817
      %v5825 = vsel %vm2396, %v5817, %v5819
      %v5826 = vsel %vm2396, %v5819, %v5821
      %v5834 = vsel %vm2396, %v5821, %v5811
      %5836 = vset.pattern.permute.xlu0 0
      %5837 = vperm.xlu0 %5836, %v4628
      %v5838 = vpop.permute.xlu0 %5837
      %v5841 = vsel %vm2415, %v4627, 0
      %5843 = vmatprep.subr.mxu0 %v4648
      %5844 = vmatpush1.msra.mxu0 %v4659
      %5845 = vmatprep.subr.mxu0 %v4673
      %5846 = vmatpush1.msra.mxu0 %v4684
      %5847 = vmatprep.subr.mxu0 %v4698
      %5848 = vmatpush1.msra.mxu0 %v4709
      %5849 = vmatprep.subr.mxu0 %v4723
      %5850 = vmatpush1.msra.mxu0 %v4734
      %5851 = vmatprep.subr.mxu0 %v4748
      %5852 = vmatpush1.msra.mxu0 %v4759
      %5853 = vmatprep.subr.mxu0 %v4773
      %5854 = vmatpush1.msra.mxu0 %v4784
      %5855 = vmatprep.subr.mxu0 %v4798
      %5856 = vmatpush1.msra.mxu0 %v4809
      %5857 = vmatprep.subr.mxu0 %v4823
      %5858 = vmatpush1.msra.mxu0 %v4834
      %5859 = vmatprep.subr.mxu0 %v4848
      %5860 = vmatpush1.msra.mxu0 %v4859
      %5861 = vmatprep.subr.mxu0 %v4873
      %5862 = vmatpush1.msra.mxu0 %v4884
      %5863 = vmatprep.subr.mxu0 %v4898
      %5864 = vmatpush1.msra.mxu0 %v4909
      %5865 = vmatprep.subr.mxu0 %v4923
      %5866 = vmatpush1.msra.mxu0 %v4934
      %5867 = vmatprep.subr.mxu0 %v4948
      %5868 = vmatpush1.msra.mxu0 %v4959
      %5869 = vmatprep.subr.mxu0 %v4973
      %5870 = vmatpush1.msra.mxu0 %v4984
      %5871 = vmatprep.subr.mxu0 %v4998
      %5872 = vmatpush1.msra.mxu0 %v5009
      %5873 = vmatprep.subr.mxu0 %v5023
      %5874 = vmatpush1.msra.mxu0 %v5034
      %5875 = vmatprep.subr.mxu0 %v5048
      %5876 = vmatpush1.msra.mxu0 %v5059
      %5877 = vmatprep.subr.mxu0 %v5073
      %5878 = vmatpush1.msra.mxu0 %v5084
      %5879 = vmatprep.subr.mxu0 %v5098
      %5880 = vmatpush1.msra.mxu0 %v5109
      %5881 = vmatprep.subr.mxu0 %v5123
      %5882 = vmatpush1.msra.mxu0 %v5134
      %5883 = vmatprep.subr.mxu0 %v5148
      %5884 = vmatpush1.msra.mxu0 %v5159
      %5885 = vmatprep.subr.mxu0 %v5173
      %5886 = vmatpush1.msra.mxu0 %v5184
      %5887 = vmatprep.subr.mxu0 %v5198
      %5888 = vmatpush1.msra.mxu0 %v5209
      %5889 = vmatprep.subr.mxu0 %v5223
      %5890 = vmatpush1.msra.mxu0 %v5234
      %5891 = vmatprep.subr.mxu0 %v4619
      %5892 = vmatpush1.msra.mxu0 %v4618
      %5893 = vmatprep.subr.mxu0 %v5248
      %5894 = vmatpush1.msra.mxu0 %v5247
      %5895 = vmatprep.subr.mxu0 %v5273
      %5896 = vmatpush1.msra.mxu0 %v5272
      %5897 = vmatprep.subr.mxu0 %v5298
      %5898 = vmatpush1.msra.mxu0 %v5297
      %5899 = vmatprep.subr.mxu0 %v5323
      %5900 = vmatpush1.msra.mxu0 %v5322
      %5901 = vmatprep.subr.mxu0 %v5348
      %5902 = vmatpush1.msra.mxu0 %v5347
      %5903 = vmatprep.subr.mxu0 %v5373
      %5904 = vmatpush1.msra.mxu0 %v5372
      %5905 = vmatprep.subr.mxu0 %v5398
      %5906 = vmatpush1.msra.mxu0 %v5397
      %5907 = vmatprep.mubr.f32.mxu0 %v4625
      %5908 = vmatmul.mubr.f32.gmra.mrb[0].mxu0 %v4624
      %v5909 = vpop.f32.mrb[0].mxu0
      %v5910 = vadd.f32 %v5838, %v5909
      %v5911 = vpop.f32.mrb[0].mxu0
      %v5912 = vadd.f32 %v5838, %v5911
      %5913 = vdwg.mxu0
      %5914 = vmatprep.subr.mxu0 %v5423
      %5915 = vmatpush1.msra.mxu0 %v5422
      %5916 = vmatprep.subr.mxu0 %v5448
      %5917 = vmatpush1.msra.mxu0 %v5447
      %5918 = vmatprep.subr.mxu0 %v5473
      %5919 = vmatpush1.msra.mxu0 %v5472
      %5920 = vmatprep.subr.mxu0 %v5498
      %5921 = vmatpush1.msra.mxu0 %v5497
      %5922 = vmatprep.subr.mxu0 %v5523
      %5923 = vmatpush1.msra.mxu0 %v5522
      %5924 = vmatprep.subr.mxu0 %v5548
      %5925 = vmatpush1.msra.mxu0 %v5547
      %5926 = vmatprep.subr.mxu0 %v5573
      %5927 = vmatpush1.msra.mxu0 %v5572
      %5928 = vmatprep.subr.mxu0 %v5598
      %5929 = vmatpush1.msra.mxu0 %v5597
      %5930 = vmatprep.subr.mxu0 %v5623
      %5931 = vmatpush1.msra.mxu0 %v5622
      %5932 = vmatprep.subr.mxu0 %v5648
      %5933 = vmatpush1.msra.mxu0 %v5647
      %5934 = vmatprep.subr.mxu0 %v5673
      %5935 = vmatpush1.msra.mxu0 %v5672
      %5936 = vmatprep.subr.mxu0 %v5698
      %5937 = vmatpush1.msra.mxu0 %v5697
      %5938 = vmatprep.subr.mxu0 %v5723
      %5939 = vmatpush1.msra.mxu0 %v5722
      %5940 = vmatprep.subr.mxu0 %v5748
      %5941 = vmatpush1.msra.mxu0 %v5747
      %5942 = vmatprep.subr.mxu0 %v5773
      %5943 = vmatpush1.msra.mxu0 %v5772
      %5944 = vmatprep.subr.mxu0 %v5798
      %5945 = vmatpush1.msra.mxu0 %v5797
      %5946 = vmatprep.subr.mxu0 %v5823
      %5947 = vmatpush1.msra.mxu0 %v5822
      %5948 = vmatprep.subr.mxu0 0.0
      %5949 = vmatpush1.msra.mxu0 0.0
      %5950 = vmatprep.subr.mxu0 0.0
      %5951 = vmatpush1.msra.mxu0 0.0
      %5952 = vmatprep.subr.mxu0 0.0
      %5953 = vmatpush1.msra.mxu0 0.0
      %5954 = vmatprep.subr.mxu0 0.0
      %5955 = vmatpush1.msra.mxu0 0.0
      %5956 = vmatprep.subr.mxu0 0.0
      %5957 = vmatpush1.msra.mxu0 0.0
      %5958 = vmatprep.subr.mxu0 0.0
      %5959 = vmatpush1.msra.mxu0 0.0
      %5960 = vmatprep.subr.mxu0 0.0
      %5961 = vmatpush1.msra.mxu0 0.0
      %5962 = vmatprep.subr.mxu0 0.0
      %5963 = vmatpush1.msra.mxu0 0.0
      %5964 = vmatprep.subr.mxu0 0.0
      %5965 = vmatpush1.msra.mxu0 0.0
      %5966 = vmatprep.subr.mxu0 0.0
      %5967 = vmatpush1.msra.mxu0 0.0
      %5968 = vmatprep.subr.mxu0 0.0
      %5969 = vmatpush1.msra.mxu0 0.0
      %5970 = vmatprep.subr.mxu0 0.0
      %5971 = vmatpush1.msra.mxu0 0.0
      %5972 = vmatprep.subr.mxu0 0.0
      %5973 = vmatpush1.msra.mxu0 0.0
      %5974 = vmatprep.subr.mxu0 0.0
      %5975 = vmatpush1.msra.mxu0 0.0
      %5976 = vmatprep.subr.mxu0 0.0
      %5977 = vmatpush1.msra.mxu0 0.0
      %5978 = vmatprep.mubr.f32.mxu0 %v5841
      %5979 = vmatmul.mubr.f32.gmra.mrb[0].mxu0 %v4626
      %v5980 = vpop.f32.mrb[0].mxu0
      %v5981 = vadd.f32 %v5910, %v5980
      %v5982 = vpop.f32.mrb[0].mxu0
      %v5983 = vadd.f32 %v5912, %v5982
      %5984 = vdwg.mxu0
      %5985 = vmatprep.subr.mxu0 %v4650
      %5986 = vmatpush1.msra.mxu0 %v4649
      %5987 = vmatprep.subr.mxu0 %v4675
      %5988 = vmatpush1.msra.mxu0 %v4674
      %5989 = vmatprep.subr.mxu0 %v4700
      %5990 = vmatpush1.msra.mxu0 %v4699
      %5991 = vmatprep.subr.mxu0 %v4725
      %5992 = vmatpush1.msra.mxu0 %v4724
      %5993 = vmatprep.subr.mxu0 %v4750
      %5994 = vmatpush1.msra.mxu0 %v4749
      %5995 = vmatprep.subr.mxu0 %v4775
      %5996 = vmatpush1.msra.mxu0 %v4774
      %5997 = vmatprep.subr.mxu0 %v4800
      %5998 = vmatpush1.msra.mxu0 %v4799
      %5999 = vmatprep.subr.mxu0 %v4825
      %6000 = vmatpush1.msra.mxu0 %v4824
      %6001 = vmatprep.subr.mxu0 %v4850
      %6002 = vmatpush1.msra.mxu0 %v4849
      %6003 = vmatprep.subr.mxu0 %v4875
      %6004 = vmatpush1.msra.mxu0 %v4874
      %6005 = vmatprep.subr.mxu0 %v4900
      %6006 = vmatpush1.msra.mxu0 %v4899
      %6007 = vmatprep.subr.mxu0 %v4925
      %6008 = vmatpush1.msra.mxu0 %v4924
      %6009 = vmatprep.subr.mxu0 %v4950
      %6010 = vmatpush1.msra.mxu0 %v4949
      %6011 = vmatprep.subr.mxu0 %v4975
      %6012 = vmatpush1.msra.mxu0 %v4974
      %6013 = vmatprep.subr.mxu0 %v5000
      %6014 = vmatpush1.msra.mxu0 %v4999
      %6015 = vmatprep.subr.mxu0 %v5025
      %6016 = vmatpush1.msra.mxu0 %v5024
      %6017 = vmatprep.subr.mxu0 %v5050
      %6018 = vmatpush1.msra.mxu0 %v5049
      %6019 = vmatprep.subr.mxu0 %v5075
      %6020 = vmatpush1.msra.mxu0 %v5074
      %6021 = vmatprep.subr.mxu0 %v5100
      %6022 = vmatpush1.msra.mxu0 %v5099
      %6023 = vmatprep.subr.mxu0 %v5125
      %6024 = vmatpush1.msra.mxu0 %v5124
      %6025 = vmatprep.subr.mxu0 %v5150
      %6026 = vmatpush1.msra.mxu0 %v5149
      %6027 = vmatprep.subr.mxu0 %v5175
      %6028 = vmatpush1.msra.mxu0 %v5174
      %6029 = vmatprep.subr.mxu0 %v5200
      %6030 = vmatpush1.msra.mxu0 %v5199
      %6031 = vmatprep.subr.mxu0 %v5225
      %6032 = vmatpush1.msra.mxu0 %v5224
      %6033 = vmatprep.subr.mxu0 %v4621
      %6034 = vmatpush1.msra.mxu0 %v4620
      %6035 = vmatprep.subr.mxu0 %v5250
      %6036 = vmatpush1.msra.mxu0 %v5249
      %6037 = vmatprep.subr.mxu0 %v5275
      %6038 = vmatpush1.msra.mxu0 %v5274
      %6039 = vmatprep.subr.mxu0 %v5300
      %6040 = vmatpush1.msra.mxu0 %v5299
      %6041 = vmatprep.subr.mxu0 %v5325
      %6042 = vmatpush1.msra.mxu0 %v5324
      %6043 = vmatprep.subr.mxu0 %v5350
      %6044 = vmatpush1.msra.mxu0 %v5349
      %6045 = vmatprep.subr.mxu0 %v5375
      %6046 = vmatpush1.msra.mxu0 %v5374
      %6047 = vmatprep.subr.mxu0 %v5400
      %6048 = vmatpush1.msra.mxu0 %v5399
      %6049 = vmatprep.mubr.f32.mxu0 %v4625
      %6050 = vmatmul.mubr.f32.gmra.mrb[0].mxu0 %v4624
      %v6051 = vpop.f32.mrb[0].mxu0
      %v6052 = vadd.f32 %v5838, %v6051
      %v6053 = vpop.f32.mrb[0].mxu0
      %v6054 = vadd.f32 %v5838, %v6053
      %6055 = vdwg.mxu0
      %6056 = vmatprep.subr.mxu0 %v5425
      %6057 = vmatpush1.msra.mxu0 %v5424
      %6058 = vmatprep.subr.mxu0 %v5450
      %6059 = vmatpush1.msra.mxu0 %v5449
      %6060 = vmatprep.subr.mxu0 %v5475
      %6061 = vmatpush1.msra.mxu0 %v5474
      %6062 = vmatprep.subr.mxu0 %v5500
      %6063 = vmatpush1.msra.mxu0 %v5499
      %6064 = vmatprep.subr.mxu0 %v5525
      %6065 = vmatpush1.msra.mxu0 %v5524
      %6066 = vmatprep.subr.mxu0 %v5550
      %6067 = vmatpush1.msra.mxu0 %v5549
      %6068 = vmatprep.subr.mxu0 %v5575
      %6069 = vmatpush1.msra.mxu0 %v5574
      %6070 = vmatprep.subr.mxu0 %v5600
      %6071 = vmatpush1.msra.mxu0 %v5599
      %6072 = vmatprep.subr.mxu0 %v5625
      %6073 = vmatpush1.msra.mxu0 %v5624
      %6074 = vmatprep.subr.mxu0 %v5650
      %6075 = vmatpush1.msra.mxu0 %v5649
      %6076 = vmatprep.subr.mxu0 %v5675
      %6077 = vmatpush1.msra.mxu0 %v5674
      %6078 = vmatprep.subr.mxu0 %v5700
      %6079 = vmatpush1.msra.mxu0 %v5699
      %6080 = vmatprep.subr.mxu0 %v5725
      %6081 = vmatpush1.msra.mxu0 %v5724
      %6082 = vmatprep.subr.mxu0 %v5750
      %6083 = vmatpush1.msra.mxu0 %v5749
      %6084 = vmatprep.subr.mxu0 %v5775
      %6085 = vmatpush1.msra.mxu0 %v5774
      %6086 = vmatprep.subr.mxu0 %v5800
      %6087 = vmatpush1.msra.mxu0 %v5799
      %6088 = vmatprep.subr.mxu0 %v5825
      %6089 = vmatpush1.msra.mxu0 %v5824
      %6090 = vmatprep.subr.mxu0 0.0
      %6091 = vmatpush1.msra.mxu0 0.0
      %6092 = vmatprep.subr.mxu0 0.0
      %6093 = vmatpush1.msra.mxu0 0.0
      %6094 = vmatprep.subr.mxu0 0.0
      %6095 = vmatpush1.msra.mxu0 0.0
      %6096 = vmatprep.subr.mxu0 0.0
      %6097 = vmatpush1.msra.mxu0 0.0
      %6098 = vmatprep.subr.mxu0 0.0
      %6099 = vmatpush1.msra.mxu0 0.0
      %6100 = vmatprep.subr.mxu0 0.0
      %6101 = vmatpush1.msra.mxu0 0.0
      %6102 = vmatprep.subr.mxu0 0.0
      %6103 = vmatpush1.msra.mxu0 0.0
      %6104 = vmatprep.subr.mxu0 0.0
      %6105 = vmatpush1.msra.mxu0 0.0
      %6106 = vmatprep.subr.mxu0 0.0
      %6107 = vmatpush1.msra.mxu0 0.0
      %6108 = vmatprep.subr.mxu0 0.0
      %6109 = vmatpush1.msra.mxu0 0.0
      %6110 = vmatprep.subr.mxu0 0.0
      %6111 = vmatpush1.msra.mxu0 0.0
      %6112 = vmatprep.subr.mxu0 0.0
      %6113 = vmatpush1.msra.mxu0 0.0
      %6114 = vmatprep.subr.mxu0 0.0
      %6115 = vmatpush1.msra.mxu0 0.0
      %6116 = vmatprep.subr.mxu0 0.0
      %6117 = vmatpush1.msra.mxu0 0.0
      %6118 = vmatprep.subr.mxu0 0.0
      %6119 = vmatpush1.msra.mxu0 0.0
      %6120 = vmatprep.mubr.f32.mxu0 %v5841
      %6121 = vmatmul.mubr.f32.gmra.mrb[0].mxu0 %v4626
      %v6122 = vpop.f32.mrb[0].mxu0
      %v6123 = vadd.f32 %v6052, %v6122
      %v6124 = vpop.f32.mrb[0].mxu0
      %v6125 = vadd.f32 %v6054, %v6124
      %6126 = vdwg.mxu0
      %6127 = vmatprep.subr.mxu0 %v4652
      %6128 = vmatpush1.msra.mxu0 %v4651
      %6129 = vmatprep.subr.mxu0 %v4677
      %6130 = vmatpush1.msra.mxu0 %v4676
      %6131 = vmatprep.subr.mxu0 %v4702
      %6132 = vmatpush1.msra.mxu0 %v4701
      %6133 = vmatprep.subr.mxu0 %v4727
      %6134 = vmatpush1.msra.mxu0 %v4726
      %6135 = vmatprep.subr.mxu0 %v4752
      %6136 = vmatpush1.msra.mxu0 %v4751
      %6137 = vmatprep.subr.mxu0 %v4777
      %6138 = vmatpush1.msra.mxu0 %v4776
      %6139 = vmatprep.subr.mxu0 %v4802
      %6140 = vmatpush1.msra.mxu0 %v4801
      %6141 = vmatprep.subr.mxu0 %v4827
      %6142 = vmatpush1.msra.mxu0 %v4826
      %6143 = vmatprep.subr.mxu0 %v4852
      %6144 = vmatpush1.msra.mxu0 %v4851
      %6145 = vmatprep.subr.mxu0 %v4877
      %6146 = vmatpush1.msra.mxu0 %v4876
      %6147 = vmatprep.subr.mxu0 %v4902
      %6148 = vmatpush1.msra.mxu0 %v4901
      %6149 = vmatprep.subr.mxu0 %v4927
      %6150 = vmatpush1.msra.mxu0 %v4926
      %6151 = vmatprep.subr.mxu0 %v4952
      %6152 = vmatpush1.msra.mxu0 %v4951
      %6153 = vmatprep.subr.mxu0 %v4977
      %6154 = vmatpush1.msra.mxu0 %v4976
      %6155 = vmatprep.subr.mxu0 %v5002
      %6156 = vmatpush1.msra.mxu0 %v5001
      %6157 = vmatprep.subr.mxu0 %v5027
      %6158 = vmatpush1.msra.mxu0 %v5026
      %6159 = vmatprep.subr.mxu0 %v5052
      %6160 = vmatpush1.msra.mxu0 %v5051
      %6161 = vmatprep.subr.mxu0 %v5077
      %6162 = vmatpush1.msra.mxu0 %v5076
      %6163 = vmatprep.subr.mxu0 %v5102
      %6164 = vmatpush1.msra.mxu0 %v5101
      %6165 = vmatprep.subr.mxu0 %v5127
      %6166 = vmatpush1.msra.mxu0 %v5126
      %6167 = vmatprep.subr.mxu0 %v5152
      %6168 = vmatpush1.msra.mxu0 %v5151
      %6169 = vmatprep.subr.mxu0 %v5177
      %6170 = vmatpush1.msra.mxu0 %v5176
      %6171 = vmatprep.subr.mxu0 %v5202
      %6172 = vmatpush1.msra.mxu0 %v5201
      %6173 = vmatprep.subr.mxu0 %v5227
      %6174 = vmatpush1.msra.mxu0 %v5226
      %6175 = vmatprep.subr.mxu0 %v4623
      %6176 = vmatpush1.msra.mxu0 %v4622
      %6177 = vmatprep.subr.mxu0 %v5259
      %6178 = vmatpush1.msra.mxu0 %v5251
      %6179 = vmatprep.subr.mxu0 %v5284
      %6180 = vmatpush1.msra.mxu0 %v5276
      %6181 = vmatprep.subr.mxu0 %v5309
      %6182 = vmatpush1.msra.mxu0 %v5301
      %6183 = vmatprep.subr.mxu0 %v5334
      %6184 = vmatpush1.msra.mxu0 %v5326
      %6185 = vmatprep.subr.mxu0 %v5359
      %6186 = vmatpush1.msra.mxu0 %v5351
      %6187 = vmatprep.subr.mxu0 %v5384
      %6188 = vmatpush1.msra.mxu0 %v5376
      %6189 = vmatprep.subr.mxu0 %v5409
      %6190 = vmatpush1.msra.mxu0 %v5401
      %6191 = vmatprep.mubr.f32.mxu0 %v4625
      %6192 = vmatmul.mubr.f32.gmra.mrb[0].mxu0 %v4624
      %v6193 = vpop.f32.mrb[0].mxu0
      %v6194 = vadd.f32 %v5838, %v6193
      %v6195 = vpop.f32.mrb[0].mxu0
      %v6196 = vadd.f32 %v5838, %v6195
      %6197 = vdwg.mxu0
      %6198 = vmatprep.subr.mxu0 %v5434
      %6199 = vmatpush1.msra.mxu0 %v5426
      %6200 = vmatprep.subr.mxu0 %v5459
      %6201 = vmatpush1.msra.mxu0 %v5451
      %6202 = vmatprep.subr.mxu0 %v5484
      %6203 = vmatpush1.msra.mxu0 %v5476
      %6204 = vmatprep.subr.mxu0 %v5509
      %6205 = vmatpush1.msra.mxu0 %v5501
      %6206 = vmatprep.subr.mxu0 %v5534
      %6207 = vmatpush1.msra.mxu0 %v5526
      %6208 = vmatprep.subr.mxu0 %v5559
      %6209 = vmatpush1.msra.mxu0 %v5551
      %6210 = vmatprep.subr.mxu0 %v5584
      %6211 = vmatpush1.msra.mxu0 %v5576
      %6212 = vmatprep.subr.mxu0 %v5609
      %6213 = vmatpush1.msra.mxu0 %v5601
      %6214 = vmatprep.subr.mxu0 %v5634
      %6215 = vmatpush1.msra.mxu0 %v5626
      %6216 = vmatprep.subr.mxu0 %v5659
      %6217 = vmatpush1.msra.mxu0 %v5651
      %6218 = vmatprep.subr.mxu0 %v5684
      %6219 = vmatpush1.msra.mxu0 %v5676
      %6220 = vmatprep.subr.mxu0 %v5709
      %6221 = vmatpush1.msra.mxu0 %v5701
      %6222 = vmatprep.subr.mxu0 %v5734
      %6223 = vmatpush1.msra.mxu0 %v5726
      %6224 = vmatprep.subr.mxu0 %v5759
      %6225 = vmatpush1.msra.mxu0 %v5751
      %6226 = vmatprep.subr.mxu0 %v5784
      %6227 = vmatpush1.msra.mxu0 %v5776
      %6228 = vmatprep.subr.mxu0 %v5809
      %6229 = vmatpush1.msra.mxu0 %v5801
      %6230 = vmatprep.subr.mxu0 %v5834
      %6231 = vmatpush1.msra.mxu0 %v5826
      %6232 = vmatprep.subr.mxu0 0.0
      %6233 = vmatpush1.msra.mxu0 0.0
      %6234 = vmatprep.subr.mxu0 0.0
      %6235 = vmatpush1.msra.mxu0 0.0
      %6236 = vmatprep.subr.mxu0 0.0
      %6237 = vmatpush1.msra.mxu0 0.0
      %6238 = vmatprep.subr.mxu0 0.0
      %6239 = vmatpush1.msra.mxu0 0.0
      %6240 = vmatprep.subr.mxu0 0.0
      %6241 = vmatpush1.msra.mxu0 0.0
      %6242 = vmatprep.subr.mxu0 0.0
      %6243 = vmatpush1.msra.mxu0 0.0
      %6244 = vmatprep.subr.mxu0 0.0
      %6245 = vmatpush1.msra.mxu0 0.0
      %6246 = vmatprep.subr.mxu0 0.0
      %6247 = vmatpush1.msra.mxu0 0.0
      %6248 = vmatprep.subr.mxu0 0.0
      %6249 = vmatpush1.msra.mxu0 0.0
      %6250 = vmatprep.subr.mxu0 0.0
      %6251 = vmatpush1.msra.mxu0 0.0
      %6252 = vmatprep.subr.mxu0 0.0
      %6253 = vmatpush1.msra.mxu0 0.0
      %6254 = vmatprep.subr.mxu0 0.0
      %6255 = vmatpush1.msra.mxu0 0.0
      %6256 = vmatprep.subr.mxu0 0.0
      %6257 = vmatpush1.msra.mxu0 0.0
      %6258 = vmatprep.subr.mxu0 0.0
      %6259 = vmatpush1.msra.mxu0 0.0
      %6260 = vmatprep.subr.mxu0 0.0
      %6261 = vmatpush1.msra.mxu0 0.0
      %6262 = vmatprep.mubr.f32.mxu0 %v5841
      %6263 = vmatmul.mubr.f32.gmra.mrb[0].mxu0 %v4626
      %v6264 = vpop.f32.mrb[0].mxu0
      %v6265 = vadd.f32 %v6194, %v6264
      %v6266 = vpop.f32.mrb[0].mxu0
      %v6267 = vadd.f32 %v6196, %v6266
      %6268 = vdwg.mxu0
      %6269 = vst [vmem:[%s305] sm:$0xff] %v5981
      %6270 = vst [vmem:[%s305 + $0x8] sm:$0xff] %v5983
      %6271 = vst [vmem:[%s305 + $0x10] sm:$0xff] %v6123
      %6272 = vst [vmem:[%s305 + $0x18] sm:$0xff] %v6125
      %6273 = vst [vmem:[%s305 + $0x20] sm:$0xff] %v6265
      %6274 = vst [vmem:[%s305 + $0x28] sm:$0xff] %v6267
      %p6275 = scmp.lt.s32.totalorder %s19, 1
      %s6276 = scalar_select %p6275, %s19, 1
      %s6277 = smul.addr %s6276, 6
      %s6278 = smul.addr %s6277, 8
      %s6279 = scalar_lea.vmem %s8, %s6278
      // Predicated region
      $region60: #{resnet_forward.1} parent=51 // pred_check
        %p6280 = pneg %p210
      $region61: #{resnet_forward.1} parent=51 // pred_check_branch
        %6282 = sbr.rel (%p6280) target = $region63
      $region62: #{resnet_forward.1} parent=51 // pred_region
        _
      $region63: #{resnet_forward.1} parent=51 // pred_fallthru
        _
    $region52: #{resnet_forward.1} parent=5 // pred_fallthru
      _
    %p6283 = scmp.le.s32.totalorder 2, %s14
    // Predicated region
    $region64: #{resnet_forward.1} parent=5 // pred_check
      %p6284 = pneg %p6283
    $region65: #{resnet_forward.1} parent=5 // pred_check_branch
      %6286 = sbr.rel (%p6284) target = $region67
    $region66: #{resnet_forward.1} parent=5 // pred_region
      %s6287 = ssub.s32 %s14, 2
      // Predicated region
      $region68: #{resnet_forward.1} parent=66 // pred_check
        %p6288 = pneg %p216
      $region69: #{resnet_forward.1} parent=66 // pred_check_branch
        %6290 = sbr.rel (%p6288) target = $region71
      $region70: #{resnet_forward.1} parent=66 // pred_region
        %p6291 = scmp.lt.s32.totalorder %s20, 1
        %s6292 = scalar_select %p6291, %s20, 1
        %s6293 = smul.addr %s6292, 6
        %s6294 = smul.addr %s6293, 8
        %s6295 = scalar_lea.vmem %s8, %s6294
      $region71: #{resnet_forward.1} parent=66 // pred_fallthru
        _
    $region67: #{resnet_forward.1} parent=5 // pred_fallthru
      _
  $region6: #{resnet_forward.1} parent=0 // loop_footer
    %s18 = sadd.s32 1, %s14
  $region7: #{resnet_forward.1} parent=0 // loop_footer_branch
    %13 = sbr.rel target = $region3
  $region8: #{resnet_forward.1} parent=0 // loop_exit
    _

</llo_original>
